<compile_context>
chip_gen: v6e
topology: v6e:2x2x1
jax: 0.10.0
libtpu: 0.0.40
codegen_flags: <defaults>
</compile_context>

<pallas_src>
import numpy as np

import jax
import jax.numpy as jnp
from jax.experimental import pallas as pl
from jax.experimental.pallas import tpu as pltpu

# ---------------- model hyperparameters ----------------
NZ = 32
NUM_CLASSES = 4
NGF = 16
NC = 3
CROP_SIZE = 16
K = 4                       # ConvTranspose kernel size in every layer
BN_EPS = 1e-5
ZDIM = NZ + NUM_CLASSES     # 36

# layer geometry: (1,1) -> (4,4,32) -> (8,8,16) -> (16,16,3), NHWC channel-minor flat
N0 = 4 * 4 * (NGF * 2)      # 512
N1 = 8 * 8 * NGF            # 1024
N2 = CROP_SIZE * CROP_SIZE * NC  # 768


# ---------------- in-kernel helpers ----------------
def _bn_relu(y, num_ch):
    """Training-mode BatchNorm2d (gamma=1, beta=0, biased var, eps=1e-5) + ReLU on a
    (B, H*W*C) slab whose minor axis is channel-minor NHWC flat (channel = col % C).
    Uses one-pass variance (clamped >= 0) and indicator-matrix matmuls for the
    per-channel group reduce / broadcast (no in-kernel reshapes)."""
    assert num_ch & (num_ch - 1) == 0  # power of two (32 / 16 here)
    b, n = y.shape
    count = b * (n // num_ch)          # samples per channel = B * H * W

    # G[j, c] = 1 if column j belongs to channel c (j % C == c);  Gt = G^T,
    # both built from 2-D iotas (cheap VPU work, stays in vregs/VMEM).
    j_g = jax.lax.broadcasted_iota(jnp.int32, (n, num_ch), 0) & (num_ch - 1)
    c_g = jax.lax.broadcasted_iota(jnp.int32, (n, num_ch), 1)
    g = jnp.where(j_g == c_g, 1.0, 0.0)                      # (n, C) f32
    j_t = jax.lax.broadcasted_iota(jnp.int32, (num_ch, n), 1) & (num_ch - 1)
    c_t = jax.lax.broadcasted_iota(jnp.int32, (num_ch, n), 0)
    gt = jnp.where(j_t == c_t, 1.0, 0.0)                     # (C, n) f32

    inv_count = 1.0 / count
    s1 = jnp.dot(jnp.sum(y, axis=0, keepdims=True), g,
                 preferred_element_type=jnp.float32)          # (1, C) sum
    s2 = jnp.dot(jnp.sum(y * y, axis=0, keepdims=True), g,
                 preferred_element_type=jnp.float32)          # (1, C) sum of squares
    mean = s1 * inv_count
    var = jnp.maximum(s2 * inv_count - mean * mean, 0.0)      # one-pass, clamped
    inv_std = jax.lax.rsqrt(var + BN_EPS)                     # (1, C)

    scale = jnp.dot(inv_std, gt, preferred_element_type=jnp.float32)          # (1, n)
    shift = jnp.dot(mean * inv_std, gt, preferred_element_type=jnp.float32)   # (1, n)
    return jnp.maximum(y * scale - shift, 0.0)


def generator_kernel(z_ref, m0_ref, m1_ref, m2_ref, out_ref):
    """Whole generator forward, fused: 3 matmuls + BN/ReLU/Tanh, VMEM-resident."""
    # L0: ConvT(36->32, k4, s1, p0) on a 1x1 input == plain matmul -> (B, 4*4*32)
    z = z_ref[...].astype(jnp.bfloat16)
    y0 = jnp.dot(z, m0_ref[...], preferred_element_type=jnp.float32)
    a0 = _bn_relu(y0, NGF * 2)

    # L1: ConvT(32->16, k4, s2, p1), pre-unrolled dense matmul -> (B, 8*8*16)
    y1 = jnp.dot(a0.astype(jnp.bfloat16), m1_ref[...],
                 preferred_element_type=jnp.float32)
    a1 = _bn_relu(y1, NGF)

    # L2: ConvT(16->3, k4, s2, p1) + Tanh -> (B, 16*16*3); 768 lanes => lane-dense store
    y2 = jnp.dot(a1.astype(jnp.bfloat16), m2_ref[...],
                 preferred_element_type=jnp.float32)
    out_ref[...] = jnp.tanh(y2)


# ---------------- forward (single fused pallas_call) ----------------
@jax.jit
def generator_forward(x, params):
    """x: (B, 36, 1, 1) NCHW (matching the PyTorch module) -> (B, 3, 16, 16) NCHW."""
    B = x.shape[0]
    zf = x.reshape(B, ZDIM)                      # 1x1 spatial: squeeze to (B, 36)
    m0, m1, m2 = params["m0"], params["m1"], params["m2"]

    flops = 2 * B * (m0.shape[0] * m0.shape[1]
                     + m1.shape[0] * m1.shape[1]
                     + m2.shape[0] * m2.shape[1])
    flops += 2 * 2 * (B + 1) * (m0.shape[1] * (NGF * 2) + m1.shape[1] * NGF)  # BN matmuls
    transcendentals = B * N2 + 2 * (NGF * 2 + NGF)                            # tanh + rsqrt
    bytes_accessed = (2 * (m0.size + m1.size + m2.size)                       # bf16 weights
                      + 4 * zf.size + 4 * B * N2)                             # f32 in/out

    out_flat = pl.pallas_call(
        generator_kernel,
        out_shape=jax.ShapeDtypeStruct((B, N2), jnp.float32),
        in_specs=[pl.BlockSpec(memory_space=pltpu.MemorySpace.VMEM)] * 4,
        out_specs=pl.BlockSpec(memory_space=pltpu.MemorySpace.VMEM),
        compiler_params=pltpu.CompilerParams(vmem_limit_bytes=32 * 1024 * 1024),
        cost_estimate=pl.CostEstimate(flops=flops,
                                      transcendentals=transcendentals,
                                      bytes_accessed=bytes_accessed),
    )(zf, m0, m1, m2)

    # Single NHWC -> NCHW layout fix-up of the small final output, outside the kernel.
    return out_flat.reshape(B, CROP_SIZE, CROP_SIZE, NC).transpose(0, 3, 1, 2)


# ---------------- parameter preparation (host-side, once) ----------------
def _unroll_conv_transpose(w, h_in, w_in, stride, pad):
    """Dense-matrix form of ConvTranspose2d(bias=False) acting on channel-minor
    NHWC-flattened activations: (h_in*w_in*Cin) -> (h_out*w_out*Cout).
    out[(oy*Wo+ox)*Cout+co] += in[(iy*Wi+ix)*Cin+cin] * w[cin,co,ky,kx]
    with oy = iy*s - p + ky, ox = ix*s - p + kx."""
    w = np.asarray(w, np.float32)
    cin, cout, k, _ = w.shape
    h_out = (h_in - 1) * stride - 2 * pad + k
    w_out = (w_in - 1) * stride - 2 * pad + k
    m = np.zeros((h_in * w_in * cin, h_out * w_out * cout), np.float32)
    for iy in range(h_in):
        for ix in range(w_in):
            r = (iy * w_in + ix) * cin
            for ky in range(k):
                oy = iy * stride - pad + ky
                if oy < 0 or oy >= h_out:
                    continue
                for kx in range(k):
                    ox = ix * stride - pad + kx
                    if ox < 0 or ox >= w_out:
                        continue
                    c = (oy * w_out + ox) * cout
                    m[r:r + cin, c:c + cout] += w[:, :, ky, kx]
    return m, h_out, w_out


def _round_bf16(a):
    return a.astype(jnp.bfloat16).astype(jnp.float32)


def init_params(key):
    k0, k1, k2 = jax.random.split(key, 3)
    # PyTorch ConvTranspose2d weight layout: (in_channels, out_channels, kH, kW)
    w0 = _round_bf16(0.02 * jax.random.normal(k0, (ZDIM, NGF * 2, K, K), jnp.float32))
    w1 = _round_bf16(0.02 * jax.random.normal(k1, (NGF * 2, NGF, K, K), jnp.float32))
    w2 = _round_bf16(0.02 * jax.random.normal(k2, (NGF, NC, K, K), jnp.float32))

    m0, h, w = _unroll_conv_transpose(w0, 1, 1, 1, 0)   # (36,  512):  -> 4x4x32
    m1, h, w = _unroll_conv_transpose(w1, h, w, 2, 1)   # (512, 1024): -> 8x8x16
    m2, h, w = _unroll_conv_transpose(w2, h, w, 2, 1)   # (1024, 768): -> 16x16x3
    assert (h, w) == (CROP_SIZE, CROP_SIZE)

    params = {"m0": jnp.asarray(m0, jnp.bfloat16),      # bf16: half the HBM->VMEM bytes
              "m1": jnp.asarray(m1, jnp.bfloat16),
              "m2": jnp.asarray(m2, jnp.bfloat16)}
    ref_weights = {"w0": w0, "w1": w1, "w2": w2}        # for the pure-JAX reference
    return params, ref_weights


# ---------------- pure-JAX reference (correctness check) ----------------
def _convt_ref(x, w, stride, pad):
    """ConvTranspose2d(bias=False) == lhs-dilated correlation with the flipped kernel."""
    k = w.shape[2]
    wf = jnp.flip(w, (2, 3)).transpose(1, 0, 2, 3)      # (Cout, Cin, kH, kW)
    return jax.lax.conv_general_dilated(
        x, wf, window_strides=(1, 1),
        padding=[(k - 1 - pad, k - 1 - pad)] * 2,
        lhs_dilation=(stride, stride),
        dimension_numbers=("NCHW", "OIHW", "NCHW"))


def _bn_relu_ref(y):
    mean = jnp.mean(y, axis=(0, 2, 3), keepdims=True)
    var = jnp.mean((y - mean) ** 2, axis=(0, 2, 3), keepdims=True)
    return jnp.maximum((y - mean) * jax.lax.rsqrt(var + BN_EPS), 0.0)


def generator_reference(x, w):
    # mirrors the kernel's bf16 casts on the matmul/conv inputs (f32 everywhere else)
    a = _bn_relu_ref(_convt_ref(_round_bf16(x), w["w0"], 1, 0))
    a = _bn_relu_ref(_convt_ref(_round_bf16(a), w["w1"], 2, 1))
    return jnp.tanh(_convt_ref(_round_bf16(a), w["w2"], 2, 1))


if __name__ == "__main__":
    key = jax.random.PRNGKey(0)
    pkey, xkey = jax.random.split(key)
    params, ref_weights = init_params(pkey)

    B = 2
    x = jax.random.normal(xkey, (B, ZDIM, 1, 1), jnp.float32)

    out = generator_forward(x, params)
    out = jax.block_until_ready(out)

    assert out.shape == (B, NC, CROP_SIZE, CROP_SIZE), out.shape
    assert out.dtype == jnp.float32
    assert bool(jnp.all(jnp.isfinite(out)))
    assert bool(jnp.all(jnp.abs(out) <= 1.0 + 1e-6))   # tanh range

    # pure-JAX reference with identical (bf16-rounded) weights/activation casts
    ref = jax.block_until_ready(jax.jit(generator_reference)(x, ref_weights))
    max_err = float(jnp.max(jnp.abs(out - ref)))
    assert max_err < 5e-3, f"max |kernel - reference| = {max_err}"

    print("KERNEL_OK")
</pallas_src>

<mosaic_0001>
module attributes {stable_mosaic.version = 11 : i64} {
  func.func @generator_kernel(%arg0: memref<2x36xf32, #tpu.memory_space<vmem>>, %arg1: memref<36x512xbf16, #tpu.memory_space<vmem>>, %arg2: memref<512x1024xbf16, #tpu.memory_space<vmem>>, %arg3: memref<1024x768xbf16, #tpu.memory_space<vmem>>, %arg4: memref<2x768xf32, #tpu.memory_space<vmem>>) attributes {dimension_semantics = [], scalar_prefetch = 0 : i64, scratch_operands = 0 : i64, tpu.core_type = #tpu.core_type<tc>} {
    %c0 = arith.constant 0 : index
    %c0_0 = arith.constant 0 : index
    %0 = vector.load %arg0[%c0, %c0_0] : memref<2x36xf32, #tpu.memory_space<vmem>>, vector<2x36xf32>
    %1 = arith.truncf %0 : vector<2x36xf32> to vector<2x36xbf16>
    %c0_1 = arith.constant 0 : index
    %c0_2 = arith.constant 0 : index
    %2 = vector.load %arg1[%c0_1, %c0_2] : memref<36x512xbf16, #tpu.memory_space<vmem>>, vector<36x512xbf16>
    %cst = arith.constant dense<0.000000e+00> : vector<2x512xf32>
    %3 = tpu.matmul %1, %2, %cst {dimension_numbers = #tpu.dot_dimension_numbers<[1], [0], [0], [1], [0, 0, 1, 1], [], []>} : vector<2x36xbf16>, vector<36x512xbf16>, vector<2x512xf32> -> vector<2x512xf32>
    %4 = tpu.iota {dimensions = array<i32: 0>} : vector<512x32xi32>
    %c31_i32 = arith.constant 31 : i32
    %5 = vector.broadcast %c31_i32 : i32 to vector<512x32xi32>
    %6 = arith.andi %4, %5 : vector<512x32xi32>
    %7 = tpu.iota {dimensions = array<i32: 1>} : vector<512x32xi32>
    %8 = arith.cmpi eq, %6, %7 : vector<512x32xi32>
    %cst_3 = arith.constant 1.000000e+00 : f32
    %cst_4 = arith.constant 0.000000e+00 : f32
    %9 = vector.broadcast %cst_3 : f32 to vector<512x32xf32>
    %10 = vector.broadcast %cst_4 : f32 to vector<512x32xf32>
    %11 = arith.select %8, %9, %10 : vector<512x32xi1>, vector<512x32xf32>
    %12 = tpu.iota {dimensions = array<i32: 1>} : vector<32x512xi32>
    %c31_i32_5 = arith.constant 31 : i32
    %13 = vector.broadcast %c31_i32_5 : i32 to vector<32x512xi32>
    %14 = arith.andi %12, %13 : vector<32x512xi32>
    %15 = tpu.iota {dimensions = array<i32: 0>} : vector<32x512xi32>
    %16 = arith.cmpi eq, %14, %15 : vector<32x512xi32>
    %cst_6 = arith.constant 1.000000e+00 : f32
    %cst_7 = arith.constant 0.000000e+00 : f32
    %17 = vector.broadcast %cst_6 : f32 to vector<32x512xf32>
    %18 = vector.broadcast %cst_7 : f32 to vector<32x512xf32>
    %19 = arith.select %16, %17, %18 : vector<32x512xi1>, vector<32x512xf32>
    %cst_8 = arith.constant dense<0.000000e+00> : vector<512xf32>
    %20 = vector.multi_reduction <add>, %3, %cst_8 [0] : vector<2x512xf32> to vector<512xf32>
    %21 = vector.shape_cast %20 : vector<512xf32> to vector<1x512xf32>
    %cst_9 = arith.constant dense<0.000000e+00> : vector<1x32xf32>
    %22 = tpu.matmul %21, %11, %cst_9 {dimension_numbers = #tpu.dot_dimension_numbers<[1], [0], [0], [1], [0, 0, 1, 1], [], []>} : vector<1x512xf32>, vector<512x32xf32>, vector<1x32xf32> -> vector<1x32xf32>
    %23 = arith.mulf %3, %3 : vector<2x512xf32>
    %cst_10 = arith.constant dense<0.000000e+00> : vector<512xf32>
    %24 = vector.multi_reduction <add>, %23, %cst_10 [0] : vector<2x512xf32> to vector<512xf32>
    %25 = vector.shape_cast %24 : vector<512xf32> to vector<1x512xf32>
    %cst_11 = arith.constant dense<0.000000e+00> : vector<1x32xf32>
    %26 = tpu.matmul %25, %11, %cst_11 {dimension_numbers = #tpu.dot_dimension_numbers<[1], [0], [0], [1], [0, 0, 1, 1], [], []>} : vector<1x512xf32>, vector<512x32xf32>, vector<1x32xf32> -> vector<1x32xf32>
    %cst_12 = arith.constant 3.125000e-02 : f32
    %27 = vector.broadcast %cst_12 : f32 to vector<1x32xf32>
    %28 = arith.mulf %22, %27 : vector<1x32xf32>
    %cst_13 = arith.constant 3.125000e-02 : f32
    %29 = vector.broadcast %cst_13 : f32 to vector<1x32xf32>
    %30 = arith.mulf %26, %29 : vector<1x32xf32>
    %31 = arith.mulf %28, %28 : vector<1x32xf32>
    %32 = arith.subf %30, %31 : vector<1x32xf32>
    %cst_14 = arith.constant 0.000000e+00 : f32
    %33 = vector.broadcast %cst_14 : f32 to vector<1x32xf32>
    %34 = arith.maximumf %32, %33 : vector<1x32xf32>
    %cst_15 = arith.constant 9.99999974E-6 : f32
    %35 = vector.broadcast %cst_15 : f32 to vector<1x32xf32>
    %36 = arith.addf %34, %35 : vector<1x32xf32>
    %37 = math.rsqrt %36 : vector<1x32xf32>
    %cst_16 = arith.constant dense<0.000000e+00> : vector<1x512xf32>
    %38 = tpu.matmul %37, %19, %cst_16 {dimension_numbers = #tpu.dot_dimension_numbers<[1], [0], [0], [1], [0, 0, 1, 1], [], []>} : vector<1x32xf32>, vector<32x512xf32>, vector<1x512xf32> -> vector<1x512xf32>
    %39 = arith.mulf %28, %37 : vector<1x32xf32>
    %cst_17 = arith.constant dense<0.000000e+00> : vector<1x512xf32>
    %40 = tpu.matmul %39, %19, %cst_17 {dimension_numbers = #tpu.dot_dimension_numbers<[1], [0], [0], [1], [0, 0, 1, 1], [], []>} : vector<1x32xf32>, vector<32x512xf32>, vector<1x512xf32> -> vector<1x512xf32>
    %41 = vector.broadcast %38 : vector<1x512xf32> to vector<2x512xf32>
    %42 = arith.mulf %3, %41 : vector<2x512xf32>
    %43 = vector.broadcast %40 : vector<1x512xf32> to vector<2x512xf32>
    %44 = arith.subf %42, %43 : vector<2x512xf32>
    %cst_18 = arith.constant 0.000000e+00 : f32
    %45 = vector.broadcast %cst_18 : f32 to vector<2x512xf32>
    %46 = arith.maximumf %44, %45 : vector<2x512xf32>
    %47 = arith.truncf %46 : vector<2x512xf32> to vector<2x512xbf16>
    %c0_19 = arith.constant 0 : index
    %c0_20 = arith.constant 0 : index
    %48 = vector.load %arg2[%c0_19, %c0_20] : memref<512x1024xbf16, #tpu.memory_space<vmem>>, vector<512x1024xbf16>
    %cst_21 = arith.constant dense<0.000000e+00> : vector<2x1024xf32>
    %49 = tpu.matmul %47, %48, %cst_21 {dimension_numbers = #tpu.dot_dimension_numbers<[1], [0], [0], [1], [0, 0, 1, 1], [], []>} : vector<2x512xbf16>, vector<512x1024xbf16>, vector<2x1024xf32> -> vector<2x1024xf32>
    %50 = tpu.iota {dimensions = array<i32: 0>} : vector<1024x16xi32>
    %c15_i32 = arith.constant 15 : i32
    %51 = vector.broadcast %c15_i32 : i32 to vector<1024x16xi32>
    %52 = arith.andi %50, %51 : vector<1024x16xi32>
    %53 = tpu.iota {dimensions = array<i32: 1>} : vector<1024x16xi32>
    %54 = arith.cmpi eq, %52, %53 : vector<1024x16xi32>
    %cst_22 = arith.constant 1.000000e+00 : f32
    %cst_23 = arith.constant 0.000000e+00 : f32
    %55 = vector.broadcast %cst_22 : f32 to vector<1024x16xf32>
    %56 = vector.broadcast %cst_23 : f32 to vector<1024x16xf32>
    %57 = arith.select %54, %55, %56 : vector<1024x16xi1>, vector<1024x16xf32>
    %58 = tpu.iota {dimensions = array<i32: 1>} : vector<16x1024xi32>
    %c15_i32_24 = arith.constant 15 : i32
    %59 = vector.broadcast %c15_i32_24 : i32 to vector<16x1024xi32>
    %60 = arith.andi %58, %59 : vector<16x1024xi32>
    %61 = tpu.iota {dimensions = array<i32: 0>} : vector<16x1024xi32>
    %62 = arith.cmpi eq, %60, %61 : vector<16x1024xi32>
    %cst_25 = arith.constant 1.000000e+00 : f32
    %cst_26 = arith.constant 0.000000e+00 : f32
    %63 = vector.broadcast %cst_25 : f32 to vector<16x1024xf32>
    %64 = vector.broadcast %cst_26 : f32 to vector<16x1024xf32>
    %65 = arith.select %62, %63, %64 : vector<16x1024xi1>, vector<16x1024xf32>
    %cst_27 = arith.constant dense<0.000000e+00> : vector<1024xf32>
    %66 = vector.multi_reduction <add>, %49, %cst_27 [0] : vector<2x1024xf32> to vector<1024xf32>
    %67 = vector.shape_cast %66 : vector<1024xf32> to vector<1x1024xf32>
    %cst_28 = arith.constant dense<0.000000e+00> : vector<1x16xf32>
    %68 = tpu.matmul %67, %57, %cst_28 {dimension_numbers = #tpu.dot_dimension_numbers<[1], [0], [0], [1], [0, 0, 1, 1], [], []>} : vector<1x1024xf32>, vector<1024x16xf32>, vector<1x16xf32> -> vector<1x16xf32>
    %69 = arith.mulf %49, %49 : vector<2x1024xf32>
    %cst_29 = arith.constant dense<0.000000e+00> : vector<1024xf32>
    %70 = vector.multi_reduction <add>, %69, %cst_29 [0] : vector<2x1024xf32> to vector<1024xf32>
    %71 = vector.shape_cast %70 : vector<1024xf32> to vector<1x1024xf32>
    %cst_30 = arith.constant dense<0.000000e+00> : vector<1x16xf32>
    %72 = tpu.matmul %71, %57, %cst_30 {dimension_numbers = #tpu.dot_dimension_numbers<[1], [0], [0], [1], [0, 0, 1, 1], [], []>} : vector<1x1024xf32>, vector<1024x16xf32>, vector<1x16xf32> -> vector<1x16xf32>
    %cst_31 = arith.constant 7.812500e-03 : f32
    %73 = vector.broadcast %cst_31 : f32 to vector<1x16xf32>
    %74 = arith.mulf %68, %73 : vector<1x16xf32>
    %cst_32 = arith.constant 7.812500e-03 : f32
    %75 = vector.broadcast %cst_32 : f32 to vector<1x16xf32>
    %76 = arith.mulf %72, %75 : vector<1x16xf32>
    %77 = arith.mulf %74, %74 : vector<1x16xf32>
    %78 = arith.subf %76, %77 : vector<1x16xf32>
    %cst_33 = arith.constant 0.000000e+00 : f32
    %79 = vector.broadcast %cst_33 : f32 to vector<1x16xf32>
    %80 = arith.maximumf %78, %79 : vector<1x16xf32>
    %cst_34 = arith.constant 9.99999974E-6 : f32
    %81 = vector.broadcast %cst_34 : f32 to vector<1x16xf32>
    %82 = arith.addf %80, %81 : vector<1x16xf32>
    %83 = math.rsqrt %82 : vector<1x16xf32>
    %cst_35 = arith.constant dense<0.000000e+00> : vector<1x1024xf32>
    %84 = tpu.matmul %83, %65, %cst_35 {dimension_numbers = #tpu.dot_dimension_numbers<[1], [0], [0], [1], [0, 0, 1, 1], [], []>} : vector<1x16xf32>, vector<16x1024xf32>, vector<1x1024xf32> -> vector<1x1024xf32>
    %85 = arith.mulf %74, %83 : vector<1x16xf32>
    %cst_36 = arith.constant dense<0.000000e+00> : vector<1x1024xf32>
    %86 = tpu.matmul %85, %65, %cst_36 {dimension_numbers = #tpu.dot_dimension_numbers<[1], [0], [0], [1], [0, 0, 1, 1], [], []>} : vector<1x16xf32>, vector<16x1024xf32>, vector<1x1024xf32> -> vector<1x1024xf32>
    %87 = vector.broadcast %84 : vector<1x1024xf32> to vector<2x1024xf32>
    %88 = arith.mulf %49, %87 : vector<2x1024xf32>
    %89 = vector.broadcast %86 : vector<1x1024xf32> to vector<2x1024xf32>
    %90 = arith.subf %88, %89 : vector<2x1024xf32>
    %cst_37 = arith.constant 0.000000e+00 : f32
    %91 = vector.broadcast %cst_37 : f32 to vector<2x1024xf32>
    %92 = arith.maximumf %90, %91 : vector<2x1024xf32>
    %93 = arith.truncf %92 : vector<2x1024xf32> to vector<2x1024xbf16>
    %c0_38 = arith.constant 0 : index
    %c0_39 = arith.constant 0 : index
    %94 = vector.load %arg3[%c0_38, %c0_39] : memref<1024x768xbf16, #tpu.memory_space<vmem>>, vector<1024x768xbf16>
    %cst_40 = arith.constant dense<0.000000e+00> : vector<2x768xf32>
    %95 = tpu.matmul %93, %94, %cst_40 {dimension_numbers = #tpu.dot_dimension_numbers<[1], [0], [0], [1], [0, 0, 1, 1], [], []>} : vector<2x1024xbf16>, vector<1024x768xbf16>, vector<2x768xf32> -> vector<2x768xf32>
    %96 = math.tanh %95 : vector<2x768xf32>
    %c0_41 = arith.constant 0 : index
    %c0_42 = arith.constant 0 : index
    %97 = vector.load %arg4[%c0_41, %c0_42] : memref<2x768xf32, #tpu.memory_space<vmem>>, vector<2x768xf32>
    tpu.vector_store %arg4[%c0_41, %c0_42], %96 {strides = array<i32>} : memref<2x768xf32, #tpu.memory_space<vmem>>, vector<2x768xf32>,
    return
  }
}

</mosaic_0001>

<llo_original>
// kernel: generator_forward.1
$region0: #{generator_forward.1}
  #allocation0 [shape = 'u32[]', space=smem, size = 0x4, offset = 0x4, fixed_abs, tag = 'smem constant byte address 0x4 - core index']
  #allocation1 [shape = 'u32[144,128]{1,0:T(1,128)}', space=vmem, size = 0x12000, scoped, tag = 'internal scratch']
  %s0 = inlined_call_operand.hbm [shape: f32[2,36], index: 0, kind: input, shape index: {}]
  %s1 = inlined_call_operand.hbm [shape: bf16[36,512], index: 1, kind: input, shape index: {}]
  %s2 = inlined_call_operand.hbm [shape: bf16[512,1024], index: 2, kind: input, shape index: {}]
  %s3 = inlined_call_operand.hbm [shape: bf16[1024,768], index: 3, kind: input, shape index: {}]
  %s4 = inlined_call_operand.vmem [shape: f32[2,768], index: 4, kind: output, shape index: {}]
  %s5 = sld [smem:[#allocation0]]
  $region42: #{generator_forward.1} parent=0
    _
  %s7 = ssub.s32 1, %s5
  %s8 = scalar_select 0, %s7, %s5
  $region1: #{generator_forward.1} parent=0
    #allocation2 [shape = 'u8[1024]{0}', space=vmem, size = 0x400, scoped, tag = 'input window, operand 0, single buffered']
    #allocation3 [shape = 's32[1]{0}', space=sflag, size = 0x4, scoped, tag = 'scoped memory for generator_forward.1']
    #allocation4 [shape = 'u8[40960]{0}', space=vmem, size = 0xa000, scoped, tag = 'input window, operand 1, single buffered']
    #allocation5 [shape = 's32[1]{0}', space=sflag, size = 0x4, scoped, tag = 'scoped memory for generator_forward.1']
    #allocation6 [shape = 'u8[1048576]{0}', space=vmem, size = 0x100000, scoped, tag = 'input window, operand 2, single buffered']
    #allocation7 [shape = 'u8[1572864]{0}', space=vmem, size = 0x180000, scoped, tag = 'input window, operand 3, single buffered']
    #allocation8 [shape = 's32[1]{0}', space=sflag, size = 0x4, scoped, tag = 'scoped memory for generator_forward.1']
    %9 = vsyncpa [#allocation3], 0
    %10 = vsyncpa [#allocation5], 0
    %11 = vsyncpa [#allocation8], 0
    // Predicated region
    $region2: #{generator_forward.1} parent=1 // pred_check
      _
    $region3: #{generator_forward.1} parent=1 // pred_check_branch
      %13 = sbr.rel (0) target = $region5
    $region4: #{generator_forward.1} parent=1 // pred_region
      %s15 = ssub.s32 32, 32
      %16 = vsyncadd [#allocation3], %s15
      %s18 = sshll.u32 [#allocation2], 4
      %s19 = int_to_ptr.vmem [resolvable:$true] %s18
      %21 = dma.hbm_to_vmem [thread:$0]  %s0, 32, %s19, [#allocation3]
    $region5: #{generator_forward.1} parent=1 // pred_fallthru
      _
    // Predicated region
    $region6: #{generator_forward.1} parent=1 // pred_check
      _
    $region7: #{generator_forward.1} parent=1 // pred_check_branch
      %23 = sbr.rel (0) target = $region9
    $region8: #{generator_forward.1} parent=1 // pred_region
      %s25 = ssub.s32 1280, 1280
      %26 = vsyncadd [#allocation5], %s25
      %s27 = sshll.u32 [#allocation4], 4
      %s28 = int_to_ptr.vmem [resolvable:$true] %s27
      %33 = dma.hbm_to_vmem [thread:$0]  %s1, 1280, %s28, [#allocation5], 256, 256, 16
    $region9: #{generator_forward.1} parent=1 // pred_fallthru
      _
    // Predicated region
    $region10: #{generator_forward.1} parent=1 // pred_check
      _
    $region11: #{generator_forward.1} parent=1 // pred_check_branch
      %35 = sbr.rel (0) target = $region13
    $region12: #{generator_forward.1} parent=1 // pred_region
      %s37 = ssub.s32 32768, 32768
      %38 = vsyncadd [#allocation5], %s37
      %s39 = sshll.u32 [#allocation6], 4
      %s40 = int_to_ptr.vmem [resolvable:$true] %s39
      %45 = dma.hbm_to_vmem [thread:$0]  %s2, 32768, %s40, [#allocation5], 512, 512, 32
    $region13: #{generator_forward.1} parent=1 // pred_fallthru
      _
    // Predicated region
    $region14: #{generator_forward.1} parent=1 // pred_check
      _
    $region15: #{generator_forward.1} parent=1 // pred_check_branch
      %47 = sbr.rel (0) target = $region17
    $region16: #{generator_forward.1} parent=1 // pred_region
      %s49 = ssub.s32 49152, 49152
      %50 = vsyncadd [#allocation8], %s49
      %s51 = sshll.u32 [#allocation7], 4
      %s52 = int_to_ptr.vmem [resolvable:$true] %s51
      %57 = dma.hbm_to_vmem [thread:$0]  %s3, 49152, %s52, [#allocation8], 384, 384, 24
    $region17: #{generator_forward.1} parent=1 // pred_fallthru
      _
    // Predicated region
    $region18: #{generator_forward.1} parent=1 // pred_check
      _
    $region19: #{generator_forward.1} parent=1 // pred_check_branch
      %59 = sbr.rel (0) target = $region21
    $region20: #{generator_forward.1} parent=1 // pred_region
      %60 = dma.done [#allocation3], 32
    $region21: #{generator_forward.1} parent=1 // pred_fallthru
      _
    // Predicated region
    $region22: #{generator_forward.1} parent=1 // pred_check
      _
    $region23: #{generator_forward.1} parent=1 // pred_check_branch
      %62 = sbr.rel (0) target = $region25
    $region24: #{generator_forward.1} parent=1 // pred_region
      %63 = dma.done [#allocation5], 1280
    $region25: #{generator_forward.1} parent=1 // pred_fallthru
      _
    // Predicated region
    $region26: #{generator_forward.1} parent=1 // pred_check
      _
    $region27: #{generator_forward.1} parent=1 // pred_check_branch
      %65 = sbr.rel (0) target = $region29
    $region28: #{generator_forward.1} parent=1 // pred_region
      %66 = dma.done [#allocation5], 32768
    $region29: #{generator_forward.1} parent=1 // pred_fallthru
      _
    // Predicated region
    $region30: #{generator_forward.1} parent=1 // pred_check
      _
    $region31: #{generator_forward.1} parent=1 // pred_check_branch
      %68 = sbr.rel (0) target = $region33
    $region32: #{generator_forward.1} parent=1 // pred_region
      %69 = dma.done [#allocation8], 49152
    $region33: #{generator_forward.1} parent=1 // pred_fallthru
      _
    %v71 = vld [vmem:[#allocation2] sm:$0x3]
    %v72 = vpack.c.bf16 %v71, %v71
    %v73 = vld [vmem:[#allocation4] sm:$0xff]
    %v74 = vld [vmem:[#allocation4 + $0x8] sm:$0xff]
    %v75 = vld [vmem:[#allocation4 + $0x10] sm:$0xff]
    %v76 = vld [vmem:[#allocation4 + $0x18] sm:$0xff]
    %v77 = vld [vmem:[#allocation4 + $0x20] sm:$0xff]
    %v78 = vld [vmem:[#allocation4 + $0x28] sm:$0xff]
    %v79 = vld [vmem:[#allocation4 + $0x30] sm:$0xff]
    %v80 = vld [vmem:[#allocation4 + $0x38] sm:$0xff]
    %v81 = vld [vmem:[#allocation4 + $0x40] sm:$0x33]
    %v82 = vld [vmem:[#allocation4 + $0x48] sm:$0x33]
    %v93 = vunpack.c.l.b16 %v73
    %v94 = vunpack.c.h.b16 %v73
    %v95 = vunpack.c.l.b16 %v74
    %v96 = vunpack.c.h.b16 %v74
    %v97 = vunpack.c.l.b16 %v75
    %v98 = vunpack.c.h.b16 %v75
    %v99 = vunpack.c.l.b16 %v76
    %v100 = vunpack.c.h.b16 %v76
    %v101 = vunpack.c.l.b16 %v77
    %v102 = vunpack.c.h.b16 %v77
    %v103 = vunpack.c.l.b16 %v78
    %v104 = vunpack.c.h.b16 %v78
    %v105 = vunpack.c.l.b16 %v79
    %v106 = vunpack.c.h.b16 %v79
    %v107 = vunpack.c.l.b16 %v80
    %v108 = vunpack.c.h.b16 %v80
    %v109 = vunpack.c.l.b16 %v81
    %v110 = vunpack.c.h.b16 %v81
    %v111 = vunpack.c.l.b16 %v82
    %v112 = vunpack.c.h.b16 %v82
    %v113 = vpack.c.b16 %v97, %v93
    %v114 = vpack.c.b16 %v98, %v94
    %v115 = vpack.c.b16 %v99, %v95
    %v116 = vpack.c.b16 %v100, %v96
    %v117 = vpack.c.b16 %v105, %v101
    %v118 = vpack.c.b16 %v106, %v102
    %v119 = vpack.c.b16 %v107, %v103
    %v120 = vpack.c.b16 %v108, %v104
    %v121 = vpack.c.b16 %v109, %v109
    %v122 = vpack.c.b16 %v110, %v110
    %v123 = vpack.c.b16 %v111, %v111
    %v124 = vpack.c.b16 %v112, %v112
    %vm133 = vcmask 293888
    %v135 = vsel %vm133, %v72, 0
    %vm137 = vcmask 1041408
    %v139 = vsel %vm137, %v121, 0
    %v142 = vsel %vm137, %v122, 0
    %v145 = vsel %vm137, %v123, 0
    %v148 = vsel %vm137, %v124, 0
    %150 = vmatprep.subr.bf16.mxu0 0
    %151 = vmatpush1.bf16.msra.mxu0 0
    %152 = vmatprep.subr.bf16.mxu0 0
    %153 = vmatpush1.bf16.msra.mxu0 0
    %154 = vmatprep.subr.bf16.mxu0 0
    %155 = vmatpush1.bf16.msra.mxu0 0
    %156 = vmatprep.subr.bf16.mxu0 0
    %157 = vmatpush1.bf16.msra.mxu0 0
    %158 = vmatprep.subr.bf16.mxu0 0
    %159 = vmatpush1.bf16.msra.mxu0 0
    %160 = vmatprep.subr.bf16.mxu0 %v142
    %161 = vmatpush1.bf16.msra.mxu0 %v139
    %162 = vmatprep.subr.bf16.mxu0 %v118
    %163 = vmatpush1.bf16.msra.mxu0 %v117
    %164 = vmatprep.subr.bf16.mxu0 %v114
    %165 = vmatpush1.bf16.msra.mxu0 %v113
    %166 = vmatprep.subr.bf16.mxu0 0
    %167 = vmatpush2.bf16.msra.mxu0 0
    %168 = vmatprep.subr.bf16.mxu0 0
    %169 = vmatpush2.bf16.msra.mxu0 0
    %170 = vmatprep.subr.bf16.mxu0 0
    %171 = vmatpush2.bf16.msra.mxu0 0
    %172 = vmatprep.subr.bf16.mxu0 0
    %173 = vmatpush2.bf16.msra.mxu0 0
    %174 = vmatprep.subr.bf16.mxu0 0
    %175 = vmatpush2.bf16.msra.mxu0 0
    %176 = vmatprep.subr.bf16.mxu0 0
    %177 = vmatpush2.bf16.msra.mxu0 0
    %178 = vmatprep.subr.bf16.mxu0 0
    %179 = vmatpush2.bf16.msra.mxu0 0
    %180 = vmatprep.subr.bf16.mxu0 0
    %181 = vmatpush2.bf16.msra.mxu0 0
    %182 = vmatprep.mubr.bf16.mxu0 0
    %183 = vmatmul.mubr.bf16.gmra.mxu0 %v135
    %v184 = vpop.f32.mrf.mxu0
    %v185 = vadd.f32 0.0, %v184
    %v186 = vpop.f32.mrf.mxu0
    %v187 = vadd.f32 0.0, %v186
    %v188 = vpop.f32.mrf.mxu0
    %v189 = vpop.f32.mrf.mxu0
    %190 = vdwg.mxu0
    %191 = vmatprep.subr.bf16.mxu0 0
    %192 = vmatpush1.bf16.msra.mxu0 0
    %193 = vmatprep.subr.bf16.mxu0 0
    %194 = vmatpush1.bf16.msra.mxu0 0
    %195 = vmatprep.subr.bf16.mxu0 0
    %196 = vmatpush1.bf16.msra.mxu0 0
    %197 = vmatprep.subr.bf16.mxu0 0
    %198 = vmatpush1.bf16.msra.mxu0 0
    %199 = vmatprep.subr.bf16.mxu0 0
    %200 = vmatpush1.bf16.msra.mxu0 0
    %201 = vmatprep.subr.bf16.mxu0 %v148
    %202 = vmatpush1.bf16.msra.mxu0 %v145
    %203 = vmatprep.subr.bf16.mxu0 %v120
    %204 = vmatpush1.bf16.msra.mxu0 %v119
    %205 = vmatprep.subr.bf16.mxu0 %v116
    %206 = vmatpush1.bf16.msra.mxu0 %v115
    %207 = vmatprep.subr.bf16.mxu0 0
    %208 = vmatpush2.bf16.msra.mxu0 0
    %209 = vmatprep.subr.bf16.mxu0 0
    %210 = vmatpush2.bf16.msra.mxu0 0
    %211 = vmatprep.subr.bf16.mxu0 0
    %212 = vmatpush2.bf16.msra.mxu0 0
    %213 = vmatprep.subr.bf16.mxu0 0
    %214 = vmatpush2.bf16.msra.mxu0 0
    %215 = vmatprep.subr.bf16.mxu0 0
    %216 = vmatpush2.bf16.msra.mxu0 0
    %217 = vmatprep.subr.bf16.mxu0 0
    %218 = vmatpush2.bf16.msra.mxu0 0
    %219 = vmatprep.subr.bf16.mxu0 0
    %220 = vmatpush2.bf16.msra.mxu0 0
    %221 = vmatprep.subr.bf16.mxu0 0
    %222 = vmatpush2.bf16.msra.mxu0 0
    %223 = vmatprep.mubr.bf16.mxu0 0
    %224 = vmatmul.mubr.bf16.gmra.mxu0 %v135
    %v225 = vpop.f32.mrf.mxu0
    %v226 = vadd.f32 0.0, %v225
    %v227 = vpop.f32.mrf.mxu0
    %v228 = vadd.f32 0.0, %v227
    %v229 = vpop.f32.mrf.mxu0
    %v230 = vpop.f32.mrf.mxu0
    %231 = vdwg.mxu0
    %v232 = vlaneseq
    %v233 = vshrl.u32 %v232, 7
    %v234 = vadd.s32 %v233, 8
    %v235 = vadd.s32 %v233, 16
    %v236 = vadd.s32 %v233, 24
    %v237 = vadd.s32 %v233, 32
    %v238 = vadd.s32 %v233, 40
    %v239 = vadd.s32 %v233, 48
    %v240 = vadd.s32 %v233, 56
    %v241 = vadd.s32 %v233, 64
    %v242 = vadd.s32 %v233, 72
    %v243 = vadd.s32 %v233, 80
    %v244 = vadd.s32 %v233, 88
    %v245 = vadd.s32 %v233, 96
    %v246 = vadd.s32 %v233, 104
    %v247 = vadd.s32 %v233, 112
    %v248 = vadd.s32 %v233, 120
    %v249 = vadd.s32 %v233, 128
    %v250 = vadd.s32 %v233, 136
    %v251 = vadd.s32 %v233, 144
    %v252 = vadd.s32 %v233, 152
    %v253 = vadd.s32 %v233, 160
    %v254 = vadd.s32 %v233, 168
    %v255 = vadd.s32 %v233, 176
    %v256 = vadd.s32 %v233, 184
    %v257 = vadd.s32 %v233, 192
    %v258 = vadd.s32 %v233, 200
    %v259 = vadd.s32 %v233, 208
    %v260 = vadd.s32 %v233, 216
    %v261 = vadd.s32 %v233, 224
    %v262 = vadd.s32 %v233, 232
    %v263 = vadd.s32 %v233, 240
    %v264 = vadd.s32 %v233, 248
    %v265 = vadd.s32 %v233, 256
    %v266 = vadd.s32 %v233, 264
    %v267 = vadd.s32 %v233, 272
    %v268 = vadd.s32 %v233, 280
    %v269 = vadd.s32 %v233, 288
    %v270 = vadd.s32 %v233, 296
    %v271 = vadd.s32 %v233, 304
    %v272 = vadd.s32 %v233, 312
    %v273 = vadd.s32 %v233, 320
    %v274 = vadd.s32 %v233, 328
    %v275 = vadd.s32 %v233, 336
    %v276 = vadd.s32 %v233, 344
    %v277 = vadd.s32 %v233, 352
    %v278 = vadd.s32 %v233, 360
    %v279 = vadd.s32 %v233, 368
    %v280 = vadd.s32 %v233, 376
    %v281 = vadd.s32 %v233, 384
    %v282 = vadd.s32 %v233, 392
    %v283 = vadd.s32 %v233, 400
    %v284 = vadd.s32 %v233, 408
    %v285 = vadd.s32 %v233, 416
    %v286 = vadd.s32 %v233, 424
    %v287 = vadd.s32 %v233, 432
    %v288 = vadd.s32 %v233, 440
    %v289 = vadd.s32 %v233, 448
    %v290 = vadd.s32 %v233, 456
    %v291 = vadd.s32 %v233, 464
    %v292 = vadd.s32 %v233, 472
    %v293 = vadd.s32 %v233, 480
    %v294 = vadd.s32 %v233, 488
    %v295 = vadd.s32 %v233, 496
    %v296 = vadd.s32 %v233, 504
    %v297 = vand.u32 %v233, 31
    %v298 = vand.u32 %v234, 31
    %v299 = vand.u32 %v235, 31
    %v300 = vand.u32 %v236, 31
    %v301 = vand.u32 %v237, 31
    %v302 = vand.u32 %v238, 31
    %v303 = vand.u32 %v239, 31
    %v304 = vand.u32 %v240, 31
    %v305 = vand.u32 %v241, 31
    %v306 = vand.u32 %v242, 31
    %v307 = vand.u32 %v243, 31
    %v308 = vand.u32 %v244, 31
    %v309 = vand.u32 %v245, 31
    %v310 = vand.u32 %v246, 31
    %v311 = vand.u32 %v247, 31
    %v312 = vand.u32 %v248, 31
    %v313 = vand.u32 %v249, 31
    %v314 = vand.u32 %v250, 31
    %v315 = vand.u32 %v251, 31
    %v316 = vand.u32 %v252, 31
    %v317 = vand.u32 %v253, 31
    %v318 = vand.u32 %v254, 31
    %v319 = vand.u32 %v255, 31
    %v320 = vand.u32 %v256, 31
    %v321 = vand.u32 %v257, 31
    %v322 = vand.u32 %v258, 31
    %v323 = vand.u32 %v259, 31
    %v324 = vand.u32 %v260, 31
    %v325 = vand.u32 %v261, 31
    %v326 = vand.u32 %v262, 31
    %v327 = vand.u32 %v263, 31
    %v328 = vand.u32 %v264, 31
    %v329 = vand.u32 %v265, 31
    %v330 = vand.u32 %v266, 31
    %v331 = vand.u32 %v267, 31
    %v332 = vand.u32 %v268, 31
    %v333 = vand.u32 %v269, 31
    %v334 = vand.u32 %v270, 31
    %v335 = vand.u32 %v271, 31
    %v336 = vand.u32 %v272, 31
    %v337 = vand.u32 %v273, 31
    %v338 = vand.u32 %v274, 31
    %v339 = vand.u32 %v275, 31
    %v340 = vand.u32 %v276, 31
    %v341 = vand.u32 %v277, 31
    %v342 = vand.u32 %v278, 31
    %v343 = vand.u32 %v279, 31
    %v344 = vand.u32 %v280, 31
    %v345 = vand.u32 %v281, 31
    %v346 = vand.u32 %v282, 31
    %v347 = vand.u32 %v283, 31
    %v348 = vand.u32 %v284, 31
    %v349 = vand.u32 %v285, 31
    %v350 = vand.u32 %v286, 31
    %v351 = vand.u32 %v287, 31
    %v352 = vand.u32 %v288, 31
    %v353 = vand.u32 %v289, 31
    %v354 = vand.u32 %v290, 31
    %v355 = vand.u32 %v291, 31
    %v356 = vand.u32 %v292, 31
    %v357 = vand.u32 %v293, 31
    %v358 = vand.u32 %v294, 31
    %v359 = vand.u32 %v295, 31
    %v360 = vand.u32 %v296, 31
    %v361 = vlaneseq
    %v362 = vand.u32 %v361, 127
    %vm363 = vcmp.eq.s32.totalorder %v297, %v362
    %vm364 = vcmp.eq.s32.totalorder %v298, %v362
    %vm365 = vcmp.eq.s32.totalorder %v299, %v362
    %vm366 = vcmp.eq.s32.totalorder %v300, %v362
    %vm367 = vcmp.eq.s32.totalorder %v301, %v362
    %vm368 = vcmp.eq.s32.totalorder %v302, %v362
    %vm369 = vcmp.eq.s32.totalorder %v303, %v362
    %vm370 = vcmp.eq.s32.totalorder %v304, %v362
    %vm371 = vcmp.eq.s32.totalorder %v305, %v362
    %vm372 = vcmp.eq.s32.totalorder %v306, %v362
    %vm373 = vcmp.eq.s32.totalorder %v307, %v362
    %vm374 = vcmp.eq.s32.totalorder %v308, %v362
    %vm375 = vcmp.eq.s32.totalorder %v309, %v362
    %vm376 = vcmp.eq.s32.totalorder %v310, %v362
    %vm377 = vcmp.eq.s32.totalorder %v311, %v362
    %vm378 = vcmp.eq.s32.totalorder %v312, %v362
    %vm379 = vcmp.eq.s32.totalorder %v313, %v362
    %vm380 = vcmp.eq.s32.totalorder %v314, %v362
    %vm381 = vcmp.eq.s32.totalorder %v315, %v362
    %vm382 = vcmp.eq.s32.totalorder %v316, %v362
    %vm383 = vcmp.eq.s32.totalorder %v317, %v362
    %vm384 = vcmp.eq.s32.totalorder %v318, %v362
    %vm385 = vcmp.eq.s32.totalorder %v319, %v362
    %vm386 = vcmp.eq.s32.totalorder %v320, %v362
    %vm387 = vcmp.eq.s32.totalorder %v321, %v362
    %vm388 = vcmp.eq.s32.totalorder %v322, %v362
    %vm389 = vcmp.eq.s32.totalorder %v323, %v362
    %vm390 = vcmp.eq.s32.totalorder %v324, %v362
    %vm391 = vcmp.eq.s32.totalorder %v325, %v362
    %vm392 = vcmp.eq.s32.totalorder %v326, %v362
    %vm393 = vcmp.eq.s32.totalorder %v327, %v362
    %vm394 = vcmp.eq.s32.totalorder %v328, %v362
    %vm395 = vcmp.eq.s32.totalorder %v329, %v362
    %vm396 = vcmp.eq.s32.totalorder %v330, %v362
    %vm397 = vcmp.eq.s32.totalorder %v331, %v362
    %vm398 = vcmp.eq.s32.totalorder %v332, %v362
    %vm399 = vcmp.eq.s32.totalorder %v333, %v362
    %vm400 = vcmp.eq.s32.totalorder %v334, %v362
    %vm401 = vcmp.eq.s32.totalorder %v335, %v362
    %vm402 = vcmp.eq.s32.totalorder %v336, %v362
    %vm403 = vcmp.eq.s32.totalorder %v337, %v362
    %vm404 = vcmp.eq.s32.totalorder %v338, %v362
    %vm405 = vcmp.eq.s32.totalorder %v339, %v362
    %vm406 = vcmp.eq.s32.totalorder %v340, %v362
    %vm407 = vcmp.eq.s32.totalorder %v341, %v362
    %vm408 = vcmp.eq.s32.totalorder %v342, %v362
    %vm409 = vcmp.eq.s32.totalorder %v343, %v362
    %vm410 = vcmp.eq.s32.totalorder %v344, %v362
    %vm411 = vcmp.eq.s32.totalorder %v345, %v362
    %vm412 = vcmp.eq.s32.totalorder %v346, %v362
    %vm413 = vcmp.eq.s32.totalorder %v347, %v362
    %vm414 = vcmp.eq.s32.totalorder %v348, %v362
    %vm415 = vcmp.eq.s32.totalorder %v349, %v362
    %vm416 = vcmp.eq.s32.totalorder %v350, %v362
    %vm417 = vcmp.eq.s32.totalorder %v351, %v362
    %vm418 = vcmp.eq.s32.totalorder %v352, %v362
    %vm419 = vcmp.eq.s32.totalorder %v353, %v362
    %vm420 = vcmp.eq.s32.totalorder %v354, %v362
    %vm421 = vcmp.eq.s32.totalorder %v355, %v362
    %vm422 = vcmp.eq.s32.totalorder %v356, %v362
    %vm423 = vcmp.eq.s32.totalorder %v357, %v362
    %vm424 = vcmp.eq.s32.totalorder %v358, %v362
    %vm425 = vcmp.eq.s32.totalorder %v359, %v362
    %vm426 = vcmp.eq.s32.totalorder %v360, %v362
    %v427 = vsel %vm363, 1.0, 0.0
    %v428 = vsel %vm364, 1.0, 0.0
    %v429 = vsel %vm365, 1.0, 0.0
    %v430 = vsel %vm366, 1.0, 0.0
    %v431 = vsel %vm367, 1.0, 0.0
    %v432 = vsel %vm368, 1.0, 0.0
    %v433 = vsel %vm369, 1.0, 0.0
    %v434 = vsel %vm370, 1.0, 0.0
    %v435 = vsel %vm371, 1.0, 0.0
    %v436 = vsel %vm372, 1.0, 0.0
    %v437 = vsel %vm373, 1.0, 0.0
    %v438 = vsel %vm374, 1.0, 0.0
    %v439 = vsel %vm375, 1.0, 0.0
    %v440 = vsel %vm376, 1.0, 0.0
    %v441 = vsel %vm377, 1.0, 0.0
    %v442 = vsel %vm378, 1.0, 0.0
    %v443 = vsel %vm379, 1.0, 0.0
    %v444 = vsel %vm380, 1.0, 0.0
    %v445 = vsel %vm381, 1.0, 0.0
    %v446 = vsel %vm382, 1.0, 0.0
    %v447 = vsel %vm383, 1.0, 0.0
    %v448 = vsel %vm384, 1.0, 0.0
    %v449 = vsel %vm385, 1.0, 0.0
    %v450 = vsel %vm386, 1.0, 0.0
    %v451 = vsel %vm387, 1.0, 0.0
    %v452 = vsel %vm388, 1.0, 0.0
    %v453 = vsel %vm389, 1.0, 0.0
    %v454 = vsel %vm390, 1.0, 0.0
    %v455 = vsel %vm391, 1.0, 0.0
    %v456 = vsel %vm392, 1.0, 0.0
    %v457 = vsel %vm393, 1.0, 0.0
    %v458 = vsel %vm394, 1.0, 0.0
    %v459 = vsel %vm395, 1.0, 0.0
    %v460 = vsel %vm396, 1.0, 0.0
    %v461 = vsel %vm397, 1.0, 0.0
    %v462 = vsel %vm398, 1.0, 0.0
    %v463 = vsel %vm399, 1.0, 0.0
    %v464 = vsel %vm400, 1.0, 0.0
    %v465 = vsel %vm401, 1.0, 0.0
    %v466 = vsel %vm402, 1.0, 0.0
    %v467 = vsel %vm403, 1.0, 0.0
    %v468 = vsel %vm404, 1.0, 0.0
    %v469 = vsel %vm405, 1.0, 0.0
    %v470 = vsel %vm406, 1.0, 0.0
    %v471 = vsel %vm407, 1.0, 0.0
    %v472 = vsel %vm408, 1.0, 0.0
    %v473 = vsel %vm409, 1.0, 0.0
    %v474 = vsel %vm410, 1.0, 0.0
    %v475 = vsel %vm411, 1.0, 0.0
    %v476 = vsel %vm412, 1.0, 0.0
    %v477 = vsel %vm413, 1.0, 0.0
    %v478 = vsel %vm414, 1.0, 0.0
    %v479 = vsel %vm415, 1.0, 0.0
    %v480 = vsel %vm416, 1.0, 0.0
    %v481 = vsel %vm417, 1.0, 0.0
    %v482 = vsel %vm418, 1.0, 0.0
    %v483 = vsel %vm419, 1.0, 0.0
    %v484 = vsel %vm420, 1.0, 0.0
    %v485 = vsel %vm421, 1.0, 0.0
    %v486 = vsel %vm422, 1.0, 0.0
    %v487 = vsel %vm423, 1.0, 0.0
    %v488 = vsel %vm424, 1.0, 0.0
    %v489 = vsel %vm425, 1.0, 0.0
    %v490 = vsel %vm426, 1.0, 0.0
    %v491 = vadd.s32 %v362, 128
    %v492 = vadd.s32 %v362, 256
    %v493 = vadd.s32 %v362, 384
    %v494 = vand.u32 %v362, 31
    %v495 = vand.u32 %v491, 31
    %v496 = vand.u32 %v492, 31
    %v497 = vand.u32 %v493, 31
    %vm498 = vcmp.eq.s32.totalorder %v494, %v233
    %vm499 = vcmp.eq.s32.totalorder %v495, %v233
    %vm500 = vcmp.eq.s32.totalorder %v496, %v233
    %vm501 = vcmp.eq.s32.totalorder %v497, %v233
    %vm502 = vcmp.eq.s32.totalorder %v494, %v234
    %vm503 = vcmp.eq.s32.totalorder %v495, %v234
    %vm504 = vcmp.eq.s32.totalorder %v496, %v234
    %vm505 = vcmp.eq.s32.totalorder %v497, %v234
    %vm506 = vcmp.eq.s32.totalorder %v494, %v235
    %vm507 = vcmp.eq.s32.totalorder %v495, %v235
    %vm508 = vcmp.eq.s32.totalorder %v496, %v235
    %vm509 = vcmp.eq.s32.totalorder %v497, %v235
    %vm510 = vcmp.eq.s32.totalorder %v494, %v236
    %vm511 = vcmp.eq.s32.totalorder %v495, %v236
    %vm512 = vcmp.eq.s32.totalorder %v496, %v236
    %vm513 = vcmp.eq.s32.totalorder %v497, %v236
    %v514 = vsel %vm498, 1.0, 0.0
    %v515 = vsel %vm499, 1.0, 0.0
    %v516 = vsel %vm500, 1.0, 0.0
    %v517 = vsel %vm501, 1.0, 0.0
    %v518 = vsel %vm502, 1.0, 0.0
    %v519 = vsel %vm503, 1.0, 0.0
    %v520 = vsel %vm504, 1.0, 0.0
    %v521 = vsel %vm505, 1.0, 0.0
    %v522 = vsel %vm506, 1.0, 0.0
    %v523 = vsel %vm507, 1.0, 0.0
    %v524 = vsel %vm508, 1.0, 0.0
    %v525 = vsel %vm509, 1.0, 0.0
    %v526 = vsel %vm510, 1.0, 0.0
    %v527 = vsel %vm511, 1.0, 0.0
    %v528 = vsel %vm512, 1.0, 0.0
    %v529 = vsel %vm513, 1.0, 0.0
    %v530 = vsel %vm137, %v185, 0.0
    %v531 = vrot.slane %v530, 4
    %v532 = vadd.f32 %v530, %v531
    %v533 = vrot.slane %v532, 2
    %v534 = vadd.f32 %v532, %v533
    %v535 = vrot.slane %v534, 1
    %v536 = vadd.f32 %v534, %v535
    %v537 = vsel %vm137, %v187, 0.0
    %v538 = vrot.slane %v537, 4
    %v539 = vadd.f32 %v537, %v538
    %v540 = vrot.slane %v539, 2
    %v541 = vadd.f32 %v539, %v540
    %v542 = vrot.slane %v541, 1
    %v543 = vadd.f32 %v541, %v542
    %v544 = vsel %vm137, %v226, 0.0
    %v545 = vrot.slane %v544, 4
    %v546 = vadd.f32 %v544, %v545
    %v547 = vrot.slane %v546, 2
    %v548 = vadd.f32 %v546, %v547
    %v549 = vrot.slane %v548, 1
    %v550 = vadd.f32 %v548, %v549
    %v551 = vsel %vm137, %v228, 0.0
    %v552 = vrot.slane %v551, 4
    %v553 = vadd.f32 %v551, %v552
    %v554 = vrot.slane %v553, 2
    %v555 = vadd.f32 %v553, %v554
    %v556 = vrot.slane %v555, 1
    %v557 = vadd.f32 %v555, %v556
    %558 = vmatprep.subr.mxu0 0.0
    %559 = vmatpush1.msra.mxu0 %v442
    %560 = vmatprep.subr.mxu0 0.0
    %561 = vmatpush1.msra.mxu0 %v441
    %562 = vmatprep.subr.mxu0 0.0
    %563 = vmatpush1.msra.mxu0 %v440
    %564 = vmatprep.subr.mxu0 0.0
    %565 = vmatpush1.msra.mxu0 %v439
    %566 = vmatprep.subr.mxu0 0.0
    %567 = vmatpush1.msra.mxu0 %v438
    %568 = vmatprep.subr.mxu0 0.0
    %569 = vmatpush1.msra.mxu0 %v437
    %570 = vmatprep.subr.mxu0 0.0
    %571 = vmatpush1.msra.mxu0 %v436
    %572 = vmatprep.subr.mxu0 0.0
    %573 = vmatpush1.msra.mxu0 %v435
    %574 = vmatprep.subr.mxu0 0.0
    %575 = vmatpush1.msra.mxu0 %v434
    %576 = vmatprep.subr.mxu0 0.0
    %577 = vmatpush1.msra.mxu0 %v433
    %578 = vmatprep.subr.mxu0 0.0
    %579 = vmatpush1.msra.mxu0 %v432
    %580 = vmatprep.subr.mxu0 0.0
    %581 = vmatpush1.msra.mxu0 %v431
    %582 = vmatprep.subr.mxu0 0.0
    %583 = vmatpush1.msra.mxu0 %v430
    %584 = vmatprep.subr.mxu0 0.0
    %585 = vmatpush1.msra.mxu0 %v429
    %586 = vmatprep.subr.mxu0 0.0
    %587 = vmatpush1.msra.mxu0 %v428
    %588 = vmatprep.subr.mxu0 0.0
    %589 = vmatpush1.msra.mxu0 %v427
    %590 = vmatprep.subr.mxu0 0.0
    %591 = vmatpush2.msra.mxu0 %v458
    %592 = vmatprep.subr.mxu0 0.0
    %593 = vmatpush2.msra.mxu0 %v457
    %594 = vmatprep.subr.mxu0 0.0
    %595 = vmatpush2.msra.mxu0 %v456
    %596 = vmatprep.subr.mxu0 0.0
    %597 = vmatpush2.msra.mxu0 %v455
    %598 = vmatprep.subr.mxu0 0.0
    %599 = vmatpush2.msra.mxu0 %v454
    %600 = vmatprep.subr.mxu0 0.0
    %601 = vmatpush2.msra.mxu0 %v453
    %602 = vmatprep.subr.mxu0 0.0
    %603 = vmatpush2.msra.mxu0 %v452
    %604 = vmatprep.subr.mxu0 0.0
    %605 = vmatpush2.msra.mxu0 %v451
    %606 = vmatprep.subr.mxu0 0.0
    %607 = vmatpush2.msra.mxu0 %v450
    %608 = vmatprep.subr.mxu0 0.0
    %609 = vmatpush2.msra.mxu0 %v449
    %610 = vmatprep.subr.mxu0 0.0
    %611 = vmatpush2.msra.mxu0 %v448
    %612 = vmatprep.subr.mxu0 0.0
    %613 = vmatpush2.msra.mxu0 %v447
    %614 = vmatprep.subr.mxu0 0.0
    %615 = vmatpush2.msra.mxu0 %v446
    %616 = vmatprep.subr.mxu0 0.0
    %617 = vmatpush2.msra.mxu0 %v445
    %618 = vmatprep.subr.mxu0 0.0
    %619 = vmatpush2.msra.mxu0 %v444
    %620 = vmatprep.subr.mxu0 0.0
    %621 = vmatpush2.msra.mxu0 %v443
    %622 = vmatprep.mubr.f32.mxu0 %v543
    %623 = vmatmul.mubr.f32.gmra.mxu0 %v536
    %v624 = vpop.f32.mrf.mxu0
    %v625 = vadd.f32 0.0, %v624
    %v626 = vpop.f32.mrf.mxu0
    %627 = vdwg.mxu0
    %628 = vmatprep.subr.mxu0 0.0
    %629 = vmatpush1.msra.mxu0 %v474
    %630 = vmatprep.subr.mxu0 0.0
    %631 = vmatpush1.msra.mxu0 %v473
    %632 = vmatprep.subr.mxu0 0.0
    %633 = vmatpush1.msra.mxu0 %v472
    %634 = vmatprep.subr.mxu0 0.0
    %635 = vmatpush1.msra.mxu0 %v471
    %636 = vmatprep.subr.mxu0 0.0
    %637 = vmatpush1.msra.mxu0 %v470
    %638 = vmatprep.subr.mxu0 0.0
    %639 = vmatpush1.msra.mxu0 %v469
    %640 = vmatprep.subr.mxu0 0.0
    %641 = vmatpush1.msra.mxu0 %v468
    %642 = vmatprep.subr.mxu0 0.0
    %643 = vmatpush1.msra.mxu0 %v467
    %644 = vmatprep.subr.mxu0 0.0
    %645 = vmatpush1.msra.mxu0 %v466
    %646 = vmatprep.subr.mxu0 0.0
    %647 = vmatpush1.msra.mxu0 %v465
    %648 = vmatprep.subr.mxu0 0.0
    %649 = vmatpush1.msra.mxu0 %v464
    %650 = vmatprep.subr.mxu0 0.0
    %651 = vmatpush1.msra.mxu0 %v463
    %652 = vmatprep.subr.mxu0 0.0
    %653 = vmatpush1.msra.mxu0 %v462
    %654 = vmatprep.subr.mxu0 0.0
    %655 = vmatpush1.msra.mxu0 %v461
    %656 = vmatprep.subr.mxu0 0.0
    %657 = vmatpush1.msra.mxu0 %v460
    %658 = vmatprep.subr.mxu0 0.0
    %659 = vmatpush1.msra.mxu0 %v459
    %660 = vmatprep.subr.mxu0 0.0
    %661 = vmatpush2.msra.mxu0 %v490
    %662 = vmatprep.subr.mxu0 0.0
    %663 = vmatpush2.msra.mxu0 %v489
    %664 = vmatprep.subr.mxu0 0.0
    %665 = vmatpush2.msra.mxu0 %v488
    %666 = vmatprep.subr.mxu0 0.0
    %667 = vmatpush2.msra.mxu0 %v487
    %668 = vmatprep.subr.mxu0 0.0
    %669 = vmatpush2.msra.mxu0 %v486
    %670 = vmatprep.subr.mxu0 0.0
    %671 = vmatpush2.msra.mxu0 %v485
    %672 = vmatprep.subr.mxu0 0.0
    %673 = vmatpush2.msra.mxu0 %v484
    %674 = vmatprep.subr.mxu0 0.0
    %675 = vmatpush2.msra.mxu0 %v483
    %676 = vmatprep.subr.mxu0 0.0
    %677 = vmatpush2.msra.mxu0 %v482
    %678 = vmatprep.subr.mxu0 0.0
    %679 = vmatpush2.msra.mxu0 %v481
    %680 = vmatprep.subr.mxu0 0.0
    %681 = vmatpush2.msra.mxu0 %v480
    %682 = vmatprep.subr.mxu0 0.0
    %683 = vmatpush2.msra.mxu0 %v479
    %684 = vmatprep.subr.mxu0 0.0
    %685 = vmatpush2.msra.mxu0 %v478
    %686 = vmatprep.subr.mxu0 0.0
    %687 = vmatpush2.msra.mxu0 %v477
    %688 = vmatprep.subr.mxu0 0.0
    %689 = vmatpush2.msra.mxu0 %v476
    %690 = vmatprep.subr.mxu0 0.0
    %691 = vmatpush2.msra.mxu0 %v475
    %692 = vmatprep.mubr.f32.mxu0 %v557
    %693 = vmatmul.mubr.f32.gmra.mxu0 %v550
    %v694 = vpop.f32.mrf.mxu0
    %v695 = vadd.f32 %v625, %v694
    %v696 = vpop.f32.mrf.mxu0
    %697 = vdwg.mxu0
    %v698 = vmul.f32 %v185, %v185
    %v699 = vmul.f32 %v187, %v187
    %v700 = vmul.f32 %v226, %v226
    %v701 = vmul.f32 %v228, %v228
    %v702 = vsel %vm137, %v698, 0.0
    %v703 = vrot.slane %v702, 4
    %v704 = vadd.f32 %v702, %v703
    %v705 = vrot.slane %v704, 2
    %v706 = vadd.f32 %v704, %v705
    %v707 = vrot.slane %v706, 1
    %v708 = vadd.f32 %v706, %v707
    %v709 = vsel %vm137, %v699, 0.0
    %v710 = vrot.slane %v709, 4
    %v711 = vadd.f32 %v709, %v710
    %v712 = vrot.slane %v711, 2
    %v713 = vadd.f32 %v711, %v712
    %v714 = vrot.slane %v713, 1
    %v715 = vadd.f32 %v713, %v714
    %v716 = vsel %vm137, %v700, 0.0
    %v717 = vrot.slane %v716, 4
    %v718 = vadd.f32 %v716, %v717
    %v719 = vrot.slane %v718, 2
    %v720 = vadd.f32 %v718, %v719
    %v721 = vrot.slane %v720, 1
    %v722 = vadd.f32 %v720, %v721
    %v723 = vsel %vm137, %v701, 0.0
    %v724 = vrot.slane %v723, 4
    %v725 = vadd.f32 %v723, %v724
    %v726 = vrot.slane %v725, 2
    %v727 = vadd.f32 %v725, %v726
    %v728 = vrot.slane %v727, 1
    %v729 = vadd.f32 %v727, %v728
    %730 = vmatprep.subr.mxu0 0.0
    %731 = vmatpush1.msra.mxu0 %v442
    %732 = vmatprep.subr.mxu0 0.0
    %733 = vmatpush1.msra.mxu0 %v441
    %734 = vmatprep.subr.mxu0 0.0
    %735 = vmatpush1.msra.mxu0 %v440
    %736 = vmatprep.subr.mxu0 0.0
    %737 = vmatpush1.msra.mxu0 %v439
    %738 = vmatprep.subr.mxu0 0.0
    %739 = vmatpush1.msra.mxu0 %v438
    %740 = vmatprep.subr.mxu0 0.0
    %741 = vmatpush1.msra.mxu0 %v437
    %742 = vmatprep.subr.mxu0 0.0
    %743 = vmatpush1.msra.mxu0 %v436
    %744 = vmatprep.subr.mxu0 0.0
    %745 = vmatpush1.msra.mxu0 %v435
    %746 = vmatprep.subr.mxu0 0.0
    %747 = vmatpush1.msra.mxu0 %v434
    %748 = vmatprep.subr.mxu0 0.0
    %749 = vmatpush1.msra.mxu0 %v433
    %750 = vmatprep.subr.mxu0 0.0
    %751 = vmatpush1.msra.mxu0 %v432
    %752 = vmatprep.subr.mxu0 0.0
    %753 = vmatpush1.msra.mxu0 %v431
    %754 = vmatprep.subr.mxu0 0.0
    %755 = vmatpush1.msra.mxu0 %v430
    %756 = vmatprep.subr.mxu0 0.0
    %757 = vmatpush1.msra.mxu0 %v429
    %758 = vmatprep.subr.mxu0 0.0
    %759 = vmatpush1.msra.mxu0 %v428
    %760 = vmatprep.subr.mxu0 0.0
    %761 = vmatpush1.msra.mxu0 %v427
    %762 = vmatprep.subr.mxu0 0.0
    %763 = vmatpush2.msra.mxu0 %v458
    %764 = vmatprep.subr.mxu0 0.0
    %765 = vmatpush2.msra.mxu0 %v457
    %766 = vmatprep.subr.mxu0 0.0
    %767 = vmatpush2.msra.mxu0 %v456
    %768 = vmatprep.subr.mxu0 0.0
    %769 = vmatpush2.msra.mxu0 %v455
    %770 = vmatprep.subr.mxu0 0.0
    %771 = vmatpush2.msra.mxu0 %v454
    %772 = vmatprep.subr.mxu0 0.0
    %773 = vmatpush2.msra.mxu0 %v453
    %774 = vmatprep.subr.mxu0 0.0
    %775 = vmatpush2.msra.mxu0 %v452
    %776 = vmatprep.subr.mxu0 0.0
    %777 = vmatpush2.msra.mxu0 %v451
    %778 = vmatprep.subr.mxu0 0.0
    %779 = vmatpush2.msra.mxu0 %v450
    %780 = vmatprep.subr.mxu0 0.0
    %781 = vmatpush2.msra.mxu0 %v449
    %782 = vmatprep.subr.mxu0 0.0
    %783 = vmatpush2.msra.mxu0 %v448
    %784 = vmatprep.subr.mxu0 0.0
    %785 = vmatpush2.msra.mxu0 %v447
    %786 = vmatprep.subr.mxu0 0.0
    %787 = vmatpush2.msra.mxu0 %v446
    %788 = vmatprep.subr.mxu0 0.0
    %789 = vmatpush2.msra.mxu0 %v445
    %790 = vmatprep.subr.mxu0 0.0
    %791 = vmatpush2.msra.mxu0 %v444
    %792 = vmatprep.subr.mxu0 0.0
    %793 = vmatpush2.msra.mxu0 %v443
    %794 = vmatprep.mubr.f32.mxu0 %v715
    %795 = vmatmul.mubr.f32.gmra.mxu0 %v708
    %v796 = vpop.f32.mrf.mxu0
    %v797 = vadd.f32 0.0, %v796
    %v798 = vpop.f32.mrf.mxu0
    %799 = vdwg.mxu0
    %800 = vmatprep.subr.mxu0 0.0
    %801 = vmatpush1.msra.mxu0 %v474
    %802 = vmatprep.subr.mxu0 0.0
    %803 = vmatpush1.msra.mxu0 %v473
    %804 = vmatprep.subr.mxu0 0.0
    %805 = vmatpush1.msra.mxu0 %v472
    %806 = vmatprep.subr.mxu0 0.0
    %807 = vmatpush1.msra.mxu0 %v471
    %808 = vmatprep.subr.mxu0 0.0
    %809 = vmatpush1.msra.mxu0 %v470
    %810 = vmatprep.subr.mxu0 0.0
    %811 = vmatpush1.msra.mxu0 %v469
    %812 = vmatprep.subr.mxu0 0.0
    %813 = vmatpush1.msra.mxu0 %v468
    %814 = vmatprep.subr.mxu0 0.0
    %815 = vmatpush1.msra.mxu0 %v467
    %816 = vmatprep.subr.mxu0 0.0
    %817 = vmatpush1.msra.mxu0 %v466
    %818 = vmatprep.subr.mxu0 0.0
    %819 = vmatpush1.msra.mxu0 %v465
    %820 = vmatprep.subr.mxu0 0.0
    %821 = vmatpush1.msra.mxu0 %v464
    %822 = vmatprep.subr.mxu0 0.0
    %823 = vmatpush1.msra.mxu0 %v463
    %824 = vmatprep.subr.mxu0 0.0
    %825 = vmatpush1.msra.mxu0 %v462
    %826 = vmatprep.subr.mxu0 0.0
    %827 = vmatpush1.msra.mxu0 %v461
    %828 = vmatprep.subr.mxu0 0.0
    %829 = vmatpush1.msra.mxu0 %v460
    %830 = vmatprep.subr.mxu0 0.0
    %831 = vmatpush1.msra.mxu0 %v459
    %832 = vmatprep.subr.mxu0 0.0
    %833 = vmatpush2.msra.mxu0 %v490
    %834 = vmatprep.subr.mxu0 0.0
    %835 = vmatpush2.msra.mxu0 %v489
    %836 = vmatprep.subr.mxu0 0.0
    %837 = vmatpush2.msra.mxu0 %v488
    %838 = vmatprep.subr.mxu0 0.0
    %839 = vmatpush2.msra.mxu0 %v487
    %840 = vmatprep.subr.mxu0 0.0
    %841 = vmatpush2.msra.mxu0 %v486
    %842 = vmatprep.subr.mxu0 0.0
    %843 = vmatpush2.msra.mxu0 %v485
    %844 = vmatprep.subr.mxu0 0.0
    %845 = vmatpush2.msra.mxu0 %v484
    %846 = vmatprep.subr.mxu0 0.0
    %847 = vmatpush2.msra.mxu0 %v483
    %848 = vmatprep.subr.mxu0 0.0
    %849 = vmatpush2.msra.mxu0 %v482
    %850 = vmatprep.subr.mxu0 0.0
    %851 = vmatpush2.msra.mxu0 %v481
    %852 = vmatprep.subr.mxu0 0.0
    %853 = vmatpush2.msra.mxu0 %v480
    %854 = vmatprep.subr.mxu0 0.0
    %855 = vmatpush2.msra.mxu0 %v479
    %856 = vmatprep.subr.mxu0 0.0
    %857 = vmatpush2.msra.mxu0 %v478
    %858 = vmatprep.subr.mxu0 0.0
    %859 = vmatpush2.msra.mxu0 %v477
    %860 = vmatprep.subr.mxu0 0.0
    %861 = vmatpush2.msra.mxu0 %v476
    %862 = vmatprep.subr.mxu0 0.0
    %863 = vmatpush2.msra.mxu0 %v475
    %864 = vmatprep.mubr.f32.mxu0 %v729
    %865 = vmatmul.mubr.f32.gmra.mxu0 %v722
    %v866 = vpop.f32.mrf.mxu0
    %v867 = vadd.f32 %v797, %v866
    %v868 = vpop.f32.mrf.mxu0
    %869 = vdwg.mxu0
    %v870 = vmul.f32 %v695, 0.03125
    %v871 = vmul.f32 %v867, 0.03125
    %v872 = vmul.f32 %v870, %v870
    %v873 = vsub.f32 %v871, %v872
    %v874 = vmax.f32 %v873, 0.0
    %v875 = vadd.f32 %v874, 1e-05
    %v876 = vrsqrt.pop %v875
    %vm877 = vcmask 261120
    %v879 = vsel %vm877, %v876, 0
    %881 = vmatprep.subr.mxu0 0.0
    %882 = vmatpush1.msra.mxu0 0.0
    %883 = vmatprep.subr.mxu0 0.0
    %884 = vmatpush1.msra.mxu0 0.0
    %885 = vmatprep.subr.mxu0 0.0
    %886 = vmatpush1.msra.mxu0 0.0
    %887 = vmatprep.subr.mxu0 0.0
    %888 = vmatpush1.msra.mxu0 0.0
    %889 = vmatprep.subr.mxu0 0.0
    %890 = vmatpush1.msra.mxu0 0.0
    %891 = vmatprep.subr.mxu0 0.0
    %892 = vmatpush1.msra.mxu0 0.0
    %893 = vmatprep.subr.mxu0 0.0
    %894 = vmatpush1.msra.mxu0 0.0
    %895 = vmatprep.subr.mxu0 0.0
    %896 = vmatpush1.msra.mxu0 0.0
    %897 = vmatprep.subr.mxu0 0.0
    %898 = vmatpush1.msra.mxu0 0.0
    %899 = vmatprep.subr.mxu0 0.0
    %900 = vmatpush1.msra.mxu0 0.0
    %901 = vmatprep.subr.mxu0 0.0
    %902 = vmatpush1.msra.mxu0 0.0
    %903 = vmatprep.subr.mxu0 0.0
    %904 = vmatpush1.msra.mxu0 0.0
    %905 = vmatprep.subr.mxu0 %v527
    %906 = vmatpush1.msra.mxu0 %v526
    %907 = vmatprep.subr.mxu0 %v523
    %908 = vmatpush1.msra.mxu0 %v522
    %909 = vmatprep.subr.mxu0 %v519
    %910 = vmatpush1.msra.mxu0 %v518
    %911 = vmatprep.subr.mxu0 %v515
    %912 = vmatpush1.msra.mxu0 %v514
    %913 = vmatprep.subr.mxu0 0.0
    %914 = vmatpush2.msra.mxu0 0.0
    %915 = vmatprep.subr.mxu0 0.0
    %916 = vmatpush2.msra.mxu0 0.0
    %917 = vmatprep.subr.mxu0 0.0
    %918 = vmatpush2.msra.mxu0 0.0
    %919 = vmatprep.subr.mxu0 0.0
    %920 = vmatpush2.msra.mxu0 0.0
    %921 = vmatprep.subr.mxu0 0.0
    %922 = vmatpush2.msra.mxu0 0.0
    %923 = vmatprep.subr.mxu0 0.0
    %924 = vmatpush2.msra.mxu0 0.0
    %925 = vmatprep.subr.mxu0 0.0
    %926 = vmatpush2.msra.mxu0 0.0
    %927 = vmatprep.subr.mxu0 0.0
    %928 = vmatpush2.msra.mxu0 0.0
    %929 = vmatprep.subr.mxu0 0.0
    %930 = vmatpush2.msra.mxu0 0.0
    %931 = vmatprep.subr.mxu0 0.0
    %932 = vmatpush2.msra.mxu0 0.0
    %933 = vmatprep.subr.mxu0 0.0
    %934 = vmatpush2.msra.mxu0 0.0
    %935 = vmatprep.subr.mxu0 0.0
    %936 = vmatpush2.msra.mxu0 0.0
    %937 = vmatprep.subr.mxu0 0.0
    %938 = vmatpush2.msra.mxu0 0.0
    %939 = vmatprep.subr.mxu0 0.0
    %940 = vmatpush2.msra.mxu0 0.0
    %941 = vmatprep.subr.mxu0 0.0
    %942 = vmatpush2.msra.mxu0 0.0
    %943 = vmatprep.subr.mxu0 0.0
    %944 = vmatpush2.msra.mxu0 0.0
    %945 = vmatprep.mubr.f32.mxu0 0.0
    %946 = vmatmul.mubr.f32.gmra.mxu0 %v879
    %v947 = vpop.f32.mrf.mxu0
    %v948 = vadd.f32 0.0, %v947
    %v949 = vpop.f32.mrf.mxu0
    %v950 = vadd.f32 0.0, %v949
    %951 = vdwg.mxu0
    %952 = vmatprep.subr.mxu0 0.0
    %953 = vmatpush1.msra.mxu0 0.0
    %954 = vmatprep.subr.mxu0 0.0
    %955 = vmatpush1.msra.mxu0 0.0
    %956 = vmatprep.subr.mxu0 0.0
    %957 = vmatpush1.msra.mxu0 0.0
    %958 = vmatprep.subr.mxu0 0.0
    %959 = vmatpush1.msra.mxu0 0.0
    %960 = vmatprep.subr.mxu0 0.0
    %961 = vmatpush1.msra.mxu0 0.0
    %962 = vmatprep.subr.mxu0 0.0
    %963 = vmatpush1.msra.mxu0 0.0
    %964 = vmatprep.subr.mxu0 0.0
    %965 = vmatpush1.msra.mxu0 0.0
    %966 = vmatprep.subr.mxu0 0.0
    %967 = vmatpush1.msra.mxu0 0.0
    %968 = vmatprep.subr.mxu0 0.0
    %969 = vmatpush1.msra.mxu0 0.0
    %970 = vmatprep.subr.mxu0 0.0
    %971 = vmatpush1.msra.mxu0 0.0
    %972 = vmatprep.subr.mxu0 0.0
    %973 = vmatpush1.msra.mxu0 0.0
    %974 = vmatprep.subr.mxu0 0.0
    %975 = vmatpush1.msra.mxu0 0.0
    %976 = vmatprep.subr.mxu0 %v529
    %977 = vmatpush1.msra.mxu0 %v528
    %978 = vmatprep.subr.mxu0 %v525
    %979 = vmatpush1.msra.mxu0 %v524
    %980 = vmatprep.subr.mxu0 %v521
    %981 = vmatpush1.msra.mxu0 %v520
    %982 = vmatprep.subr.mxu0 %v517
    %983 = vmatpush1.msra.mxu0 %v516
    %984 = vmatprep.subr.mxu0 0.0
    %985 = vmatpush2.msra.mxu0 0.0
    %986 = vmatprep.subr.mxu0 0.0
    %987 = vmatpush2.msra.mxu0 0.0
    %988 = vmatprep.subr.mxu0 0.0
    %989 = vmatpush2.msra.mxu0 0.0
    %990 = vmatprep.subr.mxu0 0.0
    %991 = vmatpush2.msra.mxu0 0.0
    %992 = vmatprep.subr.mxu0 0.0
    %993 = vmatpush2.msra.mxu0 0.0
    %994 = vmatprep.subr.mxu0 0.0
    %995 = vmatpush2.msra.mxu0 0.0
    %996 = vmatprep.subr.mxu0 0.0
    %997 = vmatpush2.msra.mxu0 0.0
    %998 = vmatprep.subr.mxu0 0.0
    %999 = vmatpush2.msra.mxu0 0.0
    %1000 = vmatprep.subr.mxu0 0.0
    %1001 = vmatpush2.msra.mxu0 0.0
    %1002 = vmatprep.subr.mxu0 0.0
    %1003 = vmatpush2.msra.mxu0 0.0
    %1004 = vmatprep.subr.mxu0 0.0
    %1005 = vmatpush2.msra.mxu0 0.0
    %1006 = vmatprep.subr.mxu0 0.0
    %1007 = vmatpush2.msra.mxu0 0.0
    %1008 = vmatprep.subr.mxu0 0.0
    %1009 = vmatpush2.msra.mxu0 0.0
    %1010 = vmatprep.subr.mxu0 0.0
    %1011 = vmatpush2.msra.mxu0 0.0
    %1012 = vmatprep.subr.mxu0 0.0
    %1013 = vmatpush2.msra.mxu0 0.0
    %1014 = vmatprep.subr.mxu0 0.0
    %1015 = vmatpush2.msra.mxu0 0.0
    %1016 = vmatprep.mubr.f32.mxu0 0.0
    %1017 = vmatmul.mubr.f32.gmra.mxu0 %v879
    %v1018 = vpop.f32.mrf.mxu0
    %v1019 = vadd.f32 0.0, %v1018
    %v1020 = vpop.f32.mrf.mxu0
    %v1021 = vadd.f32 0.0, %v1020
    %1022 = vdwg.mxu0
    %v1023 = vmul.f32 %v870, %v876
    %v1025 = vsel %vm877, %v1023, 0
    %1027 = vmatprep.subr.mxu0 0.0
    %1028 = vmatpush1.msra.mxu0 0.0
    %1029 = vmatprep.subr.mxu0 0.0
    %1030 = vmatpush1.msra.mxu0 0.0
    %1031 = vmatprep.subr.mxu0 0.0
    %1032 = vmatpush1.msra.mxu0 0.0
    %1033 = vmatprep.subr.mxu0 0.0
    %1034 = vmatpush1.msra.mxu0 0.0
    %1035 = vmatprep.subr.mxu0 0.0
    %1036 = vmatpush1.msra.mxu0 0.0
    %1037 = vmatprep.subr.mxu0 0.0
    %1038 = vmatpush1.msra.mxu0 0.0
    %1039 = vmatprep.subr.mxu0 0.0
    %1040 = vmatpush1.msra.mxu0 0.0
    %1041 = vmatprep.subr.mxu0 0.0
    %1042 = vmatpush1.msra.mxu0 0.0
    %1043 = vmatprep.subr.mxu0 0.0
    %1044 = vmatpush1.msra.mxu0 0.0
    %1045 = vmatprep.subr.mxu0 0.0
    %1046 = vmatpush1.msra.mxu0 0.0
    %1047 = vmatprep.subr.mxu0 0.0
    %1048 = vmatpush1.msra.mxu0 0.0
    %1049 = vmatprep.subr.mxu0 0.0
    %1050 = vmatpush1.msra.mxu0 0.0
    %1051 = vmatprep.subr.mxu0 %v527
    %1052 = vmatpush1.msra.mxu0 %v526
    %1053 = vmatprep.subr.mxu0 %v523
    %1054 = vmatpush1.msra.mxu0 %v522
    %1055 = vmatprep.subr.mxu0 %v519
    %1056 = vmatpush1.msra.mxu0 %v518
    %1057 = vmatprep.subr.mxu0 %v515
    %1058 = vmatpush1.msra.mxu0 %v514
    %1059 = vmatprep.subr.mxu0 0.0
    %1060 = vmatpush2.msra.mxu0 0.0
    %1061 = vmatprep.subr.mxu0 0.0
    %1062 = vmatpush2.msra.mxu0 0.0
    %1063 = vmatprep.subr.mxu0 0.0
    %1064 = vmatpush2.msra.mxu0 0.0
    %1065 = vmatprep.subr.mxu0 0.0
    %1066 = vmatpush2.msra.mxu0 0.0
    %1067 = vmatprep.subr.mxu0 0.0
    %1068 = vmatpush2.msra.mxu0 0.0
    %1069 = vmatprep.subr.mxu0 0.0
    %1070 = vmatpush2.msra.mxu0 0.0
    %1071 = vmatprep.subr.mxu0 0.0
    %1072 = vmatpush2.msra.mxu0 0.0
    %1073 = vmatprep.subr.mxu0 0.0
    %1074 = vmatpush2.msra.mxu0 0.0
    %1075 = vmatprep.subr.mxu0 0.0
    %1076 = vmatpush2.msra.mxu0 0.0
    %1077 = vmatprep.subr.mxu0 0.0
    %1078 = vmatpush2.msra.mxu0 0.0
    %1079 = vmatprep.subr.mxu0 0.0
    %1080 = vmatpush2.msra.mxu0 0.0
    %1081 = vmatprep.subr.mxu0 0.0
    %1082 = vmatpush2.msra.mxu0 0.0
    %1083 = vmatprep.subr.mxu0 0.0
    %1084 = vmatpush2.msra.mxu0 0.0
    %1085 = vmatprep.subr.mxu0 0.0
    %1086 = vmatpush2.msra.mxu0 0.0
    %1087 = vmatprep.subr.mxu0 0.0
    %1088 = vmatpush2.msra.mxu0 0.0
    %1089 = vmatprep.subr.mxu0 0.0
    %1090 = vmatpush2.msra.mxu0 0.0
    %1091 = vmatprep.mubr.f32.mxu0 0.0
    %1092 = vmatmul.mubr.f32.gmra.mxu0 %v1025
    %v1093 = vpop.f32.mrf.mxu0
    %v1094 = vadd.f32 0.0, %v1093
    %v1095 = vpop.f32.mrf.mxu0
    %v1096 = vadd.f32 0.0, %v1095
    %1097 = vdwg.mxu0
    %1098 = vmatprep.subr.mxu0 0.0
    %1099 = vmatpush1.msra.mxu0 0.0
    %1100 = vmatprep.subr.mxu0 0.0
    %1101 = vmatpush1.msra.mxu0 0.0
    %1102 = vmatprep.subr.mxu0 0.0
    %1103 = vmatpush1.msra.mxu0 0.0
    %1104 = vmatprep.subr.mxu0 0.0
    %1105 = vmatpush1.msra.mxu0 0.0
    %1106 = vmatprep.subr.mxu0 0.0
    %1107 = vmatpush1.msra.mxu0 0.0
    %1108 = vmatprep.subr.mxu0 0.0
    %1109 = vmatpush1.msra.mxu0 0.0
    %1110 = vmatprep.subr.mxu0 0.0
    %1111 = vmatpush1.msra.mxu0 0.0
    %1112 = vmatprep.subr.mxu0 0.0
    %1113 = vmatpush1.msra.mxu0 0.0
    %1114 = vmatprep.subr.mxu0 0.0
    %1115 = vmatpush1.msra.mxu0 0.0
    %1116 = vmatprep.subr.mxu0 0.0
    %1117 = vmatpush1.msra.mxu0 0.0
    %1118 = vmatprep.subr.mxu0 0.0
    %1119 = vmatpush1.msra.mxu0 0.0
    %1120 = vmatprep.subr.mxu0 0.0
    %1121 = vmatpush1.msra.mxu0 0.0
    %1122 = vmatprep.subr.mxu0 %v529
    %1123 = vmatpush1.msra.mxu0 %v528
    %1124 = vmatprep.subr.mxu0 %v525
    %1125 = vmatpush1.msra.mxu0 %v524
    %1126 = vmatprep.subr.mxu0 %v521
    %1127 = vmatpush1.msra.mxu0 %v520
    %1128 = vmatprep.subr.mxu0 %v517
    %1129 = vmatpush1.msra.mxu0 %v516
    %1130 = vmatprep.subr.mxu0 0.0
    %1131 = vmatpush2.msra.mxu0 0.0
    %1132 = vmatprep.subr.mxu0 0.0
    %1133 = vmatpush2.msra.mxu0 0.0
    %1134 = vmatprep.subr.mxu0 0.0
    %1135 = vmatpush2.msra.mxu0 0.0
    %1136 = vmatprep.subr.mxu0 0.0
    %1137 = vmatpush2.msra.mxu0 0.0
    %1138 = vmatprep.subr.mxu0 0.0
    %1139 = vmatpush2.msra.mxu0 0.0
    %1140 = vmatprep.subr.mxu0 0.0
    %1141 = vmatpush2.msra.mxu0 0.0
    %1142 = vmatprep.subr.mxu0 0.0
    %1143 = vmatpush2.msra.mxu0 0.0
    %1144 = vmatprep.subr.mxu0 0.0
    %1145 = vmatpush2.msra.mxu0 0.0
    %1146 = vmatprep.subr.mxu0 0.0
    %1147 = vmatpush2.msra.mxu0 0.0
    %1148 = vmatprep.subr.mxu0 0.0
    %1149 = vmatpush2.msra.mxu0 0.0
    %1150 = vmatprep.subr.mxu0 0.0
    %1151 = vmatpush2.msra.mxu0 0.0
    %1152 = vmatprep.subr.mxu0 0.0
    %1153 = vmatpush2.msra.mxu0 0.0
    %1154 = vmatprep.subr.mxu0 0.0
    %1155 = vmatpush2.msra.mxu0 0.0
    %1156 = vmatprep.subr.mxu0 0.0
    %1157 = vmatpush2.msra.mxu0 0.0
    %1158 = vmatprep.subr.mxu0 0.0
    %1159 = vmatpush2.msra.mxu0 0.0
    %1160 = vmatprep.subr.mxu0 0.0
    %1161 = vmatpush2.msra.mxu0 0.0
    %1162 = vmatprep.mubr.f32.mxu0 0.0
    %1163 = vmatmul.mubr.f32.gmra.mxu0 %v1025
    %v1164 = vpop.f32.mrf.mxu0
    %v1165 = vadd.f32 0.0, %v1164
    %v1166 = vpop.f32.mrf.mxu0
    %v1167 = vadd.f32 0.0, %v1166
    %1168 = vdwg.mxu0
    %v1169 = vlaneseq
    %v1170 = vshrl.u32 %v1169, 7
    %v1171 = vsub.s32 0, %v1170
    %v1172 = vrot.slane %v948, %v1171
    %v1173 = vlaneseq
    %v1174 = vshrl.u32 %v1173, 7
    %v1175 = vsub.s32 0, %v1174
    %v1176 = vrot.slane %v950, %v1175
    %v1177 = vlaneseq
    %v1178 = vshrl.u32 %v1177, 7
    %v1179 = vsub.s32 0, %v1178
    %v1180 = vrot.slane %v1019, %v1179
    %v1181 = vlaneseq
    %v1182 = vshrl.u32 %v1181, 7
    %v1183 = vsub.s32 0, %v1182
    %v1184 = vrot.slane %v1021, %v1183
    %v1185 = vmul.f32 %v185, %v1172
    %v1186 = vmul.f32 %v187, %v1176
    %v1187 = vmul.f32 %v226, %v1180
    %v1188 = vmul.f32 %v228, %v1184
    %v1189 = vlaneseq
    %v1190 = vshrl.u32 %v1189, 7
    %v1191 = vsub.s32 0, %v1190
    %v1192 = vrot.slane %v1094, %v1191
    %v1193 = vlaneseq
    %v1194 = vshrl.u32 %v1193, 7
    %v1195 = vsub.s32 0, %v1194
    %v1196 = vrot.slane %v1096, %v1195
    %v1197 = vlaneseq
    %v1198 = vshrl.u32 %v1197, 7
    %v1199 = vsub.s32 0, %v1198
    %v1200 = vrot.slane %v1165, %v1199
    %v1201 = vlaneseq
    %v1202 = vshrl.u32 %v1201, 7
    %v1203 = vsub.s32 0, %v1202
    %v1204 = vrot.slane %v1167, %v1203
    %v1205 = vsub.f32 %v1185, %v1192
    %v1206 = vsub.f32 %v1186, %v1196
    %v1207 = vsub.f32 %v1187, %v1200
    %v1208 = vsub.f32 %v1188, %v1204
    %v1209 = vmax.f32 %v1205, 0.0
    %v1210 = vmax.f32 %v1206, 0.0
    %v1211 = vmax.f32 %v1207, 0.0
    %v1212 = vmax.f32 %v1208, 0.0
    %v1213 = vpack.c.bf16 %v1209, %v1209
    %v1214 = vpack.c.bf16 %v1210, %v1210
    %v1215 = vpack.c.bf16 %v1211, %v1211
    %v1216 = vpack.c.bf16 %v1212, %v1212
    %v1217 = vld [vmem:[#allocation6] sm:$0xff]
    %v1218 = vld [vmem:[#allocation6 + $0x8] sm:$0xff]
    %v1219 = vld [vmem:[#allocation6 + $0x10] sm:$0xff]
    %v1220 = vld [vmem:[#allocation6 + $0x18] sm:$0xff]
    %v1221 = vld [vmem:[#allocation6 + $0x20] sm:$0xff]
    %v1222 = vld [vmem:[#allocation6 + $0x28] sm:$0xff]
    %v1223 = vld [vmem:[#allocation6 + $0x30] sm:$0xff]
    %v1224 = vld [vmem:[#allocation6 + $0x38] sm:$0xff]
    %v1225 = vld [vmem:[#allocation6 + $0x40] sm:$0xff]
    %v1226 = vld [vmem:[#allocation6 + $0x48] sm:$0xff]
    %v1227 = vld [vmem:[#allocation6 + $0x50] sm:$0xff]
    %v1228 = vld [vmem:[#allocation6 + $0x58] sm:$0xff]
    %v1229 = vld [vmem:[#allocation6 + $0x60] sm:$0xff]
    %v1230 = vld [vmem:[#allocation6 + $0x68] sm:$0xff]
    %v1231 = vld [vmem:[#allocation6 + $0x70] sm:$0xff]
    %v1232 = vld [vmem:[#allocation6 + $0x78] sm:$0xff]
    %v1233 = vld [vmem:[#allocation6 + $0x80] sm:$0xff]
    %v1234 = vld [vmem:[#allocation6 + $0x88] sm:$0xff]
    %v1235 = vld [vmem:[#allocation6 + $0x90] sm:$0xff]
    %v1236 = vld [vmem:[#allocation6 + $0x98] sm:$0xff]
    %v1237 = vld [vmem:[#allocation6 + $0xa0] sm:$0xff]
    %v1238 = vld [vmem:[#allocation6 + $0xa8] sm:$0xff]
    %v1239 = vld [vmem:[#allocation6 + $0xb0] sm:$0xff]
    %v1240 = vld [vmem:[#allocation6 + $0xb8] sm:$0xff]
    %v1241 = vld [vmem:[#allocation6 + $0xc0] sm:$0xff]
    %v1242 = vld [vmem:[#allocation6 + $0xc8] sm:$0xff]
    %v1243 = vld [vmem:[#allocation6 + $0xd0] sm:$0xff]
    %v1244 = vld [vmem:[#allocation6 + $0xd8] sm:$0xff]
    %v1245 = vld [vmem:[#allocation6 + $0xe0] sm:$0xff]
    %v1246 = vld [vmem:[#allocation6 + $0xe8] sm:$0xff]
    %v1247 = vld [vmem:[#allocation6 + $0xf0] sm:$0xff]
    %v1248 = vld [vmem:[#allocation6 + $0xf8] sm:$0xff]
    %v1249 = vld [vmem:[#allocation6 + $0x100] sm:$0xff]
    %v1250 = vld [vmem:[#allocation6 + $0x108] sm:$0xff]
    %v1251 = vld [vmem:[#allocation6 + $0x110] sm:$0xff]
    %v1252 = vld [vmem:[#allocation6 + $0x118] sm:$0xff]
    %v1253 = vld [vmem:[#allocation6 + $0x120] sm:$0xff]
    %v1254 = vld [vmem:[#allocation6 + $0x128] sm:$0xff]
    %v1255 = vld [vmem:[#allocation6 + $0x130] sm:$0xff]
    %v1256 = vld [vmem:[#allocation6 + $0x138] sm:$0xff]
    %v1257 = vld [vmem:[#allocation6 + $0x140] sm:$0xff]
    %v1258 = vld [vmem:[#allocation6 + $0x148] sm:$0xff]
    %v1259 = vld [vmem:[#allocation6 + $0x150] sm:$0xff]
    %v1260 = vld [vmem:[#allocation6 + $0x158] sm:$0xff]
    %v1261 = vld [vmem:[#allocation6 + $0x160] sm:$0xff]
    %v1262 = vld [vmem:[#allocation6 + $0x168] sm:$0xff]
    %v1263 = vld [vmem:[#allocation6 + $0x170] sm:$0xff]
    %v1264 = vld [vmem:[#allocation6 + $0x178] sm:$0xff]
    %v1265 = vld [vmem:[#allocation6 + $0x180] sm:$0xff]
    %v1266 = vld [vmem:[#allocation6 + $0x188] sm:$0xff]
    %v1267 = vld [vmem:[#allocation6 + $0x190] sm:$0xff]
    %v1268 = vld [vmem:[#allocation6 + $0x198] sm:$0xff]
    %v1269 = vld [vmem:[#allocation6 + $0x1a0] sm:$0xff]
    %v1270 = vld [vmem:[#allocation6 + $0x1a8] sm:$0xff]
    %v1271 = vld [vmem:[#allocation6 + $0x1b0] sm:$0xff]
    %v1272 = vld [vmem:[#allocation6 + $0x1b8] sm:$0xff]
    %v1273 = vld [vmem:[#allocation6 + $0x1c0] sm:$0xff]
    %v1274 = vld [vmem:[#allocation6 + $0x1c8] sm:$0xff]
    %v1275 = vld [vmem:[#allocation6 + $0x1d0] sm:$0xff]
    %v1276 = vld [vmem:[#allocation6 + $0x1d8] sm:$0xff]
    %v1277 = vld [vmem:[#allocation6 + $0x1e0] sm:$0xff]
    %v1278 = vld [vmem:[#allocation6 + $0x1e8] sm:$0xff]
    %v1279 = vld [vmem:[#allocation6 + $0x1f0] sm:$0xff]
    %v1280 = vld [vmem:[#allocation6 + $0x1f8] sm:$0xff]
    %v1281 = vld [vmem:[#allocation6 + $0x200] sm:$0xff]
    %v1282 = vld [vmem:[#allocation6 + $0x208] sm:$0xff]
    %v1283 = vld [vmem:[#allocation6 + $0x210] sm:$0xff]
    %v1284 = vld [vmem:[#allocation6 + $0x218] sm:$0xff]
    %v1285 = vld [vmem:[#allocation6 + $0x220] sm:$0xff]
    %v1286 = vld [vmem:[#allocation6 + $0x228] sm:$0xff]
    %v1287 = vld [vmem:[#allocation6 + $0x230] sm:$0xff]
    %v1288 = vld [vmem:[#allocation6 + $0x238] sm:$0xff]
    %v1289 = vld [vmem:[#allocation6 + $0x240] sm:$0xff]
    %v1290 = vld [vmem:[#allocation6 + $0x248] sm:$0xff]
    %v1291 = vld [vmem:[#allocation6 + $0x250] sm:$0xff]
    %v1292 = vld [vmem:[#allocation6 + $0x258] sm:$0xff]
    %v1293 = vld [vmem:[#allocation6 + $0x260] sm:$0xff]
    %v1294 = vld [vmem:[#allocation6 + $0x268] sm:$0xff]
    %v1295 = vld [vmem:[#allocation6 + $0x270] sm:$0xff]
    %v1296 = vld [vmem:[#allocation6 + $0x278] sm:$0xff]
    %v1297 = vld [vmem:[#allocation6 + $0x280] sm:$0xff]
    %v1298 = vld [vmem:[#allocation6 + $0x288] sm:$0xff]
    %v1299 = vld [vmem:[#allocation6 + $0x290] sm:$0xff]
    %v1300 = vld [vmem:[#allocation6 + $0x298] sm:$0xff]
    %v1301 = vld [vmem:[#allocation6 + $0x2a0] sm:$0xff]
    %v1302 = vld [vmem:[#allocation6 + $0x2a8] sm:$0xff]
    %v1303 = vld [vmem:[#allocation6 + $0x2b0] sm:$0xff]
    %v1304 = vld [vmem:[#allocation6 + $0x2b8] sm:$0xff]
    %v1305 = vld [vmem:[#allocation6 + $0x2c0] sm:$0xff]
    %v1306 = vld [vmem:[#allocation6 + $0x2c8] sm:$0xff]
    %v1307 = vld [vmem:[#allocation6 + $0x2d0] sm:$0xff]
    %v1308 = vld [vmem:[#allocation6 + $0x2d8] sm:$0xff]
    %v1309 = vld [vmem:[#allocation6 + $0x2e0] sm:$0xff]
    %v1310 = vld [vmem:[#allocation6 + $0x2e8] sm:$0xff]
    %v1311 = vld [vmem:[#allocation6 + $0x2f0] sm:$0xff]
    %v1312 = vld [vmem:[#allocation6 + $0x2f8] sm:$0xff]
    %v1313 = vld [vmem:[#allocation6 + $0x300] sm:$0xff]
    %v1314 = vld [vmem:[#allocation6 + $0x308] sm:$0xff]
    %v1315 = vld [vmem:[#allocation6 + $0x310] sm:$0xff]
    %v1316 = vld [vmem:[#allocation6 + $0x318] sm:$0xff]
    %v1317 = vld [vmem:[#allocation6 + $0x320] sm:$0xff]
    %v1318 = vld [vmem:[#allocation6 + $0x328] sm:$0xff]
    %v1319 = vld [vmem:[#allocation6 + $0x330] sm:$0xff]
    %v1320 = vld [vmem:[#allocation6 + $0x338] sm:$0xff]
    %v1321 = vld [vmem:[#allocation6 + $0x340] sm:$0xff]
    %v1322 = vld [vmem:[#allocation6 + $0x348] sm:$0xff]
    %v1323 = vld [vmem:[#allocation6 + $0x350] sm:$0xff]
    %v1324 = vld [vmem:[#allocation6 + $0x358] sm:$0xff]
    %v1325 = vld [vmem:[#allocation6 + $0x360] sm:$0xff]
    %v1326 = vld [vmem:[#allocation6 + $0x368] sm:$0xff]
    %v1327 = vld [vmem:[#allocation6 + $0x370] sm:$0xff]
    %v1328 = vld [vmem:[#allocation6 + $0x378] sm:$0xff]
    %v1329 = vld [vmem:[#allocation6 + $0x380] sm:$0xff]
    %v1330 = vld [vmem:[#allocation6 + $0x388] sm:$0xff]
    %v1331 = vld [vmem:[#allocation6 + $0x390] sm:$0xff]
    %v1332 = vld [vmem:[#allocation6 + $0x398] sm:$0xff]
    %v1333 = vld [vmem:[#allocation6 + $0x3a0] sm:$0xff]
    %v1334 = vld [vmem:[#allocation6 + $0x3a8] sm:$0xff]
    %v1335 = vld [vmem:[#allocation6 + $0x3b0] sm:$0xff]
    %v1336 = vld [vmem:[#allocation6 + $0x3b8] sm:$0xff]
    %v1337 = vld [vmem:[#allocation6 + $0x3c0] sm:$0xff]
    %v1338 = vld [vmem:[#allocation6 + $0x3c8] sm:$0xff]
    %v1339 = vld [vmem:[#allocation6 + $0x3d0] sm:$0xff]
    %v1340 = vld [vmem:[#allocation6 + $0x3d8] sm:$0xff]
    %v1341 = vld [vmem:[#allocation6 + $0x3e0] sm:$0xff]
    %v1342 = vld [vmem:[#allocation6 + $0x3e8] sm:$0xff]
    %v1343 = vld [vmem:[#allocation6 + $0x3f0] sm:$0xff]
    %v1344 = vld [vmem:[#allocation6 + $0x3f8] sm:$0xff]
    %v1345 = vld [vmem:[#allocation6 + $0x400] sm:$0xff]
    %v1346 = vld [vmem:[#allocation6 + $0x408] sm:$0xff]
    %v1347 = vld [vmem:[#allocation6 + $0x410] sm:$0xff]
    %v1348 = vld [vmem:[#allocation6 + $0x418] sm:$0xff]
    %v1349 = vld [vmem:[#allocation6 + $0x420] sm:$0xff]
    %v1350 = vld [vmem:[#allocation6 + $0x428] sm:$0xff]
    %v1351 = vld [vmem:[#allocation6 + $0x430] sm:$0xff]
    %v1352 = vld [vmem:[#allocation6 + $0x438] sm:$0xff]
    %v1353 = vld [vmem:[#allocation6 + $0x440] sm:$0xff]
    %v1354 = vld [vmem:[#allocation6 + $0x448] sm:$0xff]
    %v1355 = vld [vmem:[#allocation6 + $0x450] sm:$0xff]
    %v1356 = vld [vmem:[#allocation6 + $0x458] sm:$0xff]
    %v1357 = vld [vmem:[#allocation6 + $0x460] sm:$0xff]
    %v1358 = vld [vmem:[#allocation6 + $0x468] sm:$0xff]
    %v1359 = vld [vmem:[#allocation6 + $0x470] sm:$0xff]
    %v1360 = vld [vmem:[#allocation6 + $0x478] sm:$0xff]
    %v1361 = vld [vmem:[#allocation6 + $0x480] sm:$0xff]
    %v1362 = vld [vmem:[#allocation6 + $0x488] sm:$0xff]
    %v1363 = vld [vmem:[#allocation6 + $0x490] sm:$0xff]
    %v1364 = vld [vmem:[#allocation6 + $0x498] sm:$0xff]
    %v1365 = vld [vmem:[#allocation6 + $0x4a0] sm:$0xff]
    %v1366 = vld [vmem:[#allocation6 + $0x4a8] sm:$0xff]
    %v1367 = vld [vmem:[#allocation6 + $0x4b0] sm:$0xff]
    %v1368 = vld [vmem:[#allocation6 + $0x4b8] sm:$0xff]
    %v1369 = vld [vmem:[#allocation6 + $0x4c0] sm:$0xff]
    %v1370 = vld [vmem:[#allocation6 + $0x4c8] sm:$0xff]
    %v1371 = vld [vmem:[#allocation6 + $0x4d0] sm:$0xff]
    %v1372 = vld [vmem:[#allocation6 + $0x4d8] sm:$0xff]
    %v1373 = vld [vmem:[#allocation6 + $0x4e0] sm:$0xff]
    %v1374 = vld [vmem:[#allocation6 + $0x4e8] sm:$0xff]
    %v1375 = vld [vmem:[#allocation6 + $0x4f0] sm:$0xff]
    %v1376 = vld [vmem:[#allocation6 + $0x4f8] sm:$0xff]
    %v1377 = vld [vmem:[#allocation6 + $0x500] sm:$0xff]
    %v1378 = vld [vmem:[#allocation6 + $0x508] sm:$0xff]
    %v1379 = vld [vmem:[#allocation6 + $0x510] sm:$0xff]
    %v1380 = vld [vmem:[#allocation6 + $0x518] sm:$0xff]
    %v1381 = vld [vmem:[#allocation6 + $0x520] sm:$0xff]
    %v1382 = vld [vmem:[#allocation6 + $0x528] sm:$0xff]
    %v1383 = vld [vmem:[#allocation6 + $0x530] sm:$0xff]
    %v1384 = vld [vmem:[#allocation6 + $0x538] sm:$0xff]
    %v1385 = vld [vmem:[#allocation6 + $0x540] sm:$0xff]
    %v1386 = vld [vmem:[#allocation6 + $0x548] sm:$0xff]
    %v1387 = vld [vmem:[#allocation6 + $0x550] sm:$0xff]
    %v1388 = vld [vmem:[#allocation6 + $0x558] sm:$0xff]
    %v1389 = vld [vmem:[#allocation6 + $0x560] sm:$0xff]
    %v1390 = vld [vmem:[#allocation6 + $0x568] sm:$0xff]
    %v1391 = vld [vmem:[#allocation6 + $0x570] sm:$0xff]
    %v1392 = vld [vmem:[#allocation6 + $0x578] sm:$0xff]
    %v1393 = vld [vmem:[#allocation6 + $0x580] sm:$0xff]
    %v1394 = vld [vmem:[#allocation6 + $0x588] sm:$0xff]
    %v1395 = vld [vmem:[#allocation6 + $0x590] sm:$0xff]
    %v1396 = vld [vmem:[#allocation6 + $0x598] sm:$0xff]
    %v1397 = vld [vmem:[#allocation6 + $0x5a0] sm:$0xff]
    %v1398 = vld [vmem:[#allocation6 + $0x5a8] sm:$0xff]
    %v1399 = vld [vmem:[#allocation6 + $0x5b0] sm:$0xff]
    %v1400 = vld [vmem:[#allocation6 + $0x5b8] sm:$0xff]
    %v1401 = vld [vmem:[#allocation6 + $0x5c0] sm:$0xff]
    %v1402 = vld [vmem:[#allocation6 + $0x5c8] sm:$0xff]
    %v1403 = vld [vmem:[#allocation6 + $0x5d0] sm:$0xff]
    %v1404 = vld [vmem:[#allocation6 + $0x5d8] sm:$0xff]
    %v1405 = vld [vmem:[#allocation6 + $0x5e0] sm:$0xff]
    %v1406 = vld [vmem:[#allocation6 + $0x5e8] sm:$0xff]
    %v1407 = vld [vmem:[#allocation6 + $0x5f0] sm:$0xff]
    %v1408 = vld [vmem:[#allocation6 + $0x5f8] sm:$0xff]
    %v1409 = vld [vmem:[#allocation6 + $0x600] sm:$0xff]
    %v1410 = vld [vmem:[#allocation6 + $0x608] sm:$0xff]
    %v1411 = vld [vmem:[#allocation6 + $0x610] sm:$0xff]
    %v1412 = vld [vmem:[#allocation6 + $0x618] sm:$0xff]
    %v1413 = vld [vmem:[#allocation6 + $0x620] sm:$0xff]
    %v1414 = vld [vmem:[#allocation6 + $0x628] sm:$0xff]
    %v1415 = vld [vmem:[#allocation6 + $0x630] sm:$0xff]
    %v1416 = vld [vmem:[#allocation6 + $0x638] sm:$0xff]
    %v1417 = vld [vmem:[#allocation6 + $0x640] sm:$0xff]
    %v1418 = vld [vmem:[#allocation6 + $0x648] sm:$0xff]
    %v1419 = vld [vmem:[#allocation6 + $0x650] sm:$0xff]
    %v1420 = vld [vmem:[#allocation6 + $0x658] sm:$0xff]
    %v1421 = vld [vmem:[#allocation6 + $0x660] sm:$0xff]
    %v1422 = vld [vmem:[#allocation6 + $0x668] sm:$0xff]
    %v1423 = vld [vmem:[#allocation6 + $0x670] sm:$0xff]
    %v1424 = vld [vmem:[#allocation6 + $0x678] sm:$0xff]
    %v1425 = vld [vmem:[#allocation6 + $0x680] sm:$0xff]
    %v1426 = vld [vmem:[#allocation6 + $0x688] sm:$0xff]
    %v1427 = vld [vmem:[#allocation6 + $0x690] sm:$0xff]
    %v1428 = vld [vmem:[#allocation6 + $0x698] sm:$0xff]
    %v1429 = vld [vmem:[#allocation6 + $0x6a0] sm:$0xff]
    %v1430 = vld [vmem:[#allocation6 + $0x6a8] sm:$0xff]
    %v1431 = vld [vmem:[#allocation6 + $0x6b0] sm:$0xff]
    %v1432 = vld [vmem:[#allocation6 + $0x6b8] sm:$0xff]
    %v1433 = vld [vmem:[#allocation6 + $0x6c0] sm:$0xff]
    %v1434 = vld [vmem:[#allocation6 + $0x6c8] sm:$0xff]
    %v1435 = vld [vmem:[#allocation6 + $0x6d0] sm:$0xff]
    %v1436 = vld [vmem:[#allocation6 + $0x6d8] sm:$0xff]
    %v1437 = vld [vmem:[#allocation6 + $0x6e0] sm:$0xff]
    %v1438 = vld [vmem:[#allocation6 + $0x6e8] sm:$0xff]
    %v1439 = vld [vmem:[#allocation6 + $0x6f0] sm:$0xff]
    %v1440 = vld [vmem:[#allocation6 + $0x6f8] sm:$0xff]
    %v1441 = vld [vmem:[#allocation6 + $0x700] sm:$0xff]
    %v1442 = vld [vmem:[#allocation6 + $0x708] sm:$0xff]
    %v1443 = vld [vmem:[#allocation6 + $0x710] sm:$0xff]
    %v1444 = vld [vmem:[#allocation6 + $0x718] sm:$0xff]
    %v1445 = vld [vmem:[#allocation6 + $0x720] sm:$0xff]
    %v1446 = vld [vmem:[#allocation6 + $0x728] sm:$0xff]
    %v1447 = vld [vmem:[#allocation6 + $0x730] sm:$0xff]
    %v1448 = vld [vmem:[#allocation6 + $0x738] sm:$0xff]
    %v1449 = vld [vmem:[#allocation6 + $0x740] sm:$0xff]
    %v1450 = vld [vmem:[#allocation6 + $0x748] sm:$0xff]
    %v1451 = vld [vmem:[#allocation6 + $0x750] sm:$0xff]
    %v1452 = vld [vmem:[#allocation6 + $0x758] sm:$0xff]
    %v1453 = vld [vmem:[#allocation6 + $0x760] sm:$0xff]
    %v1454 = vld [vmem:[#allocation6 + $0x768] sm:$0xff]
    %v1455 = vld [vmem:[#allocation6 + $0x770] sm:$0xff]
    %v1456 = vld [vmem:[#allocation6 + $0x778] sm:$0xff]
    %v1457 = vld [vmem:[#allocation6 + $0x780] sm:$0xff]
    %v1458 = vld [vmem:[#allocation6 + $0x788] sm:$0xff]
    %v1459 = vld [vmem:[#allocation6 + $0x790] sm:$0xff]
    %v1460 = vld [vmem:[#allocation6 + $0x798] sm:$0xff]
    %v1461 = vld [vmem:[#allocation6 + $0x7a0] sm:$0xff]
    %v1462 = vld [vmem:[#allocation6 + $0x7a8] sm:$0xff]
    %v1463 = vld [vmem:[#allocation6 + $0x7b0] sm:$0xff]
    %v1464 = vld [vmem:[#allocation6 + $0x7b8] sm:$0xff]
    %v1465 = vld [vmem:[#allocation6 + $0x7c0] sm:$0xff]
    %v1466 = vld [vmem:[#allocation6 + $0x7c8] sm:$0xff]
    %v1467 = vld [vmem:[#allocation6 + $0x7d0] sm:$0xff]
    %v1468 = vld [vmem:[#allocation6 + $0x7d8] sm:$0xff]
    %v1469 = vld [vmem:[#allocation6 + $0x7e0] sm:$0xff]
    %v1470 = vld [vmem:[#allocation6 + $0x7e8] sm:$0xff]
    %v1471 = vld [vmem:[#allocation6 + $0x7f0] sm:$0xff]
    %v1472 = vld [vmem:[#allocation6 + $0x7f8] sm:$0xff]
    %v1729 = vunpack.c.l.b16 %v1217
    %v1730 = vunpack.c.h.b16 %v1217
    %v1731 = vunpack.c.l.b16 %v1218
    %v1732 = vunpack.c.h.b16 %v1218
    %v1733 = vunpack.c.l.b16 %v1219
    %v1734 = vunpack.c.h.b16 %v1219
    %v1735 = vunpack.c.l.b16 %v1220
    %v1736 = vunpack.c.h.b16 %v1220
    %v1737 = vunpack.c.l.b16 %v1221
    %v1738 = vunpack.c.h.b16 %v1221
    %v1739 = vunpack.c.l.b16 %v1222
    %v1740 = vunpack.c.h.b16 %v1222
    %v1741 = vunpack.c.l.b16 %v1223
    %v1742 = vunpack.c.h.b16 %v1223
    %v1743 = vunpack.c.l.b16 %v1224
    %v1744 = vunpack.c.h.b16 %v1224
    %v1745 = vunpack.c.l.b16 %v1225
    %v1746 = vunpack.c.h.b16 %v1225
    %v1747 = vunpack.c.l.b16 %v1226
    %v1748 = vunpack.c.h.b16 %v1226
    %v1749 = vunpack.c.l.b16 %v1227
    %v1750 = vunpack.c.h.b16 %v1227
    %v1751 = vunpack.c.l.b16 %v1228
    %v1752 = vunpack.c.h.b16 %v1228
    %v1753 = vunpack.c.l.b16 %v1229
    %v1754 = vunpack.c.h.b16 %v1229
    %v1755 = vunpack.c.l.b16 %v1230
    %v1756 = vunpack.c.h.b16 %v1230
    %v1757 = vunpack.c.l.b16 %v1231
    %v1758 = vunpack.c.h.b16 %v1231
    %v1759 = vunpack.c.l.b16 %v1232
    %v1760 = vunpack.c.h.b16 %v1232
    %v1761 = vunpack.c.l.b16 %v1233
    %v1762 = vunpack.c.h.b16 %v1233
    %v1763 = vunpack.c.l.b16 %v1234
    %v1764 = vunpack.c.h.b16 %v1234
    %v1765 = vunpack.c.l.b16 %v1235
    %v1766 = vunpack.c.h.b16 %v1235
    %v1767 = vunpack.c.l.b16 %v1236
    %v1768 = vunpack.c.h.b16 %v1236
    %v1769 = vunpack.c.l.b16 %v1237
    %v1770 = vunpack.c.h.b16 %v1237
    %v1771 = vunpack.c.l.b16 %v1238
    %v1772 = vunpack.c.h.b16 %v1238
    %v1773 = vunpack.c.l.b16 %v1239
    %v1774 = vunpack.c.h.b16 %v1239
    %v1775 = vunpack.c.l.b16 %v1240
    %v1776 = vunpack.c.h.b16 %v1240
    %v1777 = vunpack.c.l.b16 %v1241
    %v1778 = vunpack.c.h.b16 %v1241
    %v1779 = vunpack.c.l.b16 %v1242
    %v1780 = vunpack.c.h.b16 %v1242
    %v1781 = vunpack.c.l.b16 %v1243
    %v1782 = vunpack.c.h.b16 %v1243
    %v1783 = vunpack.c.l.b16 %v1244
    %v1784 = vunpack.c.h.b16 %v1244
    %v1785 = vunpack.c.l.b16 %v1245
    %v1786 = vunpack.c.h.b16 %v1245
    %v1787 = vunpack.c.l.b16 %v1246
    %v1788 = vunpack.c.h.b16 %v1246
    %v1789 = vunpack.c.l.b16 %v1247
    %v1790 = vunpack.c.h.b16 %v1247
    %v1791 = vunpack.c.l.b16 %v1248
    %v1792 = vunpack.c.h.b16 %v1248
    %v1793 = vunpack.c.l.b16 %v1249
    %v1794 = vunpack.c.h.b16 %v1249
    %v1795 = vunpack.c.l.b16 %v1250
    %v1796 = vunpack.c.h.b16 %v1250
    %v1797 = vunpack.c.l.b16 %v1251
    %v1798 = vunpack.c.h.b16 %v1251
    %v1799 = vunpack.c.l.b16 %v1252
    %v1800 = vunpack.c.h.b16 %v1252
    %v1801 = vunpack.c.l.b16 %v1253
    %v1802 = vunpack.c.h.b16 %v1253
    %v1803 = vunpack.c.l.b16 %v1254
    %v1804 = vunpack.c.h.b16 %v1254
    %v1805 = vunpack.c.l.b16 %v1255
    %v1806 = vunpack.c.h.b16 %v1255
    %v1807 = vunpack.c.l.b16 %v1256
    %v1808 = vunpack.c.h.b16 %v1256
    %v1809 = vunpack.c.l.b16 %v1257
    %v1810 = vunpack.c.h.b16 %v1257
    %v1811 = vunpack.c.l.b16 %v1258
    %v1812 = vunpack.c.h.b16 %v1258
    %v1813 = vunpack.c.l.b16 %v1259
    %v1814 = vunpack.c.h.b16 %v1259
    %v1815 = vunpack.c.l.b16 %v1260
    %v1816 = vunpack.c.h.b16 %v1260
    %v1817 = vunpack.c.l.b16 %v1261
    %v1818 = vunpack.c.h.b16 %v1261
    %v1819 = vunpack.c.l.b16 %v1262
    %v1820 = vunpack.c.h.b16 %v1262
    %v1821 = vunpack.c.l.b16 %v1263
    %v1822 = vunpack.c.h.b16 %v1263
    %v1823 = vunpack.c.l.b16 %v1264
    %v1824 = vunpack.c.h.b16 %v1264
    %v1825 = vunpack.c.l.b16 %v1265
    %v1826 = vunpack.c.h.b16 %v1265
    %v1827 = vunpack.c.l.b16 %v1266
    %v1828 = vunpack.c.h.b16 %v1266
    %v1829 = vunpack.c.l.b16 %v1267
    %v1830 = vunpack.c.h.b16 %v1267
    %v1831 = vunpack.c.l.b16 %v1268
    %v1832 = vunpack.c.h.b16 %v1268
    %v1833 = vunpack.c.l.b16 %v1269
    %v1834 = vunpack.c.h.b16 %v1269
    %v1835 = vunpack.c.l.b16 %v1270
    %v1836 = vunpack.c.h.b16 %v1270
    %v1837 = vunpack.c.l.b16 %v1271
    %v1838 = vunpack.c.h.b16 %v1271
    %v1839 = vunpack.c.l.b16 %v1272
    %v1840 = vunpack.c.h.b16 %v1272
    %v1841 = vunpack.c.l.b16 %v1273
    %v1842 = vunpack.c.h.b16 %v1273
    %v1843 = vunpack.c.l.b16 %v1274
    %v1844 = vunpack.c.h.b16 %v1274
    %v1845 = vunpack.c.l.b16 %v1275
    %v1846 = vunpack.c.h.b16 %v1275
    %v1847 = vunpack.c.l.b16 %v1276
    %v1848 = vunpack.c.h.b16 %v1276
    %v1849 = vunpack.c.l.b16 %v1277
    %v1850 = vunpack.c.h.b16 %v1277
    %v1851 = vunpack.c.l.b16 %v1278
    %v1852 = vunpack.c.h.b16 %v1278
    %v1853 = vunpack.c.l.b16 %v1279
    %v1854 = vunpack.c.h.b16 %v1279
    %v1855 = vunpack.c.l.b16 %v1280
    %v1856 = vunpack.c.h.b16 %v1280
    %v1857 = vunpack.c.l.b16 %v1281
    %v1858 = vunpack.c.h.b16 %v1281
    %v1859 = vunpack.c.l.b16 %v1282
    %v1860 = vunpack.c.h.b16 %v1282
    %v1861 = vunpack.c.l.b16 %v1283
    %v1862 = vunpack.c.h.b16 %v1283
    %v1863 = vunpack.c.l.b16 %v1284
    %v1864 = vunpack.c.h.b16 %v1284
    %v1865 = vunpack.c.l.b16 %v1285
    %v1866 = vunpack.c.h.b16 %v1285
    %v1867 = vunpack.c.l.b16 %v1286
    %v1868 = vunpack.c.h.b16 %v1286
    %v1869 = vunpack.c.l.b16 %v1287
    %v1870 = vunpack.c.h.b16 %v1287
    %v1871 = vunpack.c.l.b16 %v1288
    %v1872 = vunpack.c.h.b16 %v1288
    %v1873 = vunpack.c.l.b16 %v1289
    %v1874 = vunpack.c.h.b16 %v1289
    %v1875 = vunpack.c.l.b16 %v1290
    %v1876 = vunpack.c.h.b16 %v1290
    %v1877 = vunpack.c.l.b16 %v1291
    %v1878 = vunpack.c.h.b16 %v1291
    %v1879 = vunpack.c.l.b16 %v1292
    %v1880 = vunpack.c.h.b16 %v1292
    %v1881 = vunpack.c.l.b16 %v1293
    %v1882 = vunpack.c.h.b16 %v1293
    %v1883 = vunpack.c.l.b16 %v1294
    %v1884 = vunpack.c.h.b16 %v1294
    %v1885 = vunpack.c.l.b16 %v1295
    %v1886 = vunpack.c.h.b16 %v1295
    %v1887 = vunpack.c.l.b16 %v1296
    %v1888 = vunpack.c.h.b16 %v1296
    %v1889 = vunpack.c.l.b16 %v1297
    %v1890 = vunpack.c.h.b16 %v1297
    %v1891 = vunpack.c.l.b16 %v1298
    %v1892 = vunpack.c.h.b16 %v1298
    %v1893 = vunpack.c.l.b16 %v1299
    %v1894 = vunpack.c.h.b16 %v1299
    %v1895 = vunpack.c.l.b16 %v1300
    %v1896 = vunpack.c.h.b16 %v1300
    %v1897 = vunpack.c.l.b16 %v1301
    %v1898 = vunpack.c.h.b16 %v1301
    %v1899 = vunpack.c.l.b16 %v1302
    %v1900 = vunpack.c.h.b16 %v1302
    %v1901 = vunpack.c.l.b16 %v1303
    %v1902 = vunpack.c.h.b16 %v1303
    %v1903 = vunpack.c.l.b16 %v1304
    %v1904 = vunpack.c.h.b16 %v1304
    %v1905 = vunpack.c.l.b16 %v1305
    %v1906 = vunpack.c.h.b16 %v1305
    %v1907 = vunpack.c.l.b16 %v1306
    %v1908 = vunpack.c.h.b16 %v1306
    %v1909 = vunpack.c.l.b16 %v1307
    %v1910 = vunpack.c.h.b16 %v1307
    %v1911 = vunpack.c.l.b16 %v1308
    %v1912 = vunpack.c.h.b16 %v1308
    %v1913 = vunpack.c.l.b16 %v1309
    %v1914 = vunpack.c.h.b16 %v1309
    %v1915 = vunpack.c.l.b16 %v1310
    %v1916 = vunpack.c.h.b16 %v1310
    %v1917 = vunpack.c.l.b16 %v1311
    %v1918 = vunpack.c.h.b16 %v1311
    %v1919 = vunpack.c.l.b16 %v1312
    %v1920 = vunpack.c.h.b16 %v1312
    %v1921 = vunpack.c.l.b16 %v1313
    %v1922 = vunpack.c.h.b16 %v1313
    %v1923 = vunpack.c.l.b16 %v1314
    %v1924 = vunpack.c.h.b16 %v1314
    %v1925 = vunpack.c.l.b16 %v1315
    %v1926 = vunpack.c.h.b16 %v1315
    %v1927 = vunpack.c.l.b16 %v1316
    %v1928 = vunpack.c.h.b16 %v1316
    %v1929 = vunpack.c.l.b16 %v1317
    %v1930 = vunpack.c.h.b16 %v1317
    %v1931 = vunpack.c.l.b16 %v1318
    %v1932 = vunpack.c.h.b16 %v1318
    %v1933 = vunpack.c.l.b16 %v1319
    %v1934 = vunpack.c.h.b16 %v1319
    %v1935 = vunpack.c.l.b16 %v1320
    %v1936 = vunpack.c.h.b16 %v1320
    %v1937 = vunpack.c.l.b16 %v1321
    %v1938 = vunpack.c.h.b16 %v1321
    %v1939 = vunpack.c.l.b16 %v1322
    %v1940 = vunpack.c.h.b16 %v1322
    %v1941 = vunpack.c.l.b16 %v1323
    %v1942 = vunpack.c.h.b16 %v1323
    %v1943 = vunpack.c.l.b16 %v1324
    %v1944 = vunpack.c.h.b16 %v1324
    %v1945 = vunpack.c.l.b16 %v1325
    %v1946 = vunpack.c.h.b16 %v1325
    %v1947 = vunpack.c.l.b16 %v1326
    %v1948 = vunpack.c.h.b16 %v1326
    %v1949 = vunpack.c.l.b16 %v1327
    %v1950 = vunpack.c.h.b16 %v1327
    %v1951 = vunpack.c.l.b16 %v1328
    %v1952 = vunpack.c.h.b16 %v1328
    %v1953 = vunpack.c.l.b16 %v1329
    %v1954 = vunpack.c.h.b16 %v1329
    %v1955 = vunpack.c.l.b16 %v1330
    %v1956 = vunpack.c.h.b16 %v1330
    %v1957 = vunpack.c.l.b16 %v1331
    %v1958 = vunpack.c.h.b16 %v1331
    %v1959 = vunpack.c.l.b16 %v1332
    %v1960 = vunpack.c.h.b16 %v1332
    %v1961 = vunpack.c.l.b16 %v1333
    %v1962 = vunpack.c.h.b16 %v1333
    %v1963 = vunpack.c.l.b16 %v1334
    %v1964 = vunpack.c.h.b16 %v1334
    %v1965 = vunpack.c.l.b16 %v1335
    %v1966 = vunpack.c.h.b16 %v1335
    %v1967 = vunpack.c.l.b16 %v1336
    %v1968 = vunpack.c.h.b16 %v1336
    %v1969 = vunpack.c.l.b16 %v1337
    %v1970 = vunpack.c.h.b16 %v1337
    %v1971 = vunpack.c.l.b16 %v1338
    %v1972 = vunpack.c.h.b16 %v1338
    %v1973 = vunpack.c.l.b16 %v1339
    %v1974 = vunpack.c.h.b16 %v1339
    %v1975 = vunpack.c.l.b16 %v1340
    %v1976 = vunpack.c.h.b16 %v1340
    %v1977 = vunpack.c.l.b16 %v1341
    %v1978 = vunpack.c.h.b16 %v1341
    %v1979 = vunpack.c.l.b16 %v1342
    %v1980 = vunpack.c.h.b16 %v1342
    %v1981 = vunpack.c.l.b16 %v1343
    %v1982 = vunpack.c.h.b16 %v1343
    %v1983 = vunpack.c.l.b16 %v1344
    %v1984 = vunpack.c.h.b16 %v1344
    %v1985 = vunpack.c.l.b16 %v1345
    %v1986 = vunpack.c.h.b16 %v1345
    %v1987 = vunpack.c.l.b16 %v1346
    %v1988 = vunpack.c.h.b16 %v1346
    %v1989 = vunpack.c.l.b16 %v1347
    %v1990 = vunpack.c.h.b16 %v1347
    %v1991 = vunpack.c.l.b16 %v1348
    %v1992 = vunpack.c.h.b16 %v1348
    %v1993 = vunpack.c.l.b16 %v1349
    %v1994 = vunpack.c.h.b16 %v1349
    %v1995 = vunpack.c.l.b16 %v1350
    %v1996 = vunpack.c.h.b16 %v1350
    %v1997 = vunpack.c.l.b16 %v1351
    %v1998 = vunpack.c.h.b16 %v1351
    %v1999 = vunpack.c.l.b16 %v1352
    %v2000 = vunpack.c.h.b16 %v1352
    %v2001 = vunpack.c.l.b16 %v1353
    %v2002 = vunpack.c.h.b16 %v1353
    %v2003 = vunpack.c.l.b16 %v1354
    %v2004 = vunpack.c.h.b16 %v1354
    %v2005 = vunpack.c.l.b16 %v1355
    %v2006 = vunpack.c.h.b16 %v1355
    %v2007 = vunpack.c.l.b16 %v1356
    %v2008 = vunpack.c.h.b16 %v1356
    %v2009 = vunpack.c.l.b16 %v1357
    %v2010 = vunpack.c.h.b16 %v1357
    %v2011 = vunpack.c.l.b16 %v1358
    %v2012 = vunpack.c.h.b16 %v1358
    %v2013 = vunpack.c.l.b16 %v1359
    %v2014 = vunpack.c.h.b16 %v1359
    %v2015 = vunpack.c.l.b16 %v1360
    %v2016 = vunpack.c.h.b16 %v1360
    %v2017 = vunpack.c.l.b16 %v1361
    %v2018 = vunpack.c.h.b16 %v1361
    %v2019 = vunpack.c.l.b16 %v1362
    %v2020 = vunpack.c.h.b16 %v1362
    %v2021 = vunpack.c.l.b16 %v1363
    %v2022 = vunpack.c.h.b16 %v1363
    %v2023 = vunpack.c.l.b16 %v1364
    %v2024 = vunpack.c.h.b16 %v1364
    %v2025 = vunpack.c.l.b16 %v1365
    %v2026 = vunpack.c.h.b16 %v1365
    %v2027 = vunpack.c.l.b16 %v1366
    %v2028 = vunpack.c.h.b16 %v1366
    %v2029 = vunpack.c.l.b16 %v1367
    %v2030 = vunpack.c.h.b16 %v1367
    %v2031 = vunpack.c.l.b16 %v1368
    %v2032 = vunpack.c.h.b16 %v1368
    %v2033 = vunpack.c.l.b16 %v1369
    %v2034 = vunpack.c.h.b16 %v1369
    %v2035 = vunpack.c.l.b16 %v1370
    %v2036 = vunpack.c.h.b16 %v1370
    %v2037 = vunpack.c.l.b16 %v1371
    %v2038 = vunpack.c.h.b16 %v1371
    %v2039 = vunpack.c.l.b16 %v1372
    %v2040 = vunpack.c.h.b16 %v1372
    %v2041 = vunpack.c.l.b16 %v1373
    %v2042 = vunpack.c.h.b16 %v1373
    %v2043 = vunpack.c.l.b16 %v1374
    %v2044 = vunpack.c.h.b16 %v1374
    %v2045 = vunpack.c.l.b16 %v1375
    %v2046 = vunpack.c.h.b16 %v1375
    %v2047 = vunpack.c.l.b16 %v1376
    %v2048 = vunpack.c.h.b16 %v1376
    %v2049 = vunpack.c.l.b16 %v1377
    %v2050 = vunpack.c.h.b16 %v1377
    %v2051 = vunpack.c.l.b16 %v1378
    %v2052 = vunpack.c.h.b16 %v1378
    %v2053 = vunpack.c.l.b16 %v1379
    %v2054 = vunpack.c.h.b16 %v1379
    %v2055 = vunpack.c.l.b16 %v1380
    %v2056 = vunpack.c.h.b16 %v1380
    %v2057 = vunpack.c.l.b16 %v1381
    %v2058 = vunpack.c.h.b16 %v1381
    %v2059 = vunpack.c.l.b16 %v1382
    %v2060 = vunpack.c.h.b16 %v1382
    %v2061 = vunpack.c.l.b16 %v1383
    %v2062 = vunpack.c.h.b16 %v1383
    %v2063 = vunpack.c.l.b16 %v1384
    %v2064 = vunpack.c.h.b16 %v1384
    %v2065 = vunpack.c.l.b16 %v1385
    %v2066 = vunpack.c.h.b16 %v1385
    %v2067 = vunpack.c.l.b16 %v1386
    %v2068 = vunpack.c.h.b16 %v1386
    %v2069 = vunpack.c.l.b16 %v1387
    %v2070 = vunpack.c.h.b16 %v1387
    %v2071 = vunpack.c.l.b16 %v1388
    %v2072 = vunpack.c.h.b16 %v1388
    %v2073 = vunpack.c.l.b16 %v1389
    %v2074 = vunpack.c.h.b16 %v1389
    %v2075 = vunpack.c.l.b16 %v1390
    %v2076 = vunpack.c.h.b16 %v1390
    %v2077 = vunpack.c.l.b16 %v1391
    %v2078 = vunpack.c.h.b16 %v1391
    %v2079 = vunpack.c.l.b16 %v1392
    %v2080 = vunpack.c.h.b16 %v1392
    %v2081 = vunpack.c.l.b16 %v1393
    %v2082 = vunpack.c.h.b16 %v1393
    %v2083 = vunpack.c.l.b16 %v1394
    %v2084 = vunpack.c.h.b16 %v1394
    %v2085 = vunpack.c.l.b16 %v1395
    %v2086 = vunpack.c.h.b16 %v1395
    %v2087 = vunpack.c.l.b16 %v1396
    %v2088 = vunpack.c.h.b16 %v1396
    %v2089 = vunpack.c.l.b16 %v1397
    %v2090 = vunpack.c.h.b16 %v1397
    %v2091 = vunpack.c.l.b16 %v1398
    %v2092 = vunpack.c.h.b16 %v1398
    %v2093 = vunpack.c.l.b16 %v1399
    %v2094 = vunpack.c.h.b16 %v1399
    %v2095 = vunpack.c.l.b16 %v1400
    %v2096 = vunpack.c.h.b16 %v1400
    %v2097 = vunpack.c.l.b16 %v1401
    %v2098 = vunpack.c.h.b16 %v1401
    %v2099 = vunpack.c.l.b16 %v1402
    %v2100 = vunpack.c.h.b16 %v1402
    %v2101 = vunpack.c.l.b16 %v1403
    %v2102 = vunpack.c.h.b16 %v1403
    %v2103 = vunpack.c.l.b16 %v1404
    %v2104 = vunpack.c.h.b16 %v1404
    %v2105 = vunpack.c.l.b16 %v1405
    %v2106 = vunpack.c.h.b16 %v1405
    %v2107 = vunpack.c.l.b16 %v1406
    %v2108 = vunpack.c.h.b16 %v1406
    %v2109 = vunpack.c.l.b16 %v1407
    %v2110 = vunpack.c.h.b16 %v1407
    %v2111 = vunpack.c.l.b16 %v1408
    %v2112 = vunpack.c.h.b16 %v1408
    %v2113 = vunpack.c.l.b16 %v1409
    %v2114 = vunpack.c.h.b16 %v1409
    %v2115 = vunpack.c.l.b16 %v1410
    %v2116 = vunpack.c.h.b16 %v1410
    %v2117 = vunpack.c.l.b16 %v1411
    %v2118 = vunpack.c.h.b16 %v1411
    %v2119 = vunpack.c.l.b16 %v1412
    %v2120 = vunpack.c.h.b16 %v1412
    %v2121 = vunpack.c.l.b16 %v1413
    %v2122 = vunpack.c.h.b16 %v1413
    %v2123 = vunpack.c.l.b16 %v1414
    %v2124 = vunpack.c.h.b16 %v1414
    %v2125 = vunpack.c.l.b16 %v1415
    %v2126 = vunpack.c.h.b16 %v1415
    %v2127 = vunpack.c.l.b16 %v1416
    %v2128 = vunpack.c.h.b16 %v1416
    %v2129 = vunpack.c.l.b16 %v1417
    %v2130 = vunpack.c.h.b16 %v1417
    %v2131 = vunpack.c.l.b16 %v1418
    %v2132 = vunpack.c.h.b16 %v1418
    %v2133 = vunpack.c.l.b16 %v1419
    %v2134 = vunpack.c.h.b16 %v1419
    %v2135 = vunpack.c.l.b16 %v1420
    %v2136 = vunpack.c.h.b16 %v1420
    %v2137 = vunpack.c.l.b16 %v1421
    %v2138 = vunpack.c.h.b16 %v1421
    %v2139 = vunpack.c.l.b16 %v1422
    %v2140 = vunpack.c.h.b16 %v1422
    %v2141 = vunpack.c.l.b16 %v1423
    %v2142 = vunpack.c.h.b16 %v1423
    %v2143 = vunpack.c.l.b16 %v1424
    %v2144 = vunpack.c.h.b16 %v1424
    %v2145 = vunpack.c.l.b16 %v1425
    %v2146 = vunpack.c.h.b16 %v1425
    %v2147 = vunpack.c.l.b16 %v1426
    %v2148 = vunpack.c.h.b16 %v1426
    %v2149 = vunpack.c.l.b16 %v1427
    %v2150 = vunpack.c.h.b16 %v1427
    %v2151 = vunpack.c.l.b16 %v1428
    %v2152 = vunpack.c.h.b16 %v1428
    %v2153 = vunpack.c.l.b16 %v1429
    %v2154 = vunpack.c.h.b16 %v1429
    %v2155 = vunpack.c.l.b16 %v1430
    %v2156 = vunpack.c.h.b16 %v1430
    %v2157 = vunpack.c.l.b16 %v1431
    %v2158 = vunpack.c.h.b16 %v1431
    %v2159 = vunpack.c.l.b16 %v1432
    %v2160 = vunpack.c.h.b16 %v1432
    %v2161 = vunpack.c.l.b16 %v1433
    %v2162 = vunpack.c.h.b16 %v1433
    %v2163 = vunpack.c.l.b16 %v1434
    %v2164 = vunpack.c.h.b16 %v1434
    %v2165 = vunpack.c.l.b16 %v1435
    %v2166 = vunpack.c.h.b16 %v1435
    %v2167 = vunpack.c.l.b16 %v1436
    %v2168 = vunpack.c.h.b16 %v1436
    %v2169 = vunpack.c.l.b16 %v1437
    %v2170 = vunpack.c.h.b16 %v1437
    %v2171 = vunpack.c.l.b16 %v1438
    %v2172 = vunpack.c.h.b16 %v1438
    %v2173 = vunpack.c.l.b16 %v1439
    %v2174 = vunpack.c.h.b16 %v1439
    %v2175 = vunpack.c.l.b16 %v1440
    %v2176 = vunpack.c.h.b16 %v1440
    %v2177 = vunpack.c.l.b16 %v1441
    %v2178 = vunpack.c.h.b16 %v1441
    %v2179 = vunpack.c.l.b16 %v1442
    %v2180 = vunpack.c.h.b16 %v1442
    %v2181 = vunpack.c.l.b16 %v1443
    %v2182 = vunpack.c.h.b16 %v1443
    %v2183 = vunpack.c.l.b16 %v1444
    %v2184 = vunpack.c.h.b16 %v1444
    %v2185 = vunpack.c.l.b16 %v1445
    %v2186 = vunpack.c.h.b16 %v1445
    %v2187 = vunpack.c.l.b16 %v1446
    %v2188 = vunpack.c.h.b16 %v1446
    %v2189 = vunpack.c.l.b16 %v1447
    %v2190 = vunpack.c.h.b16 %v1447
    %v2191 = vunpack.c.l.b16 %v1448
    %v2192 = vunpack.c.h.b16 %v1448
    %v2193 = vunpack.c.l.b16 %v1449
    %v2194 = vunpack.c.h.b16 %v1449
    %v2195 = vunpack.c.l.b16 %v1450
    %v2196 = vunpack.c.h.b16 %v1450
    %v2197 = vunpack.c.l.b16 %v1451
    %v2198 = vunpack.c.h.b16 %v1451
    %v2199 = vunpack.c.l.b16 %v1452
    %v2200 = vunpack.c.h.b16 %v1452
    %v2201 = vunpack.c.l.b16 %v1453
    %v2202 = vunpack.c.h.b16 %v1453
    %v2203 = vunpack.c.l.b16 %v1454
    %v2204 = vunpack.c.h.b16 %v1454
    %v2205 = vunpack.c.l.b16 %v1455
    %v2206 = vunpack.c.h.b16 %v1455
    %v2207 = vunpack.c.l.b16 %v1456
    %v2208 = vunpack.c.h.b16 %v1456
    %v2209 = vunpack.c.l.b16 %v1457
    %v2210 = vunpack.c.h.b16 %v1457
    %v2211 = vunpack.c.l.b16 %v1458
    %v2212 = vunpack.c.h.b16 %v1458
    %v2213 = vunpack.c.l.b16 %v1459
    %v2214 = vunpack.c.h.b16 %v1459
    %v2215 = vunpack.c.l.b16 %v1460
    %v2216 = vunpack.c.h.b16 %v1460
    %v2217 = vunpack.c.l.b16 %v1461
    %v2218 = vunpack.c.h.b16 %v1461
    %v2219 = vunpack.c.l.b16 %v1462
    %v2220 = vunpack.c.h.b16 %v1462
    %v2221 = vunpack.c.l.b16 %v1463
    %v2222 = vunpack.c.h.b16 %v1463
    %v2223 = vunpack.c.l.b16 %v1464
    %v2224 = vunpack.c.h.b16 %v1464
    %v2225 = vunpack.c.l.b16 %v1465
    %v2226 = vunpack.c.h.b16 %v1465
    %v2227 = vunpack.c.l.b16 %v1466
    %v2228 = vunpack.c.h.b16 %v1466
    %v2229 = vunpack.c.l.b16 %v1467
    %v2230 = vunpack.c.h.b16 %v1467
    %v2231 = vunpack.c.l.b16 %v1468
    %v2232 = vunpack.c.h.b16 %v1468
    %v2233 = vunpack.c.l.b16 %v1469
    %v2234 = vunpack.c.h.b16 %v1469
    %v2235 = vunpack.c.l.b16 %v1470
    %v2236 = vunpack.c.h.b16 %v1470
    %v2237 = vunpack.c.l.b16 %v1471
    %v2238 = vunpack.c.h.b16 %v1471
    %v2239 = vunpack.c.l.b16 %v1472
    %v2240 = vunpack.c.h.b16 %v1472
    %v2241 = vpack.c.b16 %v1737, %v1729
    %v2242 = vpack.c.b16 %v1738, %v1730
    %v2243 = vpack.c.b16 %v1739, %v1731
    %v2244 = vpack.c.b16 %v1740, %v1732
    %v2245 = vpack.c.b16 %v1741, %v1733
    %v2246 = vpack.c.b16 %v1742, %v1734
    %v2247 = vpack.c.b16 %v1743, %v1735
    %v2248 = vpack.c.b16 %v1744, %v1736
    %v2249 = vpack.c.b16 %v1753, %v1745
    %v2250 = vpack.c.b16 %v1754, %v1746
    %v2251 = vpack.c.b16 %v1755, %v1747
    %v2252 = vpack.c.b16 %v1756, %v1748
    %v2253 = vpack.c.b16 %v1757, %v1749
    %v2254 = vpack.c.b16 %v1758, %v1750
    %v2255 = vpack.c.b16 %v1759, %v1751
    %v2256 = vpack.c.b16 %v1760, %v1752
    %v2257 = vpack.c.b16 %v1769, %v1761
    %v2258 = vpack.c.b16 %v1770, %v1762
    %v2259 = vpack.c.b16 %v1771, %v1763
    %v2260 = vpack.c.b16 %v1772, %v1764
    %v2261 = vpack.c.b16 %v1773, %v1765
    %v2262 = vpack.c.b16 %v1774, %v1766
    %v2263 = vpack.c.b16 %v1775, %v1767
    %v2264 = vpack.c.b16 %v1776, %v1768
    %v2265 = vpack.c.b16 %v1785, %v1777
    %v2266 = vpack.c.b16 %v1786, %v1778
    %v2267 = vpack.c.b16 %v1787, %v1779
    %v2268 = vpack.c.b16 %v1788, %v1780
    %v2269 = vpack.c.b16 %v1789, %v1781
    %v2270 = vpack.c.b16 %v1790, %v1782
    %v2271 = vpack.c.b16 %v1791, %v1783
    %v2272 = vpack.c.b16 %v1792, %v1784
    %v2273 = vpack.c.b16 %v1801, %v1793
    %v2274 = vpack.c.b16 %v1802, %v1794
    %v2275 = vpack.c.b16 %v1803, %v1795
    %v2276 = vpack.c.b16 %v1804, %v1796
    %v2277 = vpack.c.b16 %v1805, %v1797
    %v2278 = vpack.c.b16 %v1806, %v1798
    %v2279 = vpack.c.b16 %v1807, %v1799
    %v2280 = vpack.c.b16 %v1808, %v1800
    %v2281 = vpack.c.b16 %v1817, %v1809
    %v2282 = vpack.c.b16 %v1818, %v1810
    %v2283 = vpack.c.b16 %v1819, %v1811
    %v2284 = vpack.c.b16 %v1820, %v1812
    %v2285 = vpack.c.b16 %v1821, %v1813
    %v2286 = vpack.c.b16 %v1822, %v1814
    %v2287 = vpack.c.b16 %v1823, %v1815
    %v2288 = vpack.c.b16 %v1824, %v1816
    %v2289 = vpack.c.b16 %v1833, %v1825
    %v2290 = vpack.c.b16 %v1834, %v1826
    %v2291 = vpack.c.b16 %v1835, %v1827
    %v2292 = vpack.c.b16 %v1836, %v1828
    %v2293 = vpack.c.b16 %v1837, %v1829
    %v2294 = vpack.c.b16 %v1838, %v1830
    %v2295 = vpack.c.b16 %v1839, %v1831
    %v2296 = vpack.c.b16 %v1840, %v1832
    %v2297 = vpack.c.b16 %v1849, %v1841
    %v2298 = vpack.c.b16 %v1850, %v1842
    %v2299 = vpack.c.b16 %v1851, %v1843
    %v2300 = vpack.c.b16 %v1852, %v1844
    %v2301 = vpack.c.b16 %v1853, %v1845
    %v2302 = vpack.c.b16 %v1854, %v1846
    %v2303 = vpack.c.b16 %v1855, %v1847
    %v2304 = vpack.c.b16 %v1856, %v1848
    %v2305 = vpack.c.b16 %v1865, %v1857
    %v2306 = vpack.c.b16 %v1866, %v1858
    %v2307 = vpack.c.b16 %v1867, %v1859
    %v2308 = vpack.c.b16 %v1868, %v1860
    %v2309 = vpack.c.b16 %v1869, %v1861
    %v2310 = vpack.c.b16 %v1870, %v1862
    %v2311 = vpack.c.b16 %v1871, %v1863
    %v2312 = vpack.c.b16 %v1872, %v1864
    %v2313 = vpack.c.b16 %v1881, %v1873
    %v2314 = vpack.c.b16 %v1882, %v1874
    %v2315 = vpack.c.b16 %v1883, %v1875
    %v2316 = vpack.c.b16 %v1884, %v1876
    %v2317 = vpack.c.b16 %v1885, %v1877
    %v2318 = vpack.c.b16 %v1886, %v1878
    %v2319 = vpack.c.b16 %v1887, %v1879
    %v2320 = vpack.c.b16 %v1888, %v1880
    %v2321 = vpack.c.b16 %v1897, %v1889
    %v2322 = vpack.c.b16 %v1898, %v1890
    %v2323 = vpack.c.b16 %v1899, %v1891
    %v2324 = vpack.c.b16 %v1900, %v1892
    %v2325 = vpack.c.b16 %v1901, %v1893
    %v2326 = vpack.c.b16 %v1902, %v1894
    %v2327 = vpack.c.b16 %v1903, %v1895
    %v2328 = vpack.c.b16 %v1904, %v1896
    %v2329 = vpack.c.b16 %v1913, %v1905
    %v2330 = vpack.c.b16 %v1914, %v1906
    %v2331 = vpack.c.b16 %v1915, %v1907
    %v2332 = vpack.c.b16 %v1916, %v1908
    %v2333 = vpack.c.b16 %v1917, %v1909
    %v2334 = vpack.c.b16 %v1918, %v1910
    %v2335 = vpack.c.b16 %v1919, %v1911
    %v2336 = vpack.c.b16 %v1920, %v1912
    %v2337 = vpack.c.b16 %v1929, %v1921
    %v2338 = vpack.c.b16 %v1930, %v1922
    %v2339 = vpack.c.b16 %v1931, %v1923
    %v2340 = vpack.c.b16 %v1932, %v1924
    %v2341 = vpack.c.b16 %v1933, %v1925
    %v2342 = vpack.c.b16 %v1934, %v1926
    %v2343 = vpack.c.b16 %v1935, %v1927
    %v2344 = vpack.c.b16 %v1936, %v1928
    %v2345 = vpack.c.b16 %v1945, %v1937
    %v2346 = vpack.c.b16 %v1946, %v1938
    %v2347 = vpack.c.b16 %v1947, %v1939
    %v2348 = vpack.c.b16 %v1948, %v1940
    %v2349 = vpack.c.b16 %v1949, %v1941
    %v2350 = vpack.c.b16 %v1950, %v1942
    %v2351 = vpack.c.b16 %v1951, %v1943
    %v2352 = vpack.c.b16 %v1952, %v1944
    %v2353 = vpack.c.b16 %v1961, %v1953
    %v2354 = vpack.c.b16 %v1962, %v1954
    %v2355 = vpack.c.b16 %v1963, %v1955
    %v2356 = vpack.c.b16 %v1964, %v1956
    %v2357 = vpack.c.b16 %v1965, %v1957
    %v2358 = vpack.c.b16 %v1966, %v1958
    %v2359 = vpack.c.b16 %v1967, %v1959
    %v2360 = vpack.c.b16 %v1968, %v1960
    %v2361 = vpack.c.b16 %v1977, %v1969
    %v2362 = vpack.c.b16 %v1978, %v1970
    %v2363 = vpack.c.b16 %v1979, %v1971
    %v2364 = vpack.c.b16 %v1980, %v1972
    %v2365 = vpack.c.b16 %v1981, %v1973
    %v2366 = vpack.c.b16 %v1982, %v1974
    %v2367 = vpack.c.b16 %v1983, %v1975
    %v2368 = vpack.c.b16 %v1984, %v1976
    %v2369 = vpack.c.b16 %v1993, %v1985
    %v2370 = vpack.c.b16 %v1994, %v1986
    %v2371 = vpack.c.b16 %v1995, %v1987
    %v2372 = vpack.c.b16 %v1996, %v1988
    %v2373 = vpack.c.b16 %v1997, %v1989
    %v2374 = vpack.c.b16 %v1998, %v1990
    %v2375 = vpack.c.b16 %v1999, %v1991
    %v2376 = vpack.c.b16 %v2000, %v1992
    %v2377 = vpack.c.b16 %v2009, %v2001
    %v2378 = vpack.c.b16 %v2010, %v2002
    %v2379 = vpack.c.b16 %v2011, %v2003
    %v2380 = vpack.c.b16 %v2012, %v2004
    %v2381 = vpack.c.b16 %v2013, %v2005
    %v2382 = vpack.c.b16 %v2014, %v2006
    %v2383 = vpack.c.b16 %v2015, %v2007
    %v2384 = vpack.c.b16 %v2016, %v2008
    %v2385 = vpack.c.b16 %v2025, %v2017
    %v2386 = vpack.c.b16 %v2026, %v2018
    %v2387 = vpack.c.b16 %v2027, %v2019
    %v2388 = vpack.c.b16 %v2028, %v2020
    %v2389 = vpack.c.b16 %v2029, %v2021
    %v2390 = vpack.c.b16 %v2030, %v2022
    %v2391 = vpack.c.b16 %v2031, %v2023
    %v2392 = vpack.c.b16 %v2032, %v2024
    %v2393 = vpack.c.b16 %v2041, %v2033
    %v2394 = vpack.c.b16 %v2042, %v2034
    %v2395 = vpack.c.b16 %v2043, %v2035
    %v2396 = vpack.c.b16 %v2044, %v2036
    %v2397 = vpack.c.b16 %v2045, %v2037
    %v2398 = vpack.c.b16 %v2046, %v2038
    %v2399 = vpack.c.b16 %v2047, %v2039
    %v2400 = vpack.c.b16 %v2048, %v2040
    %v2401 = vpack.c.b16 %v2057, %v2049
    %v2402 = vpack.c.b16 %v2058, %v2050
    %v2403 = vpack.c.b16 %v2059, %v2051
    %v2404 = vpack.c.b16 %v2060, %v2052
    %v2405 = vpack.c.b16 %v2061, %v2053
    %v2406 = vpack.c.b16 %v2062, %v2054
    %v2407 = vpack.c.b16 %v2063, %v2055
    %v2408 = vpack.c.b16 %v2064, %v2056
    %v2409 = vpack.c.b16 %v2073, %v2065
    %v2410 = vpack.c.b16 %v2074, %v2066
    %v2411 = vpack.c.b16 %v2075, %v2067
    %v2412 = vpack.c.b16 %v2076, %v2068
    %v2413 = vpack.c.b16 %v2077, %v2069
    %v2414 = vpack.c.b16 %v2078, %v2070
    %v2415 = vpack.c.b16 %v2079, %v2071
    %v2416 = vpack.c.b16 %v2080, %v2072
    %v2417 = vpack.c.b16 %v2089, %v2081
    %v2418 = vpack.c.b16 %v2090, %v2082
    %v2419 = vpack.c.b16 %v2091, %v2083
    %v2420 = vpack.c.b16 %v2092, %v2084
    %v2421 = vpack.c.b16 %v2093, %v2085
    %v2422 = vpack.c.b16 %v2094, %v2086
    %v2423 = vpack.c.b16 %v2095, %v2087
    %v2424 = vpack.c.b16 %v2096, %v2088
    %v2425 = vpack.c.b16 %v2105, %v2097
    %v2426 = vpack.c.b16 %v2106, %v2098
    %v2427 = vpack.c.b16 %v2107, %v2099
    %v2428 = vpack.c.b16 %v2108, %v2100
    %v2429 = vpack.c.b16 %v2109, %v2101
    %v2430 = vpack.c.b16 %v2110, %v2102
    %v2431 = vpack.c.b16 %v2111, %v2103
    %v2432 = vpack.c.b16 %v2112, %v2104
    %v2433 = vpack.c.b16 %v2121, %v2113
    %v2434 = vpack.c.b16 %v2122, %v2114
    %v2435 = vpack.c.b16 %v2123, %v2115
    %v2436 = vpack.c.b16 %v2124, %v2116
    %v2437 = vpack.c.b16 %v2125, %v2117
    %v2438 = vpack.c.b16 %v2126, %v2118
    %v2439 = vpack.c.b16 %v2127, %v2119
    %v2440 = vpack.c.b16 %v2128, %v2120
    %v2441 = vpack.c.b16 %v2137, %v2129
    %v2442 = vpack.c.b16 %v2138, %v2130
    %v2443 = vpack.c.b16 %v2139, %v2131
    %v2444 = vpack.c.b16 %v2140, %v2132
    %v2445 = vpack.c.b16 %v2141, %v2133
    %v2446 = vpack.c.b16 %v2142, %v2134
    %v2447 = vpack.c.b16 %v2143, %v2135
    %v2448 = vpack.c.b16 %v2144, %v2136
    %v2449 = vpack.c.b16 %v2153, %v2145
    %v2450 = vpack.c.b16 %v2154, %v2146
    %v2451 = vpack.c.b16 %v2155, %v2147
    %v2452 = vpack.c.b16 %v2156, %v2148
    %v2453 = vpack.c.b16 %v2157, %v2149
    %v2454 = vpack.c.b16 %v2158, %v2150
    %v2455 = vpack.c.b16 %v2159, %v2151
    %v2456 = vpack.c.b16 %v2160, %v2152
    %v2457 = vpack.c.b16 %v2169, %v2161
    %v2458 = vpack.c.b16 %v2170, %v2162
    %v2459 = vpack.c.b16 %v2171, %v2163
    %v2460 = vpack.c.b16 %v2172, %v2164
    %v2461 = vpack.c.b16 %v2173, %v2165
    %v2462 = vpack.c.b16 %v2174, %v2166
    %v2463 = vpack.c.b16 %v2175, %v2167
    %v2464 = vpack.c.b16 %v2176, %v2168
    %v2465 = vpack.c.b16 %v2185, %v2177
    %v2466 = vpack.c.b16 %v2186, %v2178
    %v2467 = vpack.c.b16 %v2187, %v2179
    %v2468 = vpack.c.b16 %v2188, %v2180
    %v2469 = vpack.c.b16 %v2189, %v2181
    %v2470 = vpack.c.b16 %v2190, %v2182
    %v2471 = vpack.c.b16 %v2191, %v2183
    %v2472 = vpack.c.b16 %v2192, %v2184
    %v2473 = vpack.c.b16 %v2201, %v2193
    %v2474 = vpack.c.b16 %v2202, %v2194
    %v2475 = vpack.c.b16 %v2203, %v2195
    %v2476 = vpack.c.b16 %v2204, %v2196
    %v2477 = vpack.c.b16 %v2205, %v2197
    %v2478 = vpack.c.b16 %v2206, %v2198
    %v2479 = vpack.c.b16 %v2207, %v2199
    %v2480 = vpack.c.b16 %v2208, %v2200
    %v2481 = vpack.c.b16 %v2217, %v2209
    %v2482 = vpack.c.b16 %v2218, %v2210
    %v2483 = vpack.c.b16 %v2219, %v2211
    %v2484 = vpack.c.b16 %v2220, %v2212
    %v2485 = vpack.c.b16 %v2221, %v2213
    %v2486 = vpack.c.b16 %v2222, %v2214
    %v2487 = vpack.c.b16 %v2223, %v2215
    %v2488 = vpack.c.b16 %v2224, %v2216
    %v2489 = vpack.c.b16 %v2233, %v2225
    %v2490 = vpack.c.b16 %v2234, %v2226
    %v2491 = vpack.c.b16 %v2235, %v2227
    %v2492 = vpack.c.b16 %v2236, %v2228
    %v2493 = vpack.c.b16 %v2237, %v2229
    %v2494 = vpack.c.b16 %v2238, %v2230
    %v2495 = vpack.c.b16 %v2239, %v2231
    %v2496 = vpack.c.b16 %v2240, %v2232
    %2753 = vmatprep.subr.bf16.mxu0 %v2298
    %2754 = vmatpush1.bf16.msra.mxu0 %v2297
    %2755 = vmatprep.subr.bf16.mxu0 %v2290
    %2756 = vmatpush1.bf16.msra.mxu0 %v2289
    %2757 = vmatprep.subr.bf16.mxu0 %v2282
    %2758 = vmatpush1.bf16.msra.mxu0 %v2281
    %2759 = vmatprep.subr.bf16.mxu0 %v2274
    %2760 = vmatpush1.bf16.msra.mxu0 %v2273
    %2761 = vmatprep.subr.bf16.mxu0 %v2266
    %2762 = vmatpush1.bf16.msra.mxu0 %v2265
    %2763 = vmatprep.subr.bf16.mxu0 %v2258
    %2764 = vmatpush1.bf16.msra.mxu0 %v2257
    %2765 = vmatprep.subr.bf16.mxu0 %v2250
    %2766 = vmatpush1.bf16.msra.mxu0 %v2249
    %2767 = vmatprep.subr.bf16.mxu0 %v2242
    %2768 = vmatpush1.bf16.msra.mxu0 %v2241
    %2769 = vmatprep.subr.bf16.mxu0 %v2362
    %2770 = vmatpush2.bf16.msra.mxu0 %v2361
    %2771 = vmatprep.subr.bf16.mxu0 %v2354
    %2772 = vmatpush2.bf16.msra.mxu0 %v2353
    %2773 = vmatprep.subr.bf16.mxu0 %v2346
    %2774 = vmatpush2.bf16.msra.mxu0 %v2345
    %2775 = vmatprep.subr.bf16.mxu0 %v2338
    %2776 = vmatpush2.bf16.msra.mxu0 %v2337
    %2777 = vmatprep.subr.bf16.mxu0 %v2330
    %2778 = vmatpush2.bf16.msra.mxu0 %v2329
    %2779 = vmatprep.subr.bf16.mxu0 %v2322
    %2780 = vmatpush2.bf16.msra.mxu0 %v2321
    %2781 = vmatprep.subr.bf16.mxu0 %v2314
    %2782 = vmatpush2.bf16.msra.mxu0 %v2313
    %2783 = vmatprep.subr.bf16.mxu0 %v2306
    %2784 = vmatpush2.bf16.msra.mxu0 %v2305
    %2785 = vmatprep.mubr.bf16.mxu0 %v1214
    %2786 = vmatmul.mubr.bf16.gmra.mxu0 %v1213
    %v2787 = vpop.f32.mrf.mxu0
    %v2788 = vadd.f32 0.0, %v2787
    %v2789 = vpop.f32.mrf.mxu0
    %v2790 = vadd.f32 0.0, %v2789
    %v2791 = vpop.f32.mrf.mxu0
    %v2792 = vpop.f32.mrf.mxu0
    %2793 = vdwg.mxu0
    %2794 = vmatprep.subr.bf16.mxu0 %v2426
    %2795 = vmatpush1.bf16.msra.mxu0 %v2425
    %2796 = vmatprep.subr.bf16.mxu0 %v2418
    %2797 = vmatpush1.bf16.msra.mxu0 %v2417
    %2798 = vmatprep.subr.bf16.mxu0 %v2410
    %2799 = vmatpush1.bf16.msra.mxu0 %v2409
    %2800 = vmatprep.subr.bf16.mxu0 %v2402
    %2801 = vmatpush1.bf16.msra.mxu0 %v2401
    %2802 = vmatprep.subr.bf16.mxu0 %v2394
    %2803 = vmatpush1.bf16.msra.mxu0 %v2393
    %2804 = vmatprep.subr.bf16.mxu0 %v2386
    %2805 = vmatpush1.bf16.msra.mxu0 %v2385
    %2806 = vmatprep.subr.bf16.mxu0 %v2378
    %2807 = vmatpush1.bf16.msra.mxu0 %v2377
    %2808 = vmatprep.subr.bf16.mxu0 %v2370
    %2809 = vmatpush1.bf16.msra.mxu0 %v2369
    %2810 = vmatprep.subr.bf16.mxu0 %v2490
    %2811 = vmatpush2.bf16.msra.mxu0 %v2489
    %2812 = vmatprep.subr.bf16.mxu0 %v2482
    %2813 = vmatpush2.bf16.msra.mxu0 %v2481
    %2814 = vmatprep.subr.bf16.mxu0 %v2474
    %2815 = vmatpush2.bf16.msra.mxu0 %v2473
    %2816 = vmatprep.subr.bf16.mxu0 %v2466
    %2817 = vmatpush2.bf16.msra.mxu0 %v2465
    %2818 = vmatprep.subr.bf16.mxu0 %v2458
    %2819 = vmatpush2.bf16.msra.mxu0 %v2457
    %2820 = vmatprep.subr.bf16.mxu0 %v2450
    %2821 = vmatpush2.bf16.msra.mxu0 %v2449
    %2822 = vmatprep.subr.bf16.mxu0 %v2442
    %2823 = vmatpush2.bf16.msra.mxu0 %v2441
    %2824 = vmatprep.subr.bf16.mxu0 %v2434
    %2825 = vmatpush2.bf16.msra.mxu0 %v2433
    %2826 = vmatprep.mubr.bf16.mxu0 %v1216
    %2827 = vmatmul.mubr.bf16.gmra.mxu0 %v1215
    %v2828 = vpop.f32.mrf.mxu0
    %v2829 = vadd.f32 %v2788, %v2828
    %v2830 = vpop.f32.mrf.mxu0
    %v2831 = vadd.f32 %v2790, %v2830
    %v2832 = vpop.f32.mrf.mxu0
    %v2833 = vpop.f32.mrf.mxu0
    %2834 = vdwg.mxu0
    %2835 = vmatprep.subr.bf16.mxu0 %v2300
    %2836 = vmatpush1.bf16.msra.mxu0 %v2299
    %2837 = vmatprep.subr.bf16.mxu0 %v2292
    %2838 = vmatpush1.bf16.msra.mxu0 %v2291
    %2839 = vmatprep.subr.bf16.mxu0 %v2284
    %2840 = vmatpush1.bf16.msra.mxu0 %v2283
    %2841 = vmatprep.subr.bf16.mxu0 %v2276
    %2842 = vmatpush1.bf16.msra.mxu0 %v2275
    %2843 = vmatprep.subr.bf16.mxu0 %v2268
    %2844 = vmatpush1.bf16.msra.mxu0 %v2267
    %2845 = vmatprep.subr.bf16.mxu0 %v2260
    %2846 = vmatpush1.bf16.msra.mxu0 %v2259
    %2847 = vmatprep.subr.bf16.mxu0 %v2252
    %2848 = vmatpush1.bf16.msra.mxu0 %v2251
    %2849 = vmatprep.subr.bf16.mxu0 %v2244
    %2850 = vmatpush1.bf16.msra.mxu0 %v2243
    %2851 = vmatprep.subr.bf16.mxu0 %v2364
    %2852 = vmatpush2.bf16.msra.mxu0 %v2363
    %2853 = vmatprep.subr.bf16.mxu0 %v2356
    %2854 = vmatpush2.bf16.msra.mxu0 %v2355
    %2855 = vmatprep.subr.bf16.mxu0 %v2348
    %2856 = vmatpush2.bf16.msra.mxu0 %v2347
    %2857 = vmatprep.subr.bf16.mxu0 %v2340
    %2858 = vmatpush2.bf16.msra.mxu0 %v2339
    %2859 = vmatprep.subr.bf16.mxu0 %v2332
    %2860 = vmatpush2.bf16.msra.mxu0 %v2331
    %2861 = vmatprep.subr.bf16.mxu0 %v2324
    %2862 = vmatpush2.bf16.msra.mxu0 %v2323
    %2863 = vmatprep.subr.bf16.mxu0 %v2316
    %2864 = vmatpush2.bf16.msra.mxu0 %v2315
    %2865 = vmatprep.subr.bf16.mxu0 %v2308
    %2866 = vmatpush2.bf16.msra.mxu0 %v2307
    %2867 = vmatprep.mubr.bf16.mxu0 %v1214
    %2868 = vmatmul.mubr.bf16.gmra.mxu0 %v1213
    %v2869 = vpop.f32.mrf.mxu0
    %v2870 = vadd.f32 0.0, %v2869
    %v2871 = vpop.f32.mrf.mxu0
    %v2872 = vadd.f32 0.0, %v2871
    %v2873 = vpop.f32.mrf.mxu0
    %v2874 = vpop.f32.mrf.mxu0
    %2875 = vdwg.mxu0
    %2876 = vmatprep.subr.bf16.mxu0 %v2428
    %2877 = vmatpush1.bf16.msra.mxu0 %v2427
    %2878 = vmatprep.subr.bf16.mxu0 %v2420
    %2879 = vmatpush1.bf16.msra.mxu0 %v2419
    %2880 = vmatprep.subr.bf16.mxu0 %v2412
    %2881 = vmatpush1.bf16.msra.mxu0 %v2411
    %2882 = vmatprep.subr.bf16.mxu0 %v2404
    %2883 = vmatpush1.bf16.msra.mxu0 %v2403
    %2884 = vmatprep.subr.bf16.mxu0 %v2396
    %2885 = vmatpush1.bf16.msra.mxu0 %v2395
    %2886 = vmatprep.subr.bf16.mxu0 %v2388
    %2887 = vmatpush1.bf16.msra.mxu0 %v2387
    %2888 = vmatprep.subr.bf16.mxu0 %v2380
    %2889 = vmatpush1.bf16.msra.mxu0 %v2379
    %2890 = vmatprep.subr.bf16.mxu0 %v2372
    %2891 = vmatpush1.bf16.msra.mxu0 %v2371
    %2892 = vmatprep.subr.bf16.mxu0 %v2492
    %2893 = vmatpush2.bf16.msra.mxu0 %v2491
    %2894 = vmatprep.subr.bf16.mxu0 %v2484
    %2895 = vmatpush2.bf16.msra.mxu0 %v2483
    %2896 = vmatprep.subr.bf16.mxu0 %v2476
    %2897 = vmatpush2.bf16.msra.mxu0 %v2475
    %2898 = vmatprep.subr.bf16.mxu0 %v2468
    %2899 = vmatpush2.bf16.msra.mxu0 %v2467
    %2900 = vmatprep.subr.bf16.mxu0 %v2460
    %2901 = vmatpush2.bf16.msra.mxu0 %v2459
    %2902 = vmatprep.subr.bf16.mxu0 %v2452
    %2903 = vmatpush2.bf16.msra.mxu0 %v2451
    %2904 = vmatprep.subr.bf16.mxu0 %v2444
    %2905 = vmatpush2.bf16.msra.mxu0 %v2443
    %2906 = vmatprep.subr.bf16.mxu0 %v2436
    %2907 = vmatpush2.bf16.msra.mxu0 %v2435
    %2908 = vmatprep.mubr.bf16.mxu0 %v1216
    %2909 = vmatmul.mubr.bf16.gmra.mxu0 %v1215
    %v2910 = vpop.f32.mrf.mxu0
    %v2911 = vadd.f32 %v2870, %v2910
    %v2912 = vpop.f32.mrf.mxu0
    %v2913 = vadd.f32 %v2872, %v2912
    %v2914 = vpop.f32.mrf.mxu0
    %v2915 = vpop.f32.mrf.mxu0
    %2916 = vdwg.mxu0
    %2917 = vmatprep.subr.bf16.mxu0 %v2302
    %2918 = vmatpush1.bf16.msra.mxu0 %v2301
    %2919 = vmatprep.subr.bf16.mxu0 %v2294
    %2920 = vmatpush1.bf16.msra.mxu0 %v2293
    %2921 = vmatprep.subr.bf16.mxu0 %v2286
    %2922 = vmatpush1.bf16.msra.mxu0 %v2285
    %2923 = vmatprep.subr.bf16.mxu0 %v2278
    %2924 = vmatpush1.bf16.msra.mxu0 %v2277
    %2925 = vmatprep.subr.bf16.mxu0 %v2270
    %2926 = vmatpush1.bf16.msra.mxu0 %v2269
    %2927 = vmatprep.subr.bf16.mxu0 %v2262
    %2928 = vmatpush1.bf16.msra.mxu0 %v2261
    %2929 = vmatprep.subr.bf16.mxu0 %v2254
    %2930 = vmatpush1.bf16.msra.mxu0 %v2253
    %2931 = vmatprep.subr.bf16.mxu0 %v2246
    %2932 = vmatpush1.bf16.msra.mxu0 %v2245
    %2933 = vmatprep.subr.bf16.mxu0 %v2366
    %2934 = vmatpush2.bf16.msra.mxu0 %v2365
    %2935 = vmatprep.subr.bf16.mxu0 %v2358
    %2936 = vmatpush2.bf16.msra.mxu0 %v2357
    %2937 = vmatprep.subr.bf16.mxu0 %v2350
    %2938 = vmatpush2.bf16.msra.mxu0 %v2349
    %2939 = vmatprep.subr.bf16.mxu0 %v2342
    %2940 = vmatpush2.bf16.msra.mxu0 %v2341
    %2941 = vmatprep.subr.bf16.mxu0 %v2334
    %2942 = vmatpush2.bf16.msra.mxu0 %v2333
    %2943 = vmatprep.subr.bf16.mxu0 %v2326
    %2944 = vmatpush2.bf16.msra.mxu0 %v2325
    %2945 = vmatprep.subr.bf16.mxu0 %v2318
    %2946 = vmatpush2.bf16.msra.mxu0 %v2317
    %2947 = vmatprep.subr.bf16.mxu0 %v2310
    %2948 = vmatpush2.bf16.msra.mxu0 %v2309
    %2949 = vmatprep.mubr.bf16.mxu0 %v1214
    %2950 = vmatmul.mubr.bf16.gmra.mxu0 %v1213
    %v2951 = vpop.f32.mrf.mxu0
    %v2952 = vadd.f32 0.0, %v2951
    %v2953 = vpop.f32.mrf.mxu0
    %v2954 = vadd.f32 0.0, %v2953
    %v2955 = vpop.f32.mrf.mxu0
    %v2956 = vpop.f32.mrf.mxu0
    %2957 = vdwg.mxu0
    %2958 = vmatprep.subr.bf16.mxu0 %v2430
    %2959 = vmatpush1.bf16.msra.mxu0 %v2429
    %2960 = vmatprep.subr.bf16.mxu0 %v2422
    %2961 = vmatpush1.bf16.msra.mxu0 %v2421
    %2962 = vmatprep.subr.bf16.mxu0 %v2414
    %2963 = vmatpush1.bf16.msra.mxu0 %v2413
    %2964 = vmatprep.subr.bf16.mxu0 %v2406
    %2965 = vmatpush1.bf16.msra.mxu0 %v2405
    %2966 = vmatprep.subr.bf16.mxu0 %v2398
    %2967 = vmatpush1.bf16.msra.mxu0 %v2397
    %2968 = vmatprep.subr.bf16.mxu0 %v2390
    %2969 = vmatpush1.bf16.msra.mxu0 %v2389
    %2970 = vmatprep.subr.bf16.mxu0 %v2382
    %2971 = vmatpush1.bf16.msra.mxu0 %v2381
    %2972 = vmatprep.subr.bf16.mxu0 %v2374
    %2973 = vmatpush1.bf16.msra.mxu0 %v2373
    %2974 = vmatprep.subr.bf16.mxu0 %v2494
    %2975 = vmatpush2.bf16.msra.mxu0 %v2493
    %2976 = vmatprep.subr.bf16.mxu0 %v2486
    %2977 = vmatpush2.bf16.msra.mxu0 %v2485
    %2978 = vmatprep.subr.bf16.mxu0 %v2478
    %2979 = vmatpush2.bf16.msra.mxu0 %v2477
    %2980 = vmatprep.subr.bf16.mxu0 %v2470
    %2981 = vmatpush2.bf16.msra.mxu0 %v2469
    %2982 = vmatprep.subr.bf16.mxu0 %v2462
    %2983 = vmatpush2.bf16.msra.mxu0 %v2461
    %2984 = vmatprep.subr.bf16.mxu0 %v2454
    %2985 = vmatpush2.bf16.msra.mxu0 %v2453
    %2986 = vmatprep.subr.bf16.mxu0 %v2446
    %2987 = vmatpush2.bf16.msra.mxu0 %v2445
    %2988 = vmatprep.subr.bf16.mxu0 %v2438
    %2989 = vmatpush2.bf16.msra.mxu0 %v2437
    %2990 = vmatprep.mubr.bf16.mxu0 %v1216
    %2991 = vmatmul.mubr.bf16.gmra.mxu0 %v1215
    %v2992 = vpop.f32.mrf.mxu0
    %v2993 = vadd.f32 %v2952, %v2992
    %v2994 = vpop.f32.mrf.mxu0
    %v2995 = vadd.f32 %v2954, %v2994
    %v2996 = vpop.f32.mrf.mxu0
    %v2997 = vpop.f32.mrf.mxu0
    %2998 = vdwg.mxu0
    %2999 = vmatprep.subr.bf16.mxu0 %v2304
    %3000 = vmatpush1.bf16.msra.mxu0 %v2303
    %3001 = vmatprep.subr.bf16.mxu0 %v2296
    %3002 = vmatpush1.bf16.msra.mxu0 %v2295
    %3003 = vmatprep.subr.bf16.mxu0 %v2288
    %3004 = vmatpush1.bf16.msra.mxu0 %v2287
    %3005 = vmatprep.subr.bf16.mxu0 %v2280
    %3006 = vmatpush1.bf16.msra.mxu0 %v2279
    %3007 = vmatprep.subr.bf16.mxu0 %v2272
    %3008 = vmatpush1.bf16.msra.mxu0 %v2271
    %3009 = vmatprep.subr.bf16.mxu0 %v2264
    %3010 = vmatpush1.bf16.msra.mxu0 %v2263
    %3011 = vmatprep.subr.bf16.mxu0 %v2256
    %3012 = vmatpush1.bf16.msra.mxu0 %v2255
    %3013 = vmatprep.subr.bf16.mxu0 %v2248
    %3014 = vmatpush1.bf16.msra.mxu0 %v2247
    %3015 = vmatprep.subr.bf16.mxu0 %v2368
    %3016 = vmatpush2.bf16.msra.mxu0 %v2367
    %3017 = vmatprep.subr.bf16.mxu0 %v2360
    %3018 = vmatpush2.bf16.msra.mxu0 %v2359
    %3019 = vmatprep.subr.bf16.mxu0 %v2352
    %3020 = vmatpush2.bf16.msra.mxu0 %v2351
    %3021 = vmatprep.subr.bf16.mxu0 %v2344
    %3022 = vmatpush2.bf16.msra.mxu0 %v2343
    %3023 = vmatprep.subr.bf16.mxu0 %v2336
    %3024 = vmatpush2.bf16.msra.mxu0 %v2335
    %3025 = vmatprep.subr.bf16.mxu0 %v2328
    %3026 = vmatpush2.bf16.msra.mxu0 %v2327
    %3027 = vmatprep.subr.bf16.mxu0 %v2320
    %3028 = vmatpush2.bf16.msra.mxu0 %v2319
    %3029 = vmatprep.subr.bf16.mxu0 %v2312
    %3030 = vmatpush2.bf16.msra.mxu0 %v2311
    %3031 = vmatprep.mubr.bf16.mxu0 %v1214
    %3032 = vmatmul.mubr.bf16.gmra.mxu0 %v1213
    %v3033 = vpop.f32.mrf.mxu0
    %v3034 = vadd.f32 0.0, %v3033
    %v3035 = vpop.f32.mrf.mxu0
    %v3036 = vadd.f32 0.0, %v3035
    %v3037 = vpop.f32.mrf.mxu0
    %v3038 = vpop.f32.mrf.mxu0
    %3039 = vdwg.mxu0
    %3040 = vmatprep.subr.bf16.mxu0 %v2432
    %3041 = vmatpush1.bf16.msra.mxu0 %v2431
    %3042 = vmatprep.subr.bf16.mxu0 %v2424
    %3043 = vmatpush1.bf16.msra.mxu0 %v2423
    %3044 = vmatprep.subr.bf16.mxu0 %v2416
    %3045 = vmatpush1.bf16.msra.mxu0 %v2415
    %3046 = vmatprep.subr.bf16.mxu0 %v2408
    %3047 = vmatpush1.bf16.msra.mxu0 %v2407
    %3048 = vmatprep.subr.bf16.mxu0 %v2400
    %3049 = vmatpush1.bf16.msra.mxu0 %v2399
    %3050 = vmatprep.subr.bf16.mxu0 %v2392
    %3051 = vmatpush1.bf16.msra.mxu0 %v2391
    %3052 = vmatprep.subr.bf16.mxu0 %v2384
    %3053 = vmatpush1.bf16.msra.mxu0 %v2383
    %3054 = vmatprep.subr.bf16.mxu0 %v2376
    %3055 = vmatpush1.bf16.msra.mxu0 %v2375
    %3056 = vmatprep.subr.bf16.mxu0 %v2496
    %3057 = vmatpush2.bf16.msra.mxu0 %v2495
    %3058 = vmatprep.subr.bf16.mxu0 %v2488
    %3059 = vmatpush2.bf16.msra.mxu0 %v2487
    %3060 = vmatprep.subr.bf16.mxu0 %v2480
    %3061 = vmatpush2.bf16.msra.mxu0 %v2479
    %3062 = vmatprep.subr.bf16.mxu0 %v2472
    %3063 = vmatpush2.bf16.msra.mxu0 %v2471
    %3064 = vmatprep.subr.bf16.mxu0 %v2464
    %3065 = vmatpush2.bf16.msra.mxu0 %v2463
    %3066 = vmatprep.subr.bf16.mxu0 %v2456
    %3067 = vmatpush2.bf16.msra.mxu0 %v2455
    %3068 = vmatprep.subr.bf16.mxu0 %v2448
    %3069 = vmatpush2.bf16.msra.mxu0 %v2447
    %3070 = vmatprep.subr.bf16.mxu0 %v2440
    %3071 = vmatpush2.bf16.msra.mxu0 %v2439
    %3072 = vmatprep.mubr.bf16.mxu0 %v1216
    %3073 = vmatmul.mubr.bf16.gmra.mxu0 %v1215
    %v3074 = vpop.f32.mrf.mxu0
    %v3075 = vadd.f32 %v3034, %v3074
    %v3076 = vpop.f32.mrf.mxu0
    %v3077 = vadd.f32 %v3036, %v3076
    %v3078 = vpop.f32.mrf.mxu0
    %v3079 = vpop.f32.mrf.mxu0
    %3080 = vdwg.mxu0
    %v3081 = vadd.s32 %v233, 512
    %v3082 = vadd.s32 %v233, 520
    %v3083 = vadd.s32 %v233, 528
    %v3084 = vadd.s32 %v233, 536
    %v3085 = vadd.s32 %v233, 544
    %v3086 = vadd.s32 %v233, 552
    %v3087 = vadd.s32 %v233, 560
    %v3088 = vadd.s32 %v233, 568
    %v3089 = vadd.s32 %v233, 576
    %v3090 = vadd.s32 %v233, 584
    %v3091 = vadd.s32 %v233, 592
    %v3092 = vadd.s32 %v233, 600
    %v3093 = vadd.s32 %v233, 608
    %v3094 = vadd.s32 %v233, 616
    %v3095 = vadd.s32 %v233, 624
    %v3096 = vadd.s32 %v233, 632
    %v3097 = vadd.s32 %v233, 640
    %v3098 = vadd.s32 %v233, 648
    %v3099 = vadd.s32 %v233, 656
    %v3100 = vadd.s32 %v233, 664
    %v3101 = vadd.s32 %v233, 672
    %v3102 = vadd.s32 %v233, 680
    %v3103 = vadd.s32 %v233, 688
    %v3104 = vadd.s32 %v233, 696
    %v3105 = vadd.s32 %v233, 704
    %v3106 = vadd.s32 %v233, 712
    %v3107 = vadd.s32 %v233, 720
    %v3108 = vadd.s32 %v233, 728
    %v3109 = vadd.s32 %v233, 736
    %v3110 = vadd.s32 %v233, 744
    %v3111 = vadd.s32 %v233, 752
    %v3112 = vadd.s32 %v233, 760
    %v3113 = vadd.s32 %v233, 768
    %v3114 = vadd.s32 %v233, 776
    %v3115 = vadd.s32 %v233, 784
    %v3116 = vadd.s32 %v233, 792
    %v3117 = vadd.s32 %v233, 800
    %v3118 = vadd.s32 %v233, 808
    %v3119 = vadd.s32 %v233, 816
    %v3120 = vadd.s32 %v233, 824
    %v3121 = vadd.s32 %v233, 832
    %v3122 = vadd.s32 %v233, 840
    %v3123 = vadd.s32 %v233, 848
    %v3124 = vadd.s32 %v233, 856
    %v3125 = vadd.s32 %v233, 864
    %v3126 = vadd.s32 %v233, 872
    %v3127 = vadd.s32 %v233, 880
    %v3128 = vadd.s32 %v233, 888
    %v3129 = vadd.s32 %v233, 896
    %v3130 = vadd.s32 %v233, 904
    %v3131 = vadd.s32 %v233, 912
    %v3132 = vadd.s32 %v233, 920
    %v3133 = vadd.s32 %v233, 928
    %v3134 = vadd.s32 %v233, 936
    %v3135 = vadd.s32 %v233, 944
    %v3136 = vadd.s32 %v233, 952
    %v3137 = vadd.s32 %v233, 960
    %v3138 = vadd.s32 %v233, 968
    %v3139 = vadd.s32 %v233, 976
    %v3140 = vadd.s32 %v233, 984
    %v3141 = vadd.s32 %v233, 992
    %v3142 = vadd.s32 %v233, 1000
    %v3143 = vadd.s32 %v233, 1008
    %v3144 = vadd.s32 %v233, 1016
    %v3145 = vand.u32 %v233, 15
    %v3146 = vand.u32 %v234, 15
    %v3147 = vand.u32 %v235, 15
    %v3148 = vand.u32 %v236, 15
    %v3149 = vand.u32 %v237, 15
    %v3150 = vand.u32 %v238, 15
    %v3151 = vand.u32 %v239, 15
    %v3152 = vand.u32 %v240, 15
    %v3153 = vand.u32 %v241, 15
    %v3154 = vand.u32 %v242, 15
    %v3155 = vand.u32 %v243, 15
    %v3156 = vand.u32 %v244, 15
    %v3157 = vand.u32 %v245, 15
    %v3158 = vand.u32 %v246, 15
    %v3159 = vand.u32 %v247, 15
    %v3160 = vand.u32 %v248, 15
    %v3161 = vand.u32 %v249, 15
    %v3162 = vand.u32 %v250, 15
    %v3163 = vand.u32 %v251, 15
    %v3164 = vand.u32 %v252, 15
    %v3165 = vand.u32 %v253, 15
    %v3166 = vand.u32 %v254, 15
    %v3167 = vand.u32 %v255, 15
    %v3168 = vand.u32 %v256, 15
    %v3169 = vand.u32 %v257, 15
    %v3170 = vand.u32 %v258, 15
    %v3171 = vand.u32 %v259, 15
    %v3172 = vand.u32 %v260, 15
    %v3173 = vand.u32 %v261, 15
    %v3174 = vand.u32 %v262, 15
    %v3175 = vand.u32 %v263, 15
    %v3176 = vand.u32 %v264, 15
    %v3177 = vand.u32 %v265, 15
    %v3178 = vand.u32 %v266, 15
    %v3179 = vand.u32 %v267, 15
    %v3180 = vand.u32 %v268, 15
    %v3181 = vand.u32 %v269, 15
    %v3182 = vand.u32 %v270, 15
    %v3183 = vand.u32 %v271, 15
    %v3184 = vand.u32 %v272, 15
    %v3185 = vand.u32 %v273, 15
    %v3186 = vand.u32 %v274, 15
    %v3187 = vand.u32 %v275, 15
    %v3188 = vand.u32 %v276, 15
    %v3189 = vand.u32 %v277, 15
    %v3190 = vand.u32 %v278, 15
    %v3191 = vand.u32 %v279, 15
    %v3192 = vand.u32 %v280, 15
    %v3193 = vand.u32 %v281, 15
    %v3194 = vand.u32 %v282, 15
    %v3195 = vand.u32 %v283, 15
    %v3196 = vand.u32 %v284, 15
    %v3197 = vand.u32 %v285, 15
    %v3198 = vand.u32 %v286, 15
    %v3199 = vand.u32 %v287, 15
    %v3200 = vand.u32 %v288, 15
    %v3201 = vand.u32 %v289, 15
    %v3202 = vand.u32 %v290, 15
    %v3203 = vand.u32 %v291, 15
    %v3204 = vand.u32 %v292, 15
    %v3205 = vand.u32 %v293, 15
    %v3206 = vand.u32 %v294, 15
    %v3207 = vand.u32 %v295, 15
    %v3208 = vand.u32 %v296, 15
    %v3209 = vand.u32 %v3081, 15
    %v3210 = vand.u32 %v3082, 15
    %v3211 = vand.u32 %v3083, 15
    %v3212 = vand.u32 %v3084, 15
    %v3213 = vand.u32 %v3085, 15
    %v3214 = vand.u32 %v3086, 15
    %v3215 = vand.u32 %v3087, 15
    %v3216 = vand.u32 %v3088, 15
    %v3217 = vand.u32 %v3089, 15
    %v3218 = vand.u32 %v3090, 15
    %v3219 = vand.u32 %v3091, 15
    %v3220 = vand.u32 %v3092, 15
    %v3221 = vand.u32 %v3093, 15
    %v3222 = vand.u32 %v3094, 15
    %v3223 = vand.u32 %v3095, 15
    %v3224 = vand.u32 %v3096, 15
    %v3225 = vand.u32 %v3097, 15
    %v3226 = vand.u32 %v3098, 15
    %v3227 = vand.u32 %v3099, 15
    %v3228 = vand.u32 %v3100, 15
    %v3229 = vand.u32 %v3101, 15
    %v3230 = vand.u32 %v3102, 15
    %v3231 = vand.u32 %v3103, 15
    %v3232 = vand.u32 %v3104, 15
    %v3233 = vand.u32 %v3105, 15
    %v3234 = vand.u32 %v3106, 15
    %v3235 = vand.u32 %v3107, 15
    %v3236 = vand.u32 %v3108, 15
    %v3237 = vand.u32 %v3109, 15
    %v3238 = vand.u32 %v3110, 15
    %v3239 = vand.u32 %v3111, 15
    %v3240 = vand.u32 %v3112, 15
    %v3241 = vand.u32 %v3113, 15
    %v3242 = vand.u32 %v3114, 15
    %v3243 = vand.u32 %v3115, 15
    %v3244 = vand.u32 %v3116, 15
    %v3245 = vand.u32 %v3117, 15
    %v3246 = vand.u32 %v3118, 15
    %v3247 = vand.u32 %v3119, 15
    %v3248 = vand.u32 %v3120, 15
    %v3249 = vand.u32 %v3121, 15
    %v3250 = vand.u32 %v3122, 15
    %v3251 = vand.u32 %v3123, 15
    %v3252 = vand.u32 %v3124, 15
    %v3253 = vand.u32 %v3125, 15
    %v3254 = vand.u32 %v3126, 15
    %v3255 = vand.u32 %v3127, 15
    %v3256 = vand.u32 %v3128, 15
    %v3257 = vand.u32 %v3129, 15
    %v3258 = vand.u32 %v3130, 15
    %v3259 = vand.u32 %v3131, 15
    %v3260 = vand.u32 %v3132, 15
    %v3261 = vand.u32 %v3133, 15
    %v3262 = vand.u32 %v3134, 15
    %v3263 = vand.u32 %v3135, 15
    %v3264 = vand.u32 %v3136, 15
    %v3265 = vand.u32 %v3137, 15
    %v3266 = vand.u32 %v3138, 15
    %v3267 = vand.u32 %v3139, 15
    %v3268 = vand.u32 %v3140, 15
    %v3269 = vand.u32 %v3141, 15
    %v3270 = vand.u32 %v3142, 15
    %v3271 = vand.u32 %v3143, 15
    %v3272 = vand.u32 %v3144, 15
    %vm3273 = vcmp.eq.s32.totalorder %v3145, %v362
    %vm3274 = vcmp.eq.s32.totalorder %v3146, %v362
    %vm3275 = vcmp.eq.s32.totalorder %v3147, %v362
    %vm3276 = vcmp.eq.s32.totalorder %v3148, %v362
    %vm3277 = vcmp.eq.s32.totalorder %v3149, %v362
    %vm3278 = vcmp.eq.s32.totalorder %v3150, %v362
    %vm3279 = vcmp.eq.s32.totalorder %v3151, %v362
    %vm3280 = vcmp.eq.s32.totalorder %v3152, %v362
    %vm3281 = vcmp.eq.s32.totalorder %v3153, %v362
    %vm3282 = vcmp.eq.s32.totalorder %v3154, %v362
    %vm3283 = vcmp.eq.s32.totalorder %v3155, %v362
    %vm3284 = vcmp.eq.s32.totalorder %v3156, %v362
    %vm3285 = vcmp.eq.s32.totalorder %v3157, %v362
    %vm3286 = vcmp.eq.s32.totalorder %v3158, %v362
    %vm3287 = vcmp.eq.s32.totalorder %v3159, %v362
    %vm3288 = vcmp.eq.s32.totalorder %v3160, %v362
    %vm3289 = vcmp.eq.s32.totalorder %v3161, %v362
    %vm3290 = vcmp.eq.s32.totalorder %v3162, %v362
    %vm3291 = vcmp.eq.s32.totalorder %v3163, %v362
    %vm3292 = vcmp.eq.s32.totalorder %v3164, %v362
    %vm3293 = vcmp.eq.s32.totalorder %v3165, %v362
    %vm3294 = vcmp.eq.s32.totalorder %v3166, %v362
    %vm3295 = vcmp.eq.s32.totalorder %v3167, %v362
    %vm3296 = vcmp.eq.s32.totalorder %v3168, %v362
    %vm3297 = vcmp.eq.s32.totalorder %v3169, %v362
    %vm3298 = vcmp.eq.s32.totalorder %v3170, %v362
    %vm3299 = vcmp.eq.s32.totalorder %v3171, %v362
    %vm3300 = vcmp.eq.s32.totalorder %v3172, %v362
    %vm3301 = vcmp.eq.s32.totalorder %v3173, %v362
    %vm3302 = vcmp.eq.s32.totalorder %v3174, %v362
    %vm3303 = vcmp.eq.s32.totalorder %v3175, %v362
    %vm3304 = vcmp.eq.s32.totalorder %v3176, %v362
    %vm3305 = vcmp.eq.s32.totalorder %v3177, %v362
    %vm3306 = vcmp.eq.s32.totalorder %v3178, %v362
    %vm3307 = vcmp.eq.s32.totalorder %v3179, %v362
    %vm3308 = vcmp.eq.s32.totalorder %v3180, %v362
    %vm3309 = vcmp.eq.s32.totalorder %v3181, %v362
    %vm3310 = vcmp.eq.s32.totalorder %v3182, %v362
    %vm3311 = vcmp.eq.s32.totalorder %v3183, %v362
    %vm3312 = vcmp.eq.s32.totalorder %v3184, %v362
    %vm3313 = vcmp.eq.s32.totalorder %v3185, %v362
    %vm3314 = vcmp.eq.s32.totalorder %v3186, %v362
    %vm3315 = vcmp.eq.s32.totalorder %v3187, %v362
    %vm3316 = vcmp.eq.s32.totalorder %v3188, %v362
    %vm3317 = vcmp.eq.s32.totalorder %v3189, %v362
    %vm3318 = vcmp.eq.s32.totalorder %v3190, %v362
    %vm3319 = vcmp.eq.s32.totalorder %v3191, %v362
    %vm3320 = vcmp.eq.s32.totalorder %v3192, %v362
    %vm3321 = vcmp.eq.s32.totalorder %v3193, %v362
    %vm3322 = vcmp.eq.s32.totalorder %v3194, %v362
    %vm3323 = vcmp.eq.s32.totalorder %v3195, %v362
    %vm3324 = vcmp.eq.s32.totalorder %v3196, %v362
    %vm3325 = vcmp.eq.s32.totalorder %v3197, %v362
    %vm3326 = vcmp.eq.s32.totalorder %v3198, %v362
    %vm3327 = vcmp.eq.s32.totalorder %v3199, %v362
    %vm3328 = vcmp.eq.s32.totalorder %v3200, %v362
    %vm3329 = vcmp.eq.s32.totalorder %v3201, %v362
    %vm3330 = vcmp.eq.s32.totalorder %v3202, %v362
    %vm3331 = vcmp.eq.s32.totalorder %v3203, %v362
    %vm3332 = vcmp.eq.s32.totalorder %v3204, %v362
    %vm3333 = vcmp.eq.s32.totalorder %v3205, %v362
    %vm3334 = vcmp.eq.s32.totalorder %v3206, %v362
    %vm3335 = vcmp.eq.s32.totalorder %v3207, %v362
    %vm3336 = vcmp.eq.s32.totalorder %v3208, %v362
    %vm3337 = vcmp.eq.s32.totalorder %v3209, %v362
    %vm3338 = vcmp.eq.s32.totalorder %v3210, %v362
    %vm3339 = vcmp.eq.s32.totalorder %v3211, %v362
    %vm3340 = vcmp.eq.s32.totalorder %v3212, %v362
    %vm3341 = vcmp.eq.s32.totalorder %v3213, %v362
    %vm3342 = vcmp.eq.s32.totalorder %v3214, %v362
    %vm3343 = vcmp.eq.s32.totalorder %v3215, %v362
    %vm3344 = vcmp.eq.s32.totalorder %v3216, %v362
    %vm3345 = vcmp.eq.s32.totalorder %v3217, %v362
    %vm3346 = vcmp.eq.s32.totalorder %v3218, %v362
    %vm3347 = vcmp.eq.s32.totalorder %v3219, %v362
    %vm3348 = vcmp.eq.s32.totalorder %v3220, %v362
    %vm3349 = vcmp.eq.s32.totalorder %v3221, %v362
    %vm3350 = vcmp.eq.s32.totalorder %v3222, %v362
    %vm3351 = vcmp.eq.s32.totalorder %v3223, %v362
    %vm3352 = vcmp.eq.s32.totalorder %v3224, %v362
    %vm3353 = vcmp.eq.s32.totalorder %v3225, %v362
    %vm3354 = vcmp.eq.s32.totalorder %v3226, %v362
    %vm3355 = vcmp.eq.s32.totalorder %v3227, %v362
    %vm3356 = vcmp.eq.s32.totalorder %v3228, %v362
    %vm3357 = vcmp.eq.s32.totalorder %v3229, %v362
    %vm3358 = vcmp.eq.s32.totalorder %v3230, %v362
    %vm3359 = vcmp.eq.s32.totalorder %v3231, %v362
    %vm3360 = vcmp.eq.s32.totalorder %v3232, %v362
    %vm3361 = vcmp.eq.s32.totalorder %v3233, %v362
    %vm3362 = vcmp.eq.s32.totalorder %v3234, %v362
    %vm3363 = vcmp.eq.s32.totalorder %v3235, %v362
    %vm3364 = vcmp.eq.s32.totalorder %v3236, %v362
    %vm3365 = vcmp.eq.s32.totalorder %v3237, %v362
    %vm3366 = vcmp.eq.s32.totalorder %v3238, %v362
    %vm3367 = vcmp.eq.s32.totalorder %v3239, %v362
    %vm3368 = vcmp.eq.s32.totalorder %v3240, %v362
    %vm3369 = vcmp.eq.s32.totalorder %v3241, %v362
    %vm3370 = vcmp.eq.s32.totalorder %v3242, %v362
    %vm3371 = vcmp.eq.s32.totalorder %v3243, %v362
    %vm3372 = vcmp.eq.s32.totalorder %v3244, %v362
    %vm3373 = vcmp.eq.s32.totalorder %v3245, %v362
    %vm3374 = vcmp.eq.s32.totalorder %v3246, %v362
    %vm3375 = vcmp.eq.s32.totalorder %v3247, %v362
    %vm3376 = vcmp.eq.s32.totalorder %v3248, %v362
    %vm3377 = vcmp.eq.s32.totalorder %v3249, %v362
    %vm3378 = vcmp.eq.s32.totalorder %v3250, %v362
    %vm3379 = vcmp.eq.s32.totalorder %v3251, %v362
    %vm3380 = vcmp.eq.s32.totalorder %v3252, %v362
    %vm3381 = vcmp.eq.s32.totalorder %v3253, %v362
    %vm3382 = vcmp.eq.s32.totalorder %v3254, %v362
    %vm3383 = vcmp.eq.s32.totalorder %v3255, %v362
    %vm3384 = vcmp.eq.s32.totalorder %v3256, %v362
    %vm3385 = vcmp.eq.s32.totalorder %v3257, %v362
    %vm3386 = vcmp.eq.s32.totalorder %v3258, %v362
    %vm3387 = vcmp.eq.s32.totalorder %v3259, %v362
    %vm3388 = vcmp.eq.s32.totalorder %v3260, %v362
    %vm3389 = vcmp.eq.s32.totalorder %v3261, %v362
    %vm3390 = vcmp.eq.s32.totalorder %v3262, %v362
    %vm3391 = vcmp.eq.s32.totalorder %v3263, %v362
    %vm3392 = vcmp.eq.s32.totalorder %v3264, %v362
    %vm3393 = vcmp.eq.s32.totalorder %v3265, %v362
    %vm3394 = vcmp.eq.s32.totalorder %v3266, %v362
    %vm3395 = vcmp.eq.s32.totalorder %v3267, %v362
    %vm3396 = vcmp.eq.s32.totalorder %v3268, %v362
    %vm3397 = vcmp.eq.s32.totalorder %v3269, %v362
    %vm3398 = vcmp.eq.s32.totalorder %v3270, %v362
    %vm3399 = vcmp.eq.s32.totalorder %v3271, %v362
    %vm3400 = vcmp.eq.s32.totalorder %v3272, %v362
    %v3401 = vsel %vm3273, 1.0, 0.0
    %v3402 = vsel %vm3274, 1.0, 0.0
    %v3403 = vsel %vm3275, 1.0, 0.0
    %v3404 = vsel %vm3276, 1.0, 0.0
    %v3405 = vsel %vm3277, 1.0, 0.0
    %v3406 = vsel %vm3278, 1.0, 0.0
    %v3407 = vsel %vm3279, 1.0, 0.0
    %v3408 = vsel %vm3280, 1.0, 0.0
    %v3409 = vsel %vm3281, 1.0, 0.0
    %v3410 = vsel %vm3282, 1.0, 0.0
    %v3411 = vsel %vm3283, 1.0, 0.0
    %v3412 = vsel %vm3284, 1.0, 0.0
    %v3413 = vsel %vm3285, 1.0, 0.0
    %v3414 = vsel %vm3286, 1.0, 0.0
    %v3415 = vsel %vm3287, 1.0, 0.0
    %v3416 = vsel %vm3288, 1.0, 0.0
    %v3417 = vsel %vm3289, 1.0, 0.0
    %v3418 = vsel %vm3290, 1.0, 0.0
    %v3419 = vsel %vm3291, 1.0, 0.0
    %v3420 = vsel %vm3292, 1.0, 0.0
    %v3421 = vsel %vm3293, 1.0, 0.0
    %v3422 = vsel %vm3294, 1.0, 0.0
    %v3423 = vsel %vm3295, 1.0, 0.0
    %v3424 = vsel %vm3296, 1.0, 0.0
    %v3425 = vsel %vm3297, 1.0, 0.0
    %v3426 = vsel %vm3298, 1.0, 0.0
    %v3427 = vsel %vm3299, 1.0, 0.0
    %v3428 = vsel %vm3300, 1.0, 0.0
    %v3429 = vsel %vm3301, 1.0, 0.0
    %v3430 = vsel %vm3302, 1.0, 0.0
    %v3431 = vsel %vm3303, 1.0, 0.0
    %v3432 = vsel %vm3304, 1.0, 0.0
    %v3433 = vsel %vm3305, 1.0, 0.0
    %v3434 = vsel %vm3306, 1.0, 0.0
    %v3435 = vsel %vm3307, 1.0, 0.0
    %v3436 = vsel %vm3308, 1.0, 0.0
    %v3437 = vsel %vm3309, 1.0, 0.0
    %v3438 = vsel %vm3310, 1.0, 0.0
    %v3439 = vsel %vm3311, 1.0, 0.0
    %v3440 = vsel %vm3312, 1.0, 0.0
    %v3441 = vsel %vm3313, 1.0, 0.0
    %v3442 = vsel %vm3314, 1.0, 0.0
    %v3443 = vsel %vm3315, 1.0, 0.0
    %v3444 = vsel %vm3316, 1.0, 0.0
    %v3445 = vsel %vm3317, 1.0, 0.0
    %v3446 = vsel %vm3318, 1.0, 0.0
    %v3447 = vsel %vm3319, 1.0, 0.0
    %v3448 = vsel %vm3320, 1.0, 0.0
    %v3449 = vsel %vm3321, 1.0, 0.0
    %v3450 = vsel %vm3322, 1.0, 0.0
    %v3451 = vsel %vm3323, 1.0, 0.0
    %v3452 = vsel %vm3324, 1.0, 0.0
    %v3453 = vsel %vm3325, 1.0, 0.0
    %v3454 = vsel %vm3326, 1.0, 0.0
    %v3455 = vsel %vm3327, 1.0, 0.0
    %v3456 = vsel %vm3328, 1.0, 0.0
    %v3457 = vsel %vm3329, 1.0, 0.0
    %v3458 = vsel %vm3330, 1.0, 0.0
    %v3459 = vsel %vm3331, 1.0, 0.0
    %v3460 = vsel %vm3332, 1.0, 0.0
    %v3461 = vsel %vm3333, 1.0, 0.0
    %v3462 = vsel %vm3334, 1.0, 0.0
    %v3463 = vsel %vm3335, 1.0, 0.0
    %v3464 = vsel %vm3336, 1.0, 0.0
    %v3465 = vsel %vm3337, 1.0, 0.0
    %v3466 = vsel %vm3338, 1.0, 0.0
    %v3467 = vsel %vm3339, 1.0, 0.0
    %v3468 = vsel %vm3340, 1.0, 0.0
    %v3469 = vsel %vm3341, 1.0, 0.0
    %v3470 = vsel %vm3342, 1.0, 0.0
    %v3471 = vsel %vm3343, 1.0, 0.0
    %v3472 = vsel %vm3344, 1.0, 0.0
    %v3473 = vsel %vm3345, 1.0, 0.0
    %v3474 = vsel %vm3346, 1.0, 0.0
    %v3475 = vsel %vm3347, 1.0, 0.0
    %v3476 = vsel %vm3348, 1.0, 0.0
    %v3477 = vsel %vm3349, 1.0, 0.0
    %v3478 = vsel %vm3350, 1.0, 0.0
    %v3479 = vsel %vm3351, 1.0, 0.0
    %v3480 = vsel %vm3352, 1.0, 0.0
    %v3481 = vsel %vm3353, 1.0, 0.0
    %v3482 = vsel %vm3354, 1.0, 0.0
    %v3483 = vsel %vm3355, 1.0, 0.0
    %v3484 = vsel %vm3356, 1.0, 0.0
    %v3485 = vsel %vm3357, 1.0, 0.0
    %v3486 = vsel %vm3358, 1.0, 0.0
    %v3487 = vsel %vm3359, 1.0, 0.0
    %v3488 = vsel %vm3360, 1.0, 0.0
    %v3489 = vsel %vm3361, 1.0, 0.0
    %v3490 = vsel %vm3362, 1.0, 0.0
    %v3491 = vsel %vm3363, 1.0, 0.0
    %v3492 = vsel %vm3364, 1.0, 0.0
    %v3493 = vsel %vm3365, 1.0, 0.0
    %v3494 = vsel %vm3366, 1.0, 0.0
    %v3495 = vsel %vm3367, 1.0, 0.0
    %v3496 = vsel %vm3368, 1.0, 0.0
    %v3497 = vsel %vm3369, 1.0, 0.0
    %v3498 = vsel %vm3370, 1.0, 0.0
    %v3499 = vsel %vm3371, 1.0, 0.0
    %v3500 = vsel %vm3372, 1.0, 0.0
    %v3501 = vsel %vm3373, 1.0, 0.0
    %v3502 = vsel %vm3374, 1.0, 0.0
    %v3503 = vsel %vm3375, 1.0, 0.0
    %v3504 = vsel %vm3376, 1.0, 0.0
    %v3505 = vsel %vm3377, 1.0, 0.0
    %v3506 = vsel %vm3378, 1.0, 0.0
    %v3507 = vsel %vm3379, 1.0, 0.0
    %v3508 = vsel %vm3380, 1.0, 0.0
    %v3509 = vsel %vm3381, 1.0, 0.0
    %v3510 = vsel %vm3382, 1.0, 0.0
    %v3511 = vsel %vm3383, 1.0, 0.0
    %v3512 = vsel %vm3384, 1.0, 0.0
    %v3513 = vsel %vm3385, 1.0, 0.0
    %v3514 = vsel %vm3386, 1.0, 0.0
    %v3515 = vsel %vm3387, 1.0, 0.0
    %v3516 = vsel %vm3388, 1.0, 0.0
    %v3517 = vsel %vm3389, 1.0, 0.0
    %v3518 = vsel %vm3390, 1.0, 0.0
    %v3519 = vsel %vm3391, 1.0, 0.0
    %v3520 = vsel %vm3392, 1.0, 0.0
    %v3521 = vsel %vm3393, 1.0, 0.0
    %v3522 = vsel %vm3394, 1.0, 0.0
    %v3523 = vsel %vm3395, 1.0, 0.0
    %v3524 = vsel %vm3396, 1.0, 0.0
    %v3525 = vsel %vm3397, 1.0, 0.0
    %v3526 = vsel %vm3398, 1.0, 0.0
    %v3527 = vsel %vm3399, 1.0, 0.0
    %v3528 = vsel %vm3400, 1.0, 0.0
    %v3529 = vadd.s32 %v362, 512
    %v3530 = vadd.s32 %v362, 640
    %v3531 = vadd.s32 %v362, 768
    %v3532 = vadd.s32 %v362, 896
    %v3533 = vand.u32 %v362, 15
    %v3534 = vand.u32 %v491, 15
    %v3535 = vand.u32 %v492, 15
    %v3536 = vand.u32 %v493, 15
    %v3537 = vand.u32 %v3529, 15
    %v3538 = vand.u32 %v3530, 15
    %v3539 = vand.u32 %v3531, 15
    %v3540 = vand.u32 %v3532, 15
    %vm3541 = vcmp.eq.s32.totalorder %v3533, %v233
    %vm3542 = vcmp.eq.s32.totalorder %v3534, %v233
    %vm3543 = vcmp.eq.s32.totalorder %v3535, %v233
    %vm3544 = vcmp.eq.s32.totalorder %v3536, %v233
    %vm3545 = vcmp.eq.s32.totalorder %v3537, %v233
    %vm3546 = vcmp.eq.s32.totalorder %v3538, %v233
    %vm3547 = vcmp.eq.s32.totalorder %v3539, %v233
    %vm3548 = vcmp.eq.s32.totalorder %v3540, %v233
    %vm3549 = vcmp.eq.s32.totalorder %v3533, %v234
    %vm3550 = vcmp.eq.s32.totalorder %v3534, %v234
    %vm3551 = vcmp.eq.s32.totalorder %v3535, %v234
    %vm3552 = vcmp.eq.s32.totalorder %v3536, %v234
    %vm3553 = vcmp.eq.s32.totalorder %v3537, %v234
    %vm3554 = vcmp.eq.s32.totalorder %v3538, %v234
    %vm3555 = vcmp.eq.s32.totalorder %v3539, %v234
    %vm3556 = vcmp.eq.s32.totalorder %v3540, %v234
    %v3557 = vsel %vm3541, 1.0, 0.0
    %v3558 = vsel %vm3542, 1.0, 0.0
    %v3559 = vsel %vm3543, 1.0, 0.0
    %v3560 = vsel %vm3544, 1.0, 0.0
    %v3561 = vsel %vm3545, 1.0, 0.0
    %v3562 = vsel %vm3546, 1.0, 0.0
    %v3563 = vsel %vm3547, 1.0, 0.0
    %v3564 = vsel %vm3548, 1.0, 0.0
    %v3565 = vsel %vm3549, 1.0, 0.0
    %v3566 = vsel %vm3550, 1.0, 0.0
    %v3567 = vsel %vm3551, 1.0, 0.0
    %v3568 = vsel %vm3552, 1.0, 0.0
    %v3569 = vsel %vm3553, 1.0, 0.0
    %v3570 = vsel %vm3554, 1.0, 0.0
    %v3571 = vsel %vm3555, 1.0, 0.0
    %v3572 = vsel %vm3556, 1.0, 0.0
    %v3573 = vsel %vm137, %v2829, 0.0
    %v3574 = vrot.slane %v3573, 4
    %v3575 = vadd.f32 %v3573, %v3574
    %v3576 = vrot.slane %v3575, 2
    %v3577 = vadd.f32 %v3575, %v3576
    %v3578 = vrot.slane %v3577, 1
    %v3579 = vadd.f32 %v3577, %v3578
    %v3580 = vsel %vm137, %v2831, 0.0
    %v3581 = vrot.slane %v3580, 4
    %v3582 = vadd.f32 %v3580, %v3581
    %v3583 = vrot.slane %v3582, 2
    %v3584 = vadd.f32 %v3582, %v3583
    %v3585 = vrot.slane %v3584, 1
    %v3586 = vadd.f32 %v3584, %v3585
    %v3587 = vsel %vm137, %v2911, 0.0
    %v3588 = vrot.slane %v3587, 4
    %v3589 = vadd.f32 %v3587, %v3588
    %v3590 = vrot.slane %v3589, 2
    %v3591 = vadd.f32 %v3589, %v3590
    %v3592 = vrot.slane %v3591, 1
    %v3593 = vadd.f32 %v3591, %v3592
    %v3594 = vsel %vm137, %v2913, 0.0
    %v3595 = vrot.slane %v3594, 4
    %v3596 = vadd.f32 %v3594, %v3595
    %v3597 = vrot.slane %v3596, 2
    %v3598 = vadd.f32 %v3596, %v3597
    %v3599 = vrot.slane %v3598, 1
    %v3600 = vadd.f32 %v3598, %v3599
    %v3601 = vsel %vm137, %v2993, 0.0
    %v3602 = vrot.slane %v3601, 4
    %v3603 = vadd.f32 %v3601, %v3602
    %v3604 = vrot.slane %v3603, 2
    %v3605 = vadd.f32 %v3603, %v3604
    %v3606 = vrot.slane %v3605, 1
    %v3607 = vadd.f32 %v3605, %v3606
    %v3608 = vsel %vm137, %v2995, 0.0
    %v3609 = vrot.slane %v3608, 4
    %v3610 = vadd.f32 %v3608, %v3609
    %v3611 = vrot.slane %v3610, 2
    %v3612 = vadd.f32 %v3610, %v3611
    %v3613 = vrot.slane %v3612, 1
    %v3614 = vadd.f32 %v3612, %v3613
    %v3615 = vsel %vm137, %v3075, 0.0
    %v3616 = vrot.slane %v3615, 4
    %v3617 = vadd.f32 %v3615, %v3616
    %v3618 = vrot.slane %v3617, 2
    %v3619 = vadd.f32 %v3617, %v3618
    %v3620 = vrot.slane %v3619, 1
    %v3621 = vadd.f32 %v3619, %v3620
    %v3622 = vsel %vm137, %v3077, 0.0
    %v3623 = vrot.slane %v3622, 4
    %v3624 = vadd.f32 %v3622, %v3623
    %v3625 = vrot.slane %v3624, 2
    %v3626 = vadd.f32 %v3624, %v3625
    %v3627 = vrot.slane %v3626, 1
    %v3628 = vadd.f32 %v3626, %v3627
    %3629 = vmatprep.subr.mxu0 0.0
    %3630 = vmatpush1.msra.mxu0 %v3416
    %3631 = vmatprep.subr.mxu0 0.0
    %3632 = vmatpush1.msra.mxu0 %v3415
    %3633 = vmatprep.subr.mxu0 0.0
    %3634 = vmatpush1.msra.mxu0 %v3414
    %3635 = vmatprep.subr.mxu0 0.0
    %3636 = vmatpush1.msra.mxu0 %v3413
    %3637 = vmatprep.subr.mxu0 0.0
    %3638 = vmatpush1.msra.mxu0 %v3412
    %3639 = vmatprep.subr.mxu0 0.0
    %3640 = vmatpush1.msra.mxu0 %v3411
    %3641 = vmatprep.subr.mxu0 0.0
    %3642 = vmatpush1.msra.mxu0 %v3410
    %3643 = vmatprep.subr.mxu0 0.0
    %3644 = vmatpush1.msra.mxu0 %v3409
    %3645 = vmatprep.subr.mxu0 0.0
    %3646 = vmatpush1.msra.mxu0 %v3408
    %3647 = vmatprep.subr.mxu0 0.0
    %3648 = vmatpush1.msra.mxu0 %v3407
    %3649 = vmatprep.subr.mxu0 0.0
    %3650 = vmatpush1.msra.mxu0 %v3406
    %3651 = vmatprep.subr.mxu0 0.0
    %3652 = vmatpush1.msra.mxu0 %v3405
    %3653 = vmatprep.subr.mxu0 0.0
    %3654 = vmatpush1.msra.mxu0 %v3404
    %3655 = vmatprep.subr.mxu0 0.0
    %3656 = vmatpush1.msra.mxu0 %v3403
    %3657 = vmatprep.subr.mxu0 0.0
    %3658 = vmatpush1.msra.mxu0 %v3402
    %3659 = vmatprep.subr.mxu0 0.0
    %3660 = vmatpush1.msra.mxu0 %v3401
    %3661 = vmatprep.subr.mxu0 0.0
    %3662 = vmatpush2.msra.mxu0 %v3432
    %3663 = vmatprep.subr.mxu0 0.0
    %3664 = vmatpush2.msra.mxu0 %v3431
    %3665 = vmatprep.subr.mxu0 0.0
    %3666 = vmatpush2.msra.mxu0 %v3430
    %3667 = vmatprep.subr.mxu0 0.0
    %3668 = vmatpush2.msra.mxu0 %v3429
    %3669 = vmatprep.subr.mxu0 0.0
    %3670 = vmatpush2.msra.mxu0 %v3428
    %3671 = vmatprep.subr.mxu0 0.0
    %3672 = vmatpush2.msra.mxu0 %v3427
    %3673 = vmatprep.subr.mxu0 0.0
    %3674 = vmatpush2.msra.mxu0 %v3426
    %3675 = vmatprep.subr.mxu0 0.0
    %3676 = vmatpush2.msra.mxu0 %v3425
    %3677 = vmatprep.subr.mxu0 0.0
    %3678 = vmatpush2.msra.mxu0 %v3424
    %3679 = vmatprep.subr.mxu0 0.0
    %3680 = vmatpush2.msra.mxu0 %v3423
    %3681 = vmatprep.subr.mxu0 0.0
    %3682 = vmatpush2.msra.mxu0 %v3422
    %3683 = vmatprep.subr.mxu0 0.0
    %3684 = vmatpush2.msra.mxu0 %v3421
    %3685 = vmatprep.subr.mxu0 0.0
    %3686 = vmatpush2.msra.mxu0 %v3420
    %3687 = vmatprep.subr.mxu0 0.0
    %3688 = vmatpush2.msra.mxu0 %v3419
    %3689 = vmatprep.subr.mxu0 0.0
    %3690 = vmatpush2.msra.mxu0 %v3418
    %3691 = vmatprep.subr.mxu0 0.0
    %3692 = vmatpush2.msra.mxu0 %v3417
    %3693 = vmatprep.mubr.f32.mxu0 %v3586
    %3694 = vmatmul.mubr.f32.gmra.mxu0 %v3579
    %v3695 = vpop.f32.mrf.mxu0
    %v3696 = vadd.f32 0.0, %v3695
    %v3697 = vpop.f32.mrf.mxu0
    %3698 = vdwg.mxu0
    %3699 = vmatprep.subr.mxu0 0.0
    %3700 = vmatpush1.msra.mxu0 %v3448
    %3701 = vmatprep.subr.mxu0 0.0
    %3702 = vmatpush1.msra.mxu0 %v3447
    %3703 = vmatprep.subr.mxu0 0.0
    %3704 = vmatpush1.msra.mxu0 %v3446
    %3705 = vmatprep.subr.mxu0 0.0
    %3706 = vmatpush1.msra.mxu0 %v3445
    %3707 = vmatprep.subr.mxu0 0.0
    %3708 = vmatpush1.msra.mxu0 %v3444
    %3709 = vmatprep.subr.mxu0 0.0
    %3710 = vmatpush1.msra.mxu0 %v3443
    %3711 = vmatprep.subr.mxu0 0.0
    %3712 = vmatpush1.msra.mxu0 %v3442
    %3713 = vmatprep.subr.mxu0 0.0
    %3714 = vmatpush1.msra.mxu0 %v3441
    %3715 = vmatprep.subr.mxu0 0.0
    %3716 = vmatpush1.msra.mxu0 %v3440
    %3717 = vmatprep.subr.mxu0 0.0
    %3718 = vmatpush1.msra.mxu0 %v3439
    %3719 = vmatprep.subr.mxu0 0.0
    %3720 = vmatpush1.msra.mxu0 %v3438
    %3721 = vmatprep.subr.mxu0 0.0
    %3722 = vmatpush1.msra.mxu0 %v3437
    %3723 = vmatprep.subr.mxu0 0.0
    %3724 = vmatpush1.msra.mxu0 %v3436
    %3725 = vmatprep.subr.mxu0 0.0
    %3726 = vmatpush1.msra.mxu0 %v3435
    %3727 = vmatprep.subr.mxu0 0.0
    %3728 = vmatpush1.msra.mxu0 %v3434
    %3729 = vmatprep.subr.mxu0 0.0
    %3730 = vmatpush1.msra.mxu0 %v3433
    %3731 = vmatprep.subr.mxu0 0.0
    %3732 = vmatpush2.msra.mxu0 %v3464
    %3733 = vmatprep.subr.mxu0 0.0
    %3734 = vmatpush2.msra.mxu0 %v3463
    %3735 = vmatprep.subr.mxu0 0.0
    %3736 = vmatpush2.msra.mxu0 %v3462
    %3737 = vmatprep.subr.mxu0 0.0
    %3738 = vmatpush2.msra.mxu0 %v3461
    %3739 = vmatprep.subr.mxu0 0.0
    %3740 = vmatpush2.msra.mxu0 %v3460
    %3741 = vmatprep.subr.mxu0 0.0
    %3742 = vmatpush2.msra.mxu0 %v3459
    %3743 = vmatprep.subr.mxu0 0.0
    %3744 = vmatpush2.msra.mxu0 %v3458
    %3745 = vmatprep.subr.mxu0 0.0
    %3746 = vmatpush2.msra.mxu0 %v3457
    %3747 = vmatprep.subr.mxu0 0.0
    %3748 = vmatpush2.msra.mxu0 %v3456
    %3749 = vmatprep.subr.mxu0 0.0
    %3750 = vmatpush2.msra.mxu0 %v3455
    %3751 = vmatprep.subr.mxu0 0.0
    %3752 = vmatpush2.msra.mxu0 %v3454
    %3753 = vmatprep.subr.mxu0 0.0
    %3754 = vmatpush2.msra.mxu0 %v3453
    %3755 = vmatprep.subr.mxu0 0.0
    %3756 = vmatpush2.msra.mxu0 %v3452
    %3757 = vmatprep.subr.mxu0 0.0
    %3758 = vmatpush2.msra.mxu0 %v3451
    %3759 = vmatprep.subr.mxu0 0.0
    %3760 = vmatpush2.msra.mxu0 %v3450
    %3761 = vmatprep.subr.mxu0 0.0
    %3762 = vmatpush2.msra.mxu0 %v3449
    %3763 = vmatprep.mubr.f32.mxu0 %v3600
    %3764 = vmatmul.mubr.f32.gmra.mxu0 %v3593
    %v3765 = vpop.f32.mrf.mxu0
    %v3766 = vadd.f32 %v3696, %v3765
    %v3767 = vpop.f32.mrf.mxu0
    %3768 = vdwg.mxu0
    %3769 = vmatprep.subr.mxu0 0.0
    %3770 = vmatpush1.msra.mxu0 %v3480
    %3771 = vmatprep.subr.mxu0 0.0
    %3772 = vmatpush1.msra.mxu0 %v3479
    %3773 = vmatprep.subr.mxu0 0.0
    %3774 = vmatpush1.msra.mxu0 %v3478
    %3775 = vmatprep.subr.mxu0 0.0
    %3776 = vmatpush1.msra.mxu0 %v3477
    %3777 = vmatprep.subr.mxu0 0.0
    %3778 = vmatpush1.msra.mxu0 %v3476
    %3779 = vmatprep.subr.mxu0 0.0
    %3780 = vmatpush1.msra.mxu0 %v3475
    %3781 = vmatprep.subr.mxu0 0.0
    %3782 = vmatpush1.msra.mxu0 %v3474
    %3783 = vmatprep.subr.mxu0 0.0
    %3784 = vmatpush1.msra.mxu0 %v3473
    %3785 = vmatprep.subr.mxu0 0.0
    %3786 = vmatpush1.msra.mxu0 %v3472
    %3787 = vmatprep.subr.mxu0 0.0
    %3788 = vmatpush1.msra.mxu0 %v3471
    %3789 = vmatprep.subr.mxu0 0.0
    %3790 = vmatpush1.msra.mxu0 %v3470
    %3791 = vmatprep.subr.mxu0 0.0
    %3792 = vmatpush1.msra.mxu0 %v3469
    %3793 = vmatprep.subr.mxu0 0.0
    %3794 = vmatpush1.msra.mxu0 %v3468
    %3795 = vmatprep.subr.mxu0 0.0
    %3796 = vmatpush1.msra.mxu0 %v3467
    %3797 = vmatprep.subr.mxu0 0.0
    %3798 = vmatpush1.msra.mxu0 %v3466
    %3799 = vmatprep.subr.mxu0 0.0
    %3800 = vmatpush1.msra.mxu0 %v3465
    %3801 = vmatprep.subr.mxu0 0.0
    %3802 = vmatpush2.msra.mxu0 %v3496
    %3803 = vmatprep.subr.mxu0 0.0
    %3804 = vmatpush2.msra.mxu0 %v3495
    %3805 = vmatprep.subr.mxu0 0.0
    %3806 = vmatpush2.msra.mxu0 %v3494
    %3807 = vmatprep.subr.mxu0 0.0
    %3808 = vmatpush2.msra.mxu0 %v3493
    %3809 = vmatprep.subr.mxu0 0.0
    %3810 = vmatpush2.msra.mxu0 %v3492
    %3811 = vmatprep.subr.mxu0 0.0
    %3812 = vmatpush2.msra.mxu0 %v3491
    %3813 = vmatprep.subr.mxu0 0.0
    %3814 = vmatpush2.msra.mxu0 %v3490
    %3815 = vmatprep.subr.mxu0 0.0
    %3816 = vmatpush2.msra.mxu0 %v3489
    %3817 = vmatprep.subr.mxu0 0.0
    %3818 = vmatpush2.msra.mxu0 %v3488
    %3819 = vmatprep.subr.mxu0 0.0
    %3820 = vmatpush2.msra.mxu0 %v3487
    %3821 = vmatprep.subr.mxu0 0.0
    %3822 = vmatpush2.msra.mxu0 %v3486
    %3823 = vmatprep.subr.mxu0 0.0
    %3824 = vmatpush2.msra.mxu0 %v3485
    %3825 = vmatprep.subr.mxu0 0.0
    %3826 = vmatpush2.msra.mxu0 %v3484
    %3827 = vmatprep.subr.mxu0 0.0
    %3828 = vmatpush2.msra.mxu0 %v3483
    %3829 = vmatprep.subr.mxu0 0.0
    %3830 = vmatpush2.msra.mxu0 %v3482
    %3831 = vmatprep.subr.mxu0 0.0
    %3832 = vmatpush2.msra.mxu0 %v3481
    %3833 = vmatprep.mubr.f32.mxu0 %v3614
    %3834 = vmatmul.mubr.f32.gmra.mxu0 %v3607
    %v3835 = vpop.f32.mrf.mxu0
    %v3836 = vadd.f32 %v3766, %v3835
    %v3837 = vpop.f32.mrf.mxu0
    %3838 = vdwg.mxu0
    %3839 = vmatprep.subr.mxu0 0.0
    %3840 = vmatpush1.msra.mxu0 %v3512
    %3841 = vmatprep.subr.mxu0 0.0
    %3842 = vmatpush1.msra.mxu0 %v3511
    %3843 = vmatprep.subr.mxu0 0.0
    %3844 = vmatpush1.msra.mxu0 %v3510
    %3845 = vmatprep.subr.mxu0 0.0
    %3846 = vmatpush1.msra.mxu0 %v3509
    %3847 = vmatprep.subr.mxu0 0.0
    %3848 = vmatpush1.msra.mxu0 %v3508
    %3849 = vmatprep.subr.mxu0 0.0
    %3850 = vmatpush1.msra.mxu0 %v3507
    %3851 = vmatprep.subr.mxu0 0.0
    %3852 = vmatpush1.msra.mxu0 %v3506
    %3853 = vmatprep.subr.mxu0 0.0
    %3854 = vmatpush1.msra.mxu0 %v3505
    %3855 = vmatprep.subr.mxu0 0.0
    %3856 = vmatpush1.msra.mxu0 %v3504
    %3857 = vmatprep.subr.mxu0 0.0
    %3858 = vmatpush1.msra.mxu0 %v3503
    %3859 = vmatprep.subr.mxu0 0.0
    %3860 = vmatpush1.msra.mxu0 %v3502
    %3861 = vmatprep.subr.mxu0 0.0
    %3862 = vmatpush1.msra.mxu0 %v3501
    %3863 = vmatprep.subr.mxu0 0.0
    %3864 = vmatpush1.msra.mxu0 %v3500
    %3865 = vmatprep.subr.mxu0 0.0
    %3866 = vmatpush1.msra.mxu0 %v3499
    %3867 = vmatprep.subr.mxu0 0.0
    %3868 = vmatpush1.msra.mxu0 %v3498
    %3869 = vmatprep.subr.mxu0 0.0
    %3870 = vmatpush1.msra.mxu0 %v3497
    %3871 = vmatprep.subr.mxu0 0.0
    %3872 = vmatpush2.msra.mxu0 %v3528
    %3873 = vmatprep.subr.mxu0 0.0
    %3874 = vmatpush2.msra.mxu0 %v3527
    %3875 = vmatprep.subr.mxu0 0.0
    %3876 = vmatpush2.msra.mxu0 %v3526
    %3877 = vmatprep.subr.mxu0 0.0
    %3878 = vmatpush2.msra.mxu0 %v3525
    %3879 = vmatprep.subr.mxu0 0.0
    %3880 = vmatpush2.msra.mxu0 %v3524
    %3881 = vmatprep.subr.mxu0 0.0
    %3882 = vmatpush2.msra.mxu0 %v3523
    %3883 = vmatprep.subr.mxu0 0.0
    %3884 = vmatpush2.msra.mxu0 %v3522
    %3885 = vmatprep.subr.mxu0 0.0
    %3886 = vmatpush2.msra.mxu0 %v3521
    %3887 = vmatprep.subr.mxu0 0.0
    %3888 = vmatpush2.msra.mxu0 %v3520
    %3889 = vmatprep.subr.mxu0 0.0
    %3890 = vmatpush2.msra.mxu0 %v3519
    %3891 = vmatprep.subr.mxu0 0.0
    %3892 = vmatpush2.msra.mxu0 %v3518
    %3893 = vmatprep.subr.mxu0 0.0
    %3894 = vmatpush2.msra.mxu0 %v3517
    %3895 = vmatprep.subr.mxu0 0.0
    %3896 = vmatpush2.msra.mxu0 %v3516
    %3897 = vmatprep.subr.mxu0 0.0
    %3898 = vmatpush2.msra.mxu0 %v3515
    %3899 = vmatprep.subr.mxu0 0.0
    %3900 = vmatpush2.msra.mxu0 %v3514
    %3901 = vmatprep.subr.mxu0 0.0
    %3902 = vmatpush2.msra.mxu0 %v3513
    %3903 = vmatprep.mubr.f32.mxu0 %v3628
    %3904 = vmatmul.mubr.f32.gmra.mxu0 %v3621
    %v3905 = vpop.f32.mrf.mxu0
    %v3906 = vadd.f32 %v3836, %v3905
    %v3907 = vpop.f32.mrf.mxu0
    %3908 = vdwg.mxu0
    %v3909 = vmul.f32 %v2829, %v2829
    %v3910 = vmul.f32 %v2831, %v2831
    %v3911 = vmul.f32 %v2911, %v2911
    %v3912 = vmul.f32 %v2913, %v2913
    %v3913 = vmul.f32 %v2993, %v2993
    %v3914 = vmul.f32 %v2995, %v2995
    %v3915 = vmul.f32 %v3075, %v3075
    %v3916 = vmul.f32 %v3077, %v3077
    %v3917 = vsel %vm137, %v3909, 0.0
    %v3918 = vrot.slane %v3917, 4
    %v3919 = vadd.f32 %v3917, %v3918
    %v3920 = vrot.slane %v3919, 2
    %v3921 = vadd.f32 %v3919, %v3920
    %v3922 = vrot.slane %v3921, 1
    %v3923 = vadd.f32 %v3921, %v3922
    %v3924 = vsel %vm137, %v3910, 0.0
    %v3925 = vrot.slane %v3924, 4
    %v3926 = vadd.f32 %v3924, %v3925
    %v3927 = vrot.slane %v3926, 2
    %v3928 = vadd.f32 %v3926, %v3927
    %v3929 = vrot.slane %v3928, 1
    %v3930 = vadd.f32 %v3928, %v3929
    %v3931 = vsel %vm137, %v3911, 0.0
    %v3932 = vrot.slane %v3931, 4
    %v3933 = vadd.f32 %v3931, %v3932
    %v3934 = vrot.slane %v3933, 2
    %v3935 = vadd.f32 %v3933, %v3934
    %v3936 = vrot.slane %v3935, 1
    %v3937 = vadd.f32 %v3935, %v3936
    %v3938 = vsel %vm137, %v3912, 0.0
    %v3939 = vrot.slane %v3938, 4
    %v3940 = vadd.f32 %v3938, %v3939
    %v3941 = vrot.slane %v3940, 2
    %v3942 = vadd.f32 %v3940, %v3941
    %v3943 = vrot.slane %v3942, 1
    %v3944 = vadd.f32 %v3942, %v3943
    %v3945 = vsel %vm137, %v3913, 0.0
    %v3946 = vrot.slane %v3945, 4
    %v3947 = vadd.f32 %v3945, %v3946
    %v3948 = vrot.slane %v3947, 2
    %v3949 = vadd.f32 %v3947, %v3948
    %v3950 = vrot.slane %v3949, 1
    %v3951 = vadd.f32 %v3949, %v3950
    %v3952 = vsel %vm137, %v3914, 0.0
    %v3953 = vrot.slane %v3952, 4
    %v3954 = vadd.f32 %v3952, %v3953
    %v3955 = vrot.slane %v3954, 2
    %v3956 = vadd.f32 %v3954, %v3955
    %v3957 = vrot.slane %v3956, 1
    %v3958 = vadd.f32 %v3956, %v3957
    %v3959 = vsel %vm137, %v3915, 0.0
    %v3960 = vrot.slane %v3959, 4
    %v3961 = vadd.f32 %v3959, %v3960
    %v3962 = vrot.slane %v3961, 2
    %v3963 = vadd.f32 %v3961, %v3962
    %v3964 = vrot.slane %v3963, 1
    %v3965 = vadd.f32 %v3963, %v3964
    %v3966 = vsel %vm137, %v3916, 0.0
    %v3967 = vrot.slane %v3966, 4
    %v3968 = vadd.f32 %v3966, %v3967
    %v3969 = vrot.slane %v3968, 2
    %v3970 = vadd.f32 %v3968, %v3969
    %v3971 = vrot.slane %v3970, 1
    %v3972 = vadd.f32 %v3970, %v3971
    %3973 = vmatprep.subr.mxu0 0.0
    %3974 = vmatpush1.msra.mxu0 %v3416
    %3975 = vmatprep.subr.mxu0 0.0
    %3976 = vmatpush1.msra.mxu0 %v3415
    %3977 = vmatprep.subr.mxu0 0.0
    %3978 = vmatpush1.msra.mxu0 %v3414
    %3979 = vmatprep.subr.mxu0 0.0
    %3980 = vmatpush1.msra.mxu0 %v3413
    %3981 = vmatprep.subr.mxu0 0.0
    %3982 = vmatpush1.msra.mxu0 %v3412
    %3983 = vmatprep.subr.mxu0 0.0
    %3984 = vmatpush1.msra.mxu0 %v3411
    %3985 = vmatprep.subr.mxu0 0.0
    %3986 = vmatpush1.msra.mxu0 %v3410
    %3987 = vmatprep.subr.mxu0 0.0
    %3988 = vmatpush1.msra.mxu0 %v3409
    %3989 = vmatprep.subr.mxu0 0.0
    %3990 = vmatpush1.msra.mxu0 %v3408
    %3991 = vmatprep.subr.mxu0 0.0
    %3992 = vmatpush1.msra.mxu0 %v3407
    %3993 = vmatprep.subr.mxu0 0.0
    %3994 = vmatpush1.msra.mxu0 %v3406
    %3995 = vmatprep.subr.mxu0 0.0
    %3996 = vmatpush1.msra.mxu0 %v3405
    %3997 = vmatprep.subr.mxu0 0.0
    %3998 = vmatpush1.msra.mxu0 %v3404
    %3999 = vmatprep.subr.mxu0 0.0
    %4000 = vmatpush1.msra.mxu0 %v3403
    %4001 = vmatprep.subr.mxu0 0.0
    %4002 = vmatpush1.msra.mxu0 %v3402
    %4003 = vmatprep.subr.mxu0 0.0
    %4004 = vmatpush1.msra.mxu0 %v3401
    %4005 = vmatprep.subr.mxu0 0.0
    %4006 = vmatpush2.msra.mxu0 %v3432
    %4007 = vmatprep.subr.mxu0 0.0
    %4008 = vmatpush2.msra.mxu0 %v3431
    %4009 = vmatprep.subr.mxu0 0.0
    %4010 = vmatpush2.msra.mxu0 %v3430
    %4011 = vmatprep.subr.mxu0 0.0
    %4012 = vmatpush2.msra.mxu0 %v3429
    %4013 = vmatprep.subr.mxu0 0.0
    %4014 = vmatpush2.msra.mxu0 %v3428
    %4015 = vmatprep.subr.mxu0 0.0
    %4016 = vmatpush2.msra.mxu0 %v3427
    %4017 = vmatprep.subr.mxu0 0.0
    %4018 = vmatpush2.msra.mxu0 %v3426
    %4019 = vmatprep.subr.mxu0 0.0
    %4020 = vmatpush2.msra.mxu0 %v3425
    %4021 = vmatprep.subr.mxu0 0.0
    %4022 = vmatpush2.msra.mxu0 %v3424
    %4023 = vmatprep.subr.mxu0 0.0
    %4024 = vmatpush2.msra.mxu0 %v3423
    %4025 = vmatprep.subr.mxu0 0.0
    %4026 = vmatpush2.msra.mxu0 %v3422
    %4027 = vmatprep.subr.mxu0 0.0
    %4028 = vmatpush2.msra.mxu0 %v3421
    %4029 = vmatprep.subr.mxu0 0.0
    %4030 = vmatpush2.msra.mxu0 %v3420
    %4031 = vmatprep.subr.mxu0 0.0
    %4032 = vmatpush2.msra.mxu0 %v3419
    %4033 = vmatprep.subr.mxu0 0.0
    %4034 = vmatpush2.msra.mxu0 %v3418
    %4035 = vmatprep.subr.mxu0 0.0
    %4036 = vmatpush2.msra.mxu0 %v3417
    %4037 = vmatprep.mubr.f32.mxu0 %v3930
    %4038 = vmatmul.mubr.f32.gmra.mxu0 %v3923
    %v4039 = vpop.f32.mrf.mxu0
    %v4040 = vadd.f32 0.0, %v4039
    %v4041 = vpop.f32.mrf.mxu0
    %4042 = vdwg.mxu0
    %4043 = vmatprep.subr.mxu0 0.0
    %4044 = vmatpush1.msra.mxu0 %v3448
    %4045 = vmatprep.subr.mxu0 0.0
    %4046 = vmatpush1.msra.mxu0 %v3447
    %4047 = vmatprep.subr.mxu0 0.0
    %4048 = vmatpush1.msra.mxu0 %v3446
    %4049 = vmatprep.subr.mxu0 0.0
    %4050 = vmatpush1.msra.mxu0 %v3445
    %4051 = vmatprep.subr.mxu0 0.0
    %4052 = vmatpush1.msra.mxu0 %v3444
    %4053 = vmatprep.subr.mxu0 0.0
    %4054 = vmatpush1.msra.mxu0 %v3443
    %4055 = vmatprep.subr.mxu0 0.0
    %4056 = vmatpush1.msra.mxu0 %v3442
    %4057 = vmatprep.subr.mxu0 0.0
    %4058 = vmatpush1.msra.mxu0 %v3441
    %4059 = vmatprep.subr.mxu0 0.0
    %4060 = vmatpush1.msra.mxu0 %v3440
    %4061 = vmatprep.subr.mxu0 0.0
    %4062 = vmatpush1.msra.mxu0 %v3439
    %4063 = vmatprep.subr.mxu0 0.0
    %4064 = vmatpush1.msra.mxu0 %v3438
    %4065 = vmatprep.subr.mxu0 0.0
    %4066 = vmatpush1.msra.mxu0 %v3437
    %4067 = vmatprep.subr.mxu0 0.0
    %4068 = vmatpush1.msra.mxu0 %v3436
    %4069 = vmatprep.subr.mxu0 0.0
    %4070 = vmatpush1.msra.mxu0 %v3435
    %4071 = vmatprep.subr.mxu0 0.0
    %4072 = vmatpush1.msra.mxu0 %v3434
    %4073 = vmatprep.subr.mxu0 0.0
    %4074 = vmatpush1.msra.mxu0 %v3433
    %4075 = vmatprep.subr.mxu0 0.0
    %4076 = vmatpush2.msra.mxu0 %v3464
    %4077 = vmatprep.subr.mxu0 0.0
    %4078 = vmatpush2.msra.mxu0 %v3463
    %4079 = vmatprep.subr.mxu0 0.0
    %4080 = vmatpush2.msra.mxu0 %v3462
    %4081 = vmatprep.subr.mxu0 0.0
    %4082 = vmatpush2.msra.mxu0 %v3461
    %4083 = vmatprep.subr.mxu0 0.0
    %4084 = vmatpush2.msra.mxu0 %v3460
    %4085 = vmatprep.subr.mxu0 0.0
    %4086 = vmatpush2.msra.mxu0 %v3459
    %4087 = vmatprep.subr.mxu0 0.0
    %4088 = vmatpush2.msra.mxu0 %v3458
    %4089 = vmatprep.subr.mxu0 0.0
    %4090 = vmatpush2.msra.mxu0 %v3457
    %4091 = vmatprep.subr.mxu0 0.0
    %4092 = vmatpush2.msra.mxu0 %v3456
    %4093 = vmatprep.subr.mxu0 0.0
    %4094 = vmatpush2.msra.mxu0 %v3455
    %4095 = vmatprep.subr.mxu0 0.0
    %4096 = vmatpush2.msra.mxu0 %v3454
    %4097 = vmatprep.subr.mxu0 0.0
    %4098 = vmatpush2.msra.mxu0 %v3453
    %4099 = vmatprep.subr.mxu0 0.0
    %4100 = vmatpush2.msra.mxu0 %v3452
    %4101 = vmatprep.subr.mxu0 0.0
    %4102 = vmatpush2.msra.mxu0 %v3451
    %4103 = vmatprep.subr.mxu0 0.0
    %4104 = vmatpush2.msra.mxu0 %v3450
    %4105 = vmatprep.subr.mxu0 0.0
    %4106 = vmatpush2.msra.mxu0 %v3449
    %4107 = vmatprep.mubr.f32.mxu0 %v3944
    %4108 = vmatmul.mubr.f32.gmra.mxu0 %v3937
    %v4109 = vpop.f32.mrf.mxu0
    %v4110 = vadd.f32 %v4040, %v4109
    %v4111 = vpop.f32.mrf.mxu0
    %4112 = vdwg.mxu0
    %4113 = vmatprep.subr.mxu0 0.0
    %4114 = vmatpush1.msra.mxu0 %v3480
    %4115 = vmatprep.subr.mxu0 0.0
    %4116 = vmatpush1.msra.mxu0 %v3479
    %4117 = vmatprep.subr.mxu0 0.0
    %4118 = vmatpush1.msra.mxu0 %v3478
    %4119 = vmatprep.subr.mxu0 0.0
    %4120 = vmatpush1.msra.mxu0 %v3477
    %4121 = vmatprep.subr.mxu0 0.0
    %4122 = vmatpush1.msra.mxu0 %v3476
    %4123 = vmatprep.subr.mxu0 0.0
    %4124 = vmatpush1.msra.mxu0 %v3475
    %4125 = vmatprep.subr.mxu0 0.0
    %4126 = vmatpush1.msra.mxu0 %v3474
    %4127 = vmatprep.subr.mxu0 0.0
    %4128 = vmatpush1.msra.mxu0 %v3473
    %4129 = vmatprep.subr.mxu0 0.0
    %4130 = vmatpush1.msra.mxu0 %v3472
    %4131 = vmatprep.subr.mxu0 0.0
    %4132 = vmatpush1.msra.mxu0 %v3471
    %4133 = vmatprep.subr.mxu0 0.0
    %4134 = vmatpush1.msra.mxu0 %v3470
    %4135 = vmatprep.subr.mxu0 0.0
    %4136 = vmatpush1.msra.mxu0 %v3469
    %4137 = vmatprep.subr.mxu0 0.0
    %4138 = vmatpush1.msra.mxu0 %v3468
    %4139 = vmatprep.subr.mxu0 0.0
    %4140 = vmatpush1.msra.mxu0 %v3467
    %4141 = vmatprep.subr.mxu0 0.0
    %4142 = vmatpush1.msra.mxu0 %v3466
    %4143 = vmatprep.subr.mxu0 0.0
    %4144 = vmatpush1.msra.mxu0 %v3465
    %4145 = vmatprep.subr.mxu0 0.0
    %4146 = vmatpush2.msra.mxu0 %v3496
    %4147 = vmatprep.subr.mxu0 0.0
    %4148 = vmatpush2.msra.mxu0 %v3495
    %4149 = vmatprep.subr.mxu0 0.0
    %4150 = vmatpush2.msra.mxu0 %v3494
    %4151 = vmatprep.subr.mxu0 0.0
    %4152 = vmatpush2.msra.mxu0 %v3493
    %4153 = vmatprep.subr.mxu0 0.0
    %4154 = vmatpush2.msra.mxu0 %v3492
    %4155 = vmatprep.subr.mxu0 0.0
    %4156 = vmatpush2.msra.mxu0 %v3491
    %4157 = vmatprep.subr.mxu0 0.0
    %4158 = vmatpush2.msra.mxu0 %v3490
    %4159 = vmatprep.subr.mxu0 0.0
    %4160 = vmatpush2.msra.mxu0 %v3489
    %4161 = vmatprep.subr.mxu0 0.0
    %4162 = vmatpush2.msra.mxu0 %v3488
    %4163 = vmatprep.subr.mxu0 0.0
    %4164 = vmatpush2.msra.mxu0 %v3487
    %4165 = vmatprep.subr.mxu0 0.0
    %4166 = vmatpush2.msra.mxu0 %v3486
    %4167 = vmatprep.subr.mxu0 0.0
    %4168 = vmatpush2.msra.mxu0 %v3485
    %4169 = vmatprep.subr.mxu0 0.0
    %4170 = vmatpush2.msra.mxu0 %v3484
    %4171 = vmatprep.subr.mxu0 0.0
    %4172 = vmatpush2.msra.mxu0 %v3483
    %4173 = vmatprep.subr.mxu0 0.0
    %4174 = vmatpush2.msra.mxu0 %v3482
    %4175 = vmatprep.subr.mxu0 0.0
    %4176 = vmatpush2.msra.mxu0 %v3481
    %4177 = vmatprep.mubr.f32.mxu0 %v3958
    %4178 = vmatmul.mubr.f32.gmra.mxu0 %v3951
    %v4179 = vpop.f32.mrf.mxu0
    %v4180 = vadd.f32 %v4110, %v4179
    %v4181 = vpop.f32.mrf.mxu0
    %4182 = vdwg.mxu0
    %4183 = vmatprep.subr.mxu0 0.0
    %4184 = vmatpush1.msra.mxu0 %v3512
    %4185 = vmatprep.subr.mxu0 0.0
    %4186 = vmatpush1.msra.mxu0 %v3511
    %4187 = vmatprep.subr.mxu0 0.0
    %4188 = vmatpush1.msra.mxu0 %v3510
    %4189 = vmatprep.subr.mxu0 0.0
    %4190 = vmatpush1.msra.mxu0 %v3509
    %4191 = vmatprep.subr.mxu0 0.0
    %4192 = vmatpush1.msra.mxu0 %v3508
    %4193 = vmatprep.subr.mxu0 0.0
    %4194 = vmatpush1.msra.mxu0 %v3507
    %4195 = vmatprep.subr.mxu0 0.0
    %4196 = vmatpush1.msra.mxu0 %v3506
    %4197 = vmatprep.subr.mxu0 0.0
    %4198 = vmatpush1.msra.mxu0 %v3505
    %4199 = vmatprep.subr.mxu0 0.0
    %4200 = vmatpush1.msra.mxu0 %v3504
    %4201 = vmatprep.subr.mxu0 0.0
    %4202 = vmatpush1.msra.mxu0 %v3503
    %4203 = vmatprep.subr.mxu0 0.0
    %4204 = vmatpush1.msra.mxu0 %v3502
    %4205 = vmatprep.subr.mxu0 0.0
    %4206 = vmatpush1.msra.mxu0 %v3501
    %4207 = vmatprep.subr.mxu0 0.0
    %4208 = vmatpush1.msra.mxu0 %v3500
    %4209 = vmatprep.subr.mxu0 0.0
    %4210 = vmatpush1.msra.mxu0 %v3499
    %4211 = vmatprep.subr.mxu0 0.0
    %4212 = vmatpush1.msra.mxu0 %v3498
    %4213 = vmatprep.subr.mxu0 0.0
    %4214 = vmatpush1.msra.mxu0 %v3497
    %4215 = vmatprep.subr.mxu0 0.0
    %4216 = vmatpush2.msra.mxu0 %v3528
    %4217 = vmatprep.subr.mxu0 0.0
    %4218 = vmatpush2.msra.mxu0 %v3527
    %4219 = vmatprep.subr.mxu0 0.0
    %4220 = vmatpush2.msra.mxu0 %v3526
    %4221 = vmatprep.subr.mxu0 0.0
    %4222 = vmatpush2.msra.mxu0 %v3525
    %4223 = vmatprep.subr.mxu0 0.0
    %4224 = vmatpush2.msra.mxu0 %v3524
    %4225 = vmatprep.subr.mxu0 0.0
    %4226 = vmatpush2.msra.mxu0 %v3523
    %4227 = vmatprep.subr.mxu0 0.0
    %4228 = vmatpush2.msra.mxu0 %v3522
    %4229 = vmatprep.subr.mxu0 0.0
    %4230 = vmatpush2.msra.mxu0 %v3521
    %4231 = vmatprep.subr.mxu0 0.0
    %4232 = vmatpush2.msra.mxu0 %v3520
    %4233 = vmatprep.subr.mxu0 0.0
    %4234 = vmatpush2.msra.mxu0 %v3519
    %4235 = vmatprep.subr.mxu0 0.0
    %4236 = vmatpush2.msra.mxu0 %v3518
    %4237 = vmatprep.subr.mxu0 0.0
    %4238 = vmatpush2.msra.mxu0 %v3517
    %4239 = vmatprep.subr.mxu0 0.0
    %4240 = vmatpush2.msra.mxu0 %v3516
    %4241 = vmatprep.subr.mxu0 0.0
    %4242 = vmatpush2.msra.mxu0 %v3515
    %4243 = vmatprep.subr.mxu0 0.0
    %4244 = vmatpush2.msra.mxu0 %v3514
    %4245 = vmatprep.subr.mxu0 0.0
    %4246 = vmatpush2.msra.mxu0 %v3513
    %4247 = vmatprep.mubr.f32.mxu0 %v3972
    %4248 = vmatmul.mubr.f32.gmra.mxu0 %v3965
    %v4249 = vpop.f32.mrf.mxu0
    %v4250 = vadd.f32 %v4180, %v4249
    %v4251 = vpop.f32.mrf.mxu0
    %4252 = vdwg.mxu0
    %v4253 = vmul.f32 %v3906, 0.0078125
    %v4254 = vmul.f32 %v4250, 0.0078125
    %v4255 = vmul.f32 %v4253, %v4253
    %v4256 = vsub.f32 %v4254, %v4255
    %v4257 = vmax.f32 %v4256, 0.0
    %v4258 = vadd.f32 %v4257, 1e-05
    %v4259 = vrsqrt.pop %v4258
    %vm4260 = vcmask 130048
    %v4262 = vsel %vm4260, %v4259, 0
    %4264 = vmatprep.subr.mxu0 0.0
    %4265 = vmatpush1.msra.mxu0 0.0
    %4266 = vmatprep.subr.mxu0 0.0
    %4267 = vmatpush1.msra.mxu0 0.0
    %4268 = vmatprep.subr.mxu0 0.0
    %4269 = vmatpush1.msra.mxu0 0.0
    %4270 = vmatprep.subr.mxu0 0.0
    %4271 = vmatpush1.msra.mxu0 0.0
    %4272 = vmatprep.subr.mxu0 0.0
    %4273 = vmatpush1.msra.mxu0 0.0
    %4274 = vmatprep.subr.mxu0 0.0
    %4275 = vmatpush1.msra.mxu0 0.0
    %4276 = vmatprep.subr.mxu0 0.0
    %4277 = vmatpush1.msra.mxu0 0.0
    %4278 = vmatprep.subr.mxu0 0.0
    %4279 = vmatpush1.msra.mxu0 0.0
    %4280 = vmatprep.subr.mxu0 0.0
    %4281 = vmatpush1.msra.mxu0 0.0
    %4282 = vmatprep.subr.mxu0 0.0
    %4283 = vmatpush1.msra.mxu0 0.0
    %4284 = vmatprep.subr.mxu0 0.0
    %4285 = vmatpush1.msra.mxu0 0.0
    %4286 = vmatprep.subr.mxu0 0.0
    %4287 = vmatpush1.msra.mxu0 0.0
    %4288 = vmatprep.subr.mxu0 0.0
    %4289 = vmatpush1.msra.mxu0 0.0
    %4290 = vmatprep.subr.mxu0 0.0
    %4291 = vmatpush1.msra.mxu0 0.0
    %4292 = vmatprep.subr.mxu0 %v3566
    %4293 = vmatpush1.msra.mxu0 %v3565
    %4294 = vmatprep.subr.mxu0 %v3558
    %4295 = vmatpush1.msra.mxu0 %v3557
    %4296 = vmatprep.subr.mxu0 0.0
    %4297 = vmatpush2.msra.mxu0 0.0
    %4298 = vmatprep.subr.mxu0 0.0
    %4299 = vmatpush2.msra.mxu0 0.0
    %4300 = vmatprep.subr.mxu0 0.0
    %4301 = vmatpush2.msra.mxu0 0.0
    %4302 = vmatprep.subr.mxu0 0.0
    %4303 = vmatpush2.msra.mxu0 0.0
    %4304 = vmatprep.subr.mxu0 0.0
    %4305 = vmatpush2.msra.mxu0 0.0
    %4306 = vmatprep.subr.mxu0 0.0
    %4307 = vmatpush2.msra.mxu0 0.0
    %4308 = vmatprep.subr.mxu0 0.0
    %4309 = vmatpush2.msra.mxu0 0.0
    %4310 = vmatprep.subr.mxu0 0.0
    %4311 = vmatpush2.msra.mxu0 0.0
    %4312 = vmatprep.subr.mxu0 0.0
    %4313 = vmatpush2.msra.mxu0 0.0
    %4314 = vmatprep.subr.mxu0 0.0
    %4315 = vmatpush2.msra.mxu0 0.0
    %4316 = vmatprep.subr.mxu0 0.0
    %4317 = vmatpush2.msra.mxu0 0.0
    %4318 = vmatprep.subr.mxu0 0.0
    %4319 = vmatpush2.msra.mxu0 0.0
    %4320 = vmatprep.subr.mxu0 0.0
    %4321 = vmatpush2.msra.mxu0 0.0
    %4322 = vmatprep.subr.mxu0 0.0
    %4323 = vmatpush2.msra.mxu0 0.0
    %4324 = vmatprep.subr.mxu0 0.0
    %4325 = vmatpush2.msra.mxu0 0.0
    %4326 = vmatprep.subr.mxu0 0.0
    %4327 = vmatpush2.msra.mxu0 0.0
    %4328 = vmatprep.mubr.f32.mxu0 0.0
    %4329 = vmatmul.mubr.f32.gmra.mxu0 %v4262
    %v4330 = vpop.f32.mrf.mxu0
    %v4331 = vadd.f32 0.0, %v4330
    %v4332 = vpop.f32.mrf.mxu0
    %v4333 = vadd.f32 0.0, %v4332
    %4334 = vdwg.mxu0
    %4335 = vmatprep.subr.mxu0 0.0
    %4336 = vmatpush1.msra.mxu0 0.0
    %4337 = vmatprep.subr.mxu0 0.0
    %4338 = vmatpush1.msra.mxu0 0.0
    %4339 = vmatprep.subr.mxu0 0.0
    %4340 = vmatpush1.msra.mxu0 0.0
    %4341 = vmatprep.subr.mxu0 0.0
    %4342 = vmatpush1.msra.mxu0 0.0
    %4343 = vmatprep.subr.mxu0 0.0
    %4344 = vmatpush1.msra.mxu0 0.0
    %4345 = vmatprep.subr.mxu0 0.0
    %4346 = vmatpush1.msra.mxu0 0.0
    %4347 = vmatprep.subr.mxu0 0.0
    %4348 = vmatpush1.msra.mxu0 0.0
    %4349 = vmatprep.subr.mxu0 0.0
    %4350 = vmatpush1.msra.mxu0 0.0
    %4351 = vmatprep.subr.mxu0 0.0
    %4352 = vmatpush1.msra.mxu0 0.0
    %4353 = vmatprep.subr.mxu0 0.0
    %4354 = vmatpush1.msra.mxu0 0.0
    %4355 = vmatprep.subr.mxu0 0.0
    %4356 = vmatpush1.msra.mxu0 0.0
    %4357 = vmatprep.subr.mxu0 0.0
    %4358 = vmatpush1.msra.mxu0 0.0
    %4359 = vmatprep.subr.mxu0 0.0
    %4360 = vmatpush1.msra.mxu0 0.0
    %4361 = vmatprep.subr.mxu0 0.0
    %4362 = vmatpush1.msra.mxu0 0.0
    %4363 = vmatprep.subr.mxu0 %v3568
    %4364 = vmatpush1.msra.mxu0 %v3567
    %4365 = vmatprep.subr.mxu0 %v3560
    %4366 = vmatpush1.msra.mxu0 %v3559
    %4367 = vmatprep.subr.mxu0 0.0
    %4368 = vmatpush2.msra.mxu0 0.0
    %4369 = vmatprep.subr.mxu0 0.0
    %4370 = vmatpush2.msra.mxu0 0.0
    %4371 = vmatprep.subr.mxu0 0.0
    %4372 = vmatpush2.msra.mxu0 0.0
    %4373 = vmatprep.subr.mxu0 0.0
    %4374 = vmatpush2.msra.mxu0 0.0
    %4375 = vmatprep.subr.mxu0 0.0
    %4376 = vmatpush2.msra.mxu0 0.0
    %4377 = vmatprep.subr.mxu0 0.0
    %4378 = vmatpush2.msra.mxu0 0.0
    %4379 = vmatprep.subr.mxu0 0.0
    %4380 = vmatpush2.msra.mxu0 0.0
    %4381 = vmatprep.subr.mxu0 0.0
    %4382 = vmatpush2.msra.mxu0 0.0
    %4383 = vmatprep.subr.mxu0 0.0
    %4384 = vmatpush2.msra.mxu0 0.0
    %4385 = vmatprep.subr.mxu0 0.0
    %4386 = vmatpush2.msra.mxu0 0.0
    %4387 = vmatprep.subr.mxu0 0.0
    %4388 = vmatpush2.msra.mxu0 0.0
    %4389 = vmatprep.subr.mxu0 0.0
    %4390 = vmatpush2.msra.mxu0 0.0
    %4391 = vmatprep.subr.mxu0 0.0
    %4392 = vmatpush2.msra.mxu0 0.0
    %4393 = vmatprep.subr.mxu0 0.0
    %4394 = vmatpush2.msra.mxu0 0.0
    %4395 = vmatprep.subr.mxu0 0.0
    %4396 = vmatpush2.msra.mxu0 0.0
    %4397 = vmatprep.subr.mxu0 0.0
    %4398 = vmatpush2.msra.mxu0 0.0
    %4399 = vmatprep.mubr.f32.mxu0 0.0
    %4400 = vmatmul.mubr.f32.gmra.mxu0 %v4262
    %v4401 = vpop.f32.mrf.mxu0
    %v4402 = vadd.f32 0.0, %v4401
    %v4403 = vpop.f32.mrf.mxu0
    %v4404 = vadd.f32 0.0, %v4403
    %4405 = vdwg.mxu0
    %4406 = vmatprep.subr.mxu0 0.0
    %4407 = vmatpush1.msra.mxu0 0.0
    %4408 = vmatprep.subr.mxu0 0.0
    %4409 = vmatpush1.msra.mxu0 0.0
    %4410 = vmatprep.subr.mxu0 0.0
    %4411 = vmatpush1.msra.mxu0 0.0
    %4412 = vmatprep.subr.mxu0 0.0
    %4413 = vmatpush1.msra.mxu0 0.0
    %4414 = vmatprep.subr.mxu0 0.0
    %4415 = vmatpush1.msra.mxu0 0.0
    %4416 = vmatprep.subr.mxu0 0.0
    %4417 = vmatpush1.msra.mxu0 0.0
    %4418 = vmatprep.subr.mxu0 0.0
    %4419 = vmatpush1.msra.mxu0 0.0
    %4420 = vmatprep.subr.mxu0 0.0
    %4421 = vmatpush1.msra.mxu0 0.0
    %4422 = vmatprep.subr.mxu0 0.0
    %4423 = vmatpush1.msra.mxu0 0.0
    %4424 = vmatprep.subr.mxu0 0.0
    %4425 = vmatpush1.msra.mxu0 0.0
    %4426 = vmatprep.subr.mxu0 0.0
    %4427 = vmatpush1.msra.mxu0 0.0
    %4428 = vmatprep.subr.mxu0 0.0
    %4429 = vmatpush1.msra.mxu0 0.0
    %4430 = vmatprep.subr.mxu0 0.0
    %4431 = vmatpush1.msra.mxu0 0.0
    %4432 = vmatprep.subr.mxu0 0.0
    %4433 = vmatpush1.msra.mxu0 0.0
    %4434 = vmatprep.subr.mxu0 %v3570
    %4435 = vmatpush1.msra.mxu0 %v3569
    %4436 = vmatprep.subr.mxu0 %v3562
    %4437 = vmatpush1.msra.mxu0 %v3561
    %4438 = vmatprep.subr.mxu0 0.0
    %4439 = vmatpush2.msra.mxu0 0.0
    %4440 = vmatprep.subr.mxu0 0.0
    %4441 = vmatpush2.msra.mxu0 0.0
    %4442 = vmatprep.subr.mxu0 0.0
    %4443 = vmatpush2.msra.mxu0 0.0
    %4444 = vmatprep.subr.mxu0 0.0
    %4445 = vmatpush2.msra.mxu0 0.0
    %4446 = vmatprep.subr.mxu0 0.0
    %4447 = vmatpush2.msra.mxu0 0.0
    %4448 = vmatprep.subr.mxu0 0.0
    %4449 = vmatpush2.msra.mxu0 0.0
    %4450 = vmatprep.subr.mxu0 0.0
    %4451 = vmatpush2.msra.mxu0 0.0
    %4452 = vmatprep.subr.mxu0 0.0
    %4453 = vmatpush2.msra.mxu0 0.0
    %4454 = vmatprep.subr.mxu0 0.0
    %4455 = vmatpush2.msra.mxu0 0.0
    %4456 = vmatprep.subr.mxu0 0.0
    %4457 = vmatpush2.msra.mxu0 0.0
    %4458 = vmatprep.subr.mxu0 0.0
    %4459 = vmatpush2.msra.mxu0 0.0
    %4460 = vmatprep.subr.mxu0 0.0
    %4461 = vmatpush2.msra.mxu0 0.0
    %4462 = vmatprep.subr.mxu0 0.0
    %4463 = vmatpush2.msra.mxu0 0.0
    %4464 = vmatprep.subr.mxu0 0.0
    %4465 = vmatpush2.msra.mxu0 0.0
    %4466 = vmatprep.subr.mxu0 0.0
    %4467 = vmatpush2.msra.mxu0 0.0
    %4468 = vmatprep.subr.mxu0 0.0
    %4469 = vmatpush2.msra.mxu0 0.0
    %4470 = vmatprep.mubr.f32.mxu0 0.0
    %4471 = vmatmul.mubr.f32.gmra.mxu0 %v4262
    %v4472 = vpop.f32.mrf.mxu0
    %v4473 = vadd.f32 0.0, %v4472
    %v4474 = vpop.f32.mrf.mxu0
    %v4475 = vadd.f32 0.0, %v4474
    %4476 = vdwg.mxu0
    %4477 = vmatprep.subr.mxu0 0.0
    %4478 = vmatpush1.msra.mxu0 0.0
    %4479 = vmatprep.subr.mxu0 0.0
    %4480 = vmatpush1.msra.mxu0 0.0
    %4481 = vmatprep.subr.mxu0 0.0
    %4482 = vmatpush1.msra.mxu0 0.0
    %4483 = vmatprep.subr.mxu0 0.0
    %4484 = vmatpush1.msra.mxu0 0.0
    %4485 = vmatprep.subr.mxu0 0.0
    %4486 = vmatpush1.msra.mxu0 0.0
    %4487 = vmatprep.subr.mxu0 0.0
    %4488 = vmatpush1.msra.mxu0 0.0
    %4489 = vmatprep.subr.mxu0 0.0
    %4490 = vmatpush1.msra.mxu0 0.0
    %4491 = vmatprep.subr.mxu0 0.0
    %4492 = vmatpush1.msra.mxu0 0.0
    %4493 = vmatprep.subr.mxu0 0.0
    %4494 = vmatpush1.msra.mxu0 0.0
    %4495 = vmatprep.subr.mxu0 0.0
    %4496 = vmatpush1.msra.mxu0 0.0
    %4497 = vmatprep.subr.mxu0 0.0
    %4498 = vmatpush1.msra.mxu0 0.0
    %4499 = vmatprep.subr.mxu0 0.0
    %4500 = vmatpush1.msra.mxu0 0.0
    %4501 = vmatprep.subr.mxu0 0.0
    %4502 = vmatpush1.msra.mxu0 0.0
    %4503 = vmatprep.subr.mxu0 0.0
    %4504 = vmatpush1.msra.mxu0 0.0
    %4505 = vmatprep.subr.mxu0 %v3572
    %4506 = vmatpush1.msra.mxu0 %v3571
    %4507 = vmatprep.subr.mxu0 %v3564
    %4508 = vmatpush1.msra.mxu0 %v3563
    %4509 = vmatprep.subr.mxu0 0.0
    %4510 = vmatpush2.msra.mxu0 0.0
    %4511 = vmatprep.subr.mxu0 0.0
    %4512 = vmatpush2.msra.mxu0 0.0
    %4513 = vmatprep.subr.mxu0 0.0
    %4514 = vmatpush2.msra.mxu0 0.0
    %4515 = vmatprep.subr.mxu0 0.0
    %4516 = vmatpush2.msra.mxu0 0.0
    %4517 = vmatprep.subr.mxu0 0.0
    %4518 = vmatpush2.msra.mxu0 0.0
    %4519 = vmatprep.subr.mxu0 0.0
    %4520 = vmatpush2.msra.mxu0 0.0
    %4521 = vmatprep.subr.mxu0 0.0
    %4522 = vmatpush2.msra.mxu0 0.0
    %4523 = vmatprep.subr.mxu0 0.0
    %4524 = vmatpush2.msra.mxu0 0.0
    %4525 = vmatprep.subr.mxu0 0.0
    %4526 = vmatpush2.msra.mxu0 0.0
    %4527 = vmatprep.subr.mxu0 0.0
    %4528 = vmatpush2.msra.mxu0 0.0
    %4529 = vmatprep.subr.mxu0 0.0
    %4530 = vmatpush2.msra.mxu0 0.0
    %4531 = vmatprep.subr.mxu0 0.0
    %4532 = vmatpush2.msra.mxu0 0.0
    %4533 = vmatprep.subr.mxu0 0.0
    %4534 = vmatpush2.msra.mxu0 0.0
    %4535 = vmatprep.subr.mxu0 0.0
    %4536 = vmatpush2.msra.mxu0 0.0
    %4537 = vmatprep.subr.mxu0 0.0
    %4538 = vmatpush2.msra.mxu0 0.0
    %4539 = vmatprep.subr.mxu0 0.0
    %4540 = vmatpush2.msra.mxu0 0.0
    %4541 = vmatprep.mubr.f32.mxu0 0.0
    %4542 = vmatmul.mubr.f32.gmra.mxu0 %v4262
    %v4543 = vpop.f32.mrf.mxu0
    %v4544 = vadd.f32 0.0, %v4543
    %v4545 = vpop.f32.mrf.mxu0
    %v4546 = vadd.f32 0.0, %v4545
    %4547 = vdwg.mxu0
    %v4548 = vmul.f32 %v4253, %v4259
    %v4550 = vsel %vm4260, %v4548, 0
    %4552 = vmatprep.subr.mxu0 0.0
    %4553 = vmatpush1.msra.mxu0 0.0
    %4554 = vmatprep.subr.mxu0 0.0
    %4555 = vmatpush1.msra.mxu0 0.0
    %4556 = vmatprep.subr.mxu0 0.0
    %4557 = vmatpush1.msra.mxu0 0.0
    %4558 = vmatprep.subr.mxu0 0.0
    %4559 = vmatpush1.msra.mxu0 0.0
    %4560 = vmatprep.subr.mxu0 0.0
    %4561 = vmatpush1.msra.mxu0 0.0
    %4562 = vmatprep.subr.mxu0 0.0
    %4563 = vmatpush1.msra.mxu0 0.0
    %4564 = vmatprep.subr.mxu0 0.0
    %4565 = vmatpush1.msra.mxu0 0.0
    %4566 = vmatprep.subr.mxu0 0.0
    %4567 = vmatpush1.msra.mxu0 0.0
    %4568 = vmatprep.subr.mxu0 0.0
    %4569 = vmatpush1.msra.mxu0 0.0
    %4570 = vmatprep.subr.mxu0 0.0
    %4571 = vmatpush1.msra.mxu0 0.0
    %4572 = vmatprep.subr.mxu0 0.0
    %4573 = vmatpush1.msra.mxu0 0.0
    %4574 = vmatprep.subr.mxu0 0.0
    %4575 = vmatpush1.msra.mxu0 0.0
    %4576 = vmatprep.subr.mxu0 0.0
    %4577 = vmatpush1.msra.mxu0 0.0
    %4578 = vmatprep.subr.mxu0 0.0
    %4579 = vmatpush1.msra.mxu0 0.0
    %4580 = vmatprep.subr.mxu0 %v3566
    %4581 = vmatpush1.msra.mxu0 %v3565
    %4582 = vmatprep.subr.mxu0 %v3558
    %4583 = vmatpush1.msra.mxu0 %v3557
    %4584 = vmatprep.subr.mxu0 0.0
    %4585 = vmatpush2.msra.mxu0 0.0
    %4586 = vmatprep.subr.mxu0 0.0
    %4587 = vmatpush2.msra.mxu0 0.0
    %4588 = vmatprep.subr.mxu0 0.0
    %4589 = vmatpush2.msra.mxu0 0.0
    %4590 = vmatprep.subr.mxu0 0.0
    %4591 = vmatpush2.msra.mxu0 0.0
    %4592 = vmatprep.subr.mxu0 0.0
    %4593 = vmatpush2.msra.mxu0 0.0
    %4594 = vmatprep.subr.mxu0 0.0
    %4595 = vmatpush2.msra.mxu0 0.0
    %4596 = vmatprep.subr.mxu0 0.0
    %4597 = vmatpush2.msra.mxu0 0.0
    %4598 = vmatprep.subr.mxu0 0.0
    %4599 = vmatpush2.msra.mxu0 0.0
    %4600 = vmatprep.subr.mxu0 0.0
    %4601 = vmatpush2.msra.mxu0 0.0
    %4602 = vmatprep.subr.mxu0 0.0
    %4603 = vmatpush2.msra.mxu0 0.0
    %4604 = vmatprep.subr.mxu0 0.0
    %4605 = vmatpush2.msra.mxu0 0.0
    %4606 = vmatprep.subr.mxu0 0.0
    %4607 = vmatpush2.msra.mxu0 0.0
    %4608 = vmatprep.subr.mxu0 0.0
    %4609 = vmatpush2.msra.mxu0 0.0
    %4610 = vmatprep.subr.mxu0 0.0
    %4611 = vmatpush2.msra.mxu0 0.0
    %4612 = vmatprep.subr.mxu0 0.0
    %4613 = vmatpush2.msra.mxu0 0.0
    %4614 = vmatprep.subr.mxu0 0.0
    %4615 = vmatpush2.msra.mxu0 0.0
    %4616 = vmatprep.mubr.f32.mxu0 0.0
    %4617 = vmatmul.mubr.f32.gmra.mxu0 %v4550
    %v4618 = vpop.f32.mrf.mxu0
    %v4619 = vadd.f32 0.0, %v4618
    %v4620 = vpop.f32.mrf.mxu0
    %v4621 = vadd.f32 0.0, %v4620
    %4622 = vdwg.mxu0
    %4623 = vmatprep.subr.mxu0 0.0
    %4624 = vmatpush1.msra.mxu0 0.0
    %4625 = vmatprep.subr.mxu0 0.0
    %4626 = vmatpush1.msra.mxu0 0.0
    %4627 = vmatprep.subr.mxu0 0.0
    %4628 = vmatpush1.msra.mxu0 0.0
    %4629 = vmatprep.subr.mxu0 0.0
    %4630 = vmatpush1.msra.mxu0 0.0
    %4631 = vmatprep.subr.mxu0 0.0
    %4632 = vmatpush1.msra.mxu0 0.0
    %4633 = vmatprep.subr.mxu0 0.0
    %4634 = vmatpush1.msra.mxu0 0.0
    %4635 = vmatprep.subr.mxu0 0.0
    %4636 = vmatpush1.msra.mxu0 0.0
    %4637 = vmatprep.subr.mxu0 0.0
    %4638 = vmatpush1.msra.mxu0 0.0
    %4639 = vmatprep.subr.mxu0 0.0
    %4640 = vmatpush1.msra.mxu0 0.0
    %4641 = vmatprep.subr.mxu0 0.0
    %4642 = vmatpush1.msra.mxu0 0.0
    %4643 = vmatprep.subr.mxu0 0.0
    %4644 = vmatpush1.msra.mxu0 0.0
    %4645 = vmatprep.subr.mxu0 0.0
    %4646 = vmatpush1.msra.mxu0 0.0
    %4647 = vmatprep.subr.mxu0 0.0
    %4648 = vmatpush1.msra.mxu0 0.0
    %4649 = vmatprep.subr.mxu0 0.0
    %4650 = vmatpush1.msra.mxu0 0.0
    %4651 = vmatprep.subr.mxu0 %v3568
    %4652 = vmatpush1.msra.mxu0 %v3567
    %4653 = vmatprep.subr.mxu0 %v3560
    %4654 = vmatpush1.msra.mxu0 %v3559
    %4655 = vmatprep.subr.mxu0 0.0
    %4656 = vmatpush2.msra.mxu0 0.0
    %4657 = vmatprep.subr.mxu0 0.0
    %4658 = vmatpush2.msra.mxu0 0.0
    %4659 = vmatprep.subr.mxu0 0.0
    %4660 = vmatpush2.msra.mxu0 0.0
    %4661 = vmatprep.subr.mxu0 0.0
    %4662 = vmatpush2.msra.mxu0 0.0
    %4663 = vmatprep.subr.mxu0 0.0
    %4664 = vmatpush2.msra.mxu0 0.0
    %4665 = vmatprep.subr.mxu0 0.0
    %4666 = vmatpush2.msra.mxu0 0.0
    %4667 = vmatprep.subr.mxu0 0.0
    %4668 = vmatpush2.msra.mxu0 0.0
    %4669 = vmatprep.subr.mxu0 0.0
    %4670 = vmatpush2.msra.mxu0 0.0
    %4671 = vmatprep.subr.mxu0 0.0
    %4672 = vmatpush2.msra.mxu0 0.0
    %4673 = vmatprep.subr.mxu0 0.0
    %4674 = vmatpush2.msra.mxu0 0.0
    %4675 = vmatprep.subr.mxu0 0.0
    %4676 = vmatpush2.msra.mxu0 0.0
    %4677 = vmatprep.subr.mxu0 0.0
    %4678 = vmatpush2.msra.mxu0 0.0
    %4679 = vmatprep.subr.mxu0 0.0
    %4680 = vmatpush2.msra.mxu0 0.0
    %4681 = vmatprep.subr.mxu0 0.0
    %4682 = vmatpush2.msra.mxu0 0.0
    %4683 = vmatprep.subr.mxu0 0.0
    %4684 = vmatpush2.msra.mxu0 0.0
    %4685 = vmatprep.subr.mxu0 0.0
    %4686 = vmatpush2.msra.mxu0 0.0
    %4687 = vmatprep.mubr.f32.mxu0 0.0
    %4688 = vmatmul.mubr.f32.gmra.mxu0 %v4550
    %v4689 = vpop.f32.mrf.mxu0
    %v4690 = vadd.f32 0.0, %v4689
    %v4691 = vpop.f32.mrf.mxu0
    %v4692 = vadd.f32 0.0, %v4691
    %4693 = vdwg.mxu0
    %4694 = vmatprep.subr.mxu0 0.0
    %4695 = vmatpush1.msra.mxu0 0.0
    %4696 = vmatprep.subr.mxu0 0.0
    %4697 = vmatpush1.msra.mxu0 0.0
    %4698 = vmatprep.subr.mxu0 0.0
    %4699 = vmatpush1.msra.mxu0 0.0
    %4700 = vmatprep.subr.mxu0 0.0
    %4701 = vmatpush1.msra.mxu0 0.0
    %4702 = vmatprep.subr.mxu0 0.0
    %4703 = vmatpush1.msra.mxu0 0.0
    %4704 = vmatprep.subr.mxu0 0.0
    %4705 = vmatpush1.msra.mxu0 0.0
    %4706 = vmatprep.subr.mxu0 0.0
    %4707 = vmatpush1.msra.mxu0 0.0
    %4708 = vmatprep.subr.mxu0 0.0
    %4709 = vmatpush1.msra.mxu0 0.0
    %4710 = vmatprep.subr.mxu0 0.0
    %4711 = vmatpush1.msra.mxu0 0.0
    %4712 = vmatprep.subr.mxu0 0.0
    %4713 = vmatpush1.msra.mxu0 0.0
    %4714 = vmatprep.subr.mxu0 0.0
    %4715 = vmatpush1.msra.mxu0 0.0
    %4716 = vmatprep.subr.mxu0 0.0
    %4717 = vmatpush1.msra.mxu0 0.0
    %4718 = vmatprep.subr.mxu0 0.0
    %4719 = vmatpush1.msra.mxu0 0.0
    %4720 = vmatprep.subr.mxu0 0.0
    %4721 = vmatpush1.msra.mxu0 0.0
    %4722 = vmatprep.subr.mxu0 %v3570
    %4723 = vmatpush1.msra.mxu0 %v3569
    %4724 = vmatprep.subr.mxu0 %v3562
    %4725 = vmatpush1.msra.mxu0 %v3561
    %4726 = vmatprep.subr.mxu0 0.0
    %4727 = vmatpush2.msra.mxu0 0.0
    %4728 = vmatprep.subr.mxu0 0.0
    %4729 = vmatpush2.msra.mxu0 0.0
    %4730 = vmatprep.subr.mxu0 0.0
    %4731 = vmatpush2.msra.mxu0 0.0
    %4732 = vmatprep.subr.mxu0 0.0
    %4733 = vmatpush2.msra.mxu0 0.0
    %4734 = vmatprep.subr.mxu0 0.0
    %4735 = vmatpush2.msra.mxu0 0.0
    %4736 = vmatprep.subr.mxu0 0.0
    %4737 = vmatpush2.msra.mxu0 0.0
    %4738 = vmatprep.subr.mxu0 0.0
    %4739 = vmatpush2.msra.mxu0 0.0
    %4740 = vmatprep.subr.mxu0 0.0
    %4741 = vmatpush2.msra.mxu0 0.0
    %4742 = vmatprep.subr.mxu0 0.0
    %4743 = vmatpush2.msra.mxu0 0.0
    %4744 = vmatprep.subr.mxu0 0.0
    %4745 = vmatpush2.msra.mxu0 0.0
    %4746 = vmatprep.subr.mxu0 0.0
    %4747 = vmatpush2.msra.mxu0 0.0
    %4748 = vmatprep.subr.mxu0 0.0
    %4749 = vmatpush2.msra.mxu0 0.0
    %4750 = vmatprep.subr.mxu0 0.0
    %4751 = vmatpush2.msra.mxu0 0.0
    %4752 = vmatprep.subr.mxu0 0.0
    %4753 = vmatpush2.msra.mxu0 0.0
    %4754 = vmatprep.subr.mxu0 0.0
    %4755 = vmatpush2.msra.mxu0 0.0
    %4756 = vmatprep.subr.mxu0 0.0
    %4757 = vmatpush2.msra.mxu0 0.0
    %4758 = vmatprep.mubr.f32.mxu0 0.0
    %4759 = vmatmul.mubr.f32.gmra.mxu0 %v4550
    %v4760 = vpop.f32.mrf.mxu0
    %v4761 = vadd.f32 0.0, %v4760
    %v4762 = vpop.f32.mrf.mxu0
    %v4763 = vadd.f32 0.0, %v4762
    %4764 = vdwg.mxu0
    %4765 = vmatprep.subr.mxu0 0.0
    %4766 = vmatpush1.msra.mxu0 0.0
    %4767 = vmatprep.subr.mxu0 0.0
    %4768 = vmatpush1.msra.mxu0 0.0
    %4769 = vmatprep.subr.mxu0 0.0
    %4770 = vmatpush1.msra.mxu0 0.0
    %4771 = vmatprep.subr.mxu0 0.0
    %4772 = vmatpush1.msra.mxu0 0.0
    %4773 = vmatprep.subr.mxu0 0.0
    %4774 = vmatpush1.msra.mxu0 0.0
    %4775 = vmatprep.subr.mxu0 0.0
    %4776 = vmatpush1.msra.mxu0 0.0
    %4777 = vmatprep.subr.mxu0 0.0
    %4778 = vmatpush1.msra.mxu0 0.0
    %4779 = vmatprep.subr.mxu0 0.0
    %4780 = vmatpush1.msra.mxu0 0.0
    %4781 = vmatprep.subr.mxu0 0.0
    %4782 = vmatpush1.msra.mxu0 0.0
    %4783 = vmatprep.subr.mxu0 0.0
    %4784 = vmatpush1.msra.mxu0 0.0
    %4785 = vmatprep.subr.mxu0 0.0
    %4786 = vmatpush1.msra.mxu0 0.0
    %4787 = vmatprep.subr.mxu0 0.0
    %4788 = vmatpush1.msra.mxu0 0.0
    %4789 = vmatprep.subr.mxu0 0.0
    %4790 = vmatpush1.msra.mxu0 0.0
    %4791 = vmatprep.subr.mxu0 0.0
    %4792 = vmatpush1.msra.mxu0 0.0
    %4793 = vmatprep.subr.mxu0 %v3572
    %4794 = vmatpush1.msra.mxu0 %v3571
    %4795 = vmatprep.subr.mxu0 %v3564
    %4796 = vmatpush1.msra.mxu0 %v3563
    %4797 = vmatprep.subr.mxu0 0.0
    %4798 = vmatpush2.msra.mxu0 0.0
    %4799 = vmatprep.subr.mxu0 0.0
    %4800 = vmatpush2.msra.mxu0 0.0
    %4801 = vmatprep.subr.mxu0 0.0
    %4802 = vmatpush2.msra.mxu0 0.0
    %4803 = vmatprep.subr.mxu0 0.0
    %4804 = vmatpush2.msra.mxu0 0.0
    %4805 = vmatprep.subr.mxu0 0.0
    %4806 = vmatpush2.msra.mxu0 0.0
    %4807 = vmatprep.subr.mxu0 0.0
    %4808 = vmatpush2.msra.mxu0 0.0
    %4809 = vmatprep.subr.mxu0 0.0
    %4810 = vmatpush2.msra.mxu0 0.0
    %4811 = vmatprep.subr.mxu0 0.0
    %4812 = vmatpush2.msra.mxu0 0.0
    %4813 = vmatprep.subr.mxu0 0.0
    %4814 = vmatpush2.msra.mxu0 0.0
    %4815 = vmatprep.subr.mxu0 0.0
    %4816 = vmatpush2.msra.mxu0 0.0
    %4817 = vmatprep.subr.mxu0 0.0
    %4818 = vmatpush2.msra.mxu0 0.0
    %4819 = vmatprep.subr.mxu0 0.0
    %4820 = vmatpush2.msra.mxu0 0.0
    %4821 = vmatprep.subr.mxu0 0.0
    %4822 = vmatpush2.msra.mxu0 0.0
    %4823 = vmatprep.subr.mxu0 0.0
    %4824 = vmatpush2.msra.mxu0 0.0
    %4825 = vmatprep.subr.mxu0 0.0
    %4826 = vmatpush2.msra.mxu0 0.0
    %4827 = vmatprep.subr.mxu0 0.0
    %4828 = vmatpush2.msra.mxu0 0.0
    %4829 = vmatprep.mubr.f32.mxu0 0.0
    %4830 = vmatmul.mubr.f32.gmra.mxu0 %v4550
    %v4831 = vpop.f32.mrf.mxu0
    %v4832 = vadd.f32 0.0, %v4831
    %v4833 = vpop.f32.mrf.mxu0
    %v4834 = vadd.f32 0.0, %v4833
    %4835 = vdwg.mxu0
    %v4836 = vlaneseq
    %v4837 = vshrl.u32 %v4836, 7
    %v4838 = vsub.s32 0, %v4837
    %v4839 = vrot.slane %v4331, %v4838
    %v4840 = vlaneseq
    %v4841 = vshrl.u32 %v4840, 7
    %v4842 = vsub.s32 0, %v4841
    %v4843 = vrot.slane %v4333, %v4842
    %v4844 = vlaneseq
    %v4845 = vshrl.u32 %v4844, 7
    %v4846 = vsub.s32 0, %v4845
    %v4847 = vrot.slane %v4402, %v4846
    %v4848 = vlaneseq
    %v4849 = vshrl.u32 %v4848, 7
    %v4850 = vsub.s32 0, %v4849
    %v4851 = vrot.slane %v4404, %v4850
    %v4852 = vlaneseq
    %v4853 = vshrl.u32 %v4852, 7
    %v4854 = vsub.s32 0, %v4853
    %v4855 = vrot.slane %v4473, %v4854
    %v4856 = vlaneseq
    %v4857 = vshrl.u32 %v4856, 7
    %v4858 = vsub.s32 0, %v4857
    %v4859 = vrot.slane %v4475, %v4858
    %v4860 = vlaneseq
    %v4861 = vshrl.u32 %v4860, 7
    %v4862 = vsub.s32 0, %v4861
    %v4863 = vrot.slane %v4544, %v4862
    %v4864 = vlaneseq
    %v4865 = vshrl.u32 %v4864, 7
    %v4866 = vsub.s32 0, %v4865
    %v4867 = vrot.slane %v4546, %v4866
    %v4868 = vmul.f32 %v2829, %v4839
    %v4869 = vmul.f32 %v2831, %v4843
    %v4870 = vmul.f32 %v2911, %v4847
    %v4871 = vmul.f32 %v2913, %v4851
    %v4872 = vmul.f32 %v2993, %v4855
    %v4873 = vmul.f32 %v2995, %v4859
    %v4874 = vmul.f32 %v3075, %v4863
    %v4875 = vmul.f32 %v3077, %v4867
    %v4876 = vlaneseq
    %v4877 = vshrl.u32 %v4876, 7
    %v4878 = vsub.s32 0, %v4877
    %v4879 = vrot.slane %v4619, %v4878
    %v4880 = vlaneseq
    %v4881 = vshrl.u32 %v4880, 7
    %v4882 = vsub.s32 0, %v4881
    %v4883 = vrot.slane %v4621, %v4882
    %v4884 = vlaneseq
    %v4885 = vshrl.u32 %v4884, 7
    %v4886 = vsub.s32 0, %v4885
    %v4887 = vrot.slane %v4690, %v4886
    %v4888 = vlaneseq
    %v4889 = vshrl.u32 %v4888, 7
    %v4890 = vsub.s32 0, %v4889
    %v4891 = vrot.slane %v4692, %v4890
    %v4892 = vlaneseq
    %v4893 = vshrl.u32 %v4892, 7
    %v4894 = vsub.s32 0, %v4893
    %v4895 = vrot.slane %v4761, %v4894
    %v4896 = vlaneseq
    %v4897 = vshrl.u32 %v4896, 7
    %v4898 = vsub.s32 0, %v4897
    %v4899 = vrot.slane %v4763, %v4898
    %v4900 = vlaneseq
    %v4901 = vshrl.u32 %v4900, 7
    %v4902 = vsub.s32 0, %v4901
    %v4903 = vrot.slane %v4832, %v4902
    %v4904 = vlaneseq
    %v4905 = vshrl.u32 %v4904, 7
    %v4906 = vsub.s32 0, %v4905
    %v4907 = vrot.slane %v4834, %v4906
    %v4908 = vsub.f32 %v4868, %v4879
    %v4909 = vsub.f32 %v4869, %v4883
    %v4910 = vsub.f32 %v4870, %v4887
    %v4911 = vsub.f32 %v4871, %v4891
    %v4912 = vsub.f32 %v4872, %v4895
    %v4913 = vsub.f32 %v4873, %v4899
    %v4914 = vsub.f32 %v4874, %v4903
    %v4915 = vsub.f32 %v4875, %v4907
    %v4916 = vmax.f32 %v4908, 0.0
    %v4917 = vmax.f32 %v4909, 0.0
    %v4918 = vmax.f32 %v4910, 0.0
    %v4919 = vmax.f32 %v4911, 0.0
    %v4920 = vmax.f32 %v4912, 0.0
    %v4921 = vmax.f32 %v4913, 0.0
    %v4922 = vmax.f32 %v4914, 0.0
    %v4923 = vmax.f32 %v4915, 0.0
    %v4924 = vpack.c.bf16 %v4916, %v4916
    %v4925 = vpack.c.bf16 %v4917, %v4917
    %v4926 = vpack.c.bf16 %v4918, %v4918
    %v4927 = vpack.c.bf16 %v4919, %v4919
    %v4928 = vpack.c.bf16 %v4920, %v4920
    %v4929 = vpack.c.bf16 %v4921, %v4921
    %v4930 = vpack.c.bf16 %v4922, %v4922
    %v4931 = vpack.c.bf16 %v4923, %v4923
    %v4932 = vld [vmem:[#allocation7] sm:$0xff]
    %v4933 = vld [vmem:[#allocation7 + $0x8] sm:$0xff]
    %v4934 = vld [vmem:[#allocation7 + $0x10] sm:$0xff]
    %v4935 = vld [vmem:[#allocation7 + $0x18] sm:$0xff]
    %v4936 = vld [vmem:[#allocation7 + $0x20] sm:$0xff]
    %v4937 = vld [vmem:[#allocation7 + $0x28] sm:$0xff]
    %v4938 = vld [vmem:[#allocation7 + $0x30] sm:$0xff]
    %v4939 = vld [vmem:[#allocation7 + $0x38] sm:$0xff]
    %v4940 = vld [vmem:[#allocation7 + $0x40] sm:$0xff]
    %v4941 = vld [vmem:[#allocation7 + $0x48] sm:$0xff]
    %v4942 = vld [vmem:[#allocation7 + $0x50] sm:$0xff]
    %v4943 = vld [vmem:[#allocation7 + $0x58] sm:$0xff]
    %v4944 = vld [vmem:[#allocation7 + $0x60] sm:$0xff]
    %v4945 = vld [vmem:[#allocation7 + $0x68] sm:$0xff]
    %v4946 = vld [vmem:[#allocation7 + $0x70] sm:$0xff]
    %v4947 = vld [vmem:[#allocation7 + $0x78] sm:$0xff]
    %v4948 = vld [vmem:[#allocation7 + $0x80] sm:$0xff]
    %v4949 = vld [vmem:[#allocation7 + $0x88] sm:$0xff]
    %v4950 = vld [vmem:[#allocation7 + $0x90] sm:$0xff]
    %v4951 = vld [vmem:[#allocation7 + $0x98] sm:$0xff]
    %v4952 = vld [vmem:[#allocation7 + $0xa0] sm:$0xff]
    %v4953 = vld [vmem:[#allocation7 + $0xa8] sm:$0xff]
    %v4954 = vld [vmem:[#allocation7 + $0xb0] sm:$0xff]
    %v4955 = vld [vmem:[#allocation7 + $0xb8] sm:$0xff]
    %v4956 = vld [vmem:[#allocation7 + $0xc0] sm:$0xff]
    %v4957 = vld [vmem:[#allocation7 + $0xc8] sm:$0xff]
    %v4958 = vld [vmem:[#allocation7 + $0xd0] sm:$0xff]
    %v4959 = vld [vmem:[#allocation7 + $0xd8] sm:$0xff]
    %v4960 = vld [vmem:[#allocation7 + $0xe0] sm:$0xff]
    %v4961 = vld [vmem:[#allocation7 + $0xe8] sm:$0xff]
    %v4962 = vld [vmem:[#allocation7 + $0xf0] sm:$0xff]
    %v4963 = vld [vmem:[#allocation7 + $0xf8] sm:$0xff]
    %v4964 = vld [vmem:[#allocation7 + $0x100] sm:$0xff]
    %v4965 = vld [vmem:[#allocation7 + $0x108] sm:$0xff]
    %v4966 = vld [vmem:[#allocation7 + $0x110] sm:$0xff]
    %v4967 = vld [vmem:[#allocation7 + $0x118] sm:$0xff]
    %v4968 = vld [vmem:[#allocation7 + $0x120] sm:$0xff]
    %v4969 = vld [vmem:[#allocation7 + $0x128] sm:$0xff]
    %v4970 = vld [vmem:[#allocation7 + $0x130] sm:$0xff]
    %v4971 = vld [vmem:[#allocation7 + $0x138] sm:$0xff]
    %v4972 = vld [vmem:[#allocation7 + $0x140] sm:$0xff]
    %v4973 = vld [vmem:[#allocation7 + $0x148] sm:$0xff]
    %v4974 = vld [vmem:[#allocation7 + $0x150] sm:$0xff]
    %v4975 = vld [vmem:[#allocation7 + $0x158] sm:$0xff]
    %v4976 = vld [vmem:[#allocation7 + $0x160] sm:$0xff]
    %v4977 = vld [vmem:[#allocation7 + $0x168] sm:$0xff]
    %v4978 = vld [vmem:[#allocation7 + $0x170] sm:$0xff]
    %v4979 = vld [vmem:[#allocation7 + $0x178] sm:$0xff]
    %v4980 = vld [vmem:[#allocation7 + $0x180] sm:$0xff]
    %v4981 = vld [vmem:[#allocation7 + $0x188] sm:$0xff]
    %v4982 = vld [vmem:[#allocation7 + $0x190] sm:$0xff]
    %v4983 = vld [vmem:[#allocation7 + $0x198] sm:$0xff]
    %v4984 = vld [vmem:[#allocation7 + $0x1a0] sm:$0xff]
    %v4985 = vld [vmem:[#allocation7 + $0x1a8] sm:$0xff]
    %v4986 = vld [vmem:[#allocation7 + $0x1b0] sm:$0xff]
    %v4987 = vld [vmem:[#allocation7 + $0x1b8] sm:$0xff]
    %v4988 = vld [vmem:[#allocation7 + $0x1c0] sm:$0xff]
    %v4989 = vld [vmem:[#allocation7 + $0x1c8] sm:$0xff]
    %v4990 = vld [vmem:[#allocation7 + $0x1d0] sm:$0xff]
    %v4991 = vld [vmem:[#allocation7 + $0x1d8] sm:$0xff]
    %v4992 = vld [vmem:[#allocation7 + $0x1e0] sm:$0xff]
    %v4993 = vld [vmem:[#allocation7 + $0x1e8] sm:$0xff]
    %v4994 = vld [vmem:[#allocation7 + $0x1f0] sm:$0xff]
    %v4995 = vld [vmem:[#allocation7 + $0x1f8] sm:$0xff]
    %v4996 = vld [vmem:[#allocation7 + $0x200] sm:$0xff]
    %v4997 = vld [vmem:[#allocation7 + $0x208] sm:$0xff]
    %v4998 = vld [vmem:[#allocation7 + $0x210] sm:$0xff]
    %v4999 = vld [vmem:[#allocation7 + $0x218] sm:$0xff]
    %v5000 = vld [vmem:[#allocation7 + $0x220] sm:$0xff]
    %v5001 = vld [vmem:[#allocation7 + $0x228] sm:$0xff]
    %v5002 = vld [vmem:[#allocation7 + $0x230] sm:$0xff]
    %v5003 = vld [vmem:[#allocation7 + $0x238] sm:$0xff]
    %v5004 = vld [vmem:[#allocation7 + $0x240] sm:$0xff]
    %v5005 = vld [vmem:[#allocation7 + $0x248] sm:$0xff]
    %v5006 = vld [vmem:[#allocation7 + $0x250] sm:$0xff]
    %v5007 = vld [vmem:[#allocation7 + $0x258] sm:$0xff]
    %v5008 = vld [vmem:[#allocation7 + $0x260] sm:$0xff]
    %v5009 = vld [vmem:[#allocation7 + $0x268] sm:$0xff]
    %v5010 = vld [vmem:[#allocation7 + $0x270] sm:$0xff]
    %v5011 = vld [vmem:[#allocation7 + $0x278] sm:$0xff]
    %v5012 = vld [vmem:[#allocation7 + $0x280] sm:$0xff]
    %v5013 = vld [vmem:[#allocation7 + $0x288] sm:$0xff]
    %v5014 = vld [vmem:[#allocation7 + $0x290] sm:$0xff]
    %v5015 = vld [vmem:[#allocation7 + $0x298] sm:$0xff]
    %v5016 = vld [vmem:[#allocation7 + $0x2a0] sm:$0xff]
    %v5017 = vld [vmem:[#allocation7 + $0x2a8] sm:$0xff]
    %v5018 = vld [vmem:[#allocation7 + $0x2b0] sm:$0xff]
    %v5019 = vld [vmem:[#allocation7 + $0x2b8] sm:$0xff]
    %v5020 = vld [vmem:[#allocation7 + $0x2c0] sm:$0xff]
    %v5021 = vld [vmem:[#allocation7 + $0x2c8] sm:$0xff]
    %v5022 = vld [vmem:[#allocation7 + $0x2d0] sm:$0xff]
    %v5023 = vld [vmem:[#allocation7 + $0x2d8] sm:$0xff]
    %v5024 = vld [vmem:[#allocation7 + $0x2e0] sm:$0xff]
    %v5025 = vld [vmem:[#allocation7 + $0x2e8] sm:$0xff]
    %v5026 = vld [vmem:[#allocation7 + $0x2f0] sm:$0xff]
    %v5027 = vld [vmem:[#allocation7 + $0x2f8] sm:$0xff]
    %v5028 = vld [vmem:[#allocation7 + $0x300] sm:$0xff]
    %v5029 = vld [vmem:[#allocation7 + $0x308] sm:$0xff]
    %v5030 = vld [vmem:[#allocation7 + $0x310] sm:$0xff]
    %v5031 = vld [vmem:[#allocation7 + $0x318] sm:$0xff]
    %v5032 = vld [vmem:[#allocation7 + $0x320] sm:$0xff]
    %v5033 = vld [vmem:[#allocation7 + $0x328] sm:$0xff]
    %v5034 = vld [vmem:[#allocation7 + $0x330] sm:$0xff]
    %v5035 = vld [vmem:[#allocation7 + $0x338] sm:$0xff]
    %v5036 = vld [vmem:[#allocation7 + $0x340] sm:$0xff]
    %v5037 = vld [vmem:[#allocation7 + $0x348] sm:$0xff]
    %v5038 = vld [vmem:[#allocation7 + $0x350] sm:$0xff]
    %v5039 = vld [vmem:[#allocation7 + $0x358] sm:$0xff]
    %v5040 = vld [vmem:[#allocation7 + $0x360] sm:$0xff]
    %v5041 = vld [vmem:[#allocation7 + $0x368] sm:$0xff]
    %v5042 = vld [vmem:[#allocation7 + $0x370] sm:$0xff]
    %v5043 = vld [vmem:[#allocation7 + $0x378] sm:$0xff]
    %v5044 = vld [vmem:[#allocation7 + $0x380] sm:$0xff]
    %v5045 = vld [vmem:[#allocation7 + $0x388] sm:$0xff]
    %v5046 = vld [vmem:[#allocation7 + $0x390] sm:$0xff]
    %v5047 = vld [vmem:[#allocation7 + $0x398] sm:$0xff]
    %v5048 = vld [vmem:[#allocation7 + $0x3a0] sm:$0xff]
    %v5049 = vld [vmem:[#allocation7 + $0x3a8] sm:$0xff]
    %v5050 = vld [vmem:[#allocation7 + $0x3b0] sm:$0xff]
    %v5051 = vld [vmem:[#allocation7 + $0x3b8] sm:$0xff]
    %v5052 = vld [vmem:[#allocation7 + $0x3c0] sm:$0xff]
    %v5053 = vld [vmem:[#allocation7 + $0x3c8] sm:$0xff]
    %v5054 = vld [vmem:[#allocation7 + $0x3d0] sm:$0xff]
    %v5055 = vld [vmem:[#allocation7 + $0x3d8] sm:$0xff]
    %v5056 = vld [vmem:[#allocation7 + $0x3e0] sm:$0xff]
    %v5057 = vld [vmem:[#allocation7 + $0x3e8] sm:$0xff]
    %v5058 = vld [vmem:[#allocation7 + $0x3f0] sm:$0xff]
    %v5059 = vld [vmem:[#allocation7 + $0x3f8] sm:$0xff]
    %v5060 = vld [vmem:[#allocation7 + $0x400] sm:$0xff]
    %v5061 = vld [vmem:[#allocation7 + $0x408] sm:$0xff]
    %v5062 = vld [vmem:[#allocation7 + $0x410] sm:$0xff]
    %v5063 = vld [vmem:[#allocation7 + $0x418] sm:$0xff]
    %v5064 = vld [vmem:[#allocation7 + $0x420] sm:$0xff]
    %v5065 = vld [vmem:[#allocation7 + $0x428] sm:$0xff]
    %v5066 = vld [vmem:[#allocation7 + $0x430] sm:$0xff]
    %v5067 = vld [vmem:[#allocation7 + $0x438] sm:$0xff]
    %v5068 = vld [vmem:[#allocation7 + $0x440] sm:$0xff]
    %v5069 = vld [vmem:[#allocation7 + $0x448] sm:$0xff]
    %v5070 = vld [vmem:[#allocation7 + $0x450] sm:$0xff]
    %v5071 = vld [vmem:[#allocation7 + $0x458] sm:$0xff]
    %v5072 = vld [vmem:[#allocation7 + $0x460] sm:$0xff]
    %v5073 = vld [vmem:[#allocation7 + $0x468] sm:$0xff]
    %v5074 = vld [vmem:[#allocation7 + $0x470] sm:$0xff]
    %v5075 = vld [vmem:[#allocation7 + $0x478] sm:$0xff]
    %v5076 = vld [vmem:[#allocation7 + $0x480] sm:$0xff]
    %v5077 = vld [vmem:[#allocation7 + $0x488] sm:$0xff]
    %v5078 = vld [vmem:[#allocation7 + $0x490] sm:$0xff]
    %v5079 = vld [vmem:[#allocation7 + $0x498] sm:$0xff]
    %v5080 = vld [vmem:[#allocation7 + $0x4a0] sm:$0xff]
    %v5081 = vld [vmem:[#allocation7 + $0x4a8] sm:$0xff]
    %v5082 = vld [vmem:[#allocation7 + $0x4b0] sm:$0xff]
    %v5083 = vld [vmem:[#allocation7 + $0x4b8] sm:$0xff]
    %v5084 = vld [vmem:[#allocation7 + $0x4c0] sm:$0xff]
    %v5085 = vld [vmem:[#allocation7 + $0x4c8] sm:$0xff]
    %v5086 = vld [vmem:[#allocation7 + $0x4d0] sm:$0xff]
    %v5087 = vld [vmem:[#allocation7 + $0x4d8] sm:$0xff]
    %v5088 = vld [vmem:[#allocation7 + $0x4e0] sm:$0xff]
    %v5089 = vld [vmem:[#allocation7 + $0x4e8] sm:$0xff]
    %v5090 = vld [vmem:[#allocation7 + $0x4f0] sm:$0xff]
    %v5091 = vld [vmem:[#allocation7 + $0x4f8] sm:$0xff]
    %v5092 = vld [vmem:[#allocation7 + $0x500] sm:$0xff]
    %v5093 = vld [vmem:[#allocation7 + $0x508] sm:$0xff]
    %v5094 = vld [vmem:[#allocation7 + $0x510] sm:$0xff]
    %v5095 = vld [vmem:[#allocation7 + $0x518] sm:$0xff]
    %v5096 = vld [vmem:[#allocation7 + $0x520] sm:$0xff]
    %v5097 = vld [vmem:[#allocation7 + $0x528] sm:$0xff]
    %v5098 = vld [vmem:[#allocation7 + $0x530] sm:$0xff]
    %v5099 = vld [vmem:[#allocation7 + $0x538] sm:$0xff]
    %v5100 = vld [vmem:[#allocation7 + $0x540] sm:$0xff]
    %v5101 = vld [vmem:[#allocation7 + $0x548] sm:$0xff]
    %v5102 = vld [vmem:[#allocation7 + $0x550] sm:$0xff]
    %v5103 = vld [vmem:[#allocation7 + $0x558] sm:$0xff]
    %v5104 = vld [vmem:[#allocation7 + $0x560] sm:$0xff]
    %v5105 = vld [vmem:[#allocation7 + $0x568] sm:$0xff]
    %v5106 = vld [vmem:[#allocation7 + $0x570] sm:$0xff]
    %v5107 = vld [vmem:[#allocation7 + $0x578] sm:$0xff]
    %v5108 = vld [vmem:[#allocation7 + $0x580] sm:$0xff]
    %v5109 = vld [vmem:[#allocation7 + $0x588] sm:$0xff]
    %v5110 = vld [vmem:[#allocation7 + $0x590] sm:$0xff]
    %v5111 = vld [vmem:[#allocation7 + $0x598] sm:$0xff]
    %v5112 = vld [vmem:[#allocation7 + $0x5a0] sm:$0xff]
    %v5113 = vld [vmem:[#allocation7 + $0x5a8] sm:$0xff]
    %v5114 = vld [vmem:[#allocation7 + $0x5b0] sm:$0xff]
    %v5115 = vld [vmem:[#allocation7 + $0x5b8] sm:$0xff]
    %v5116 = vld [vmem:[#allocation7 + $0x5c0] sm:$0xff]
    %v5117 = vld [vmem:[#allocation7 + $0x5c8] sm:$0xff]
    %v5118 = vld [vmem:[#allocation7 + $0x5d0] sm:$0xff]
    %v5119 = vld [vmem:[#allocation7 + $0x5d8] sm:$0xff]
    %v5120 = vld [vmem:[#allocation7 + $0x5e0] sm:$0xff]
    %v5121 = vld [vmem:[#allocation7 + $0x5e8] sm:$0xff]
    %v5122 = vld [vmem:[#allocation7 + $0x5f0] sm:$0xff]
    %v5123 = vld [vmem:[#allocation7 + $0x5f8] sm:$0xff]
    %v5124 = vld [vmem:[#allocation7 + $0x600] sm:$0xff]
    %v5125 = vld [vmem:[#allocation7 + $0x608] sm:$0xff]
    %v5126 = vld [vmem:[#allocation7 + $0x610] sm:$0xff]
    %v5127 = vld [vmem:[#allocation7 + $0x618] sm:$0xff]
    %v5128 = vld [vmem:[#allocation7 + $0x620] sm:$0xff]
    %v5129 = vld [vmem:[#allocation7 + $0x628] sm:$0xff]
    %v5130 = vld [vmem:[#allocation7 + $0x630] sm:$0xff]
    %v5131 = vld [vmem:[#allocation7 + $0x638] sm:$0xff]
    %v5132 = vld [vmem:[#allocation7 + $0x640] sm:$0xff]
    %v5133 = vld [vmem:[#allocation7 + $0x648] sm:$0xff]
    %v5134 = vld [vmem:[#allocation7 + $0x650] sm:$0xff]
    %v5135 = vld [vmem:[#allocation7 + $0x658] sm:$0xff]
    %v5136 = vld [vmem:[#allocation7 + $0x660] sm:$0xff]
    %v5137 = vld [vmem:[#allocation7 + $0x668] sm:$0xff]
    %v5138 = vld [vmem:[#allocation7 + $0x670] sm:$0xff]
    %v5139 = vld [vmem:[#allocation7 + $0x678] sm:$0xff]
    %v5140 = vld [vmem:[#allocation7 + $0x680] sm:$0xff]
    %v5141 = vld [vmem:[#allocation7 + $0x688] sm:$0xff]
    %v5142 = vld [vmem:[#allocation7 + $0x690] sm:$0xff]
    %v5143 = vld [vmem:[#allocation7 + $0x698] sm:$0xff]
    %v5144 = vld [vmem:[#allocation7 + $0x6a0] sm:$0xff]
    %v5145 = vld [vmem:[#allocation7 + $0x6a8] sm:$0xff]
    %v5146 = vld [vmem:[#allocation7 + $0x6b0] sm:$0xff]
    %v5147 = vld [vmem:[#allocation7 + $0x6b8] sm:$0xff]
    %v5148 = vld [vmem:[#allocation7 + $0x6c0] sm:$0xff]
    %v5149 = vld [vmem:[#allocation7 + $0x6c8] sm:$0xff]
    %v5150 = vld [vmem:[#allocation7 + $0x6d0] sm:$0xff]
    %v5151 = vld [vmem:[#allocation7 + $0x6d8] sm:$0xff]
    %v5152 = vld [vmem:[#allocation7 + $0x6e0] sm:$0xff]
    %v5153 = vld [vmem:[#allocation7 + $0x6e8] sm:$0xff]
    %v5154 = vld [vmem:[#allocation7 + $0x6f0] sm:$0xff]
    %v5155 = vld [vmem:[#allocation7 + $0x6f8] sm:$0xff]
    %v5156 = vld [vmem:[#allocation7 + $0x700] sm:$0xff]
    %v5157 = vld [vmem:[#allocation7 + $0x708] sm:$0xff]
    %v5158 = vld [vmem:[#allocation7 + $0x710] sm:$0xff]
    %v5159 = vld [vmem:[#allocation7 + $0x718] sm:$0xff]
    %v5160 = vld [vmem:[#allocation7 + $0x720] sm:$0xff]
    %v5161 = vld [vmem:[#allocation7 + $0x728] sm:$0xff]
    %v5162 = vld [vmem:[#allocation7 + $0x730] sm:$0xff]
    %v5163 = vld [vmem:[#allocation7 + $0x738] sm:$0xff]
    %v5164 = vld [vmem:[#allocation7 + $0x740] sm:$0xff]
    %v5165 = vld [vmem:[#allocation7 + $0x748] sm:$0xff]
    %v5166 = vld [vmem:[#allocation7 + $0x750] sm:$0xff]
    %v5167 = vld [vmem:[#allocation7 + $0x758] sm:$0xff]
    %v5168 = vld [vmem:[#allocation7 + $0x760] sm:$0xff]
    %v5169 = vld [vmem:[#allocation7 + $0x768] sm:$0xff]
    %v5170 = vld [vmem:[#allocation7 + $0x770] sm:$0xff]
    %v5171 = vld [vmem:[#allocation7 + $0x778] sm:$0xff]
    %v5172 = vld [vmem:[#allocation7 + $0x780] sm:$0xff]
    %v5173 = vld [vmem:[#allocation7 + $0x788] sm:$0xff]
    %v5174 = vld [vmem:[#allocation7 + $0x790] sm:$0xff]
    %v5175 = vld [vmem:[#allocation7 + $0x798] sm:$0xff]
    %v5176 = vld [vmem:[#allocation7 + $0x7a0] sm:$0xff]
    %v5177 = vld [vmem:[#allocation7 + $0x7a8] sm:$0xff]
    %v5178 = vld [vmem:[#allocation7 + $0x7b0] sm:$0xff]
    %v5179 = vld [vmem:[#allocation7 + $0x7b8] sm:$0xff]
    %v5180 = vld [vmem:[#allocation7 + $0x7c0] sm:$0xff]
    %v5181 = vld [vmem:[#allocation7 + $0x7c8] sm:$0xff]
    %v5182 = vld [vmem:[#allocation7 + $0x7d0] sm:$0xff]
    %v5183 = vld [vmem:[#allocation7 + $0x7d8] sm:$0xff]
    %v5184 = vld [vmem:[#allocation7 + $0x7e0] sm:$0xff]
    %v5185 = vld [vmem:[#allocation7 + $0x7e8] sm:$0xff]
    %v5186 = vld [vmem:[#allocation7 + $0x7f0] sm:$0xff]
    %v5187 = vld [vmem:[#allocation7 + $0x7f8] sm:$0xff]
    %v5188 = vld [vmem:[#allocation7 + $0x800] sm:$0xff]
    %v5189 = vld [vmem:[#allocation7 + $0x808] sm:$0xff]
    %v5190 = vld [vmem:[#allocation7 + $0x810] sm:$0xff]
    %v5191 = vld [vmem:[#allocation7 + $0x818] sm:$0xff]
    %v5192 = vld [vmem:[#allocation7 + $0x820] sm:$0xff]
    %v5193 = vld [vmem:[#allocation7 + $0x828] sm:$0xff]
    %v5194 = vld [vmem:[#allocation7 + $0x830] sm:$0xff]
    %v5195 = vld [vmem:[#allocation7 + $0x838] sm:$0xff]
    %v5196 = vld [vmem:[#allocation7 + $0x840] sm:$0xff]
    %v5197 = vld [vmem:[#allocation7 + $0x848] sm:$0xff]
    %v5198 = vld [vmem:[#allocation7 + $0x850] sm:$0xff]
    %v5199 = vld [vmem:[#allocation7 + $0x858] sm:$0xff]
    %v5200 = vld [vmem:[#allocation7 + $0x860] sm:$0xff]
    %v5201 = vld [vmem:[#allocation7 + $0x868] sm:$0xff]
    %v5202 = vld [vmem:[#allocation7 + $0x870] sm:$0xff]
    %v5203 = vld [vmem:[#allocation7 + $0x878] sm:$0xff]
    %v5204 = vld [vmem:[#allocation7 + $0x880] sm:$0xff]
    %v5205 = vld [vmem:[#allocation7 + $0x888] sm:$0xff]
    %v5206 = vld [vmem:[#allocation7 + $0x890] sm:$0xff]
    %v5207 = vld [vmem:[#allocation7 + $0x898] sm:$0xff]
    %v5208 = vld [vmem:[#allocation7 + $0x8a0] sm:$0xff]
    %v5209 = vld [vmem:[#allocation7 + $0x8a8] sm:$0xff]
    %v5210 = vld [vmem:[#allocation7 + $0x8b0] sm:$0xff]
    %v5211 = vld [vmem:[#allocation7 + $0x8b8] sm:$0xff]
    %v5212 = vld [vmem:[#allocation7 + $0x8c0] sm:$0xff]
    %v5213 = vld [vmem:[#allocation7 + $0x8c8] sm:$0xff]
    %v5214 = vld [vmem:[#allocation7 + $0x8d0] sm:$0xff]
    %v5215 = vld [vmem:[#allocation7 + $0x8d8] sm:$0xff]
    %v5216 = vld [vmem:[#allocation7 + $0x8e0] sm:$0xff]
    %v5217 = vld [vmem:[#allocation7 + $0x8e8] sm:$0xff]
    %v5218 = vld [vmem:[#allocation7 + $0x8f0] sm:$0xff]
    %v5219 = vld [vmem:[#allocation7 + $0x8f8] sm:$0xff]
    %v5220 = vld [vmem:[#allocation7 + $0x900] sm:$0xff]
    %v5221 = vld [vmem:[#allocation7 + $0x908] sm:$0xff]
    %v5222 = vld [vmem:[#allocation7 + $0x910] sm:$0xff]
    %v5223 = vld [vmem:[#allocation7 + $0x918] sm:$0xff]
    %v5224 = vld [vmem:[#allocation7 + $0x920] sm:$0xff]
    %v5225 = vld [vmem:[#allocation7 + $0x928] sm:$0xff]
    %v5226 = vld [vmem:[#allocation7 + $0x930] sm:$0xff]
    %v5227 = vld [vmem:[#allocation7 + $0x938] sm:$0xff]
    %v5228 = vld [vmem:[#allocation7 + $0x940] sm:$0xff]
    %v5229 = vld [vmem:[#allocation7 + $0x948] sm:$0xff]
    %v5230 = vld [vmem:[#allocation7 + $0x950] sm:$0xff]
    %v5231 = vld [vmem:[#allocation7 + $0x958] sm:$0xff]
    %v5232 = vld [vmem:[#allocation7 + $0x960] sm:$0xff]
    %v5233 = vld [vmem:[#allocation7 + $0x968] sm:$0xff]
    %v5234 = vld [vmem:[#allocation7 + $0x970] sm:$0xff]
    %v5235 = vld [vmem:[#allocation7 + $0x978] sm:$0xff]
    %v5236 = vld [vmem:[#allocation7 + $0x980] sm:$0xff]
    %v5237 = vld [vmem:[#allocation7 + $0x988] sm:$0xff]
    %v5238 = vld [vmem:[#allocation7 + $0x990] sm:$0xff]
    %v5239 = vld [vmem:[#allocation7 + $0x998] sm:$0xff]
    %v5240 = vld [vmem:[#allocation7 + $0x9a0] sm:$0xff]
    %v5241 = vld [vmem:[#allocation7 + $0x9a8] sm:$0xff]
    %v5242 = vld [vmem:[#allocation7 + $0x9b0] sm:$0xff]
    %v5243 = vld [vmem:[#allocation7 + $0x9b8] sm:$0xff]
    %v5244 = vld [vmem:[#allocation7 + $0x9c0] sm:$0xff]
    %v5245 = vld [vmem:[#allocation7 + $0x9c8] sm:$0xff]
    %v5246 = vld [vmem:[#allocation7 + $0x9d0] sm:$0xff]
    %v5247 = vld [vmem:[#allocation7 + $0x9d8] sm:$0xff]
    %v5248 = vld [vmem:[#allocation7 + $0x9e0] sm:$0xff]
    %v5249 = vld [vmem:[#allocation7 + $0x9e8] sm:$0xff]
    %v5250 = vld [vmem:[#allocation7 + $0x9f0] sm:$0xff]
    %v5251 = vld [vmem:[#allocation7 + $0x9f8] sm:$0xff]
    %v5252 = vld [vmem:[#allocation7 + $0xa00] sm:$0xff]
    %v5253 = vld [vmem:[#allocation7 + $0xa08] sm:$0xff]
    %v5254 = vld [vmem:[#allocation7 + $0xa10] sm:$0xff]
    %v5255 = vld [vmem:[#allocation7 + $0xa18] sm:$0xff]
    %v5256 = vld [vmem:[#allocation7 + $0xa20] sm:$0xff]
    %v5257 = vld [vmem:[#allocation7 + $0xa28] sm:$0xff]
    %v5258 = vld [vmem:[#allocation7 + $0xa30] sm:$0xff]
    %v5259 = vld [vmem:[#allocation7 + $0xa38] sm:$0xff]
    %v5260 = vld [vmem:[#allocation7 + $0xa40] sm:$0xff]
    %v5261 = vld [vmem:[#allocation7 + $0xa48] sm:$0xff]
    %v5262 = vld [vmem:[#allocation7 + $0xa50] sm:$0xff]
    %v5263 = vld [vmem:[#allocation7 + $0xa58] sm:$0xff]
    %v5264 = vld [vmem:[#allocation7 + $0xa60] sm:$0xff]
    %v5265 = vld [vmem:[#allocation7 + $0xa68] sm:$0xff]
    %v5266 = vld [vmem:[#allocation7 + $0xa70] sm:$0xff]
    %v5267 = vld [vmem:[#allocation7 + $0xa78] sm:$0xff]
    %v5268 = vld [vmem:[#allocation7 + $0xa80] sm:$0xff]
    %v5269 = vld [vmem:[#allocation7 + $0xa88] sm:$0xff]
    %v5270 = vld [vmem:[#allocation7 + $0xa90] sm:$0xff]
    %v5271 = vld [vmem:[#allocation7 + $0xa98] sm:$0xff]
    %v5272 = vld [vmem:[#allocation7 + $0xaa0] sm:$0xff]
    %v5273 = vld [vmem:[#allocation7 + $0xaa8] sm:$0xff]
    %v5274 = vld [vmem:[#allocation7 + $0xab0] sm:$0xff]
    %v5275 = vld [vmem:[#allocation7 + $0xab8] sm:$0xff]
    %v5276 = vld [vmem:[#allocation7 + $0xac0] sm:$0xff]
    %v5277 = vld [vmem:[#allocation7 + $0xac8] sm:$0xff]
    %v5278 = vld [vmem:[#allocation7 + $0xad0] sm:$0xff]
    %v5279 = vld [vmem:[#allocation7 + $0xad8] sm:$0xff]
    %v5280 = vld [vmem:[#allocation7 + $0xae0] sm:$0xff]
    %v5281 = vld [vmem:[#allocation7 + $0xae8] sm:$0xff]
    %v5282 = vld [vmem:[#allocation7 + $0xaf0] sm:$0xff]
    %v5283 = vld [vmem:[#allocation7 + $0xaf8] sm:$0xff]
    %v5284 = vld [vmem:[#allocation7 + $0xb00] sm:$0xff]
    %v5285 = vld [vmem:[#allocation7 + $0xb08] sm:$0xff]
    %v5286 = vld [vmem:[#allocation7 + $0xb10] sm:$0xff]
    %v5287 = vld [vmem:[#allocation7 + $0xb18] sm:$0xff]
    %v5288 = vld [vmem:[#allocation7 + $0xb20] sm:$0xff]
    %v5289 = vld [vmem:[#allocation7 + $0xb28] sm:$0xff]
    %v5290 = vld [vmem:[#allocation7 + $0xb30] sm:$0xff]
    %v5291 = vld [vmem:[#allocation7 + $0xb38] sm:$0xff]
    %v5292 = vld [vmem:[#allocation7 + $0xb40] sm:$0xff]
    %v5293 = vld [vmem:[#allocation7 + $0xb48] sm:$0xff]
    %v5294 = vld [vmem:[#allocation7 + $0xb50] sm:$0xff]
    %v5295 = vld [vmem:[#allocation7 + $0xb58] sm:$0xff]
    %v5296 = vld [vmem:[#allocation7 + $0xb60] sm:$0xff]
    %v5297 = vld [vmem:[#allocation7 + $0xb68] sm:$0xff]
    %v5298 = vld [vmem:[#allocation7 + $0xb70] sm:$0xff]
    %v5299 = vld [vmem:[#allocation7 + $0xb78] sm:$0xff]
    %v5300 = vld [vmem:[#allocation7 + $0xb80] sm:$0xff]
    %v5301 = vld [vmem:[#allocation7 + $0xb88] sm:$0xff]
    %v5302 = vld [vmem:[#allocation7 + $0xb90] sm:$0xff]
    %v5303 = vld [vmem:[#allocation7 + $0xb98] sm:$0xff]
    %v5304 = vld [vmem:[#allocation7 + $0xba0] sm:$0xff]
    %v5305 = vld [vmem:[#allocation7 + $0xba8] sm:$0xff]
    %v5306 = vld [vmem:[#allocation7 + $0xbb0] sm:$0xff]
    %v5307 = vld [vmem:[#allocation7 + $0xbb8] sm:$0xff]
    %v5308 = vld [vmem:[#allocation7 + $0xbc0] sm:$0xff]
    %v5309 = vld [vmem:[#allocation7 + $0xbc8] sm:$0xff]
    %v5310 = vld [vmem:[#allocation7 + $0xbd0] sm:$0xff]
    %v5311 = vld [vmem:[#allocation7 + $0xbd8] sm:$0xff]
    %v5312 = vld [vmem:[#allocation7 + $0xbe0] sm:$0xff]
    %v5313 = vld [vmem:[#allocation7 + $0xbe8] sm:$0xff]
    %v5314 = vld [vmem:[#allocation7 + $0xbf0] sm:$0xff]
    %v5315 = vld [vmem:[#allocation7 + $0xbf8] sm:$0xff]
    %v5700 = vunpack.c.l.b16 %v4932
    %v5701 = vunpack.c.h.b16 %v4932
    %v5702 = vunpack.c.l.b16 %v4933
    %v5703 = vunpack.c.h.b16 %v4933
    %v5704 = vunpack.c.l.b16 %v4934
    %v5705 = vunpack.c.h.b16 %v4934
    %v5706 = vunpack.c.l.b16 %v4935
    %v5707 = vunpack.c.h.b16 %v4935
    %v5708 = vunpack.c.l.b16 %v4936
    %v5709 = vunpack.c.h.b16 %v4936
    %v5710 = vunpack.c.l.b16 %v4937
    %v5711 = vunpack.c.h.b16 %v4937
    %v5712 = vunpack.c.l.b16 %v4938
    %v5713 = vunpack.c.h.b16 %v4938
    %v5714 = vunpack.c.l.b16 %v4939
    %v5715 = vunpack.c.h.b16 %v4939
    %v5716 = vunpack.c.l.b16 %v4940
    %v5717 = vunpack.c.h.b16 %v4940
    %v5718 = vunpack.c.l.b16 %v4941
    %v5719 = vunpack.c.h.b16 %v4941
    %v5720 = vunpack.c.l.b16 %v4942
    %v5721 = vunpack.c.h.b16 %v4942
    %v5722 = vunpack.c.l.b16 %v4943
    %v5723 = vunpack.c.h.b16 %v4943
    %v5724 = vunpack.c.l.b16 %v4944
    %v5725 = vunpack.c.h.b16 %v4944
    %v5726 = vunpack.c.l.b16 %v4945
    %v5727 = vunpack.c.h.b16 %v4945
    %v5728 = vunpack.c.l.b16 %v4946
    %v5729 = vunpack.c.h.b16 %v4946
    %v5730 = vunpack.c.l.b16 %v4947
    %v5731 = vunpack.c.h.b16 %v4947
    %v5732 = vunpack.c.l.b16 %v4948
    %v5733 = vunpack.c.h.b16 %v4948
    %v5734 = vunpack.c.l.b16 %v4949
    %v5735 = vunpack.c.h.b16 %v4949
    %v5736 = vunpack.c.l.b16 %v4950
    %v5737 = vunpack.c.h.b16 %v4950
    %v5738 = vunpack.c.l.b16 %v4951
    %v5739 = vunpack.c.h.b16 %v4951
    %v5740 = vunpack.c.l.b16 %v4952
    %v5741 = vunpack.c.h.b16 %v4952
    %v5742 = vunpack.c.l.b16 %v4953
    %v5743 = vunpack.c.h.b16 %v4953
    %v5744 = vunpack.c.l.b16 %v4954
    %v5745 = vunpack.c.h.b16 %v4954
    %v5746 = vunpack.c.l.b16 %v4955
    %v5747 = vunpack.c.h.b16 %v4955
    %v5748 = vunpack.c.l.b16 %v4956
    %v5749 = vunpack.c.h.b16 %v4956
    %v5750 = vunpack.c.l.b16 %v4957
    %v5751 = vunpack.c.h.b16 %v4957
    %v5752 = vunpack.c.l.b16 %v4958
    %v5753 = vunpack.c.h.b16 %v4958
    %v5754 = vunpack.c.l.b16 %v4959
    %v5755 = vunpack.c.h.b16 %v4959
    %v5756 = vunpack.c.l.b16 %v4960
    %v5757 = vunpack.c.h.b16 %v4960
    %v5758 = vunpack.c.l.b16 %v4961
    %v5759 = vunpack.c.h.b16 %v4961
    %v5760 = vunpack.c.l.b16 %v4962
    %v5761 = vunpack.c.h.b16 %v4962
    %v5762 = vunpack.c.l.b16 %v4963
    %v5763 = vunpack.c.h.b16 %v4963
    %v5764 = vunpack.c.l.b16 %v4964
    %v5765 = vunpack.c.h.b16 %v4964
    %v5766 = vunpack.c.l.b16 %v4965
    %v5767 = vunpack.c.h.b16 %v4965
    %v5768 = vunpack.c.l.b16 %v4966
    %v5769 = vunpack.c.h.b16 %v4966
    %v5770 = vunpack.c.l.b16 %v4967
    %v5771 = vunpack.c.h.b16 %v4967
    %v5772 = vunpack.c.l.b16 %v4968
    %v5773 = vunpack.c.h.b16 %v4968
    %v5774 = vunpack.c.l.b16 %v4969
    %v5775 = vunpack.c.h.b16 %v4969
    %v5776 = vunpack.c.l.b16 %v4970
    %v5777 = vunpack.c.h.b16 %v4970
    %v5778 = vunpack.c.l.b16 %v4971
    %v5779 = vunpack.c.h.b16 %v4971
    %v5780 = vunpack.c.l.b16 %v4972
    %v5781 = vunpack.c.h.b16 %v4972
    %v5782 = vunpack.c.l.b16 %v4973
    %v5783 = vunpack.c.h.b16 %v4973
    %v5784 = vunpack.c.l.b16 %v4974
    %v5785 = vunpack.c.h.b16 %v4974
    %v5786 = vunpack.c.l.b16 %v4975
    %v5787 = vunpack.c.h.b16 %v4975
    %v5788 = vunpack.c.l.b16 %v4976
    %v5789 = vunpack.c.h.b16 %v4976
    %v5790 = vunpack.c.l.b16 %v4977
    %v5791 = vunpack.c.h.b16 %v4977
    %v5792 = vunpack.c.l.b16 %v4978
    %v5793 = vunpack.c.h.b16 %v4978
    %v5794 = vunpack.c.l.b16 %v4979
    %v5795 = vunpack.c.h.b16 %v4979
    %v5796 = vunpack.c.l.b16 %v4980
    %v5797 = vunpack.c.h.b16 %v4980
    %v5798 = vunpack.c.l.b16 %v4981
    %v5799 = vunpack.c.h.b16 %v4981
    %v5800 = vunpack.c.l.b16 %v4982
    %v5801 = vunpack.c.h.b16 %v4982
    %v5802 = vunpack.c.l.b16 %v4983
    %v5803 = vunpack.c.h.b16 %v4983
    %v5804 = vunpack.c.l.b16 %v4984
    %v5805 = vunpack.c.h.b16 %v4984
    %v5806 = vunpack.c.l.b16 %v4985
    %v5807 = vunpack.c.h.b16 %v4985
    %v5808 = vunpack.c.l.b16 %v4986
    %v5809 = vunpack.c.h.b16 %v4986
    %v5810 = vunpack.c.l.b16 %v4987
    %v5811 = vunpack.c.h.b16 %v4987
    %v5812 = vunpack.c.l.b16 %v4988
    %v5813 = vunpack.c.h.b16 %v4988
    %v5814 = vunpack.c.l.b16 %v4989
    %v5815 = vunpack.c.h.b16 %v4989
    %v5816 = vunpack.c.l.b16 %v4990
    %v5817 = vunpack.c.h.b16 %v4990
    %v5818 = vunpack.c.l.b16 %v4991
    %v5819 = vunpack.c.h.b16 %v4991
    %v5820 = vunpack.c.l.b16 %v4992
    %v5821 = vunpack.c.h.b16 %v4992
    %v5822 = vunpack.c.l.b16 %v4993
    %v5823 = vunpack.c.h.b16 %v4993
    %v5824 = vunpack.c.l.b16 %v4994
    %v5825 = vunpack.c.h.b16 %v4994
    %v5826 = vunpack.c.l.b16 %v4995
    %v5827 = vunpack.c.h.b16 %v4995
    %v5828 = vunpack.c.l.b16 %v4996
    %v5829 = vunpack.c.h.b16 %v4996
    %v5830 = vunpack.c.l.b16 %v4997
    %v5831 = vunpack.c.h.b16 %v4997
    %v5832 = vunpack.c.l.b16 %v4998
    %v5833 = vunpack.c.h.b16 %v4998
    %v5834 = vunpack.c.l.b16 %v4999
    %v5835 = vunpack.c.h.b16 %v4999
    %v5836 = vunpack.c.l.b16 %v5000
    %v5837 = vunpack.c.h.b16 %v5000
    %v5838 = vunpack.c.l.b16 %v5001
    %v5839 = vunpack.c.h.b16 %v5001
    %v5840 = vunpack.c.l.b16 %v5002
    %v5841 = vunpack.c.h.b16 %v5002
    %v5842 = vunpack.c.l.b16 %v5003
    %v5843 = vunpack.c.h.b16 %v5003
    %v5844 = vunpack.c.l.b16 %v5004
    %v5845 = vunpack.c.h.b16 %v5004
    %v5846 = vunpack.c.l.b16 %v5005
    %v5847 = vunpack.c.h.b16 %v5005
    %v5848 = vunpack.c.l.b16 %v5006
    %v5849 = vunpack.c.h.b16 %v5006
    %v5850 = vunpack.c.l.b16 %v5007
    %v5851 = vunpack.c.h.b16 %v5007
    %v5852 = vunpack.c.l.b16 %v5008
    %v5853 = vunpack.c.h.b16 %v5008
    %v5854 = vunpack.c.l.b16 %v5009
    %v5855 = vunpack.c.h.b16 %v5009
    %v5856 = vunpack.c.l.b16 %v5010
    %v5857 = vunpack.c.h.b16 %v5010
    %v5858 = vunpack.c.l.b16 %v5011
    %v5859 = vunpack.c.h.b16 %v5011
    %v5860 = vunpack.c.l.b16 %v5012
    %v5861 = vunpack.c.h.b16 %v5012
    %v5862 = vunpack.c.l.b16 %v5013
    %v5863 = vunpack.c.h.b16 %v5013
    %v5864 = vunpack.c.l.b16 %v5014
    %v5865 = vunpack.c.h.b16 %v5014
    %v5866 = vunpack.c.l.b16 %v5015
    %v5867 = vunpack.c.h.b16 %v5015
    %v5868 = vunpack.c.l.b16 %v5016
    %v5869 = vunpack.c.h.b16 %v5016
    %v5870 = vunpack.c.l.b16 %v5017
    %v5871 = vunpack.c.h.b16 %v5017
    %v5872 = vunpack.c.l.b16 %v5018
    %v5873 = vunpack.c.h.b16 %v5018
    %v5874 = vunpack.c.l.b16 %v5019
    %v5875 = vunpack.c.h.b16 %v5019
    %v5876 = vunpack.c.l.b16 %v5020
    %v5877 = vunpack.c.h.b16 %v5020
    %v5878 = vunpack.c.l.b16 %v5021
    %v5879 = vunpack.c.h.b16 %v5021
    %v5880 = vunpack.c.l.b16 %v5022
    %v5881 = vunpack.c.h.b16 %v5022
    %v5882 = vunpack.c.l.b16 %v5023
    %v5883 = vunpack.c.h.b16 %v5023
    %v5884 = vunpack.c.l.b16 %v5024
    %v5885 = vunpack.c.h.b16 %v5024
    %v5886 = vunpack.c.l.b16 %v5025
    %v5887 = vunpack.c.h.b16 %v5025
    %v5888 = vunpack.c.l.b16 %v5026
    %v5889 = vunpack.c.h.b16 %v5026
    %v5890 = vunpack.c.l.b16 %v5027
    %v5891 = vunpack.c.h.b16 %v5027
    %v5892 = vunpack.c.l.b16 %v5028
    %v5893 = vunpack.c.h.b16 %v5028
    %v5894 = vunpack.c.l.b16 %v5029
    %v5895 = vunpack.c.h.b16 %v5029
    %v5896 = vunpack.c.l.b16 %v5030
    %v5897 = vunpack.c.h.b16 %v5030
    %v5898 = vunpack.c.l.b16 %v5031
    %v5899 = vunpack.c.h.b16 %v5031
    %v5900 = vunpack.c.l.b16 %v5032
    %v5901 = vunpack.c.h.b16 %v5032
    %v5902 = vunpack.c.l.b16 %v5033
    %v5903 = vunpack.c.h.b16 %v5033
    %v5904 = vunpack.c.l.b16 %v5034
    %v5905 = vunpack.c.h.b16 %v5034
    %v5906 = vunpack.c.l.b16 %v5035
    %v5907 = vunpack.c.h.b16 %v5035
    %v5908 = vunpack.c.l.b16 %v5036
    %v5909 = vunpack.c.h.b16 %v5036
    %v5910 = vunpack.c.l.b16 %v5037
    %v5911 = vunpack.c.h.b16 %v5037
    %v5912 = vunpack.c.l.b16 %v5038
    %v5913 = vunpack.c.h.b16 %v5038
    %v5914 = vunpack.c.l.b16 %v5039
    %v5915 = vunpack.c.h.b16 %v5039
    %v5916 = vunpack.c.l.b16 %v5040
    %v5917 = vunpack.c.h.b16 %v5040
    %v5918 = vunpack.c.l.b16 %v5041
    %v5919 = vunpack.c.h.b16 %v5041
    %v5920 = vunpack.c.l.b16 %v5042
    %v5921 = vunpack.c.h.b16 %v5042
    %v5922 = vunpack.c.l.b16 %v5043
    %v5923 = vunpack.c.h.b16 %v5043
    %v5924 = vunpack.c.l.b16 %v5044
    %v5925 = vunpack.c.h.b16 %v5044
    %v5926 = vunpack.c.l.b16 %v5045
    %v5927 = vunpack.c.h.b16 %v5045
    %v5928 = vunpack.c.l.b16 %v5046
    %v5929 = vunpack.c.h.b16 %v5046
    %v5930 = vunpack.c.l.b16 %v5047
    %v5931 = vunpack.c.h.b16 %v5047
    %v5932 = vunpack.c.l.b16 %v5048
    %v5933 = vunpack.c.h.b16 %v5048
    %v5934 = vunpack.c.l.b16 %v5049
    %v5935 = vunpack.c.h.b16 %v5049
    %v5936 = vunpack.c.l.b16 %v5050
    %v5937 = vunpack.c.h.b16 %v5050
    %v5938 = vunpack.c.l.b16 %v5051
    %v5939 = vunpack.c.h.b16 %v5051
    %v5940 = vunpack.c.l.b16 %v5052
    %v5941 = vunpack.c.h.b16 %v5052
    %v5942 = vunpack.c.l.b16 %v5053
    %v5943 = vunpack.c.h.b16 %v5053
    %v5944 = vunpack.c.l.b16 %v5054
    %v5945 = vunpack.c.h.b16 %v5054
    %v5946 = vunpack.c.l.b16 %v5055
    %v5947 = vunpack.c.h.b16 %v5055
    %v5948 = vunpack.c.l.b16 %v5056
    %v5949 = vunpack.c.h.b16 %v5056
    %v5950 = vunpack.c.l.b16 %v5057
    %v5951 = vunpack.c.h.b16 %v5057
    %v5952 = vunpack.c.l.b16 %v5058
    %v5953 = vunpack.c.h.b16 %v5058
    %v5954 = vunpack.c.l.b16 %v5059
    %v5955 = vunpack.c.h.b16 %v5059
    %v5956 = vunpack.c.l.b16 %v5060
    %v5957 = vunpack.c.h.b16 %v5060
    %v5958 = vunpack.c.l.b16 %v5061
    %v5959 = vunpack.c.h.b16 %v5061
    %v5960 = vunpack.c.l.b16 %v5062
    %v5961 = vunpack.c.h.b16 %v5062
    %v5962 = vunpack.c.l.b16 %v5063
    %v5963 = vunpack.c.h.b16 %v5063
    %v5964 = vunpack.c.l.b16 %v5064
    %v5965 = vunpack.c.h.b16 %v5064
    %v5966 = vunpack.c.l.b16 %v5065
    %v5967 = vunpack.c.h.b16 %v5065
    %v5968 = vunpack.c.l.b16 %v5066
    %v5969 = vunpack.c.h.b16 %v5066
    %v5970 = vunpack.c.l.b16 %v5067
    %v5971 = vunpack.c.h.b16 %v5067
    %v5972 = vunpack.c.l.b16 %v5068
    %v5973 = vunpack.c.h.b16 %v5068
    %v5974 = vunpack.c.l.b16 %v5069
    %v5975 = vunpack.c.h.b16 %v5069
    %v5976 = vunpack.c.l.b16 %v5070
    %v5977 = vunpack.c.h.b16 %v5070
    %v5978 = vunpack.c.l.b16 %v5071
    %v5979 = vunpack.c.h.b16 %v5071
    %v5980 = vunpack.c.l.b16 %v5072
    %v5981 = vunpack.c.h.b16 %v5072
    %v5982 = vunpack.c.l.b16 %v5073
    %v5983 = vunpack.c.h.b16 %v5073
    %v5984 = vunpack.c.l.b16 %v5074
    %v5985 = vunpack.c.h.b16 %v5074
    %v5986 = vunpack.c.l.b16 %v5075
    %v5987 = vunpack.c.h.b16 %v5075
    %v5988 = vunpack.c.l.b16 %v5076
    %v5989 = vunpack.c.h.b16 %v5076
    %v5990 = vunpack.c.l.b16 %v5077
    %v5991 = vunpack.c.h.b16 %v5077
    %v5992 = vunpack.c.l.b16 %v5078
    %v5993 = vunpack.c.h.b16 %v5078
    %v5994 = vunpack.c.l.b16 %v5079
    %v5995 = vunpack.c.h.b16 %v5079
    %v5996 = vunpack.c.l.b16 %v5080
    %v5997 = vunpack.c.h.b16 %v5080
    %v5998 = vunpack.c.l.b16 %v5081
    %v5999 = vunpack.c.h.b16 %v5081
    %v6000 = vunpack.c.l.b16 %v5082
    %v6001 = vunpack.c.h.b16 %v5082
    %v6002 = vunpack.c.l.b16 %v5083
    %v6003 = vunpack.c.h.b16 %v5083
    %v6004 = vunpack.c.l.b16 %v5084
    %v6005 = vunpack.c.h.b16 %v5084
    %v6006 = vunpack.c.l.b16 %v5085
    %v6007 = vunpack.c.h.b16 %v5085
    %v6008 = vunpack.c.l.b16 %v5086
    %v6009 = vunpack.c.h.b16 %v5086
    %v6010 = vunpack.c.l.b16 %v5087
    %v6011 = vunpack.c.h.b16 %v5087
    %v6012 = vunpack.c.l.b16 %v5088
    %v6013 = vunpack.c.h.b16 %v5088
    %v6014 = vunpack.c.l.b16 %v5089
    %v6015 = vunpack.c.h.b16 %v5089
    %v6016 = vunpack.c.l.b16 %v5090
    %v6017 = vunpack.c.h.b16 %v5090
    %v6018 = vunpack.c.l.b16 %v5091
    %v6019 = vunpack.c.h.b16 %v5091
    %v6020 = vunpack.c.l.b16 %v5092
    %v6021 = vunpack.c.h.b16 %v5092
    %v6022 = vunpack.c.l.b16 %v5093
    %v6023 = vunpack.c.h.b16 %v5093
    %v6024 = vunpack.c.l.b16 %v5094
    %v6025 = vunpack.c.h.b16 %v5094
    %v6026 = vunpack.c.l.b16 %v5095
    %v6027 = vunpack.c.h.b16 %v5095
    %v6028 = vunpack.c.l.b16 %v5096
    %v6029 = vunpack.c.h.b16 %v5096
    %v6030 = vunpack.c.l.b16 %v5097
    %v6031 = vunpack.c.h.b16 %v5097
    %v6032 = vunpack.c.l.b16 %v5098
    %v6033 = vunpack.c.h.b16 %v5098
    %v6034 = vunpack.c.l.b16 %v5099
    %v6035 = vunpack.c.h.b16 %v5099
    %v6036 = vunpack.c.l.b16 %v5100
    %v6037 = vunpack.c.h.b16 %v5100
    %v6038 = vunpack.c.l.b16 %v5101
    %v6039 = vunpack.c.h.b16 %v5101
    %v6040 = vunpack.c.l.b16 %v5102
    %v6041 = vunpack.c.h.b16 %v5102
    %v6042 = vunpack.c.l.b16 %v5103
    %v6043 = vunpack.c.h.b16 %v5103
    %v6044 = vunpack.c.l.b16 %v5104
    %v6045 = vunpack.c.h.b16 %v5104
    %v6046 = vunpack.c.l.b16 %v5105
    %v6047 = vunpack.c.h.b16 %v5105
    %v6048 = vunpack.c.l.b16 %v5106
    %v6049 = vunpack.c.h.b16 %v5106
    %v6050 = vunpack.c.l.b16 %v5107
    %v6051 = vunpack.c.h.b16 %v5107
    %v6052 = vunpack.c.l.b16 %v5108
    %v6053 = vunpack.c.h.b16 %v5108
    %v6054 = vunpack.c.l.b16 %v5109
    %v6055 = vunpack.c.h.b16 %v5109
    %v6056 = vunpack.c.l.b16 %v5110
    %v6057 = vunpack.c.h.b16 %v5110
    %v6058 = vunpack.c.l.b16 %v5111
    %v6059 = vunpack.c.h.b16 %v5111
    %v6060 = vunpack.c.l.b16 %v5112
    %v6061 = vunpack.c.h.b16 %v5112
    %v6062 = vunpack.c.l.b16 %v5113
    %v6063 = vunpack.c.h.b16 %v5113
    %v6064 = vunpack.c.l.b16 %v5114
    %v6065 = vunpack.c.h.b16 %v5114
    %v6066 = vunpack.c.l.b16 %v5115
    %v6067 = vunpack.c.h.b16 %v5115
    %v6068 = vunpack.c.l.b16 %v5116
    %v6069 = vunpack.c.h.b16 %v5116
    %v6070 = vunpack.c.l.b16 %v5117
    %v6071 = vunpack.c.h.b16 %v5117
    %v6072 = vunpack.c.l.b16 %v5118
    %v6073 = vunpack.c.h.b16 %v5118
    %v6074 = vunpack.c.l.b16 %v5119
    %v6075 = vunpack.c.h.b16 %v5119
    %v6076 = vunpack.c.l.b16 %v5120
    %v6077 = vunpack.c.h.b16 %v5120
    %v6078 = vunpack.c.l.b16 %v5121
    %v6079 = vunpack.c.h.b16 %v5121
    %v6080 = vunpack.c.l.b16 %v5122
    %v6081 = vunpack.c.h.b16 %v5122
    %v6082 = vunpack.c.l.b16 %v5123
    %v6083 = vunpack.c.h.b16 %v5123
    %v6084 = vunpack.c.l.b16 %v5124
    %v6085 = vunpack.c.h.b16 %v5124
    %v6086 = vunpack.c.l.b16 %v5125
    %v6087 = vunpack.c.h.b16 %v5125
    %v6088 = vunpack.c.l.b16 %v5126
    %v6089 = vunpack.c.h.b16 %v5126
    %v6090 = vunpack.c.l.b16 %v5127
    %v6091 = vunpack.c.h.b16 %v5127
    %v6092 = vunpack.c.l.b16 %v5128
    %v6093 = vunpack.c.h.b16 %v5128
    %v6094 = vunpack.c.l.b16 %v5129
    %v6095 = vunpack.c.h.b16 %v5129
    %v6096 = vunpack.c.l.b16 %v5130
    %v6097 = vunpack.c.h.b16 %v5130
    %v6098 = vunpack.c.l.b16 %v5131
    %v6099 = vunpack.c.h.b16 %v5131
    %v6100 = vunpack.c.l.b16 %v5132
    %v6101 = vunpack.c.h.b16 %v5132
    %v6102 = vunpack.c.l.b16 %v5133
    %v6103 = vunpack.c.h.b16 %v5133
    %v6104 = vunpack.c.l.b16 %v5134
    %v6105 = vunpack.c.h.b16 %v5134
    %v6106 = vunpack.c.l.b16 %v5135
    %v6107 = vunpack.c.h.b16 %v5135
    %v6108 = vunpack.c.l.b16 %v5136
    %v6109 = vunpack.c.h.b16 %v5136
    %v6110 = vunpack.c.l.b16 %v5137
    %v6111 = vunpack.c.h.b16 %v5137
    %v6112 = vunpack.c.l.b16 %v5138
    %v6113 = vunpack.c.h.b16 %v5138
    %v6114 = vunpack.c.l.b16 %v5139
    %v6115 = vunpack.c.h.b16 %v5139
    %v6116 = vunpack.c.l.b16 %v5140
    %v6117 = vunpack.c.h.b16 %v5140
    %v6118 = vunpack.c.l.b16 %v5141
    %v6119 = vunpack.c.h.b16 %v5141
    %v6120 = vunpack.c.l.b16 %v5142
    %v6121 = vunpack.c.h.b16 %v5142
    %v6122 = vunpack.c.l.b16 %v5143
    %v6123 = vunpack.c.h.b16 %v5143
    %v6124 = vunpack.c.l.b16 %v5144
    %v6125 = vunpack.c.h.b16 %v5144
    %v6126 = vunpack.c.l.b16 %v5145
    %v6127 = vunpack.c.h.b16 %v5145
    %v6128 = vunpack.c.l.b16 %v5146
    %v6129 = vunpack.c.h.b16 %v5146
    %v6130 = vunpack.c.l.b16 %v5147
    %v6131 = vunpack.c.h.b16 %v5147
    %v6132 = vunpack.c.l.b16 %v5148
    %v6133 = vunpack.c.h.b16 %v5148
    %v6134 = vunpack.c.l.b16 %v5149
    %v6135 = vunpack.c.h.b16 %v5149
    %v6136 = vunpack.c.l.b16 %v5150
    %v6137 = vunpack.c.h.b16 %v5150
    %v6138 = vunpack.c.l.b16 %v5151
    %v6139 = vunpack.c.h.b16 %v5151
    %v6140 = vunpack.c.l.b16 %v5152
    %v6141 = vunpack.c.h.b16 %v5152
    %v6142 = vunpack.c.l.b16 %v5153
    %v6143 = vunpack.c.h.b16 %v5153
    %v6144 = vunpack.c.l.b16 %v5154
    %v6145 = vunpack.c.h.b16 %v5154
    %v6146 = vunpack.c.l.b16 %v5155
    %v6147 = vunpack.c.h.b16 %v5155
    %v6148 = vunpack.c.l.b16 %v5156
    %v6149 = vunpack.c.h.b16 %v5156
    %v6150 = vunpack.c.l.b16 %v5157
    %v6151 = vunpack.c.h.b16 %v5157
    %v6152 = vunpack.c.l.b16 %v5158
    %v6153 = vunpack.c.h.b16 %v5158
    %v6154 = vunpack.c.l.b16 %v5159
    %v6155 = vunpack.c.h.b16 %v5159
    %v6156 = vunpack.c.l.b16 %v5160
    %v6157 = vunpack.c.h.b16 %v5160
    %v6158 = vunpack.c.l.b16 %v5161
    %v6159 = vunpack.c.h.b16 %v5161
    %v6160 = vunpack.c.l.b16 %v5162
    %v6161 = vunpack.c.h.b16 %v5162
    %v6162 = vunpack.c.l.b16 %v5163
    %v6163 = vunpack.c.h.b16 %v5163
    %v6164 = vunpack.c.l.b16 %v5164
    %v6165 = vunpack.c.h.b16 %v5164
    %v6166 = vunpack.c.l.b16 %v5165
    %v6167 = vunpack.c.h.b16 %v5165
    %v6168 = vunpack.c.l.b16 %v5166
    %v6169 = vunpack.c.h.b16 %v5166
    %v6170 = vunpack.c.l.b16 %v5167
    %v6171 = vunpack.c.h.b16 %v5167
    %v6172 = vunpack.c.l.b16 %v5168
    %v6173 = vunpack.c.h.b16 %v5168
    %v6174 = vunpack.c.l.b16 %v5169
    %v6175 = vunpack.c.h.b16 %v5169
    %v6176 = vunpack.c.l.b16 %v5170
    %v6177 = vunpack.c.h.b16 %v5170
    %v6178 = vunpack.c.l.b16 %v5171
    %v6179 = vunpack.c.h.b16 %v5171
    %v6180 = vunpack.c.l.b16 %v5172
    %v6181 = vunpack.c.h.b16 %v5172
    %v6182 = vunpack.c.l.b16 %v5173
    %v6183 = vunpack.c.h.b16 %v5173
    %v6184 = vunpack.c.l.b16 %v5174
    %v6185 = vunpack.c.h.b16 %v5174
    %v6186 = vunpack.c.l.b16 %v5175
    %v6187 = vunpack.c.h.b16 %v5175
    %v6188 = vunpack.c.l.b16 %v5176
    %v6189 = vunpack.c.h.b16 %v5176
    %v6190 = vunpack.c.l.b16 %v5177
    %v6191 = vunpack.c.h.b16 %v5177
    %v6192 = vunpack.c.l.b16 %v5178
    %v6193 = vunpack.c.h.b16 %v5178
    %v6194 = vunpack.c.l.b16 %v5179
    %v6195 = vunpack.c.h.b16 %v5179
    %v6196 = vunpack.c.l.b16 %v5180
    %v6197 = vunpack.c.h.b16 %v5180
    %v6198 = vunpack.c.l.b16 %v5181
    %v6199 = vunpack.c.h.b16 %v5181
    %v6200 = vunpack.c.l.b16 %v5182
    %v6201 = vunpack.c.h.b16 %v5182
    %v6202 = vunpack.c.l.b16 %v5183
    %v6203 = vunpack.c.h.b16 %v5183
    %v6204 = vunpack.c.l.b16 %v5184
    %v6205 = vunpack.c.h.b16 %v5184
    %v6206 = vunpack.c.l.b16 %v5185
    %v6207 = vunpack.c.h.b16 %v5185
    %v6208 = vunpack.c.l.b16 %v5186
    %v6209 = vunpack.c.h.b16 %v5186
    %v6210 = vunpack.c.l.b16 %v5187
    %v6211 = vunpack.c.h.b16 %v5187
    %v6212 = vunpack.c.l.b16 %v5188
    %v6213 = vunpack.c.h.b16 %v5188
    %v6214 = vunpack.c.l.b16 %v5189
    %v6215 = vunpack.c.h.b16 %v5189
    %v6216 = vunpack.c.l.b16 %v5190
    %v6217 = vunpack.c.h.b16 %v5190
    %v6218 = vunpack.c.l.b16 %v5191
    %v6219 = vunpack.c.h.b16 %v5191
    %v6220 = vunpack.c.l.b16 %v5192
    %v6221 = vunpack.c.h.b16 %v5192
    %v6222 = vunpack.c.l.b16 %v5193
    %v6223 = vunpack.c.h.b16 %v5193
    %v6224 = vunpack.c.l.b16 %v5194
    %v6225 = vunpack.c.h.b16 %v5194
    %v6226 = vunpack.c.l.b16 %v5195
    %v6227 = vunpack.c.h.b16 %v5195
    %v6228 = vunpack.c.l.b16 %v5196
    %v6229 = vunpack.c.h.b16 %v5196
    %v6230 = vunpack.c.l.b16 %v5197
    %v6231 = vunpack.c.h.b16 %v5197
    %v6232 = vunpack.c.l.b16 %v5198
    %v6233 = vunpack.c.h.b16 %v5198
    %v6234 = vunpack.c.l.b16 %v5199
    %v6235 = vunpack.c.h.b16 %v5199
    %v6236 = vunpack.c.l.b16 %v5200
    %v6237 = vunpack.c.h.b16 %v5200
    %v6238 = vunpack.c.l.b16 %v5201
    %v6239 = vunpack.c.h.b16 %v5201
    %v6240 = vunpack.c.l.b16 %v5202
    %v6241 = vunpack.c.h.b16 %v5202
    %v6242 = vunpack.c.l.b16 %v5203
    %v6243 = vunpack.c.h.b16 %v5203
    %v6244 = vunpack.c.l.b16 %v5204
    %v6245 = vunpack.c.h.b16 %v5204
    %v6246 = vunpack.c.l.b16 %v5205
    %v6247 = vunpack.c.h.b16 %v5205
    %v6248 = vunpack.c.l.b16 %v5206
    %v6249 = vunpack.c.h.b16 %v5206
    %v6250 = vunpack.c.l.b16 %v5207
    %v6251 = vunpack.c.h.b16 %v5207
    %v6252 = vunpack.c.l.b16 %v5208
    %v6253 = vunpack.c.h.b16 %v5208
    %v6254 = vunpack.c.l.b16 %v5209
    %v6255 = vunpack.c.h.b16 %v5209
    %v6256 = vunpack.c.l.b16 %v5210
    %v6257 = vunpack.c.h.b16 %v5210
    %v6258 = vunpack.c.l.b16 %v5211
    %v6259 = vunpack.c.h.b16 %v5211
    %v6260 = vunpack.c.l.b16 %v5212
    %v6261 = vunpack.c.h.b16 %v5212
    %v6262 = vunpack.c.l.b16 %v5213
    %v6263 = vunpack.c.h.b16 %v5213
    %v6264 = vunpack.c.l.b16 %v5214
    %v6265 = vunpack.c.h.b16 %v5214
    %v6266 = vunpack.c.l.b16 %v5215
    %v6267 = vunpack.c.h.b16 %v5215
    %v6268 = vunpack.c.l.b16 %v5216
    %v6269 = vunpack.c.h.b16 %v5216
    %v6270 = vunpack.c.l.b16 %v5217
    %v6271 = vunpack.c.h.b16 %v5217
    %v6272 = vunpack.c.l.b16 %v5218
    %v6273 = vunpack.c.h.b16 %v5218
    %v6274 = vunpack.c.l.b16 %v5219
    %v6275 = vunpack.c.h.b16 %v5219
    %v6276 = vunpack.c.l.b16 %v5220
    %v6277 = vunpack.c.h.b16 %v5220
    %v6278 = vunpack.c.l.b16 %v5221
    %v6279 = vunpack.c.h.b16 %v5221
    %v6280 = vunpack.c.l.b16 %v5222
    %v6281 = vunpack.c.h.b16 %v5222
    %v6282 = vunpack.c.l.b16 %v5223
    %v6283 = vunpack.c.h.b16 %v5223
    %v6284 = vunpack.c.l.b16 %v5224
    %v6285 = vunpack.c.h.b16 %v5224
    %v6286 = vunpack.c.l.b16 %v5225
    %v6287 = vunpack.c.h.b16 %v5225
    %v6288 = vunpack.c.l.b16 %v5226
    %v6289 = vunpack.c.h.b16 %v5226
    %v6290 = vunpack.c.l.b16 %v5227
    %v6291 = vunpack.c.h.b16 %v5227
    %v6292 = vunpack.c.l.b16 %v5228
    %v6293 = vunpack.c.h.b16 %v5228
    %v6294 = vunpack.c.l.b16 %v5229
    %v6295 = vunpack.c.h.b16 %v5229
    %v6296 = vunpack.c.l.b16 %v5230
    %v6297 = vunpack.c.h.b16 %v5230
    %v6298 = vunpack.c.l.b16 %v5231
    %v6299 = vunpack.c.h.b16 %v5231
    %v6300 = vunpack.c.l.b16 %v5232
    %v6301 = vunpack.c.h.b16 %v5232
    %v6302 = vunpack.c.l.b16 %v5233
    %v6303 = vunpack.c.h.b16 %v5233
    %v6304 = vunpack.c.l.b16 %v5234
    %v6305 = vunpack.c.h.b16 %v5234
    %v6306 = vunpack.c.l.b16 %v5235
    %v6307 = vunpack.c.h.b16 %v5235
    %v6308 = vunpack.c.l.b16 %v5236
    %v6309 = vunpack.c.h.b16 %v5236
    %v6310 = vunpack.c.l.b16 %v5237
    %v6311 = vunpack.c.h.b16 %v5237
    %v6312 = vunpack.c.l.b16 %v5238
    %v6313 = vunpack.c.h.b16 %v5238
    %v6314 = vunpack.c.l.b16 %v5239
    %v6315 = vunpack.c.h.b16 %v5239
    %v6316 = vunpack.c.l.b16 %v5240
    %v6317 = vunpack.c.h.b16 %v5240
    %v6318 = vunpack.c.l.b16 %v5241
    %v6319 = vunpack.c.h.b16 %v5241
    %v6320 = vunpack.c.l.b16 %v5242
    %v6321 = vunpack.c.h.b16 %v5242
    %v6322 = vunpack.c.l.b16 %v5243
    %v6323 = vunpack.c.h.b16 %v5243
    %v6324 = vunpack.c.l.b16 %v5244
    %v6325 = vunpack.c.h.b16 %v5244
    %v6326 = vunpack.c.l.b16 %v5245
    %v6327 = vunpack.c.h.b16 %v5245
    %v6328 = vunpack.c.l.b16 %v5246
    %v6329 = vunpack.c.h.b16 %v5246
    %v6330 = vunpack.c.l.b16 %v5247
    %v6331 = vunpack.c.h.b16 %v5247
    %v6332 = vunpack.c.l.b16 %v5248
    %v6333 = vunpack.c.h.b16 %v5248
    %v6334 = vunpack.c.l.b16 %v5249
    %v6335 = vunpack.c.h.b16 %v5249
    %v6336 = vunpack.c.l.b16 %v5250
    %v6337 = vunpack.c.h.b16 %v5250
    %v6338 = vunpack.c.l.b16 %v5251
    %v6339 = vunpack.c.h.b16 %v5251
    %v6340 = vunpack.c.l.b16 %v5252
    %v6341 = vunpack.c.h.b16 %v5252
    %v6342 = vunpack.c.l.b16 %v5253
    %v6343 = vunpack.c.h.b16 %v5253
    %v6344 = vunpack.c.l.b16 %v5254
    %v6345 = vunpack.c.h.b16 %v5254
    %v6346 = vunpack.c.l.b16 %v5255
    %v6347 = vunpack.c.h.b16 %v5255
    %v6348 = vunpack.c.l.b16 %v5256
    %v6349 = vunpack.c.h.b16 %v5256
    %v6350 = vunpack.c.l.b16 %v5257
    %v6351 = vunpack.c.h.b16 %v5257
    %v6352 = vunpack.c.l.b16 %v5258
    %v6353 = vunpack.c.h.b16 %v5258
    %v6354 = vunpack.c.l.b16 %v5259
    %v6355 = vunpack.c.h.b16 %v5259
    %v6356 = vunpack.c.l.b16 %v5260
    %v6357 = vunpack.c.h.b16 %v5260
    %v6358 = vunpack.c.l.b16 %v5261
    %v6359 = vunpack.c.h.b16 %v5261
    %v6360 = vunpack.c.l.b16 %v5262
    %v6361 = vunpack.c.h.b16 %v5262
    %v6362 = vunpack.c.l.b16 %v5263
    %v6363 = vunpack.c.h.b16 %v5263
    %v6364 = vunpack.c.l.b16 %v5264
    %v6365 = vunpack.c.h.b16 %v5264
    %v6366 = vunpack.c.l.b16 %v5265
    %v6367 = vunpack.c.h.b16 %v5265
    %v6368 = vunpack.c.l.b16 %v5266
    %v6369 = vunpack.c.h.b16 %v5266
    %v6370 = vunpack.c.l.b16 %v5267
    %v6371 = vunpack.c.h.b16 %v5267
    %v6372 = vunpack.c.l.b16 %v5268
    %v6373 = vunpack.c.h.b16 %v5268
    %v6374 = vunpack.c.l.b16 %v5269
    %v6375 = vunpack.c.h.b16 %v5269
    %v6376 = vunpack.c.l.b16 %v5270
    %v6377 = vunpack.c.h.b16 %v5270
    %v6378 = vunpack.c.l.b16 %v5271
    %v6379 = vunpack.c.h.b16 %v5271
    %v6380 = vunpack.c.l.b16 %v5272
    %v6381 = vunpack.c.h.b16 %v5272
    %v6382 = vunpack.c.l.b16 %v5273
    %v6383 = vunpack.c.h.b16 %v5273
    %v6384 = vunpack.c.l.b16 %v5274
    %v6385 = vunpack.c.h.b16 %v5274
    %v6386 = vunpack.c.l.b16 %v5275
    %v6387 = vunpack.c.h.b16 %v5275
    %v6388 = vunpack.c.l.b16 %v5276
    %v6389 = vunpack.c.h.b16 %v5276
    %v6390 = vunpack.c.l.b16 %v5277
    %v6391 = vunpack.c.h.b16 %v5277
    %v6392 = vunpack.c.l.b16 %v5278
    %v6393 = vunpack.c.h.b16 %v5278
    %v6394 = vunpack.c.l.b16 %v5279
    %v6395 = vunpack.c.h.b16 %v5279
    %v6396 = vunpack.c.l.b16 %v5280
    %v6397 = vunpack.c.h.b16 %v5280
    %v6398 = vunpack.c.l.b16 %v5281
    %v6399 = vunpack.c.h.b16 %v5281
    %v6400 = vunpack.c.l.b16 %v5282
    %v6401 = vunpack.c.h.b16 %v5282
    %v6402 = vunpack.c.l.b16 %v5283
    %v6403 = vunpack.c.h.b16 %v5283
    %v6404 = vunpack.c.l.b16 %v5284
    %v6405 = vunpack.c.h.b16 %v5284
    %v6406 = vunpack.c.l.b16 %v5285
    %v6407 = vunpack.c.h.b16 %v5285
    %v6408 = vunpack.c.l.b16 %v5286
    %v6409 = vunpack.c.h.b16 %v5286
    %v6410 = vunpack.c.l.b16 %v5287
    %v6411 = vunpack.c.h.b16 %v5287
    %v6412 = vunpack.c.l.b16 %v5288
    %v6413 = vunpack.c.h.b16 %v5288
    %v6414 = vunpack.c.l.b16 %v5289
    %v6415 = vunpack.c.h.b16 %v5289
    %v6416 = vunpack.c.l.b16 %v5290
    %v6417 = vunpack.c.h.b16 %v5290
    %v6418 = vunpack.c.l.b16 %v5291
    %v6419 = vunpack.c.h.b16 %v5291
    %v6420 = vunpack.c.l.b16 %v5292
    %v6421 = vunpack.c.h.b16 %v5292
    %v6422 = vunpack.c.l.b16 %v5293
    %v6423 = vunpack.c.h.b16 %v5293
    %v6424 = vunpack.c.l.b16 %v5294
    %v6425 = vunpack.c.h.b16 %v5294
    %v6426 = vunpack.c.l.b16 %v5295
    %v6427 = vunpack.c.h.b16 %v5295
    %v6428 = vunpack.c.l.b16 %v5296
    %v6429 = vunpack.c.h.b16 %v5296
    %v6430 = vunpack.c.l.b16 %v5297
    %v6431 = vunpack.c.h.b16 %v5297
    %v6432 = vunpack.c.l.b16 %v5298
    %v6433 = vunpack.c.h.b16 %v5298
    %v6434 = vunpack.c.l.b16 %v5299
    %v6435 = vunpack.c.h.b16 %v5299
    %v6436 = vunpack.c.l.b16 %v5300
    %v6437 = vunpack.c.h.b16 %v5300
    %v6438 = vunpack.c.l.b16 %v5301
    %v6439 = vunpack.c.h.b16 %v5301
    %v6440 = vunpack.c.l.b16 %v5302
    %v6441 = vunpack.c.h.b16 %v5302
    %v6442 = vunpack.c.l.b16 %v5303
    %v6443 = vunpack.c.h.b16 %v5303
    %v6444 = vunpack.c.l.b16 %v5304
    %v6445 = vunpack.c.h.b16 %v5304
    %v6446 = vunpack.c.l.b16 %v5305
    %v6447 = vunpack.c.h.b16 %v5305
    %v6448 = vunpack.c.l.b16 %v5306
    %v6449 = vunpack.c.h.b16 %v5306
    %v6450 = vunpack.c.l.b16 %v5307
    %v6451 = vunpack.c.h.b16 %v5307
    %v6452 = vunpack.c.l.b16 %v5308
    %v6453 = vunpack.c.h.b16 %v5308
    %v6454 = vunpack.c.l.b16 %v5309
    %v6455 = vunpack.c.h.b16 %v5309
    %v6456 = vunpack.c.l.b16 %v5310
    %v6457 = vunpack.c.h.b16 %v5310
    %v6458 = vunpack.c.l.b16 %v5311
    %v6459 = vunpack.c.h.b16 %v5311
    %v6460 = vunpack.c.l.b16 %v5312
    %v6461 = vunpack.c.h.b16 %v5312
    %v6462 = vunpack.c.l.b16 %v5313
    %v6463 = vunpack.c.h.b16 %v5313
    %v6464 = vunpack.c.l.b16 %v5314
    %v6465 = vunpack.c.h.b16 %v5314
    %v6466 = vunpack.c.l.b16 %v5315
    %v6467 = vunpack.c.h.b16 %v5315
    %v6468 = vpack.c.b16 %v5706, %v5700
    %v6469 = vpack.c.b16 %v5707, %v5701
    %v6470 = vpack.c.b16 %v5708, %v5702
    %v6471 = vpack.c.b16 %v5709, %v5703
    %v6472 = vpack.c.b16 %v5710, %v5704
    %v6473 = vpack.c.b16 %v5711, %v5705
    %v6474 = vpack.c.b16 %v5718, %v5712
    %v6475 = vpack.c.b16 %v5719, %v5713
    %v6476 = vpack.c.b16 %v5720, %v5714
    %v6477 = vpack.c.b16 %v5721, %v5715
    %v6478 = vpack.c.b16 %v5722, %v5716
    %v6479 = vpack.c.b16 %v5723, %v5717
    %v6480 = vpack.c.b16 %v5730, %v5724
    %v6481 = vpack.c.b16 %v5731, %v5725
    %v6482 = vpack.c.b16 %v5732, %v5726
    %v6483 = vpack.c.b16 %v5733, %v5727
    %v6484 = vpack.c.b16 %v5734, %v5728
    %v6485 = vpack.c.b16 %v5735, %v5729
    %v6486 = vpack.c.b16 %v5742, %v5736
    %v6487 = vpack.c.b16 %v5743, %v5737
    %v6488 = vpack.c.b16 %v5744, %v5738
    %v6489 = vpack.c.b16 %v5745, %v5739
    %v6490 = vpack.c.b16 %v5746, %v5740
    %v6491 = vpack.c.b16 %v5747, %v5741
    %v6492 = vpack.c.b16 %v5754, %v5748
    %v6493 = vpack.c.b16 %v5755, %v5749
    %v6494 = vpack.c.b16 %v5756, %v5750
    %v6495 = vpack.c.b16 %v5757, %v5751
    %v6496 = vpack.c.b16 %v5758, %v5752
    %v6497 = vpack.c.b16 %v5759, %v5753
    %v6498 = vpack.c.b16 %v5766, %v5760
    %v6499 = vpack.c.b16 %v5767, %v5761
    %v6500 = vpack.c.b16 %v5768, %v5762
    %v6501 = vpack.c.b16 %v5769, %v5763
    %v6502 = vpack.c.b16 %v5770, %v5764
    %v6503 = vpack.c.b16 %v5771, %v5765
    %v6504 = vpack.c.b16 %v5778, %v5772
    %v6505 = vpack.c.b16 %v5779, %v5773
    %v6506 = vpack.c.b16 %v5780, %v5774
    %v6507 = vpack.c.b16 %v5781, %v5775
    %v6508 = vpack.c.b16 %v5782, %v5776
    %v6509 = vpack.c.b16 %v5783, %v5777
    %v6510 = vpack.c.b16 %v5790, %v5784
    %v6511 = vpack.c.b16 %v5791, %v5785
    %v6512 = vpack.c.b16 %v5792, %v5786
    %v6513 = vpack.c.b16 %v5793, %v5787
    %v6514 = vpack.c.b16 %v5794, %v5788
    %v6515 = vpack.c.b16 %v5795, %v5789
    %v6516 = vpack.c.b16 %v5802, %v5796
    %v6517 = vpack.c.b16 %v5803, %v5797
    %v6518 = vpack.c.b16 %v5804, %v5798
    %v6519 = vpack.c.b16 %v5805, %v5799
    %v6520 = vpack.c.b16 %v5806, %v5800
    %v6521 = vpack.c.b16 %v5807, %v5801
    %v6522 = vpack.c.b16 %v5814, %v5808
    %v6523 = vpack.c.b16 %v5815, %v5809
    %v6524 = vpack.c.b16 %v5816, %v5810
    %v6525 = vpack.c.b16 %v5817, %v5811
    %v6526 = vpack.c.b16 %v5818, %v5812
    %v6527 = vpack.c.b16 %v5819, %v5813
    %v6528 = vpack.c.b16 %v5826, %v5820
    %v6529 = vpack.c.b16 %v5827, %v5821
    %v6530 = vpack.c.b16 %v5828, %v5822
    %v6531 = vpack.c.b16 %v5829, %v5823
    %v6532 = vpack.c.b16 %v5830, %v5824
    %v6533 = vpack.c.b16 %v5831, %v5825
    %v6534 = vpack.c.b16 %v5838, %v5832
    %v6535 = vpack.c.b16 %v5839, %v5833
    %v6536 = vpack.c.b16 %v5840, %v5834
    %v6537 = vpack.c.b16 %v5841, %v5835
    %v6538 = vpack.c.b16 %v5842, %v5836
    %v6539 = vpack.c.b16 %v5843, %v5837
    %v6540 = vpack.c.b16 %v5850, %v5844
    %v6541 = vpack.c.b16 %v5851, %v5845
    %v6542 = vpack.c.b16 %v5852, %v5846
    %v6543 = vpack.c.b16 %v5853, %v5847
    %v6544 = vpack.c.b16 %v5854, %v5848
    %v6545 = vpack.c.b16 %v5855, %v5849
    %v6546 = vpack.c.b16 %v5862, %v5856
    %v6547 = vpack.c.b16 %v5863, %v5857
    %v6548 = vpack.c.b16 %v5864, %v5858
    %v6549 = vpack.c.b16 %v5865, %v5859
    %v6550 = vpack.c.b16 %v5866, %v5860
    %v6551 = vpack.c.b16 %v5867, %v5861
    %v6552 = vpack.c.b16 %v5874, %v5868
    %v6553 = vpack.c.b16 %v5875, %v5869
    %v6554 = vpack.c.b16 %v5876, %v5870
    %v6555 = vpack.c.b16 %v5877, %v5871
    %v6556 = vpack.c.b16 %v5878, %v5872
    %v6557 = vpack.c.b16 %v5879, %v5873
    %v6558 = vpack.c.b16 %v5886, %v5880
    %v6559 = vpack.c.b16 %v5887, %v5881
    %v6560 = vpack.c.b16 %v5888, %v5882
    %v6561 = vpack.c.b16 %v5889, %v5883
    %v6562 = vpack.c.b16 %v5890, %v5884
    %v6563 = vpack.c.b16 %v5891, %v5885
    %v6564 = vpack.c.b16 %v5898, %v5892
    %v6565 = vpack.c.b16 %v5899, %v5893
    %v6566 = vpack.c.b16 %v5900, %v5894
    %v6567 = vpack.c.b16 %v5901, %v5895
    %v6568 = vpack.c.b16 %v5902, %v5896
    %v6569 = vpack.c.b16 %v5903, %v5897
    %v6570 = vpack.c.b16 %v5910, %v5904
    %v6571 = vpack.c.b16 %v5911, %v5905
    %v6572 = vpack.c.b16 %v5912, %v5906
    %v6573 = vpack.c.b16 %v5913, %v5907
    %v6574 = vpack.c.b16 %v5914, %v5908
    %v6575 = vpack.c.b16 %v5915, %v5909
    %v6576 = vpack.c.b16 %v5922, %v5916
    %v6577 = vpack.c.b16 %v5923, %v5917
    %v6578 = vpack.c.b16 %v5924, %v5918
    %v6579 = vpack.c.b16 %v5925, %v5919
    %v6580 = vpack.c.b16 %v5926, %v5920
    %v6581 = vpack.c.b16 %v5927, %v5921
    %v6582 = vpack.c.b16 %v5934, %v5928
    %v6583 = vpack.c.b16 %v5935, %v5929
    %v6584 = vpack.c.b16 %v5936, %v5930
    %v6585 = vpack.c.b16 %v5937, %v5931
    %v6586 = vpack.c.b16 %v5938, %v5932
    %v6587 = vpack.c.b16 %v5939, %v5933
    %v6588 = vpack.c.b16 %v5946, %v5940
    %v6589 = vpack.c.b16 %v5947, %v5941
    %v6590 = vpack.c.b16 %v5948, %v5942
    %v6591 = vpack.c.b16 %v5949, %v5943
    %v6592 = vpack.c.b16 %v5950, %v5944
    %v6593 = vpack.c.b16 %v5951, %v5945
    %v6594 = vpack.c.b16 %v5958, %v5952
    %v6595 = vpack.c.b16 %v5959, %v5953
    %v6596 = vpack.c.b16 %v5960, %v5954
    %v6597 = vpack.c.b16 %v5961, %v5955
    %v6598 = vpack.c.b16 %v5962, %v5956
    %v6599 = vpack.c.b16 %v5963, %v5957
    %v6600 = vpack.c.b16 %v5970, %v5964
    %v6601 = vpack.c.b16 %v5971, %v5965
    %v6602 = vpack.c.b16 %v5972, %v5966
    %v6603 = vpack.c.b16 %v5973, %v5967
    %v6604 = vpack.c.b16 %v5974, %v5968
    %v6605 = vpack.c.b16 %v5975, %v5969
    %v6606 = vpack.c.b16 %v5982, %v5976
    %v6607 = vpack.c.b16 %v5983, %v5977
    %v6608 = vpack.c.b16 %v5984, %v5978
    %v6609 = vpack.c.b16 %v5985, %v5979
    %v6610 = vpack.c.b16 %v5986, %v5980
    %v6611 = vpack.c.b16 %v5987, %v5981
    %v6612 = vpack.c.b16 %v5994, %v5988
    %v6613 = vpack.c.b16 %v5995, %v5989
    %v6614 = vpack.c.b16 %v5996, %v5990
    %v6615 = vpack.c.b16 %v5997, %v5991
    %v6616 = vpack.c.b16 %v5998, %v5992
    %v6617 = vpack.c.b16 %v5999, %v5993
    %v6618 = vpack.c.b16 %v6006, %v6000
    %v6619 = vpack.c.b16 %v6007, %v6001
    %v6620 = vpack.c.b16 %v6008, %v6002
    %v6621 = vpack.c.b16 %v6009, %v6003
    %v6622 = vpack.c.b16 %v6010, %v6004
    %v6623 = vpack.c.b16 %v6011, %v6005
    %v6624 = vpack.c.b16 %v6018, %v6012
    %v6625 = vpack.c.b16 %v6019, %v6013
    %v6626 = vpack.c.b16 %v6020, %v6014
    %v6627 = vpack.c.b16 %v6021, %v6015
    %v6628 = vpack.c.b16 %v6022, %v6016
    %v6629 = vpack.c.b16 %v6023, %v6017
    %v6630 = vpack.c.b16 %v6030, %v6024
    %v6631 = vpack.c.b16 %v6031, %v6025
    %v6632 = vpack.c.b16 %v6032, %v6026
    %v6633 = vpack.c.b16 %v6033, %v6027
    %v6634 = vpack.c.b16 %v6034, %v6028
    %v6635 = vpack.c.b16 %v6035, %v6029
    %v6636 = vpack.c.b16 %v6042, %v6036
    %v6637 = vpack.c.b16 %v6043, %v6037
    %v6638 = vpack.c.b16 %v6044, %v6038
    %v6639 = vpack.c.b16 %v6045, %v6039
    %v6640 = vpack.c.b16 %v6046, %v6040
    %v6641 = vpack.c.b16 %v6047, %v6041
    %v6642 = vpack.c.b16 %v6054, %v6048
    %v6643 = vpack.c.b16 %v6055, %v6049
    %v6644 = vpack.c.b16 %v6056, %v6050
    %v6645 = vpack.c.b16 %v6057, %v6051
    %v6646 = vpack.c.b16 %v6058, %v6052
    %v6647 = vpack.c.b16 %v6059, %v6053
    %v6648 = vpack.c.b16 %v6066, %v6060
    %v6649 = vpack.c.b16 %v6067, %v6061
    %v6650 = vpack.c.b16 %v6068, %v6062
    %v6651 = vpack.c.b16 %v6069, %v6063
    %v6652 = vpack.c.b16 %v6070, %v6064
    %v6653 = vpack.c.b16 %v6071, %v6065
    %v6654 = vpack.c.b16 %v6078, %v6072
    %v6655 = vpack.c.b16 %v6079, %v6073
    %v6656 = vpack.c.b16 %v6080, %v6074
    %v6657 = vpack.c.b16 %v6081, %v6075
    %v6658 = vpack.c.b16 %v6082, %v6076
    %v6659 = vpack.c.b16 %v6083, %v6077
    %v6660 = vpack.c.b16 %v6090, %v6084
    %v6661 = vpack.c.b16 %v6091, %v6085
    %v6662 = vpack.c.b16 %v6092, %v6086
    %v6663 = vpack.c.b16 %v6093, %v6087
    %v6664 = vpack.c.b16 %v6094, %v6088
    %v6665 = vpack.c.b16 %v6095, %v6089
    %v6666 = vpack.c.b16 %v6102, %v6096
    %v6667 = vpack.c.b16 %v6103, %v6097
    %v6668 = vpack.c.b16 %v6104, %v6098
    %v6669 = vpack.c.b16 %v6105, %v6099
    %v6670 = vpack.c.b16 %v6106, %v6100
    %v6671 = vpack.c.b16 %v6107, %v6101
    %v6672 = vpack.c.b16 %v6114, %v6108
    %v6673 = vpack.c.b16 %v6115, %v6109
    %v6674 = vpack.c.b16 %v6116, %v6110
    %v6675 = vpack.c.b16 %v6117, %v6111
    %v6676 = vpack.c.b16 %v6118, %v6112
    %v6677 = vpack.c.b16 %v6119, %v6113
    %v6678 = vpack.c.b16 %v6126, %v6120
    %v6679 = vpack.c.b16 %v6127, %v6121
    %v6680 = vpack.c.b16 %v6128, %v6122
    %v6681 = vpack.c.b16 %v6129, %v6123
    %v6682 = vpack.c.b16 %v6130, %v6124
    %v6683 = vpack.c.b16 %v6131, %v6125
    %v6684 = vpack.c.b16 %v6138, %v6132
    %v6685 = vpack.c.b16 %v6139, %v6133
    %v6686 = vpack.c.b16 %v6140, %v6134
    %v6687 = vpack.c.b16 %v6141, %v6135
    %v6688 = vpack.c.b16 %v6142, %v6136
    %v6689 = vpack.c.b16 %v6143, %v6137
    %v6690 = vpack.c.b16 %v6150, %v6144
    %v6691 = vpack.c.b16 %v6151, %v6145
    %v6692 = vpack.c.b16 %v6152, %v6146
    %v6693 = vpack.c.b16 %v6153, %v6147
    %v6694 = vpack.c.b16 %v6154, %v6148
    %v6695 = vpack.c.b16 %v6155, %v6149
    %v6696 = vpack.c.b16 %v6162, %v6156
    %v6697 = vpack.c.b16 %v6163, %v6157
    %v6698 = vpack.c.b16 %v6164, %v6158
    %v6699 = vpack.c.b16 %v6165, %v6159
    %v6700 = vpack.c.b16 %v6166, %v6160
    %v6701 = vpack.c.b16 %v6167, %v6161
    %v6702 = vpack.c.b16 %v6174, %v6168
    %v6703 = vpack.c.b16 %v6175, %v6169
    %v6704 = vpack.c.b16 %v6176, %v6170
    %v6705 = vpack.c.b16 %v6177, %v6171
    %v6706 = vpack.c.b16 %v6178, %v6172
    %v6707 = vpack.c.b16 %v6179, %v6173
    %v6708 = vpack.c.b16 %v6186, %v6180
    %v6709 = vpack.c.b16 %v6187, %v6181
    %v6710 = vpack.c.b16 %v6188, %v6182
    %v6711 = vpack.c.b16 %v6189, %v6183
    %v6712 = vpack.c.b16 %v6190, %v6184
    %v6713 = vpack.c.b16 %v6191, %v6185
    %v6714 = vpack.c.b16 %v6198, %v6192
    %v6715 = vpack.c.b16 %v6199, %v6193
    %v6716 = vpack.c.b16 %v6200, %v6194
    %v6717 = vpack.c.b16 %v6201, %v6195
    %v6718 = vpack.c.b16 %v6202, %v6196
    %v6719 = vpack.c.b16 %v6203, %v6197
    %v6720 = vpack.c.b16 %v6210, %v6204
    %v6721 = vpack.c.b16 %v6211, %v6205
    %v6722 = vpack.c.b16 %v6212, %v6206
    %v6723 = vpack.c.b16 %v6213, %v6207
    %v6724 = vpack.c.b16 %v6214, %v6208
    %v6725 = vpack.c.b16 %v6215, %v6209
    %v6726 = vpack.c.b16 %v6222, %v6216
    %v6727 = vpack.c.b16 %v6223, %v6217
    %v6728 = vpack.c.b16 %v6224, %v6218
    %v6729 = vpack.c.b16 %v6225, %v6219
    %v6730 = vpack.c.b16 %v6226, %v6220
    %v6731 = vpack.c.b16 %v6227, %v6221
    %v6732 = vpack.c.b16 %v6234, %v6228
    %v6733 = vpack.c.b16 %v6235, %v6229
    %v6734 = vpack.c.b16 %v6236, %v6230
    %v6735 = vpack.c.b16 %v6237, %v6231
    %v6736 = vpack.c.b16 %v6238, %v6232
    %v6737 = vpack.c.b16 %v6239, %v6233
    %v6738 = vpack.c.b16 %v6246, %v6240
    %v6739 = vpack.c.b16 %v6247, %v6241
    %v6740 = vpack.c.b16 %v6248, %v6242
    %v6741 = vpack.c.b16 %v6249, %v6243
    %v6742 = vpack.c.b16 %v6250, %v6244
    %v6743 = vpack.c.b16 %v6251, %v6245
    %v6744 = vpack.c.b16 %v6258, %v6252
    %v6745 = vpack.c.b16 %v6259, %v6253
    %v6746 = vpack.c.b16 %v6260, %v6254
    %v6747 = vpack.c.b16 %v6261, %v6255
    %v6748 = vpack.c.b16 %v6262, %v6256
    %v6749 = vpack.c.b16 %v6263, %v6257
    %v6750 = vpack.c.b16 %v6270, %v6264
    %v6751 = vpack.c.b16 %v6271, %v6265
    %v6752 = vpack.c.b16 %v6272, %v6266
    %v6753 = vpack.c.b16 %v6273, %v6267
    %v6754 = vpack.c.b16 %v6274, %v6268
    %v6755 = vpack.c.b16 %v6275, %v6269
    %v6756 = vpack.c.b16 %v6282, %v6276
    %v6757 = vpack.c.b16 %v6283, %v6277
    %v6758 = vpack.c.b16 %v6284, %v6278
    %v6759 = vpack.c.b16 %v6285, %v6279
    %v6760 = vpack.c.b16 %v6286, %v6280
    %v6761 = vpack.c.b16 %v6287, %v6281
    %v6762 = vpack.c.b16 %v6294, %v6288
    %v6763 = vpack.c.b16 %v6295, %v6289
    %v6764 = vpack.c.b16 %v6296, %v6290
    %v6765 = vpack.c.b16 %v6297, %v6291
    %v6766 = vpack.c.b16 %v6298, %v6292
    %v6767 = vpack.c.b16 %v6299, %v6293
    %v6768 = vpack.c.b16 %v6306, %v6300
    %v6769 = vpack.c.b16 %v6307, %v6301
    %v6770 = vpack.c.b16 %v6308, %v6302
    %v6771 = vpack.c.b16 %v6309, %v6303
    %v6772 = vpack.c.b16 %v6310, %v6304
    %v6773 = vpack.c.b16 %v6311, %v6305
    %v6774 = vpack.c.b16 %v6318, %v6312
    %v6775 = vpack.c.b16 %v6319, %v6313
    %v6776 = vpack.c.b16 %v6320, %v6314
    %v6777 = vpack.c.b16 %v6321, %v6315
    %v6778 = vpack.c.b16 %v6322, %v6316
    %v6779 = vpack.c.b16 %v6323, %v6317
    %v6780 = vpack.c.b16 %v6330, %v6324
    %v6781 = vpack.c.b16 %v6331, %v6325
    %v6782 = vpack.c.b16 %v6332, %v6326
    %v6783 = vpack.c.b16 %v6333, %v6327
    %v6784 = vpack.c.b16 %v6334, %v6328
    %v6785 = vpack.c.b16 %v6335, %v6329
    %v6786 = vpack.c.b16 %v6342, %v6336
    %v6787 = vpack.c.b16 %v6343, %v6337
    %v6788 = vpack.c.b16 %v6344, %v6338
    %v6789 = vpack.c.b16 %v6345, %v6339
    %v6790 = vpack.c.b16 %v6346, %v6340
    %v6791 = vpack.c.b16 %v6347, %v6341
    %v6792 = vpack.c.b16 %v6354, %v6348
    %v6793 = vpack.c.b16 %v6355, %v6349
    %v6794 = vpack.c.b16 %v6356, %v6350
    %v6795 = vpack.c.b16 %v6357, %v6351
    %v6796 = vpack.c.b16 %v6358, %v6352
    %v6797 = vpack.c.b16 %v6359, %v6353
    %v6798 = vpack.c.b16 %v6366, %v6360
    %v6799 = vpack.c.b16 %v6367, %v6361
    %v6800 = vpack.c.b16 %v6368, %v6362
    %v6801 = vpack.c.b16 %v6369, %v6363
    %v6802 = vpack.c.b16 %v6370, %v6364
    %v6803 = vpack.c.b16 %v6371, %v6365
    %v6804 = vpack.c.b16 %v6378, %v6372
    %v6805 = vpack.c.b16 %v6379, %v6373
    %v6806 = vpack.c.b16 %v6380, %v6374
    %v6807 = vpack.c.b16 %v6381, %v6375
    %v6808 = vpack.c.b16 %v6382, %v6376
    %v6809 = vpack.c.b16 %v6383, %v6377
    %v6810 = vpack.c.b16 %v6390, %v6384
    %v6811 = vpack.c.b16 %v6391, %v6385
    %v6812 = vpack.c.b16 %v6392, %v6386
    %v6813 = vpack.c.b16 %v6393, %v6387
    %v6814 = vpack.c.b16 %v6394, %v6388
    %v6815 = vpack.c.b16 %v6395, %v6389
    %v6816 = vpack.c.b16 %v6402, %v6396
    %v6817 = vpack.c.b16 %v6403, %v6397
    %v6818 = vpack.c.b16 %v6404, %v6398
    %v6819 = vpack.c.b16 %v6405, %v6399
    %v6820 = vpack.c.b16 %v6406, %v6400
    %v6821 = vpack.c.b16 %v6407, %v6401
    %v6822 = vpack.c.b16 %v6414, %v6408
    %v6823 = vpack.c.b16 %v6415, %v6409
    %v6824 = vpack.c.b16 %v6416, %v6410
    %v6825 = vpack.c.b16 %v6417, %v6411
    %v6826 = vpack.c.b16 %v6418, %v6412
    %v6827 = vpack.c.b16 %v6419, %v6413
    %v6828 = vpack.c.b16 %v6426, %v6420
    %v6829 = vpack.c.b16 %v6427, %v6421
    %v6830 = vpack.c.b16 %v6428, %v6422
    %v6831 = vpack.c.b16 %v6429, %v6423
    %v6832 = vpack.c.b16 %v6430, %v6424
    %v6833 = vpack.c.b16 %v6431, %v6425
    %v6834 = vpack.c.b16 %v6438, %v6432
    %v6835 = vpack.c.b16 %v6439, %v6433
    %v6836 = vpack.c.b16 %v6440, %v6434
    %v6837 = vpack.c.b16 %v6441, %v6435
    %v6838 = vpack.c.b16 %v6442, %v6436
    %v6839 = vpack.c.b16 %v6443, %v6437
    %v6840 = vpack.c.b16 %v6450, %v6444
    %v6841 = vpack.c.b16 %v6451, %v6445
    %v6842 = vpack.c.b16 %v6452, %v6446
    %v6843 = vpack.c.b16 %v6453, %v6447
    %v6844 = vpack.c.b16 %v6454, %v6448
    %v6845 = vpack.c.b16 %v6455, %v6449
    %v6846 = vpack.c.b16 %v6462, %v6456
    %v6847 = vpack.c.b16 %v6463, %v6457
    %v6848 = vpack.c.b16 %v6464, %v6458
    %v6849 = vpack.c.b16 %v6465, %v6459
    %v6850 = vpack.c.b16 %v6466, %v6460
    %v6851 = vpack.c.b16 %v6467, %v6461
    %7236 = vmatprep.subr.bf16.mxu0 %v6511
    %7237 = vmatpush1.bf16.msra.mxu0 %v6510
    %7238 = vmatprep.subr.bf16.mxu0 %v6505
    %7239 = vmatpush1.bf16.msra.mxu0 %v6504
    %7240 = vmatprep.subr.bf16.mxu0 %v6499
    %7241 = vmatpush1.bf16.msra.mxu0 %v6498
    %7242 = vmatprep.subr.bf16.mxu0 %v6493
    %7243 = vmatpush1.bf16.msra.mxu0 %v6492
    %7244 = vmatprep.subr.bf16.mxu0 %v6487
    %7245 = vmatpush1.bf16.msra.mxu0 %v6486
    %7246 = vmatprep.subr.bf16.mxu0 %v6481
    %7247 = vmatpush1.bf16.msra.mxu0 %v6480
    %7248 = vmatprep.subr.bf16.mxu0 %v6475
    %7249 = vmatpush1.bf16.msra.mxu0 %v6474
    %7250 = vmatprep.subr.bf16.mxu0 %v6469
    %7251 = vmatpush1.bf16.msra.mxu0 %v6468
    %7252 = vmatprep.subr.bf16.mxu0 %v6559
    %7253 = vmatpush2.bf16.msra.mxu0 %v6558
    %7254 = vmatprep.subr.bf16.mxu0 %v6553
    %7255 = vmatpush2.bf16.msra.mxu0 %v6552
    %7256 = vmatprep.subr.bf16.mxu0 %v6547
    %7257 = vmatpush2.bf16.msra.mxu0 %v6546
    %7258 = vmatprep.subr.bf16.mxu0 %v6541
    %7259 = vmatpush2.bf16.msra.mxu0 %v6540
    %7260 = vmatprep.subr.bf16.mxu0 %v6535
    %7261 = vmatpush2.bf16.msra.mxu0 %v6534
    %7262 = vmatprep.subr.bf16.mxu0 %v6529
    %7263 = vmatpush2.bf16.msra.mxu0 %v6528
    %7264 = vmatprep.subr.bf16.mxu0 %v6523
    %7265 = vmatpush2.bf16.msra.mxu0 %v6522
    %7266 = vmatprep.subr.bf16.mxu0 %v6517
    %7267 = vmatpush2.bf16.msra.mxu0 %v6516
    %7268 = vmatprep.mubr.bf16.mxu0 %v4925
    %7269 = vmatmul.mubr.bf16.gmra.mxu0 %v4924
    %v7270 = vpop.f32.mrf.mxu0
    %v7271 = vadd.f32 0.0, %v7270
    %v7272 = vpop.f32.mrf.mxu0
    %v7273 = vadd.f32 0.0, %v7272
    %v7274 = vpop.f32.mrf.mxu0
    %v7275 = vpop.f32.mrf.mxu0
    %7276 = vdwg.mxu0
    %7277 = vmatprep.subr.bf16.mxu0 %v6607
    %7278 = vmatpush1.bf16.msra.mxu0 %v6606
    %7279 = vmatprep.subr.bf16.mxu0 %v6601
    %7280 = vmatpush1.bf16.msra.mxu0 %v6600
    %7281 = vmatprep.subr.bf16.mxu0 %v6595
    %7282 = vmatpush1.bf16.msra.mxu0 %v6594
    %7283 = vmatprep.subr.bf16.mxu0 %v6589
    %7284 = vmatpush1.bf16.msra.mxu0 %v6588
    %7285 = vmatprep.subr.bf16.mxu0 %v6583
    %7286 = vmatpush1.bf16.msra.mxu0 %v6582
    %7287 = vmatprep.subr.bf16.mxu0 %v6577
    %7288 = vmatpush1.bf16.msra.mxu0 %v6576
    %7289 = vmatprep.subr.bf16.mxu0 %v6571
    %7290 = vmatpush1.bf16.msra.mxu0 %v6570
    %7291 = vmatprep.subr.bf16.mxu0 %v6565
    %7292 = vmatpush1.bf16.msra.mxu0 %v6564
    %7293 = vmatprep.subr.bf16.mxu0 %v6655
    %7294 = vmatpush2.bf16.msra.mxu0 %v6654
    %7295 = vmatprep.subr.bf16.mxu0 %v6649
    %7296 = vmatpush2.bf16.msra.mxu0 %v6648
    %7297 = vmatprep.subr.bf16.mxu0 %v6643
    %7298 = vmatpush2.bf16.msra.mxu0 %v6642
    %7299 = vmatprep.subr.bf16.mxu0 %v6637
    %7300 = vmatpush2.bf16.msra.mxu0 %v6636
    %7301 = vmatprep.subr.bf16.mxu0 %v6631
    %7302 = vmatpush2.bf16.msra.mxu0 %v6630
    %7303 = vmatprep.subr.bf16.mxu0 %v6625
    %7304 = vmatpush2.bf16.msra.mxu0 %v6624
    %7305 = vmatprep.subr.bf16.mxu0 %v6619
    %7306 = vmatpush2.bf16.msra.mxu0 %v6618
    %7307 = vmatprep.subr.bf16.mxu0 %v6613
    %7308 = vmatpush2.bf16.msra.mxu0 %v6612
    %7309 = vmatprep.mubr.bf16.mxu0 %v4927
    %7310 = vmatmul.mubr.bf16.gmra.mxu0 %v4926
    %v7311 = vpop.f32.mrf.mxu0
    %v7312 = vadd.f32 %v7271, %v7311
    %v7313 = vpop.f32.mrf.mxu0
    %v7314 = vadd.f32 %v7273, %v7313
    %v7315 = vpop.f32.mrf.mxu0
    %v7316 = vpop.f32.mrf.mxu0
    %7317 = vdwg.mxu0
    %7318 = vmatprep.subr.bf16.mxu0 %v6703
    %7319 = vmatpush1.bf16.msra.mxu0 %v6702
    %7320 = vmatprep.subr.bf16.mxu0 %v6697
    %7321 = vmatpush1.bf16.msra.mxu0 %v6696
    %7322 = vmatprep.subr.bf16.mxu0 %v6691
    %7323 = vmatpush1.bf16.msra.mxu0 %v6690
    %7324 = vmatprep.subr.bf16.mxu0 %v6685
    %7325 = vmatpush1.bf16.msra.mxu0 %v6684
    %7326 = vmatprep.subr.bf16.mxu0 %v6679
    %7327 = vmatpush1.bf16.msra.mxu0 %v6678
    %7328 = vmatprep.subr.bf16.mxu0 %v6673
    %7329 = vmatpush1.bf16.msra.mxu0 %v6672
    %7330 = vmatprep.subr.bf16.mxu0 %v6667
    %7331 = vmatpush1.bf16.msra.mxu0 %v6666
    %7332 = vmatprep.subr.bf16.mxu0 %v6661
    %7333 = vmatpush1.bf16.msra.mxu0 %v6660
    %7334 = vmatprep.subr.bf16.mxu0 %v6751
    %7335 = vmatpush2.bf16.msra.mxu0 %v6750
    %7336 = vmatprep.subr.bf16.mxu0 %v6745
    %7337 = vmatpush2.bf16.msra.mxu0 %v6744
    %7338 = vmatprep.subr.bf16.mxu0 %v6739
    %7339 = vmatpush2.bf16.msra.mxu0 %v6738
    %7340 = vmatprep.subr.bf16.mxu0 %v6733
    %7341 = vmatpush2.bf16.msra.mxu0 %v6732
    %7342 = vmatprep.subr.bf16.mxu0 %v6727
    %7343 = vmatpush2.bf16.msra.mxu0 %v6726
    %7344 = vmatprep.subr.bf16.mxu0 %v6721
    %7345 = vmatpush2.bf16.msra.mxu0 %v6720
    %7346 = vmatprep.subr.bf16.mxu0 %v6715
    %7347 = vmatpush2.bf16.msra.mxu0 %v6714
    %7348 = vmatprep.subr.bf16.mxu0 %v6709
    %7349 = vmatpush2.bf16.msra.mxu0 %v6708
    %7350 = vmatprep.mubr.bf16.mxu0 %v4929
    %7351 = vmatmul.mubr.bf16.gmra.mxu0 %v4928
    %v7352 = vpop.f32.mrf.mxu0
    %v7353 = vadd.f32 %v7312, %v7352
    %v7354 = vpop.f32.mrf.mxu0
    %v7355 = vadd.f32 %v7314, %v7354
    %v7356 = vpop.f32.mrf.mxu0
    %v7357 = vpop.f32.mrf.mxu0
    %7358 = vdwg.mxu0
    %7359 = vmatprep.subr.bf16.mxu0 %v6799
    %7360 = vmatpush1.bf16.msra.mxu0 %v6798
    %7361 = vmatprep.subr.bf16.mxu0 %v6793
    %7362 = vmatpush1.bf16.msra.mxu0 %v6792
    %7363 = vmatprep.subr.bf16.mxu0 %v6787
    %7364 = vmatpush1.bf16.msra.mxu0 %v6786
    %7365 = vmatprep.subr.bf16.mxu0 %v6781
    %7366 = vmatpush1.bf16.msra.mxu0 %v6780
    %7367 = vmatprep.subr.bf16.mxu0 %v6775
    %7368 = vmatpush1.bf16.msra.mxu0 %v6774
    %7369 = vmatprep.subr.bf16.mxu0 %v6769
    %7370 = vmatpush1.bf16.msra.mxu0 %v6768
    %7371 = vmatprep.subr.bf16.mxu0 %v6763
    %7372 = vmatpush1.bf16.msra.mxu0 %v6762
    %7373 = vmatprep.subr.bf16.mxu0 %v6757
    %7374 = vmatpush1.bf16.msra.mxu0 %v6756
    %7375 = vmatprep.subr.bf16.mxu0 %v6847
    %7376 = vmatpush2.bf16.msra.mxu0 %v6846
    %7377 = vmatprep.subr.bf16.mxu0 %v6841
    %7378 = vmatpush2.bf16.msra.mxu0 %v6840
    %7379 = vmatprep.subr.bf16.mxu0 %v6835
    %7380 = vmatpush2.bf16.msra.mxu0 %v6834
    %7381 = vmatprep.subr.bf16.mxu0 %v6829
    %7382 = vmatpush2.bf16.msra.mxu0 %v6828
    %7383 = vmatprep.subr.bf16.mxu0 %v6823
    %7384 = vmatpush2.bf16.msra.mxu0 %v6822
    %7385 = vmatprep.subr.bf16.mxu0 %v6817
    %7386 = vmatpush2.bf16.msra.mxu0 %v6816
    %7387 = vmatprep.subr.bf16.mxu0 %v6811
    %7388 = vmatpush2.bf16.msra.mxu0 %v6810
    %7389 = vmatprep.subr.bf16.mxu0 %v6805
    %7390 = vmatpush2.bf16.msra.mxu0 %v6804
    %7391 = vmatprep.mubr.bf16.mxu0 %v4931
    %7392 = vmatmul.mubr.bf16.gmra.mxu0 %v4930
    %v7393 = vpop.f32.mrf.mxu0
    %v7394 = vadd.f32 %v7353, %v7393
    %v7395 = vpop.f32.mrf.mxu0
    %v7396 = vadd.f32 %v7355, %v7395
    %v7397 = vpop.f32.mrf.mxu0
    %v7398 = vpop.f32.mrf.mxu0
    %7399 = vdwg.mxu0
    %7400 = vmatprep.subr.bf16.mxu0 %v6513
    %7401 = vmatpush1.bf16.msra.mxu0 %v6512
    %7402 = vmatprep.subr.bf16.mxu0 %v6507
    %7403 = vmatpush1.bf16.msra.mxu0 %v6506
    %7404 = vmatprep.subr.bf16.mxu0 %v6501
    %7405 = vmatpush1.bf16.msra.mxu0 %v6500
    %7406 = vmatprep.subr.bf16.mxu0 %v6495
    %7407 = vmatpush1.bf16.msra.mxu0 %v6494
    %7408 = vmatprep.subr.bf16.mxu0 %v6489
    %7409 = vmatpush1.bf16.msra.mxu0 %v6488
    %7410 = vmatprep.subr.bf16.mxu0 %v6483
    %7411 = vmatpush1.bf16.msra.mxu0 %v6482
    %7412 = vmatprep.subr.bf16.mxu0 %v6477
    %7413 = vmatpush1.bf16.msra.mxu0 %v6476
    %7414 = vmatprep.subr.bf16.mxu0 %v6471
    %7415 = vmatpush1.bf16.msra.mxu0 %v6470
    %7416 = vmatprep.subr.bf16.mxu0 %v6561
    %7417 = vmatpush2.bf16.msra.mxu0 %v6560
    %7418 = vmatprep.subr.bf16.mxu0 %v6555
    %7419 = vmatpush2.bf16.msra.mxu0 %v6554
    %7420 = vmatprep.subr.bf16.mxu0 %v6549
    %7421 = vmatpush2.bf16.msra.mxu0 %v6548
    %7422 = vmatprep.subr.bf16.mxu0 %v6543
    %7423 = vmatpush2.bf16.msra.mxu0 %v6542
    %7424 = vmatprep.subr.bf16.mxu0 %v6537
    %7425 = vmatpush2.bf16.msra.mxu0 %v6536
    %7426 = vmatprep.subr.bf16.mxu0 %v6531
    %7427 = vmatpush2.bf16.msra.mxu0 %v6530
    %7428 = vmatprep.subr.bf16.mxu0 %v6525
    %7429 = vmatpush2.bf16.msra.mxu0 %v6524
    %7430 = vmatprep.subr.bf16.mxu0 %v6519
    %7431 = vmatpush2.bf16.msra.mxu0 %v6518
    %7432 = vmatprep.mubr.bf16.mxu0 %v4925
    %7433 = vmatmul.mubr.bf16.gmra.mxu0 %v4924
    %v7434 = vpop.f32.mrf.mxu0
    %v7435 = vadd.f32 0.0, %v7434
    %v7436 = vpop.f32.mrf.mxu0
    %v7437 = vadd.f32 0.0, %v7436
    %v7438 = vpop.f32.mrf.mxu0
    %v7439 = vpop.f32.mrf.mxu0
    %7440 = vdwg.mxu0
    %7441 = vmatprep.subr.bf16.mxu0 %v6609
    %7442 = vmatpush1.bf16.msra.mxu0 %v6608
    %7443 = vmatprep.subr.bf16.mxu0 %v6603
    %7444 = vmatpush1.bf16.msra.mxu0 %v6602
    %7445 = vmatprep.subr.bf16.mxu0 %v6597
    %7446 = vmatpush1.bf16.msra.mxu0 %v6596
    %7447 = vmatprep.subr.bf16.mxu0 %v6591
    %7448 = vmatpush1.bf16.msra.mxu0 %v6590
    %7449 = vmatprep.subr.bf16.mxu0 %v6585
    %7450 = vmatpush1.bf16.msra.mxu0 %v6584
    %7451 = vmatprep.subr.bf16.mxu0 %v6579
    %7452 = vmatpush1.bf16.msra.mxu0 %v6578
    %7453 = vmatprep.subr.bf16.mxu0 %v6573
    %7454 = vmatpush1.bf16.msra.mxu0 %v6572
    %7455 = vmatprep.subr.bf16.mxu0 %v6567
    %7456 = vmatpush1.bf16.msra.mxu0 %v6566
    %7457 = vmatprep.subr.bf16.mxu0 %v6657
    %7458 = vmatpush2.bf16.msra.mxu0 %v6656
    %7459 = vmatprep.subr.bf16.mxu0 %v6651
    %7460 = vmatpush2.bf16.msra.mxu0 %v6650
    %7461 = vmatprep.subr.bf16.mxu0 %v6645
    %7462 = vmatpush2.bf16.msra.mxu0 %v6644
    %7463 = vmatprep.subr.bf16.mxu0 %v6639
    %7464 = vmatpush2.bf16.msra.mxu0 %v6638
    %7465 = vmatprep.subr.bf16.mxu0 %v6633
    %7466 = vmatpush2.bf16.msra.mxu0 %v6632
    %7467 = vmatprep.subr.bf16.mxu0 %v6627
    %7468 = vmatpush2.bf16.msra.mxu0 %v6626
    %7469 = vmatprep.subr.bf16.mxu0 %v6621
    %7470 = vmatpush2.bf16.msra.mxu0 %v6620
    %7471 = vmatprep.subr.bf16.mxu0 %v6615
    %7472 = vmatpush2.bf16.msra.mxu0 %v6614
    %7473 = vmatprep.mubr.bf16.mxu0 %v4927
    %7474 = vmatmul.mubr.bf16.gmra.mxu0 %v4926
    %v7475 = vpop.f32.mrf.mxu0
    %v7476 = vadd.f32 %v7435, %v7475
    %v7477 = vpop.f32.mrf.mxu0
    %v7478 = vadd.f32 %v7437, %v7477
    %v7479 = vpop.f32.mrf.mxu0
    %v7480 = vpop.f32.mrf.mxu0
    %7481 = vdwg.mxu0
    %7482 = vmatprep.subr.bf16.mxu0 %v6705
    %7483 = vmatpush1.bf16.msra.mxu0 %v6704
    %7484 = vmatprep.subr.bf16.mxu0 %v6699
    %7485 = vmatpush1.bf16.msra.mxu0 %v6698
    %7486 = vmatprep.subr.bf16.mxu0 %v6693
    %7487 = vmatpush1.bf16.msra.mxu0 %v6692
    %7488 = vmatprep.subr.bf16.mxu0 %v6687
    %7489 = vmatpush1.bf16.msra.mxu0 %v6686
    %7490 = vmatprep.subr.bf16.mxu0 %v6681
    %7491 = vmatpush1.bf16.msra.mxu0 %v6680
    %7492 = vmatprep.subr.bf16.mxu0 %v6675
    %7493 = vmatpush1.bf16.msra.mxu0 %v6674
    %7494 = vmatprep.subr.bf16.mxu0 %v6669
    %7495 = vmatpush1.bf16.msra.mxu0 %v6668
    %7496 = vmatprep.subr.bf16.mxu0 %v6663
    %7497 = vmatpush1.bf16.msra.mxu0 %v6662
    %7498 = vmatprep.subr.bf16.mxu0 %v6753
    %7499 = vmatpush2.bf16.msra.mxu0 %v6752
    %7500 = vmatprep.subr.bf16.mxu0 %v6747
    %7501 = vmatpush2.bf16.msra.mxu0 %v6746
    %7502 = vmatprep.subr.bf16.mxu0 %v6741
    %7503 = vmatpush2.bf16.msra.mxu0 %v6740
    %7504 = vmatprep.subr.bf16.mxu0 %v6735
    %7505 = vmatpush2.bf16.msra.mxu0 %v6734
    %7506 = vmatprep.subr.bf16.mxu0 %v6729
    %7507 = vmatpush2.bf16.msra.mxu0 %v6728
    %7508 = vmatprep.subr.bf16.mxu0 %v6723
    %7509 = vmatpush2.bf16.msra.mxu0 %v6722
    %7510 = vmatprep.subr.bf16.mxu0 %v6717
    %7511 = vmatpush2.bf16.msra.mxu0 %v6716
    %7512 = vmatprep.subr.bf16.mxu0 %v6711
    %7513 = vmatpush2.bf16.msra.mxu0 %v6710
    %7514 = vmatprep.mubr.bf16.mxu0 %v4929
    %7515 = vmatmul.mubr.bf16.gmra.mxu0 %v4928
    %v7516 = vpop.f32.mrf.mxu0
    %v7517 = vadd.f32 %v7476, %v7516
    %v7518 = vpop.f32.mrf.mxu0
    %v7519 = vadd.f32 %v7478, %v7518
    %v7520 = vpop.f32.mrf.mxu0
    %v7521 = vpop.f32.mrf.mxu0
    %7522 = vdwg.mxu0
    %7523 = vmatprep.subr.bf16.mxu0 %v6801
    %7524 = vmatpush1.bf16.msra.mxu0 %v6800
    %7525 = vmatprep.subr.bf16.mxu0 %v6795
    %7526 = vmatpush1.bf16.msra.mxu0 %v6794
    %7527 = vmatprep.subr.bf16.mxu0 %v6789
    %7528 = vmatpush1.bf16.msra.mxu0 %v6788
    %7529 = vmatprep.subr.bf16.mxu0 %v6783
    %7530 = vmatpush1.bf16.msra.mxu0 %v6782
    %7531 = vmatprep.subr.bf16.mxu0 %v6777
    %7532 = vmatpush1.bf16.msra.mxu0 %v6776
    %7533 = vmatprep.subr.bf16.mxu0 %v6771
    %7534 = vmatpush1.bf16.msra.mxu0 %v6770
    %7535 = vmatprep.subr.bf16.mxu0 %v6765
    %7536 = vmatpush1.bf16.msra.mxu0 %v6764
    %7537 = vmatprep.subr.bf16.mxu0 %v6759
    %7538 = vmatpush1.bf16.msra.mxu0 %v6758
    %7539 = vmatprep.subr.bf16.mxu0 %v6849
    %7540 = vmatpush2.bf16.msra.mxu0 %v6848
    %7541 = vmatprep.subr.bf16.mxu0 %v6843
    %7542 = vmatpush2.bf16.msra.mxu0 %v6842
    %7543 = vmatprep.subr.bf16.mxu0 %v6837
    %7544 = vmatpush2.bf16.msra.mxu0 %v6836
    %7545 = vmatprep.subr.bf16.mxu0 %v6831
    %7546 = vmatpush2.bf16.msra.mxu0 %v6830
    %7547 = vmatprep.subr.bf16.mxu0 %v6825
    %7548 = vmatpush2.bf16.msra.mxu0 %v6824
    %7549 = vmatprep.subr.bf16.mxu0 %v6819
    %7550 = vmatpush2.bf16.msra.mxu0 %v6818
    %7551 = vmatprep.subr.bf16.mxu0 %v6813
    %7552 = vmatpush2.bf16.msra.mxu0 %v6812
    %7553 = vmatprep.subr.bf16.mxu0 %v6807
    %7554 = vmatpush2.bf16.msra.mxu0 %v6806
    %7555 = vmatprep.mubr.bf16.mxu0 %v4931
    %7556 = vmatmul.mubr.bf16.gmra.mxu0 %v4930
    %v7557 = vpop.f32.mrf.mxu0
    %v7558 = vadd.f32 %v7517, %v7557
    %v7559 = vpop.f32.mrf.mxu0
    %v7560 = vadd.f32 %v7519, %v7559
    %v7561 = vpop.f32.mrf.mxu0
    %v7562 = vpop.f32.mrf.mxu0
    %7563 = vdwg.mxu0
    %7564 = vmatprep.subr.bf16.mxu0 %v6515
    %7565 = vmatpush1.bf16.msra.mxu0 %v6514
    %7566 = vmatprep.subr.bf16.mxu0 %v6509
    %7567 = vmatpush1.bf16.msra.mxu0 %v6508
    %7568 = vmatprep.subr.bf16.mxu0 %v6503
    %7569 = vmatpush1.bf16.msra.mxu0 %v6502
    %7570 = vmatprep.subr.bf16.mxu0 %v6497
    %7571 = vmatpush1.bf16.msra.mxu0 %v6496
    %7572 = vmatprep.subr.bf16.mxu0 %v6491
    %7573 = vmatpush1.bf16.msra.mxu0 %v6490
    %7574 = vmatprep.subr.bf16.mxu0 %v6485
    %7575 = vmatpush1.bf16.msra.mxu0 %v6484
    %7576 = vmatprep.subr.bf16.mxu0 %v6479
    %7577 = vmatpush1.bf16.msra.mxu0 %v6478
    %7578 = vmatprep.subr.bf16.mxu0 %v6473
    %7579 = vmatpush1.bf16.msra.mxu0 %v6472
    %7580 = vmatprep.subr.bf16.mxu0 %v6563
    %7581 = vmatpush2.bf16.msra.mxu0 %v6562
    %7582 = vmatprep.subr.bf16.mxu0 %v6557
    %7583 = vmatpush2.bf16.msra.mxu0 %v6556
    %7584 = vmatprep.subr.bf16.mxu0 %v6551
    %7585 = vmatpush2.bf16.msra.mxu0 %v6550
    %7586 = vmatprep.subr.bf16.mxu0 %v6545
    %7587 = vmatpush2.bf16.msra.mxu0 %v6544
    %7588 = vmatprep.subr.bf16.mxu0 %v6539
    %7589 = vmatpush2.bf16.msra.mxu0 %v6538
    %7590 = vmatprep.subr.bf16.mxu0 %v6533
    %7591 = vmatpush2.bf16.msra.mxu0 %v6532
    %7592 = vmatprep.subr.bf16.mxu0 %v6527
    %7593 = vmatpush2.bf16.msra.mxu0 %v6526
    %7594 = vmatprep.subr.bf16.mxu0 %v6521
    %7595 = vmatpush2.bf16.msra.mxu0 %v6520
    %7596 = vmatprep.mubr.bf16.mxu0 %v4925
    %7597 = vmatmul.mubr.bf16.gmra.mxu0 %v4924
    %v7598 = vpop.f32.mrf.mxu0
    %v7599 = vadd.f32 0.0, %v7598
    %v7600 = vpop.f32.mrf.mxu0
    %v7601 = vadd.f32 0.0, %v7600
    %v7602 = vpop.f32.mrf.mxu0
    %v7603 = vpop.f32.mrf.mxu0
    %7604 = vdwg.mxu0
    %7605 = vmatprep.subr.bf16.mxu0 %v6611
    %7606 = vmatpush1.bf16.msra.mxu0 %v6610
    %7607 = vmatprep.subr.bf16.mxu0 %v6605
    %7608 = vmatpush1.bf16.msra.mxu0 %v6604
    %7609 = vmatprep.subr.bf16.mxu0 %v6599
    %7610 = vmatpush1.bf16.msra.mxu0 %v6598
    %7611 = vmatprep.subr.bf16.mxu0 %v6593
    %7612 = vmatpush1.bf16.msra.mxu0 %v6592
    %7613 = vmatprep.subr.bf16.mxu0 %v6587
    %7614 = vmatpush1.bf16.msra.mxu0 %v6586
    %7615 = vmatprep.subr.bf16.mxu0 %v6581
    %7616 = vmatpush1.bf16.msra.mxu0 %v6580
    %7617 = vmatprep.subr.bf16.mxu0 %v6575
    %7618 = vmatpush1.bf16.msra.mxu0 %v6574
    %7619 = vmatprep.subr.bf16.mxu0 %v6569
    %7620 = vmatpush1.bf16.msra.mxu0 %v6568
    %7621 = vmatprep.subr.bf16.mxu0 %v6659
    %7622 = vmatpush2.bf16.msra.mxu0 %v6658
    %7623 = vmatprep.subr.bf16.mxu0 %v6653
    %7624 = vmatpush2.bf16.msra.mxu0 %v6652
    %7625 = vmatprep.subr.bf16.mxu0 %v6647
    %7626 = vmatpush2.bf16.msra.mxu0 %v6646
    %7627 = vmatprep.subr.bf16.mxu0 %v6641
    %7628 = vmatpush2.bf16.msra.mxu0 %v6640
    %7629 = vmatprep.subr.bf16.mxu0 %v6635
    %7630 = vmatpush2.bf16.msra.mxu0 %v6634
    %7631 = vmatprep.subr.bf16.mxu0 %v6629
    %7632 = vmatpush2.bf16.msra.mxu0 %v6628
    %7633 = vmatprep.subr.bf16.mxu0 %v6623
    %7634 = vmatpush2.bf16.msra.mxu0 %v6622
    %7635 = vmatprep.subr.bf16.mxu0 %v6617
    %7636 = vmatpush2.bf16.msra.mxu0 %v6616
    %7637 = vmatprep.mubr.bf16.mxu0 %v4927
    %7638 = vmatmul.mubr.bf16.gmra.mxu0 %v4926
    %v7639 = vpop.f32.mrf.mxu0
    %v7640 = vadd.f32 %v7599, %v7639
    %v7641 = vpop.f32.mrf.mxu0
    %v7642 = vadd.f32 %v7601, %v7641
    %v7643 = vpop.f32.mrf.mxu0
    %v7644 = vpop.f32.mrf.mxu0
    %7645 = vdwg.mxu0
    %7646 = vmatprep.subr.bf16.mxu0 %v6707
    %7647 = vmatpush1.bf16.msra.mxu0 %v6706
    %7648 = vmatprep.subr.bf16.mxu0 %v6701
    %7649 = vmatpush1.bf16.msra.mxu0 %v6700
    %7650 = vmatprep.subr.bf16.mxu0 %v6695
    %7651 = vmatpush1.bf16.msra.mxu0 %v6694
    %7652 = vmatprep.subr.bf16.mxu0 %v6689
    %7653 = vmatpush1.bf16.msra.mxu0 %v6688
    %7654 = vmatprep.subr.bf16.mxu0 %v6683
    %7655 = vmatpush1.bf16.msra.mxu0 %v6682
    %7656 = vmatprep.subr.bf16.mxu0 %v6677
    %7657 = vmatpush1.bf16.msra.mxu0 %v6676
    %7658 = vmatprep.subr.bf16.mxu0 %v6671
    %7659 = vmatpush1.bf16.msra.mxu0 %v6670
    %7660 = vmatprep.subr.bf16.mxu0 %v6665
    %7661 = vmatpush1.bf16.msra.mxu0 %v6664
    %7662 = vmatprep.subr.bf16.mxu0 %v6755
    %7663 = vmatpush2.bf16.msra.mxu0 %v6754
    %7664 = vmatprep.subr.bf16.mxu0 %v6749
    %7665 = vmatpush2.bf16.msra.mxu0 %v6748
    %7666 = vmatprep.subr.bf16.mxu0 %v6743
    %7667 = vmatpush2.bf16.msra.mxu0 %v6742
    %7668 = vmatprep.subr.bf16.mxu0 %v6737
    %7669 = vmatpush2.bf16.msra.mxu0 %v6736
    %7670 = vmatprep.subr.bf16.mxu0 %v6731
    %7671 = vmatpush2.bf16.msra.mxu0 %v6730
    %7672 = vmatprep.subr.bf16.mxu0 %v6725
    %7673 = vmatpush2.bf16.msra.mxu0 %v6724
    %7674 = vmatprep.subr.bf16.mxu0 %v6719
    %7675 = vmatpush2.bf16.msra.mxu0 %v6718
    %7676 = vmatprep.subr.bf16.mxu0 %v6713
    %7677 = vmatpush2.bf16.msra.mxu0 %v6712
    %7678 = vmatprep.mubr.bf16.mxu0 %v4929
    %7679 = vmatmul.mubr.bf16.gmra.mxu0 %v4928
    %v7680 = vpop.f32.mrf.mxu0
    %v7681 = vadd.f32 %v7640, %v7680
    %v7682 = vpop.f32.mrf.mxu0
    %v7683 = vadd.f32 %v7642, %v7682
    %v7684 = vpop.f32.mrf.mxu0
    %v7685 = vpop.f32.mrf.mxu0
    %7686 = vdwg.mxu0
    %7687 = vmatprep.subr.bf16.mxu0 %v6803
    %7688 = vmatpush1.bf16.msra.mxu0 %v6802
    %7689 = vmatprep.subr.bf16.mxu0 %v6797
    %7690 = vmatpush1.bf16.msra.mxu0 %v6796
    %7691 = vmatprep.subr.bf16.mxu0 %v6791
    %7692 = vmatpush1.bf16.msra.mxu0 %v6790
    %7693 = vmatprep.subr.bf16.mxu0 %v6785
    %7694 = vmatpush1.bf16.msra.mxu0 %v6784
    %7695 = vmatprep.subr.bf16.mxu0 %v6779
    %7696 = vmatpush1.bf16.msra.mxu0 %v6778
    %7697 = vmatprep.subr.bf16.mxu0 %v6773
    %7698 = vmatpush1.bf16.msra.mxu0 %v6772
    %7699 = vmatprep.subr.bf16.mxu0 %v6767
    %7700 = vmatpush1.bf16.msra.mxu0 %v6766
    %7701 = vmatprep.subr.bf16.mxu0 %v6761
    %7702 = vmatpush1.bf16.msra.mxu0 %v6760
    %7703 = vmatprep.subr.bf16.mxu0 %v6851
    %7704 = vmatpush2.bf16.msra.mxu0 %v6850
    %7705 = vmatprep.subr.bf16.mxu0 %v6845
    %7706 = vmatpush2.bf16.msra.mxu0 %v6844
    %7707 = vmatprep.subr.bf16.mxu0 %v6839
    %7708 = vmatpush2.bf16.msra.mxu0 %v6838
    %7709 = vmatprep.subr.bf16.mxu0 %v6833
    %7710 = vmatpush2.bf16.msra.mxu0 %v6832
    %7711 = vmatprep.subr.bf16.mxu0 %v6827
    %7712 = vmatpush2.bf16.msra.mxu0 %v6826
    %7713 = vmatprep.subr.bf16.mxu0 %v6821
    %7714 = vmatpush2.bf16.msra.mxu0 %v6820
    %7715 = vmatprep.subr.bf16.mxu0 %v6815
    %7716 = vmatpush2.bf16.msra.mxu0 %v6814
    %7717 = vmatprep.subr.bf16.mxu0 %v6809
    %7718 = vmatpush2.bf16.msra.mxu0 %v6808
    %7719 = vmatprep.mubr.bf16.mxu0 %v4931
    %7720 = vmatmul.mubr.bf16.gmra.mxu0 %v4930
    %v7721 = vpop.f32.mrf.mxu0
    %v7722 = vadd.f32 %v7681, %v7721
    %v7723 = vpop.f32.mrf.mxu0
    %v7724 = vadd.f32 %v7683, %v7723
    %v7725 = vpop.f32.mrf.mxu0
    %v7726 = vpop.f32.mrf.mxu0
    %7727 = vdwg.mxu0
    %v7728 = vtanh.pop %v7394
    %v7729 = vtanh.pop %v7396
    %v7730 = vtanh.pop %v7558
    %v7731 = vtanh.pop %v7560
    %v7732 = vtanh.pop %v7722
    %v7733 = vtanh.pop %v7724
    %v7740 = vcombine.low %v7728, %v7729
    %v7741 = vcombine.low %v7730, %v7731
    %v7743 = vunpack.c.l.s4 1983009808
    %v7744 = vunpack.c.0.s8 %v7743
    %v7745 = vlaneseq
    %v7746 = vshrl.u32 %v7745, 7
    %v7747 = vsub.s32 %v7744, %v7746
    %v7748 = vrot.slane %v7740, %v7747
    %v7750 = vunpack.c.l.s4 1983009808
    %v7751 = vunpack.c.0.s8 %v7750
    %v7752 = vlaneseq
    %v7753 = vshrl.u32 %v7752, 7
    %v7754 = vsub.s32 %v7751, %v7753
    %v7755 = vrot.slane %v7741, %v7754
    %v7756 = vcombine.low %v7748, %v7755
    %v7757 = vcombine.low %v7732, %v7733
    %v7759 = vunpack.c.l.s4 1983009808
    %v7760 = vunpack.c.0.s8 %v7759
    %v7761 = vlaneseq
    %v7762 = vshrl.u32 %v7761, 7
    %v7763 = vsub.s32 %v7760, %v7762
    %v7764 = vrot.slane %v7757, %v7763
    %7767 = vst [vmem:[%s4] sm:$0xff] %v7756
    %7768 = vst [vmem:[%s4 + $0x8] sm:$0xf] %v7764
    // Predicated region
    $region34: #{generator_forward.1} parent=1 // pred_check
      _
    $region35: #{generator_forward.1} parent=1 // pred_check_branch
      %7770 = sbr.rel (0) target = $region37
    $region36: #{generator_forward.1} parent=1 // pred_region
      _
    $region37: #{generator_forward.1} parent=1 // pred_fallthru
      _
    // Predicated region
    $region38: #{generator_forward.1} parent=1 // pred_check
      _
    $region39: #{generator_forward.1} parent=1 // pred_check_branch
      %7772 = sbr.rel (0) target = $region41
    $region40: #{generator_forward.1} parent=1 // pred_region
      _
    $region41: #{generator_forward.1} parent=1 // pred_fallthru
      _
    %7773 = vsyncpa [#allocation3], 1
    %7774 = vsyncpa [#allocation5], 1
    %7775 = vsyncpa [#allocation8], 1

</llo_original>
